<compile_context>
chip_gen: v6e
topology: v6e:2x2x1
jax: 0.10.0
libtpu: 0.0.40
codegen_flags: <defaults>
</compile_context>

<pallas_src>
import functools

import numpy as np

import jax
import jax.numpy as jnp
from jax.experimental import pallas as pl
from jax.experimental.pallas import tpu as pltpu

BN_EPS = 1e-5
MINMAX_EPS = 1e-5
_LEAD = 8          # zero rows above the first image in the chain scratch
_TAIL = 8          # zero rows below the last image in the chain scratch


def _round_up(v, m):
    return (v + m - 1) // m * m


def _vmem_limit_bytes():
    # Generation-aware: stay well under 64 MiB on v7x, allow headroom on
    # 128 MiB parts (v5e / v6e).
    limit = 32 * 1024 * 1024
    try:
        cap = int(getattr(pltpu.get_tpu_info(), "vmem_capacity_bytes", 0))
        if cap:
            limit = max(32 * 1024 * 1024, min(64 * 1024 * 1024, cap // 2))
    except Exception:
        pass
    return limit


_VMEM_SPEC = pl.BlockSpec(memory_space=pltpu.MemorySpace.VMEM)
_CPARAMS = pltpu.CompilerParams(vmem_limit_bytes=_vmem_limit_bytes())


# ----------------------------- Pallas kernels ------------------------------ #

def _strided_conv_bn_relu_kernel(xs_ref, ws_ref, g_ref, be_ref,
                                 gsel_ref, gselt_ref, o_ref, *, count):
    """Stride-2 3x3 conv (one K-concatenated banded matmul) + BN(train) + ReLU.

    xs_ref:   (M, 3*Kl)      bf16  dy-concatenated row slabs (M = N*Ho)
    ws_ref:   (3*Kl, Nlp)    bf16  banded weights, Nlp = round_up(Wo*Cout, 128)
    g_ref:    (1, C)  f32, be_ref: (1, C) f32   BN gamma / beta
    gsel_ref: (Nlp, C) f32 (zero rows on lane padding)
    gselt_ref:(C, Nlp) f32 (zero cols on lane padding)
    o_ref:    (M, Nlp) f32  (lane padding stores zeros; wrapper slices it off)

    Conv bias is intentionally dropped: training-mode BN cancels it exactly.
    """
    acc = jnp.dot(xs_ref[...], ws_ref[...], preferred_element_type=jnp.float32)

    # BatchNorm (training-mode batch stats, biased variance), one stat pass.
    s1 = jnp.sum(acc, axis=0, keepdims=True)
    s2 = jnp.sum(acc * acc, axis=0, keepdims=True)
    sc = jnp.dot(jnp.concatenate([s1, s2], axis=0), gsel_ref[...],
                 preferred_element_type=jnp.float32)                 # (2, C)
    inv_count = 1.0 / count
    mean = sc[0:1, :] * inv_count
    var = jnp.maximum(sc[1:2, :] * inv_count - mean * mean, 0.0)
    scale_c = g_ref[...] * jax.lax.rsqrt(var + BN_EPS)
    shift_c = be_ref[...] - mean * scale_c
    sl = jnp.dot(jnp.concatenate([scale_c, shift_c], axis=0), gselt_ref[...],
                 preferred_element_type=jnp.float32)                 # (2, Nlp)

    o_ref[...] = jnp.maximum(acc * sl[0:1, :] + sl[1:2, :], 0.0)


def _resblock_chain_kernel(x_ref, vmask_ref, w1_ref, g1_ref, be1_ref,
                           w2_ref, g2_ref, be2_ref, gsel_ref, gselt_ref,
                           o_ref, padb_ref, *, nb, lead, normalize, count):
    """Chain of `nb` residual blocks fully fused in one pallas_call.

    x_ref:   (M, L) f32    chain input in scratch layout (M = N*S rows,
                           L = round_up(W*C, 128) lanes; invalid rows/lanes = 0)
    vmask:   (M, L) f32    1.0 on valid rows/lanes, 0.0 elsewhere
    w*_ref:  (nb, 3*L, L)  bf16 banded conv weights (3 dy banks K-concatenated)
    g*/be*:  (nb, 1, C)    f32 BN gamma / beta
    gsel:    (L, C) f32,  gselt: (C, L) f32
    o_ref:   (M, L) f32
    padb_ref:(lead + M + tail, L) bf16  padded activation mirror (conv LHS)
    """
    m, _ = o_ref.shape
    vmask = vmask_ref[...]
    act = x_ref[...]                                   # f32 activation (masked)

    padb_ref[...] = jnp.zeros(padb_ref.shape, jnp.bfloat16)
    padb_ref[pl.ds(lead, m), :] = act.astype(jnp.bfloat16)

    def conv(w_ref, blk):
        # One MXU push: lane-concatenate the 3 row-shifted slabs along K.
        lhs = jnp.concatenate(
            [padb_ref[pl.ds(lead - 1 + dy, m), :] for dy in range(3)], axis=1)
        return jnp.dot(lhs, w_ref[blk], preferred_element_type=jnp.float32)

    def batchnorm(acc, gamma, beta):
        am = acc * vmask
        s = jnp.concatenate([jnp.sum(am, axis=0, keepdims=True),
                             jnp.sum(am * acc, axis=0, keepdims=True)], axis=0)
        sc = jnp.dot(s, gsel_ref[...], preferred_element_type=jnp.float32)
        inv_count = 1.0 / count
        mean = sc[0:1, :] * inv_count
        var = jnp.maximum(sc[1:2, :] * inv_count - mean * mean, 0.0)
        scale_c = gamma * jax.lax.rsqrt(var + BN_EPS)
        shift_c = beta - mean * scale_c
        sl = jnp.dot(jnp.concatenate([scale_c, shift_c], axis=0), gselt_ref[...],
                     preferred_element_type=jnp.float32)
        return acc * sl[0:1, :] + sl[1:2, :]

    for blk in range(nb):
        identity = act
        h1 = jnp.maximum(batchnorm(conv(w1_ref, blk),
                                   g1_ref[blk], be1_ref[blk]), 0.0) * vmask
        padb_ref[pl.ds(lead, m), :] = h1.astype(jnp.bfloat16)
        act = jnp.maximum(batchnorm(conv(w2_ref, blk),
                                    g2_ref[blk], be2_ref[blk]) + identity,
                          0.0) * vmask
        if blk + 1 < nb:
            padb_ref[pl.ds(lead, m), :] = act.astype(jnp.bfloat16)

    if normalize:
        big = jnp.float32(3.0e38)
        mn = jnp.min(jnp.min(jnp.where(vmask > 0.0, act, big),
                             axis=1, keepdims=True), axis=0, keepdims=True)
        mx = jnp.max(jnp.max(jnp.where(vmask > 0.0, act, -big),
                             axis=1, keepdims=True), axis=0, keepdims=True)
        inv = pl.reciprocal(mx - mn + MINMAX_EPS, approx=True)
        o_ref[...] = (act - mn) * inv
    else:
        o_ref[...] = act


# ------------------------- parameter preparation ---------------------------- #
# All parameter-derived constants are built ONCE here (outside jit).

def _prep_sconv(lp, w_in):
    wt = np.asarray(lp["w"], np.float32)               # (3, 3, Cin, Cout)
    cin, cout = int(wt.shape[2]), int(wt.shape[3])
    wo = (w_in - 1) // 2 + 1
    wp = w_in + 2
    kl = wp * cin
    nl = wo * cout
    nlp = _round_up(nl, 128)

    bank = np.zeros((3, kl, nlp), np.float32)
    for ky in range(3):
        for w_o in range(wo):
            for kx in range(3):
                p = 2 * w_o + kx                       # padded input column
                bank[ky, p * cin:(p + 1) * cin,
                     w_o * cout:(w_o + 1) * cout] = wt[ky, kx]
    ws = jnp.asarray(bank.reshape(3 * kl, nlp), dtype=jnp.bfloat16)

    gsel = np.zeros((nlp, cout), np.float32)
    eye = np.eye(cout, dtype=np.float32)
    for w_o in range(wo):
        gsel[w_o * cout:(w_o + 1) * cout, :] = eye

    # NOTE: lp["b"] (conv bias) is intentionally unused - training-mode BN
    # subtracts the batch mean, which cancels the bias exactly.
    return {"kind": "sconv", "ws": ws,
            "gamma": jnp.asarray(np.asarray(lp["gamma"], np.float32).reshape(1, cout)),
            "beta": jnp.asarray(np.asarray(lp["beta"], np.float32).reshape(1, cout)),
            "gsel": jnp.asarray(gsel),
            "gselt": jnp.asarray(np.ascontiguousarray(gsel.T)),
            "cout": cout, "wo": wo, "nl": nl, "nlp": nlp}


def _prep_chain(blocks, batch, h, w, c, normalize):
    wc = w * c
    lt = _round_up(wc, 128)                 # lane-dense activation width
    s_rows = _round_up(h + 1, 8)            # per-image row stride (>= h+1)
    m = batch * s_rows

    def banded(wt):                          # (3,3,C,C) -> (3*lt, lt)
        wt = np.asarray(wt, np.float32)
        bank = np.zeros((3, lt, lt), np.float32)
        for ky in range(3):
            for go in range(w):
                for kx in range(3):
                    gi = go + kx - 1        # valid input column (pad cols drop)
                    if 0 <= gi < w:
                        bank[ky, gi * c:(gi + 1) * c,
                             go * c:(go + 1) * c] = wt[ky, kx]
        return bank.reshape(3 * lt, lt)

    w1 = jnp.asarray(np.stack([banded(bk["l1"]["w"]) for bk in blocks]),
                     dtype=jnp.bfloat16)
    w2 = jnp.asarray(np.stack([banded(bk["l2"]["w"]) for bk in blocks]),
                     dtype=jnp.bfloat16)

    def bn_param(layer, key):
        return jnp.asarray(np.stack(
            [np.asarray(bk[layer][key], np.float32).reshape(1, c) for bk in blocks]))

    gsel = np.zeros((lt, c), np.float32)
    eye = np.eye(c, dtype=np.float32)
    for g in range(w):
        gsel[g * c:(g + 1) * c, :] = eye

    vmask = np.zeros((m, lt), np.float32)
    for j in range(m):
        if (j % s_rows) < h:
            vmask[j, :wc] = 1.0

    # NOTE: conv biases are unused (cancelled by training-mode BatchNorm).
    return {"kind": "chain", "normalize": normalize, "nb": len(blocks),
            "S": s_rows, "lane_total": lt,
            "w1": w1, "w2": w2,
            "g1": bn_param("l1", "gamma"), "be1": bn_param("l1", "beta"),
            "g2": bn_param("l2", "gamma"), "be2": bn_param("l2", "beta"),
            "gsel": jnp.asarray(gsel),
            "gselt": jnp.asarray(np.ascontiguousarray(gsel.T)),
            "vmask": jnp.asarray(vmask)}


def prepare_representation(params, observation_shape, batch):
    """Build per-stage constants (banded weights, selection matrices, masks)."""
    cin, hi, wi = observation_shape
    stages = [_prep_sconv(params["conv1"], wi)]
    c = int(params["conv1"]["w"].shape[-1])
    h, w = (hi - 1) // 2 + 1, (wi - 1) // 2 + 1

    ds_list = params["downsample"]
    for idx, ds in enumerate(ds_list):
        stages.append(_prep_sconv(ds["conv"], w))
        c = int(ds["conv"]["w"].shape[-1])
        h, w = (h - 1) // 2 + 1, (w - 1) // 2 + 1
        blocks = list(ds["blocks"])
        if idx == len(ds_list) - 1:
            # Fuse the last downsample step's blocks with the 6 trailing
            # residual blocks (same resolution/channels) + min-max epilogue.
            blocks = blocks + list(params["resblocks"])
            stages.append(_prep_chain(blocks, batch, h, w, c, normalize=True))
        elif blocks:
            stages.append(_prep_chain(blocks, batch, h, w, c, normalize=False))
    if not ds_list:
        stages.append(_prep_chain(list(params["resblocks"]), batch, h, w, c,
                                  normalize=True))
    return stages


# ------------------------------- JAX glue ---------------------------------- #

def _run_sconv(x_nhwc, st):
    n, hi, wi, cin = x_nhwc.shape
    cout, wo, nl, nlp = st["cout"], st["wo"], st["nl"], st["nlp"]
    ho = (hi - 1) // 2 + 1
    m = n * ho
    kl = (wi + 2) * cin

    xp = jnp.pad(x_nhwc, ((0, 0), (1, 1), (1, 1), (0, 0)))
    slabs = [xp[:, dy:dy + 2 * ho - 1:2, :, :].reshape(m, kl) for dy in range(3)]
    xs = jnp.concatenate(slabs, axis=1).astype(jnp.bfloat16)        # (m, 3*kl)

    flops = 2 * m * (3 * kl) * nlp
    bytes_accessed = 2 * (m * 3 * kl + 3 * kl * nlp) + 4 * (m * nlp)

    out = pl.pallas_call(
        functools.partial(_strided_conv_bn_relu_kernel, count=float(m * wo)),
        out_shape=jax.ShapeDtypeStruct((m, nlp), jnp.float32),
        in_specs=[_VMEM_SPEC] * 6,
        out_specs=_VMEM_SPEC,
        compiler_params=_CPARAMS,
        cost_estimate=pl.CostEstimate(flops=flops, transcendentals=0,
                                      bytes_accessed=bytes_accessed),
    )(xs, st["ws"], st["gamma"], st["beta"], st["gsel"], st["gselt"])
    return out[:, :nl].reshape(n, ho, wo, cout)


def _run_chain(x_nhwc, st):
    n, h, w, c = x_nhwc.shape
    s_rows, lt, nb = st["S"], st["lane_total"], st["nb"]
    wc = w * c
    m = n * s_rows

    x2 = jnp.pad(x_nhwc.reshape(n, h, wc),
                 ((0, 0), (0, s_rows - h), (0, lt - wc))).reshape(m, lt)

    flops = nb * 2 * (2 * m * (3 * lt) * lt)
    bytes_accessed = 4 * 2 * m * lt + 2 * int(st["w1"].size + st["w2"].size)

    out = pl.pallas_call(
        functools.partial(_resblock_chain_kernel, nb=nb, lead=_LEAD,
                          normalize=st["normalize"], count=float(n * h * w)),
        out_shape=jax.ShapeDtypeStruct((m, lt), jnp.float32),
        in_specs=[_VMEM_SPEC] * 10,
        out_specs=_VMEM_SPEC,
        scratch_shapes=[pltpu.VMEM((_LEAD + m + _TAIL, lt), jnp.bfloat16)],
        compiler_params=_CPARAMS,
        cost_estimate=pl.CostEstimate(flops=flops, transcendentals=0,
                                      bytes_accessed=bytes_accessed),
    )(x2, st["vmask"], st["w1"], st["g1"], st["be1"],
      st["w2"], st["g2"], st["be2"], st["gsel"], st["gselt"])
    return out.reshape(n, s_rows, lt)[:, :h, :wc].reshape(n, h, w, c)


def representation_forward(stages, x_nchw):
    x = jnp.transpose(x_nchw, (0, 2, 3, 1)).astype(jnp.float32)     # NCHW->NHWC
    for st in stages:
        if st["kind"] == "sconv":
            x = _run_sconv(x, st)
        else:
            x = _run_chain(x, st)
    return jnp.transpose(x, (0, 3, 1, 2))                            # NHWC->NCHW


# --------------------------- parameter creation ----------------------------- #

def _init_layer(key, cin, cout):
    kw_, kb = jax.random.split(key)
    wgt = jax.random.normal(kw_, (3, 3, cin, cout), jnp.float32) / jnp.sqrt(9.0 * cin)
    b = jax.random.normal(kb, (cout,), jnp.float32) * 0.01
    return {"w": wgt, "b": b,
            "gamma": jnp.ones((cout,), jnp.float32),    # BN defaults (weight=1)
            "beta": jnp.zeros((cout,), jnp.float32)}    # BN defaults (bias=0)


def _init_resblock(key, c):
    k1, k2 = jax.random.split(key)
    return {"l1": _init_layer(k1, c, c), "l2": _init_layer(k2, c, c)}


def init_params(key, observation_shape, num_channels, downsample_steps):
    in_ch = observation_shape[0]
    n_keys = 1 + sum(1 + nb for _, nb in downsample_steps) + 6
    ki = iter(jax.random.split(key, n_keys))
    params = {"conv1": _init_layer(next(ki), in_ch, num_channels)}
    cur = num_channels
    ds = []
    for out_ch, num_blocks in downsample_steps:
        ds.append({"conv": _init_layer(next(ki), cur, out_ch),
                   "blocks": [_init_resblock(next(ki), out_ch)
                              for _ in range(num_blocks)]})
        cur = out_ch
    params["downsample"] = ds
    params["resblocks"] = [_init_resblock(next(ki), cur) for _ in range(6)]
    return params


# ----------------------------------- main ----------------------------------- #

if __name__ == "__main__":
    observation_shape = (4, 16, 16)      # (C, H, W)
    num_channels = 8
    downsample_steps = [(8, 1)]
    batch = 2

    key = jax.random.PRNGKey(0)
    kp, kx = jax.random.split(key)
    params = init_params(kp, observation_shape, num_channels, downsample_steps)
    x = jax.random.normal(kx, (batch, *observation_shape), jnp.float32)  # NCHW

    # All parameter-derived constants (banded weights, gsel/gselt, masks) are
    # built once here, outside the jitted forward.
    stages = prepare_representation(params, observation_shape, batch)

    fwd = jax.jit(lambda xx: representation_forward(stages, xx))
    y = fwd(x)
    jax.block_until_ready(y)

    # 16 -> 8 (conv1, stride 2) -> 4 (downsample block, stride 2)
    assert y.shape == (batch, 8, 4, 4), y.shape
    assert bool(jnp.all(jnp.isfinite(y)))
    assert float(jnp.min(y)) >= -1e-4 and float(jnp.max(y)) <= 1.0 + 1e-3
    print("KERNEL_OK")
</pallas_src>

<mosaic_0001>
module attributes {stable_mosaic.version = 11 : i64} {
  func.func @_strided_conv_bn_relu_kernel(%arg0: memref<16x216xbf16, #tpu.memory_space<vmem>>, %arg1: memref<216x128xbf16, #tpu.memory_space<vmem>>, %arg2: memref<1x8xf32, #tpu.memory_space<vmem>>, %arg3: memref<1x8xf32, #tpu.memory_space<vmem>>, %arg4: memref<128x8xf32, #tpu.memory_space<vmem>>, %arg5: memref<8x128xf32, #tpu.memory_space<vmem>>, %arg6: memref<16x128xf32, #tpu.memory_space<vmem>>) attributes {dimension_semantics = [], scalar_prefetch = 0 : i64, scratch_operands = 0 : i64, tpu.core_type = #tpu.core_type<tc>} {
    %c0 = arith.constant 0 : index
    %c0_0 = arith.constant 0 : index
    %0 = vector.load %arg0[%c0, %c0_0] : memref<16x216xbf16, #tpu.memory_space<vmem>>, vector<16x216xbf16>
    %c0_1 = arith.constant 0 : index
    %c0_2 = arith.constant 0 : index
    %1 = vector.load %arg1[%c0_1, %c0_2] : memref<216x128xbf16, #tpu.memory_space<vmem>>, vector<216x128xbf16>
    %cst = arith.constant dense<0.000000e+00> : vector<16x128xf32>
    %2 = tpu.matmul %0, %1, %cst {dimension_numbers = #tpu.dot_dimension_numbers<[1], [0], [0], [1], [0, 0, 1, 1], [], []>} : vector<16x216xbf16>, vector<216x128xbf16>, vector<16x128xf32> -> vector<16x128xf32>
    %cst_3 = arith.constant dense<0.000000e+00> : vector<128xf32>
    %3 = vector.multi_reduction <add>, %2, %cst_3 [0] : vector<16x128xf32> to vector<128xf32>
    %4 = vector.shape_cast %3 : vector<128xf32> to vector<1x128xf32>
    %5 = arith.mulf %2, %2 : vector<16x128xf32>
    %cst_4 = arith.constant dense<0.000000e+00> : vector<128xf32>
    %6 = vector.multi_reduction <add>, %5, %cst_4 [0] : vector<16x128xf32> to vector<128xf32>
    %7 = vector.shape_cast %6 : vector<128xf32> to vector<1x128xf32>
    %8 = tpu.concatenate %4, %7 in 0 : vector<1x128xf32>, vector<1x128xf32> -> vector<2x128xf32>
    %c0_5 = arith.constant 0 : index
    %c0_6 = arith.constant 0 : index
    %9 = vector.load %arg4[%c0_5, %c0_6] : memref<128x8xf32, #tpu.memory_space<vmem>>, vector<128x8xf32>
    %cst_7 = arith.constant dense<0.000000e+00> : vector<2x8xf32>
    %10 = tpu.matmul %8, %9, %cst_7 {dimension_numbers = #tpu.dot_dimension_numbers<[1], [0], [0], [1], [0, 0, 1, 1], [], []>} : vector<2x128xf32>, vector<128x8xf32>, vector<2x8xf32> -> vector<2x8xf32>
    %11 = vector.extract_strided_slice %10 {offsets = [0, 0], sizes = [1, 8], strides = [1, 1]} : vector<2x8xf32> to vector<1x8xf32>
    %cst_8 = arith.constant 7.812500e-03 : f32
    %12 = vector.broadcast %cst_8 : f32 to vector<1x8xf32>
    %13 = arith.mulf %11, %12 : vector<1x8xf32>
    %14 = vector.extract_strided_slice %10 {offsets = [1, 0], sizes = [1, 8], strides = [1, 1]} : vector<2x8xf32> to vector<1x8xf32>
    %cst_9 = arith.constant 7.812500e-03 : f32
    %15 = vector.broadcast %cst_9 : f32 to vector<1x8xf32>
    %16 = arith.mulf %14, %15 : vector<1x8xf32>
    %17 = arith.mulf %13, %13 : vector<1x8xf32>
    %18 = arith.subf %16, %17 : vector<1x8xf32>
    %cst_10 = arith.constant 0.000000e+00 : f32
    %19 = vector.broadcast %cst_10 : f32 to vector<1x8xf32>
    %20 = arith.maximumf %18, %19 : vector<1x8xf32>
    %c0_11 = arith.constant 0 : index
    %c0_12 = arith.constant 0 : index
    %21 = vector.load %arg2[%c0_11, %c0_12] : memref<1x8xf32, #tpu.memory_space<vmem>>, vector<1x8xf32>
    %cst_13 = arith.constant 9.99999974E-6 : f32
    %22 = vector.broadcast %cst_13 : f32 to vector<1x8xf32>
    %23 = arith.addf %20, %22 : vector<1x8xf32>
    %24 = math.rsqrt %23 : vector<1x8xf32>
    %25 = arith.mulf %21, %24 : vector<1x8xf32>
    %c0_14 = arith.constant 0 : index
    %c0_15 = arith.constant 0 : index
    %26 = vector.load %arg3[%c0_14, %c0_15] : memref<1x8xf32, #tpu.memory_space<vmem>>, vector<1x8xf32>
    %27 = arith.mulf %13, %25 : vector<1x8xf32>
    %28 = arith.subf %26, %27 : vector<1x8xf32>
    %29 = tpu.concatenate %25, %28 in 0 : vector<1x8xf32>, vector<1x8xf32> -> vector<2x8xf32>
    %c0_16 = arith.constant 0 : index
    %c0_17 = arith.constant 0 : index
    %30 = vector.load %arg5[%c0_16, %c0_17] : memref<8x128xf32, #tpu.memory_space<vmem>>, vector<8x128xf32>
    %cst_18 = arith.constant dense<0.000000e+00> : vector<2x128xf32>
    %31 = tpu.matmul %29, %30, %cst_18 {dimension_numbers = #tpu.dot_dimension_numbers<[1], [0], [0], [1], [0, 0, 1, 1], [], []>} : vector<2x8xf32>, vector<8x128xf32>, vector<2x128xf32> -> vector<2x128xf32>
    %32 = vector.extract_strided_slice %31 {offsets = [0, 0], sizes = [1, 128], strides = [1, 1]} : vector<2x128xf32> to vector<1x128xf32>
    %33 = vector.broadcast %32 : vector<1x128xf32> to vector<16x128xf32>
    %34 = arith.mulf %2, %33 : vector<16x128xf32>
    %35 = vector.extract_strided_slice %31 {offsets = [1, 0], sizes = [1, 128], strides = [1, 1]} : vector<2x128xf32> to vector<1x128xf32>
    %36 = vector.broadcast %35 : vector<1x128xf32> to vector<16x128xf32>
    %37 = arith.addf %34, %36 : vector<16x128xf32>
    %cst_19 = arith.constant 0.000000e+00 : f32
    %38 = vector.broadcast %cst_19 : f32 to vector<16x128xf32>
    %39 = arith.maximumf %37, %38 : vector<16x128xf32>
    %c0_20 = arith.constant 0 : index
    %c0_21 = arith.constant 0 : index
    %40 = vector.load %arg6[%c0_20, %c0_21] : memref<16x128xf32, #tpu.memory_space<vmem>>, vector<16x128xf32>
    tpu.vector_store %arg6[%c0_20, %c0_21], %39 {strides = array<i32>} : memref<16x128xf32, #tpu.memory_space<vmem>>, vector<16x128xf32>,
    return
  }
}

module attributes {stable_mosaic.version = 11 : i64} {
  func.func @_strided_conv_bn_relu_kernel(%arg0: memref<8x240xbf16, #tpu.memory_space<vmem>>, %arg1: memref<240x128xbf16, #tpu.memory_space<vmem>>, %arg2: memref<1x8xf32, #tpu.memory_space<vmem>>, %arg3: memref<1x8xf32, #tpu.memory_space<vmem>>, %arg4: memref<128x8xf32, #tpu.memory_space<vmem>>, %arg5: memref<8x128xf32, #tpu.memory_space<vmem>>, %arg6: memref<8x128xf32, #tpu.memory_space<vmem>>) attributes {dimension_semantics = [], scalar_prefetch = 0 : i64, scratch_operands = 0 : i64, tpu.core_type = #tpu.core_type<tc>} {
    %c0 = arith.constant 0 : index
    %c0_0 = arith.constant 0 : index
    %0 = vector.load %arg0[%c0, %c0_0] : memref<8x240xbf16, #tpu.memory_space<vmem>>, vector<8x240xbf16>
    %c0_1 = arith.constant 0 : index
    %c0_2 = arith.constant 0 : index
    %1 = vector.load %arg1[%c0_1, %c0_2] : memref<240x128xbf16, #tpu.memory_space<vmem>>, vector<240x128xbf16>
    %cst = arith.constant dense<0.000000e+00> : vector<8x128xf32>
    %2 = tpu.matmul %0, %1, %cst {dimension_numbers = #tpu.dot_dimension_numbers<[1], [0], [0], [1], [0, 0, 1, 1], [], []>} : vector<8x240xbf16>, vector<240x128xbf16>, vector<8x128xf32> -> vector<8x128xf32>
    %cst_3 = arith.constant dense<0.000000e+00> : vector<128xf32>
    %3 = vector.multi_reduction <add>, %2, %cst_3 [0] : vector<8x128xf32> to vector<128xf32>
    %4 = vector.shape_cast %3 : vector<128xf32> to vector<1x128xf32>
    %5 = arith.mulf %2, %2 : vector<8x128xf32>
    %cst_4 = arith.constant dense<0.000000e+00> : vector<128xf32>
    %6 = vector.multi_reduction <add>, %5, %cst_4 [0] : vector<8x128xf32> to vector<128xf32>
    %7 = vector.shape_cast %6 : vector<128xf32> to vector<1x128xf32>
    %8 = tpu.concatenate %4, %7 in 0 : vector<1x128xf32>, vector<1x128xf32> -> vector<2x128xf32>
    %c0_5 = arith.constant 0 : index
    %c0_6 = arith.constant 0 : index
    %9 = vector.load %arg4[%c0_5, %c0_6] : memref<128x8xf32, #tpu.memory_space<vmem>>, vector<128x8xf32>
    %cst_7 = arith.constant dense<0.000000e+00> : vector<2x8xf32>
    %10 = tpu.matmul %8, %9, %cst_7 {dimension_numbers = #tpu.dot_dimension_numbers<[1], [0], [0], [1], [0, 0, 1, 1], [], []>} : vector<2x128xf32>, vector<128x8xf32>, vector<2x8xf32> -> vector<2x8xf32>
    %11 = vector.extract_strided_slice %10 {offsets = [0, 0], sizes = [1, 8], strides = [1, 1]} : vector<2x8xf32> to vector<1x8xf32>
    %cst_8 = arith.constant 3.125000e-02 : f32
    %12 = vector.broadcast %cst_8 : f32 to vector<1x8xf32>
    %13 = arith.mulf %11, %12 : vector<1x8xf32>
    %14 = vector.extract_strided_slice %10 {offsets = [1, 0], sizes = [1, 8], strides = [1, 1]} : vector<2x8xf32> to vector<1x8xf32>
    %cst_9 = arith.constant 3.125000e-02 : f32
    %15 = vector.broadcast %cst_9 : f32 to vector<1x8xf32>
    %16 = arith.mulf %14, %15 : vector<1x8xf32>
    %17 = arith.mulf %13, %13 : vector<1x8xf32>
    %18 = arith.subf %16, %17 : vector<1x8xf32>
    %cst_10 = arith.constant 0.000000e+00 : f32
    %19 = vector.broadcast %cst_10 : f32 to vector<1x8xf32>
    %20 = arith.maximumf %18, %19 : vector<1x8xf32>
    %c0_11 = arith.constant 0 : index
    %c0_12 = arith.constant 0 : index
    %21 = vector.load %arg2[%c0_11, %c0_12] : memref<1x8xf32, #tpu.memory_space<vmem>>, vector<1x8xf32>
    %cst_13 = arith.constant 9.99999974E-6 : f32
    %22 = vector.broadcast %cst_13 : f32 to vector<1x8xf32>
    %23 = arith.addf %20, %22 : vector<1x8xf32>
    %24 = math.rsqrt %23 : vector<1x8xf32>
    %25 = arith.mulf %21, %24 : vector<1x8xf32>
    %c0_14 = arith.constant 0 : index
    %c0_15 = arith.constant 0 : index
    %26 = vector.load %arg3[%c0_14, %c0_15] : memref<1x8xf32, #tpu.memory_space<vmem>>, vector<1x8xf32>
    %27 = arith.mulf %13, %25 : vector<1x8xf32>
    %28 = arith.subf %26, %27 : vector<1x8xf32>
    %29 = tpu.concatenate %25, %28 in 0 : vector<1x8xf32>, vector<1x8xf32> -> vector<2x8xf32>
    %c0_16 = arith.constant 0 : index
    %c0_17 = arith.constant 0 : index
    %30 = vector.load %arg5[%c0_16, %c0_17] : memref<8x128xf32, #tpu.memory_space<vmem>>, vector<8x128xf32>
    %cst_18 = arith.constant dense<0.000000e+00> : vector<2x128xf32>
    %31 = tpu.matmul %29, %30, %cst_18 {dimension_numbers = #tpu.dot_dimension_numbers<[1], [0], [0], [1], [0, 0, 1, 1], [], []>} : vector<2x8xf32>, vector<8x128xf32>, vector<2x128xf32> -> vector<2x128xf32>
    %32 = vector.extract_strided_slice %31 {offsets = [0, 0], sizes = [1, 128], strides = [1, 1]} : vector<2x128xf32> to vector<1x128xf32>
    %33 = vector.broadcast %32 : vector<1x128xf32> to vector<8x128xf32>
    %34 = arith.mulf %2, %33 : vector<8x128xf32>
    %35 = vector.extract_strided_slice %31 {offsets = [1, 0], sizes = [1, 128], strides = [1, 1]} : vector<2x128xf32> to vector<1x128xf32>
    %36 = vector.broadcast %35 : vector<1x128xf32> to vector<8x128xf32>
    %37 = arith.addf %34, %36 : vector<8x128xf32>
    %cst_19 = arith.constant 0.000000e+00 : f32
    %38 = vector.broadcast %cst_19 : f32 to vector<8x128xf32>
    %39 = arith.maximumf %37, %38 : vector<8x128xf32>
    %c0_20 = arith.constant 0 : index
    %c0_21 = arith.constant 0 : index
    %40 = vector.load %arg6[%c0_20, %c0_21] : memref<8x128xf32, #tpu.memory_space<vmem>>, vector<8x128xf32>
    tpu.vector_store %arg6[%c0_20, %c0_21], %39 {strides = array<i32>} : memref<8x128xf32, #tpu.memory_space<vmem>>, vector<8x128xf32>,
    return
  }
}

module attributes {stable_mosaic.version = 11 : i64} {
  func.func @_resblock_chain_kernel(%arg0: memref<16x128xf32, #tpu.memory_space<vmem>>, %arg1: memref<16x128xf32, #tpu.memory_space<vmem>>, %arg2: memref<7x384x128xbf16, #tpu.memory_space<vmem>>, %arg3: memref<7x1x8xf32, #tpu.memory_space<vmem>>, %arg4: memref<7x1x8xf32, #tpu.memory_space<vmem>>, %arg5: memref<7x384x128xbf16, #tpu.memory_space<vmem>>, %arg6: memref<7x1x8xf32, #tpu.memory_space<vmem>>, %arg7: memref<7x1x8xf32, #tpu.memory_space<vmem>>, %arg8: memref<128x8xf32, #tpu.memory_space<vmem>>, %arg9: memref<8x128xf32, #tpu.memory_space<vmem>>, %arg10: memref<16x128xf32, #tpu.memory_space<vmem>>, %arg11: memref<32x128xbf16, #tpu.memory_space<vmem>>) attributes {dimension_semantics = [], scalar_prefetch = 0 : i64, scratch_operands = 1 : i64, tpu.core_type = #tpu.core_type<tc>} {
    %c0 = arith.constant 0 : index
    %c0_0 = arith.constant 0 : index
    %0 = vector.load %arg1[%c0, %c0_0] : memref<16x128xf32, #tpu.memory_space<vmem>>, vector<16x128xf32>
    %c0_1 = arith.constant 0 : index
    %c0_2 = arith.constant 0 : index
    %1 = vector.load %arg0[%c0_1, %c0_2] : memref<16x128xf32, #tpu.memory_space<vmem>>, vector<16x128xf32>
    %cst = arith.constant 0.000000e+00 : bf16
    %2 = vector.broadcast %cst : bf16 to vector<32x128xbf16>
    %c0_3 = arith.constant 0 : index
    %c0_4 = arith.constant 0 : index
    %3 = vector.load %arg11[%c0_3, %c0_4] : memref<32x128xbf16, #tpu.memory_space<vmem>>, vector<32x128xbf16>
    tpu.vector_store %arg11[%c0_3, %c0_4], %2 {strides = array<i32>} : memref<32x128xbf16, #tpu.memory_space<vmem>>, vector<32x128xbf16>,
    %4 = arith.truncf %1 : vector<16x128xf32> to vector<16x128xbf16>
    %c8 = arith.constant 8 : index
    %c0_5 = arith.constant 0 : index
    %5 = vector.load %arg11[%c8, %c0_5] : memref<32x128xbf16, #tpu.memory_space<vmem>>, vector<16x128xbf16>
    tpu.vector_store %arg11[%c8, %c0_5], %4 {strides = array<i32>} : memref<32x128xbf16, #tpu.memory_space<vmem>>, vector<16x128xbf16>,
    %c7 = arith.constant 7 : index
    %c0_6 = arith.constant 0 : index
    %6 = vector.load %arg11[%c7, %c0_6] : memref<32x128xbf16, #tpu.memory_space<vmem>>, vector<16x128xbf16>
    %c8_7 = arith.constant 8 : index
    %c0_8 = arith.constant 0 : index
    %7 = vector.load %arg11[%c8_7, %c0_8] : memref<32x128xbf16, #tpu.memory_space<vmem>>, vector<16x128xbf16>
    %c9 = arith.constant 9 : index
    %c0_9 = arith.constant 0 : index
    %8 = vector.load %arg11[%c9, %c0_9] : memref<32x128xbf16, #tpu.memory_space<vmem>>, vector<16x128xbf16>
    %9 = tpu.concatenate %6, %7, %8 in 1 : vector<16x128xbf16>, vector<16x128xbf16>, vector<16x128xbf16> -> vector<16x384xbf16>
    %c0_10 = arith.constant 0 : index
    %c0_11 = arith.constant 0 : index
    %c0_12 = arith.constant 0 : index
    %10 = vector.load %arg2[%c0_10, %c0_11, %c0_12] : memref<7x384x128xbf16, #tpu.memory_space<vmem>>, vector<1x384x128xbf16>
    %11 = vector.shape_cast %10 : vector<1x384x128xbf16> to vector<384x128xbf16>
    %cst_13 = arith.constant dense<0.000000e+00> : vector<16x128xf32>
    %12 = tpu.matmul %9, %11, %cst_13 {dimension_numbers = #tpu.dot_dimension_numbers<[1], [0], [0], [1], [0, 0, 1, 1], [], []>} : vector<16x384xbf16>, vector<384x128xbf16>, vector<16x128xf32> -> vector<16x128xf32>
    %c0_14 = arith.constant 0 : index
    %c0_15 = arith.constant 0 : index
    %c0_16 = arith.constant 0 : index
    %13 = vector.load %arg3[%c0_14, %c0_15, %c0_16] : memref<7x1x8xf32, #tpu.memory_space<vmem>>, vector<1x1x8xf32>
    %14 = vector.shape_cast %13 : vector<1x1x8xf32> to vector<1x8xf32>
    %c0_17 = arith.constant 0 : index
    %c0_18 = arith.constant 0 : index
    %c0_19 = arith.constant 0 : index
    %15 = vector.load %arg4[%c0_17, %c0_18, %c0_19] : memref<7x1x8xf32, #tpu.memory_space<vmem>>, vector<1x1x8xf32>
    %16 = vector.shape_cast %15 : vector<1x1x8xf32> to vector<1x8xf32>
    %17 = arith.mulf %12, %0 : vector<16x128xf32>
    %cst_20 = arith.constant dense<0.000000e+00> : vector<128xf32>
    %18 = vector.multi_reduction <add>, %17, %cst_20 [0] : vector<16x128xf32> to vector<128xf32>
    %19 = vector.shape_cast %18 : vector<128xf32> to vector<1x128xf32>
    %20 = arith.mulf %17, %12 : vector<16x128xf32>
    %cst_21 = arith.constant dense<0.000000e+00> : vector<128xf32>
    %21 = vector.multi_reduction <add>, %20, %cst_21 [0] : vector<16x128xf32> to vector<128xf32>
    %22 = vector.shape_cast %21 : vector<128xf32> to vector<1x128xf32>
    %23 = tpu.concatenate %19, %22 in 0 : vector<1x128xf32>, vector<1x128xf32> -> vector<2x128xf32>
    %c0_22 = arith.constant 0 : index
    %c0_23 = arith.constant 0 : index
    %24 = vector.load %arg8[%c0_22, %c0_23] : memref<128x8xf32, #tpu.memory_space<vmem>>, vector<128x8xf32>
    %cst_24 = arith.constant dense<0.000000e+00> : vector<2x8xf32>
    %25 = tpu.matmul %23, %24, %cst_24 {dimension_numbers = #tpu.dot_dimension_numbers<[1], [0], [0], [1], [0, 0, 1, 1], [], []>} : vector<2x128xf32>, vector<128x8xf32>, vector<2x8xf32> -> vector<2x8xf32>
    %26 = vector.extract_strided_slice %25 {offsets = [0, 0], sizes = [1, 8], strides = [1, 1]} : vector<2x8xf32> to vector<1x8xf32>
    %cst_25 = arith.constant 3.125000e-02 : f32
    %27 = vector.broadcast %cst_25 : f32 to vector<1x8xf32>
    %28 = arith.mulf %26, %27 : vector<1x8xf32>
    %29 = vector.extract_strided_slice %25 {offsets = [1, 0], sizes = [1, 8], strides = [1, 1]} : vector<2x8xf32> to vector<1x8xf32>
    %cst_26 = arith.constant 3.125000e-02 : f32
    %30 = vector.broadcast %cst_26 : f32 to vector<1x8xf32>
    %31 = arith.mulf %29, %30 : vector<1x8xf32>
    %32 = arith.mulf %28, %28 : vector<1x8xf32>
    %33 = arith.subf %31, %32 : vector<1x8xf32>
    %cst_27 = arith.constant 0.000000e+00 : f32
    %34 = vector.broadcast %cst_27 : f32 to vector<1x8xf32>
    %35 = arith.maximumf %33, %34 : vector<1x8xf32>
    %cst_28 = arith.constant 9.99999974E-6 : f32
    %36 = vector.broadcast %cst_28 : f32 to vector<1x8xf32>
    %37 = arith.addf %35, %36 : vector<1x8xf32>
    %38 = math.rsqrt %37 : vector<1x8xf32>
    %39 = arith.mulf %14, %38 : vector<1x8xf32>
    %40 = arith.mulf %28, %39 : vector<1x8xf32>
    %41 = arith.subf %16, %40 : vector<1x8xf32>
    %42 = tpu.concatenate %39, %41 in 0 : vector<1x8xf32>, vector<1x8xf32> -> vector<2x8xf32>
    %c0_29 = arith.constant 0 : index
    %c0_30 = arith.constant 0 : index
    %43 = vector.load %arg9[%c0_29, %c0_30] : memref<8x128xf32, #tpu.memory_space<vmem>>, vector<8x128xf32>
    %cst_31 = arith.constant dense<0.000000e+00> : vector<2x128xf32>
    %44 = tpu.matmul %42, %43, %cst_31 {dimension_numbers = #tpu.dot_dimension_numbers<[1], [0], [0], [1], [0, 0, 1, 1], [], []>} : vector<2x8xf32>, vector<8x128xf32>, vector<2x128xf32> -> vector<2x128xf32>
    %45 = vector.extract_strided_slice %44 {offsets = [0, 0], sizes = [1, 128], strides = [1, 1]} : vector<2x128xf32> to vector<1x128xf32>
    %46 = vector.broadcast %45 : vector<1x128xf32> to vector<16x128xf32>
    %47 = arith.mulf %12, %46 : vector<16x128xf32>
    %48 = vector.extract_strided_slice %44 {offsets = [1, 0], sizes = [1, 128], strides = [1, 1]} : vector<2x128xf32> to vector<1x128xf32>
    %49 = vector.broadcast %48 : vector<1x128xf32> to vector<16x128xf32>
    %50 = arith.addf %47, %49 : vector<16x128xf32>
    %cst_32 = arith.constant 0.000000e+00 : f32
    %51 = vector.broadcast %cst_32 : f32 to vector<16x128xf32>
    %52 = arith.maximumf %50, %51 : vector<16x128xf32>
    %53 = arith.mulf %52, %0 : vector<16x128xf32>
    %54 = arith.truncf %53 : vector<16x128xf32> to vector<16x128xbf16>
    %c8_33 = arith.constant 8 : index
    %c0_34 = arith.constant 0 : index
    %55 = vector.load %arg11[%c8_33, %c0_34] : memref<32x128xbf16, #tpu.memory_space<vmem>>, vector<16x128xbf16>
    tpu.vector_store %arg11[%c8_33, %c0_34], %54 {strides = array<i32>} : memref<32x128xbf16, #tpu.memory_space<vmem>>, vector<16x128xbf16>,
    %c7_35 = arith.constant 7 : index
    %c0_36 = arith.constant 0 : index
    %56 = vector.load %arg11[%c7_35, %c0_36] : memref<32x128xbf16, #tpu.memory_space<vmem>>, vector<16x128xbf16>
    %c8_37 = arith.constant 8 : index
    %c0_38 = arith.constant 0 : index
    %57 = vector.load %arg11[%c8_37, %c0_38] : memref<32x128xbf16, #tpu.memory_space<vmem>>, vector<16x128xbf16>
    %c9_39 = arith.constant 9 : index
    %c0_40 = arith.constant 0 : index
    %58 = vector.load %arg11[%c9_39, %c0_40] : memref<32x128xbf16, #tpu.memory_space<vmem>>, vector<16x128xbf16>
    %59 = tpu.concatenate %56, %57, %58 in 1 : vector<16x128xbf16>, vector<16x128xbf16>, vector<16x128xbf16> -> vector<16x384xbf16>
    %c0_41 = arith.constant 0 : index
    %c0_42 = arith.constant 0 : index
    %c0_43 = arith.constant 0 : index
    %60 = vector.load %arg5[%c0_41, %c0_42, %c0_43] : memref<7x384x128xbf16, #tpu.memory_space<vmem>>, vector<1x384x128xbf16>
    %61 = vector.shape_cast %60 : vector<1x384x128xbf16> to vector<384x128xbf16>
    %cst_44 = arith.constant dense<0.000000e+00> : vector<16x128xf32>
    %62 = tpu.matmul %59, %61, %cst_44 {dimension_numbers = #tpu.dot_dimension_numbers<[1], [0], [0], [1], [0, 0, 1, 1], [], []>} : vector<16x384xbf16>, vector<384x128xbf16>, vector<16x128xf32> -> vector<16x128xf32>
    %c0_45 = arith.constant 0 : index
    %c0_46 = arith.constant 0 : index
    %c0_47 = arith.constant 0 : index
    %63 = vector.load %arg6[%c0_45, %c0_46, %c0_47] : memref<7x1x8xf32, #tpu.memory_space<vmem>>, vector<1x1x8xf32>
    %64 = vector.shape_cast %63 : vector<1x1x8xf32> to vector<1x8xf32>
    %c0_48 = arith.constant 0 : index
    %c0_49 = arith.constant 0 : index
    %c0_50 = arith.constant 0 : index
    %65 = vector.load %arg7[%c0_48, %c0_49, %c0_50] : memref<7x1x8xf32, #tpu.memory_space<vmem>>, vector<1x1x8xf32>
    %66 = vector.shape_cast %65 : vector<1x1x8xf32> to vector<1x8xf32>
    %67 = arith.mulf %62, %0 : vector<16x128xf32>
    %cst_51 = arith.constant dense<0.000000e+00> : vector<128xf32>
    %68 = vector.multi_reduction <add>, %67, %cst_51 [0] : vector<16x128xf32> to vector<128xf32>
    %69 = vector.shape_cast %68 : vector<128xf32> to vector<1x128xf32>
    %70 = arith.mulf %67, %62 : vector<16x128xf32>
    %cst_52 = arith.constant dense<0.000000e+00> : vector<128xf32>
    %71 = vector.multi_reduction <add>, %70, %cst_52 [0] : vector<16x128xf32> to vector<128xf32>
    %72 = vector.shape_cast %71 : vector<128xf32> to vector<1x128xf32>
    %73 = tpu.concatenate %69, %72 in 0 : vector<1x128xf32>, vector<1x128xf32> -> vector<2x128xf32>
    %c0_53 = arith.constant 0 : index
    %c0_54 = arith.constant 0 : index
    %74 = vector.load %arg8[%c0_53, %c0_54] : memref<128x8xf32, #tpu.memory_space<vmem>>, vector<128x8xf32>
    %cst_55 = arith.constant dense<0.000000e+00> : vector<2x8xf32>
    %75 = tpu.matmul %73, %74, %cst_55 {dimension_numbers = #tpu.dot_dimension_numbers<[1], [0], [0], [1], [0, 0, 1, 1], [], []>} : vector<2x128xf32>, vector<128x8xf32>, vector<2x8xf32> -> vector<2x8xf32>
    %76 = vector.extract_strided_slice %75 {offsets = [0, 0], sizes = [1, 8], strides = [1, 1]} : vector<2x8xf32> to vector<1x8xf32>
    %cst_56 = arith.constant 3.125000e-02 : f32
    %77 = vector.broadcast %cst_56 : f32 to vector<1x8xf32>
    %78 = arith.mulf %76, %77 : vector<1x8xf32>
    %79 = vector.extract_strided_slice %75 {offsets = [1, 0], sizes = [1, 8], strides = [1, 1]} : vector<2x8xf32> to vector<1x8xf32>
    %cst_57 = arith.constant 3.125000e-02 : f32
    %80 = vector.broadcast %cst_57 : f32 to vector<1x8xf32>
    %81 = arith.mulf %79, %80 : vector<1x8xf32>
    %82 = arith.mulf %78, %78 : vector<1x8xf32>
    %83 = arith.subf %81, %82 : vector<1x8xf32>
    %cst_58 = arith.constant 0.000000e+00 : f32
    %84 = vector.broadcast %cst_58 : f32 to vector<1x8xf32>
    %85 = arith.maximumf %83, %84 : vector<1x8xf32>
    %cst_59 = arith.constant 9.99999974E-6 : f32
    %86 = vector.broadcast %cst_59 : f32 to vector<1x8xf32>
    %87 = arith.addf %85, %86 : vector<1x8xf32>
    %88 = math.rsqrt %87 : vector<1x8xf32>
    %89 = arith.mulf %64, %88 : vector<1x8xf32>
    %90 = arith.mulf %78, %89 : vector<1x8xf32>
    %91 = arith.subf %66, %90 : vector<1x8xf32>
    %92 = tpu.concatenate %89, %91 in 0 : vector<1x8xf32>, vector<1x8xf32> -> vector<2x8xf32>
    %c0_60 = arith.constant 0 : index
    %c0_61 = arith.constant 0 : index
    %93 = vector.load %arg9[%c0_60, %c0_61] : memref<8x128xf32, #tpu.memory_space<vmem>>, vector<8x128xf32>
    %cst_62 = arith.constant dense<0.000000e+00> : vector<2x128xf32>
    %94 = tpu.matmul %92, %93, %cst_62 {dimension_numbers = #tpu.dot_dimension_numbers<[1], [0], [0], [1], [0, 0, 1, 1], [], []>} : vector<2x8xf32>, vector<8x128xf32>, vector<2x128xf32> -> vector<2x128xf32>
    %95 = vector.extract_strided_slice %94 {offsets = [0, 0], sizes = [1, 128], strides = [1, 1]} : vector<2x128xf32> to vector<1x128xf32>
    %96 = vector.broadcast %95 : vector<1x128xf32> to vector<16x128xf32>
    %97 = arith.mulf %62, %96 : vector<16x128xf32>
    %98 = vector.extract_strided_slice %94 {offsets = [1, 0], sizes = [1, 128], strides = [1, 1]} : vector<2x128xf32> to vector<1x128xf32>
    %99 = vector.broadcast %98 : vector<1x128xf32> to vector<16x128xf32>
    %100 = arith.addf %97, %99 : vector<16x128xf32>
    %101 = arith.addf %100, %1 : vector<16x128xf32>
    %cst_63 = arith.constant 0.000000e+00 : f32
    %102 = vector.broadcast %cst_63 : f32 to vector<16x128xf32>
    %103 = arith.maximumf %101, %102 : vector<16x128xf32>
    %104 = arith.mulf %103, %0 : vector<16x128xf32>
    %105 = arith.truncf %104 : vector<16x128xf32> to vector<16x128xbf16>
    %c8_64 = arith.constant 8 : index
    %c0_65 = arith.constant 0 : index
    %106 = vector.load %arg11[%c8_64, %c0_65] : memref<32x128xbf16, #tpu.memory_space<vmem>>, vector<16x128xbf16>
    tpu.vector_store %arg11[%c8_64, %c0_65], %105 {strides = array<i32>} : memref<32x128xbf16, #tpu.memory_space<vmem>>, vector<16x128xbf16>,
    %c7_66 = arith.constant 7 : index
    %c0_67 = arith.constant 0 : index
    %107 = vector.load %arg11[%c7_66, %c0_67] : memref<32x128xbf16, #tpu.memory_space<vmem>>, vector<16x128xbf16>
    %c8_68 = arith.constant 8 : index
    %c0_69 = arith.constant 0 : index
    %108 = vector.load %arg11[%c8_68, %c0_69] : memref<32x128xbf16, #tpu.memory_space<vmem>>, vector<16x128xbf16>
    %c9_70 = arith.constant 9 : index
    %c0_71 = arith.constant 0 : index
    %109 = vector.load %arg11[%c9_70, %c0_71] : memref<32x128xbf16, #tpu.memory_space<vmem>>, vector<16x128xbf16>
    %110 = tpu.concatenate %107, %108, %109 in 1 : vector<16x128xbf16>, vector<16x128xbf16>, vector<16x128xbf16> -> vector<16x384xbf16>
    %c1 = arith.constant 1 : index
    %c0_72 = arith.constant 0 : index
    %c0_73 = arith.constant 0 : index
    %111 = vector.load %arg2[%c1, %c0_72, %c0_73] : memref<7x384x128xbf16, #tpu.memory_space<vmem>>, vector<1x384x128xbf16>
    %112 = vector.shape_cast %111 : vector<1x384x128xbf16> to vector<384x128xbf16>
    %cst_74 = arith.constant dense<0.000000e+00> : vector<16x128xf32>
    %113 = tpu.matmul %110, %112, %cst_74 {dimension_numbers = #tpu.dot_dimension_numbers<[1], [0], [0], [1], [0, 0, 1, 1], [], []>} : vector<16x384xbf16>, vector<384x128xbf16>, vector<16x128xf32> -> vector<16x128xf32>
    %c1_75 = arith.constant 1 : index
    %c0_76 = arith.constant 0 : index
    %c0_77 = arith.constant 0 : index
    %114 = vector.load %arg3[%c1_75, %c0_76, %c0_77] : memref<7x1x8xf32, #tpu.memory_space<vmem>>, vector<1x1x8xf32>
    %115 = vector.shape_cast %114 : vector<1x1x8xf32> to vector<1x8xf32>
    %c1_78 = arith.constant 1 : index
    %c0_79 = arith.constant 0 : index
    %c0_80 = arith.constant 0 : index
    %116 = vector.load %arg4[%c1_78, %c0_79, %c0_80] : memref<7x1x8xf32, #tpu.memory_space<vmem>>, vector<1x1x8xf32>
    %117 = vector.shape_cast %116 : vector<1x1x8xf32> to vector<1x8xf32>
    %118 = arith.mulf %113, %0 : vector<16x128xf32>
    %cst_81 = arith.constant dense<0.000000e+00> : vector<128xf32>
    %119 = vector.multi_reduction <add>, %118, %cst_81 [0] : vector<16x128xf32> to vector<128xf32>
    %120 = vector.shape_cast %119 : vector<128xf32> to vector<1x128xf32>
    %121 = arith.mulf %118, %113 : vector<16x128xf32>
    %cst_82 = arith.constant dense<0.000000e+00> : vector<128xf32>
    %122 = vector.multi_reduction <add>, %121, %cst_82 [0] : vector<16x128xf32> to vector<128xf32>
    %123 = vector.shape_cast %122 : vector<128xf32> to vector<1x128xf32>
    %124 = tpu.concatenate %120, %123 in 0 : vector<1x128xf32>, vector<1x128xf32> -> vector<2x128xf32>
    %c0_83 = arith.constant 0 : index
    %c0_84 = arith.constant 0 : index
    %125 = vector.load %arg8[%c0_83, %c0_84] : memref<128x8xf32, #tpu.memory_space<vmem>>, vector<128x8xf32>
    %cst_85 = arith.constant dense<0.000000e+00> : vector<2x8xf32>
    %126 = tpu.matmul %124, %125, %cst_85 {dimension_numbers = #tpu.dot_dimension_numbers<[1], [0], [0], [1], [0, 0, 1, 1], [], []>} : vector<2x128xf32>, vector<128x8xf32>, vector<2x8xf32> -> vector<2x8xf32>
    %127 = vector.extract_strided_slice %126 {offsets = [0, 0], sizes = [1, 8], strides = [1, 1]} : vector<2x8xf32> to vector<1x8xf32>
    %cst_86 = arith.constant 3.125000e-02 : f32
    %128 = vector.broadcast %cst_86 : f32 to vector<1x8xf32>
    %129 = arith.mulf %127, %128 : vector<1x8xf32>
    %130 = vector.extract_strided_slice %126 {offsets = [1, 0], sizes = [1, 8], strides = [1, 1]} : vector<2x8xf32> to vector<1x8xf32>
    %cst_87 = arith.constant 3.125000e-02 : f32
    %131 = vector.broadcast %cst_87 : f32 to vector<1x8xf32>
    %132 = arith.mulf %130, %131 : vector<1x8xf32>
    %133 = arith.mulf %129, %129 : vector<1x8xf32>
    %134 = arith.subf %132, %133 : vector<1x8xf32>
    %cst_88 = arith.constant 0.000000e+00 : f32
    %135 = vector.broadcast %cst_88 : f32 to vector<1x8xf32>
    %136 = arith.maximumf %134, %135 : vector<1x8xf32>
    %cst_89 = arith.constant 9.99999974E-6 : f32
    %137 = vector.broadcast %cst_89 : f32 to vector<1x8xf32>
    %138 = arith.addf %136, %137 : vector<1x8xf32>
    %139 = math.rsqrt %138 : vector<1x8xf32>
    %140 = arith.mulf %115, %139 : vector<1x8xf32>
    %141 = arith.mulf %129, %140 : vector<1x8xf32>
    %142 = arith.subf %117, %141 : vector<1x8xf32>
    %143 = tpu.concatenate %140, %142 in 0 : vector<1x8xf32>, vector<1x8xf32> -> vector<2x8xf32>
    %c0_90 = arith.constant 0 : index
    %c0_91 = arith.constant 0 : index
    %144 = vector.load %arg9[%c0_90, %c0_91] : memref<8x128xf32, #tpu.memory_space<vmem>>, vector<8x128xf32>
    %cst_92 = arith.constant dense<0.000000e+00> : vector<2x128xf32>
    %145 = tpu.matmul %143, %144, %cst_92 {dimension_numbers = #tpu.dot_dimension_numbers<[1], [0], [0], [1], [0, 0, 1, 1], [], []>} : vector<2x8xf32>, vector<8x128xf32>, vector<2x128xf32> -> vector<2x128xf32>
    %146 = vector.extract_strided_slice %145 {offsets = [0, 0], sizes = [1, 128], strides = [1, 1]} : vector<2x128xf32> to vector<1x128xf32>
    %147 = vector.broadcast %146 : vector<1x128xf32> to vector<16x128xf32>
    %148 = arith.mulf %113, %147 : vector<16x128xf32>
    %149 = vector.extract_strided_slice %145 {offsets = [1, 0], sizes = [1, 128], strides = [1, 1]} : vector<2x128xf32> to vector<1x128xf32>
    %150 = vector.broadcast %149 : vector<1x128xf32> to vector<16x128xf32>
    %151 = arith.addf %148, %150 : vector<16x128xf32>
    %cst_93 = arith.constant 0.000000e+00 : f32
    %152 = vector.broadcast %cst_93 : f32 to vector<16x128xf32>
    %153 = arith.maximumf %151, %152 : vector<16x128xf32>
    %154 = arith.mulf %153, %0 : vector<16x128xf32>
    %155 = arith.truncf %154 : vector<16x128xf32> to vector<16x128xbf16>
    %c8_94 = arith.constant 8 : index
    %c0_95 = arith.constant 0 : index
    %156 = vector.load %arg11[%c8_94, %c0_95] : memref<32x128xbf16, #tpu.memory_space<vmem>>, vector<16x128xbf16>
    tpu.vector_store %arg11[%c8_94, %c0_95], %155 {strides = array<i32>} : memref<32x128xbf16, #tpu.memory_space<vmem>>, vector<16x128xbf16>,
    %c7_96 = arith.constant 7 : index
    %c0_97 = arith.constant 0 : index
    %157 = vector.load %arg11[%c7_96, %c0_97] : memref<32x128xbf16, #tpu.memory_space<vmem>>, vector<16x128xbf16>
    %c8_98 = arith.constant 8 : index
    %c0_99 = arith.constant 0 : index
    %158 = vector.load %arg11[%c8_98, %c0_99] : memref<32x128xbf16, #tpu.memory_space<vmem>>, vector<16x128xbf16>
    %c9_100 = arith.constant 9 : index
    %c0_101 = arith.constant 0 : index
    %159 = vector.load %arg11[%c9_100, %c0_101] : memref<32x128xbf16, #tpu.memory_space<vmem>>, vector<16x128xbf16>
    %160 = tpu.concatenate %157, %158, %159 in 1 : vector<16x128xbf16>, vector<16x128xbf16>, vector<16x128xbf16> -> vector<16x384xbf16>
    %c1_102 = arith.constant 1 : index
    %c0_103 = arith.constant 0 : index
    %c0_104 = arith.constant 0 : index
    %161 = vector.load %arg5[%c1_102, %c0_103, %c0_104] : memref<7x384x128xbf16, #tpu.memory_space<vmem>>, vector<1x384x128xbf16>
    %162 = vector.shape_cast %161 : vector<1x384x128xbf16> to vector<384x128xbf16>
    %cst_105 = arith.constant dense<0.000000e+00> : vector<16x128xf32>
    %163 = tpu.matmul %160, %162, %cst_105 {dimension_numbers = #tpu.dot_dimension_numbers<[1], [0], [0], [1], [0, 0, 1, 1], [], []>} : vector<16x384xbf16>, vector<384x128xbf16>, vector<16x128xf32> -> vector<16x128xf32>
    %c1_106 = arith.constant 1 : index
    %c0_107 = arith.constant 0 : index
    %c0_108 = arith.constant 0 : index
    %164 = vector.load %arg6[%c1_106, %c0_107, %c0_108] : memref<7x1x8xf32, #tpu.memory_space<vmem>>, vector<1x1x8xf32>
    %165 = vector.shape_cast %164 : vector<1x1x8xf32> to vector<1x8xf32>
    %c1_109 = arith.constant 1 : index
    %c0_110 = arith.constant 0 : index
    %c0_111 = arith.constant 0 : index
    %166 = vector.load %arg7[%c1_109, %c0_110, %c0_111] : memref<7x1x8xf32, #tpu.memory_space<vmem>>, vector<1x1x8xf32>
    %167 = vector.shape_cast %166 : vector<1x1x8xf32> to vector<1x8xf32>
    %168 = arith.mulf %163, %0 : vector<16x128xf32>
    %cst_112 = arith.constant dense<0.000000e+00> : vector<128xf32>
    %169 = vector.multi_reduction <add>, %168, %cst_112 [0] : vector<16x128xf32> to vector<128xf32>
    %170 = vector.shape_cast %169 : vector<128xf32> to vector<1x128xf32>
    %171 = arith.mulf %168, %163 : vector<16x128xf32>
    %cst_113 = arith.constant dense<0.000000e+00> : vector<128xf32>
    %172 = vector.multi_reduction <add>, %171, %cst_113 [0] : vector<16x128xf32> to vector<128xf32>
    %173 = vector.shape_cast %172 : vector<128xf32> to vector<1x128xf32>
    %174 = tpu.concatenate %170, %173 in 0 : vector<1x128xf32>, vector<1x128xf32> -> vector<2x128xf32>
    %c0_114 = arith.constant 0 : index
    %c0_115 = arith.constant 0 : index
    %175 = vector.load %arg8[%c0_114, %c0_115] : memref<128x8xf32, #tpu.memory_space<vmem>>, vector<128x8xf32>
    %cst_116 = arith.constant dense<0.000000e+00> : vector<2x8xf32>
    %176 = tpu.matmul %174, %175, %cst_116 {dimension_numbers = #tpu.dot_dimension_numbers<[1], [0], [0], [1], [0, 0, 1, 1], [], []>} : vector<2x128xf32>, vector<128x8xf32>, vector<2x8xf32> -> vector<2x8xf32>
    %177 = vector.extract_strided_slice %176 {offsets = [0, 0], sizes = [1, 8], strides = [1, 1]} : vector<2x8xf32> to vector<1x8xf32>
    %cst_117 = arith.constant 3.125000e-02 : f32
    %178 = vector.broadcast %cst_117 : f32 to vector<1x8xf32>
    %179 = arith.mulf %177, %178 : vector<1x8xf32>
    %180 = vector.extract_strided_slice %176 {offsets = [1, 0], sizes = [1, 8], strides = [1, 1]} : vector<2x8xf32> to vector<1x8xf32>
    %cst_118 = arith.constant 3.125000e-02 : f32
    %181 = vector.broadcast %cst_118 : f32 to vector<1x8xf32>
    %182 = arith.mulf %180, %181 : vector<1x8xf32>
    %183 = arith.mulf %179, %179 : vector<1x8xf32>
    %184 = arith.subf %182, %183 : vector<1x8xf32>
    %cst_119 = arith.constant 0.000000e+00 : f32
    %185 = vector.broadcast %cst_119 : f32 to vector<1x8xf32>
    %186 = arith.maximumf %184, %185 : vector<1x8xf32>
    %cst_120 = arith.constant 9.99999974E-6 : f32
    %187 = vector.broadcast %cst_120 : f32 to vector<1x8xf32>
    %188 = arith.addf %186, %187 : vector<1x8xf32>
    %189 = math.rsqrt %188 : vector<1x8xf32>
    %190 = arith.mulf %165, %189 : vector<1x8xf32>
    %191 = arith.mulf %179, %190 : vector<1x8xf32>
    %192 = arith.subf %167, %191 : vector<1x8xf32>
    %193 = tpu.concatenate %190, %192 in 0 : vector<1x8xf32>, vector<1x8xf32> -> vector<2x8xf32>
    %c0_121 = arith.constant 0 : index
    %c0_122 = arith.constant 0 : index
    %194 = vector.load %arg9[%c0_121, %c0_122] : memref<8x128xf32, #tpu.memory_space<vmem>>, vector<8x128xf32>
    %cst_123 = arith.constant dense<0.000000e+00> : vector<2x128xf32>
    %195 = tpu.matmul %193, %194, %cst_123 {dimension_numbers = #tpu.dot_dimension_numbers<[1], [0], [0], [1], [0, 0, 1, 1], [], []>} : vector<2x8xf32>, vector<8x128xf32>, vector<2x128xf32> -> vector<2x128xf32>
    %196 = vector.extract_strided_slice %195 {offsets = [0, 0], sizes = [1, 128], strides = [1, 1]} : vector<2x128xf32> to vector<1x128xf32>
    %197 = vector.broadcast %196 : vector<1x128xf32> to vector<16x128xf32>
    %198 = arith.mulf %163, %197 : vector<16x128xf32>
    %199 = vector.extract_strided_slice %195 {offsets = [1, 0], sizes = [1, 128], strides = [1, 1]} : vector<2x128xf32> to vector<1x128xf32>
    %200 = vector.broadcast %199 : vector<1x128xf32> to vector<16x128xf32>
    %201 = arith.addf %198, %200 : vector<16x128xf32>
    %202 = arith.addf %201, %104 : vector<16x128xf32>
    %cst_124 = arith.constant 0.000000e+00 : f32
    %203 = vector.broadcast %cst_124 : f32 to vector<16x128xf32>
    %204 = arith.maximumf %202, %203 : vector<16x128xf32>
    %205 = arith.mulf %204, %0 : vector<16x128xf32>
    %206 = arith.truncf %205 : vector<16x128xf32> to vector<16x128xbf16>
    %c8_125 = arith.constant 8 : index
    %c0_126 = arith.constant 0 : index
    %207 = vector.load %arg11[%c8_125, %c0_126] : memref<32x128xbf16, #tpu.memory_space<vmem>>, vector<16x128xbf16>
    tpu.vector_store %arg11[%c8_125, %c0_126], %206 {strides = array<i32>} : memref<32x128xbf16, #tpu.memory_space<vmem>>, vector<16x128xbf16>,
    %c7_127 = arith.constant 7 : index
    %c0_128 = arith.constant 0 : index
    %208 = vector.load %arg11[%c7_127, %c0_128] : memref<32x128xbf16, #tpu.memory_space<vmem>>, vector<16x128xbf16>
    %c8_129 = arith.constant 8 : index
    %c0_130 = arith.constant 0 : index
    %209 = vector.load %arg11[%c8_129, %c0_130] : memref<32x128xbf16, #tpu.memory_space<vmem>>, vector<16x128xbf16>
    %c9_131 = arith.constant 9 : index
    %c0_132 = arith.constant 0 : index
    %210 = vector.load %arg11[%c9_131, %c0_132] : memref<32x128xbf16, #tpu.memory_space<vmem>>, vector<16x128xbf16>
    %211 = tpu.concatenate %208, %209, %210 in 1 : vector<16x128xbf16>, vector<16x128xbf16>, vector<16x128xbf16> -> vector<16x384xbf16>
    %c2 = arith.constant 2 : index
    %c0_133 = arith.constant 0 : index
    %c0_134 = arith.constant 0 : index
    %212 = vector.load %arg2[%c2, %c0_133, %c0_134] : memref<7x384x128xbf16, #tpu.memory_space<vmem>>, vector<1x384x128xbf16>
    %213 = vector.shape_cast %212 : vector<1x384x128xbf16> to vector<384x128xbf16>
    %cst_135 = arith.constant dense<0.000000e+00> : vector<16x128xf32>
    %214 = tpu.matmul %211, %213, %cst_135 {dimension_numbers = #tpu.dot_dimension_numbers<[1], [0], [0], [1], [0, 0, 1, 1], [], []>} : vector<16x384xbf16>, vector<384x128xbf16>, vector<16x128xf32> -> vector<16x128xf32>
    %c2_136 = arith.constant 2 : index
    %c0_137 = arith.constant 0 : index
    %c0_138 = arith.constant 0 : index
    %215 = vector.load %arg3[%c2_136, %c0_137, %c0_138] : memref<7x1x8xf32, #tpu.memory_space<vmem>>, vector<1x1x8xf32>
    %216 = vector.shape_cast %215 : vector<1x1x8xf32> to vector<1x8xf32>
    %c2_139 = arith.constant 2 : index
    %c0_140 = arith.constant 0 : index
    %c0_141 = arith.constant 0 : index
    %217 = vector.load %arg4[%c2_139, %c0_140, %c0_141] : memref<7x1x8xf32, #tpu.memory_space<vmem>>, vector<1x1x8xf32>
    %218 = vector.shape_cast %217 : vector<1x1x8xf32> to vector<1x8xf32>
    %219 = arith.mulf %214, %0 : vector<16x128xf32>
    %cst_142 = arith.constant dense<0.000000e+00> : vector<128xf32>
    %220 = vector.multi_reduction <add>, %219, %cst_142 [0] : vector<16x128xf32> to vector<128xf32>
    %221 = vector.shape_cast %220 : vector<128xf32> to vector<1x128xf32>
    %222 = arith.mulf %219, %214 : vector<16x128xf32>
    %cst_143 = arith.constant dense<0.000000e+00> : vector<128xf32>
    %223 = vector.multi_reduction <add>, %222, %cst_143 [0] : vector<16x128xf32> to vector<128xf32>
    %224 = vector.shape_cast %223 : vector<128xf32> to vector<1x128xf32>
    %225 = tpu.concatenate %221, %224 in 0 : vector<1x128xf32>, vector<1x128xf32> -> vector<2x128xf32>
    %c0_144 = arith.constant 0 : index
    %c0_145 = arith.constant 0 : index
    %226 = vector.load %arg8[%c0_144, %c0_145] : memref<128x8xf32, #tpu.memory_space<vmem>>, vector<128x8xf32>
    %cst_146 = arith.constant dense<0.000000e+00> : vector<2x8xf32>
    %227 = tpu.matmul %225, %226, %cst_146 {dimension_numbers = #tpu.dot_dimension_numbers<[1], [0], [0], [1], [0, 0, 1, 1], [], []>} : vector<2x128xf32>, vector<128x8xf32>, vector<2x8xf32> -> vector<2x8xf32>
    %228 = vector.extract_strided_slice %227 {offsets = [0, 0], sizes = [1, 8], strides = [1, 1]} : vector<2x8xf32> to vector<1x8xf32>
    %cst_147 = arith.constant 3.125000e-02 : f32
    %229 = vector.broadcast %cst_147 : f32 to vector<1x8xf32>
    %230 = arith.mulf %228, %229 : vector<1x8xf32>
    %231 = vector.extract_strided_slice %227 {offsets = [1, 0], sizes = [1, 8], strides = [1, 1]} : vector<2x8xf32> to vector<1x8xf32>
    %cst_148 = arith.constant 3.125000e-02 : f32
    %232 = vector.broadcast %cst_148 : f32 to vector<1x8xf32>
    %233 = arith.mulf %231, %232 : vector<1x8xf32>
    %234 = arith.mulf %230, %230 : vector<1x8xf32>
    %235 = arith.subf %233, %234 : vector<1x8xf32>
    %cst_149 = arith.constant 0.000000e+00 : f32
    %236 = vector.broadcast %cst_149 : f32 to vector<1x8xf32>
    %237 = arith.maximumf %235, %236 : vector<1x8xf32>
    %cst_150 = arith.constant 9.99999974E-6 : f32
    %238 = vector.broadcast %cst_150 : f32 to vector<1x8xf32>
    %239 = arith.addf %237, %238 : vector<1x8xf32>
    %240 = math.rsqrt %239 : vector<1x8xf32>
    %241 = arith.mulf %216, %240 : vector<1x8xf32>
    %242 = arith.mulf %230, %241 : vector<1x8xf32>
    %243 = arith.subf %218, %242 : vector<1x8xf32>
    %244 = tpu.concatenate %241, %243 in 0 : vector<1x8xf32>, vector<1x8xf32> -> vector<2x8xf32>
    %c0_151 = arith.constant 0 : index
    %c0_152 = arith.constant 0 : index
    %245 = vector.load %arg9[%c0_151, %c0_152] : memref<8x128xf32, #tpu.memory_space<vmem>>, vector<8x128xf32>
    %cst_153 = arith.constant dense<0.000000e+00> : vector<2x128xf32>
    %246 = tpu.matmul %244, %245, %cst_153 {dimension_numbers = #tpu.dot_dimension_numbers<[1], [0], [0], [1], [0, 0, 1, 1], [], []>} : vector<2x8xf32>, vector<8x128xf32>, vector<2x128xf32> -> vector<2x128xf32>
    %247 = vector.extract_strided_slice %246 {offsets = [0, 0], sizes = [1, 128], strides = [1, 1]} : vector<2x128xf32> to vector<1x128xf32>
    %248 = vector.broadcast %247 : vector<1x128xf32> to vector<16x128xf32>
    %249 = arith.mulf %214, %248 : vector<16x128xf32>
    %250 = vector.extract_strided_slice %246 {offsets = [1, 0], sizes = [1, 128], strides = [1, 1]} : vector<2x128xf32> to vector<1x128xf32>
    %251 = vector.broadcast %250 : vector<1x128xf32> to vector<16x128xf32>
    %252 = arith.addf %249, %251 : vector<16x128xf32>
    %cst_154 = arith.constant 0.000000e+00 : f32
    %253 = vector.broadcast %cst_154 : f32 to vector<16x128xf32>
    %254 = arith.maximumf %252, %253 : vector<16x128xf32>
    %255 = arith.mulf %254, %0 : vector<16x128xf32>
    %256 = arith.truncf %255 : vector<16x128xf32> to vector<16x128xbf16>
    %c8_155 = arith.constant 8 : index
    %c0_156 = arith.constant 0 : index
    %257 = vector.load %arg11[%c8_155, %c0_156] : memref<32x128xbf16, #tpu.memory_space<vmem>>, vector<16x128xbf16>
    tpu.vector_store %arg11[%c8_155, %c0_156], %256 {strides = array<i32>} : memref<32x128xbf16, #tpu.memory_space<vmem>>, vector<16x128xbf16>,
    %c7_157 = arith.constant 7 : index
    %c0_158 = arith.constant 0 : index
    %258 = vector.load %arg11[%c7_157, %c0_158] : memref<32x128xbf16, #tpu.memory_space<vmem>>, vector<16x128xbf16>
    %c8_159 = arith.constant 8 : index
    %c0_160 = arith.constant 0 : index
    %259 = vector.load %arg11[%c8_159, %c0_160] : memref<32x128xbf16, #tpu.memory_space<vmem>>, vector<16x128xbf16>
    %c9_161 = arith.constant 9 : index
    %c0_162 = arith.constant 0 : index
    %260 = vector.load %arg11[%c9_161, %c0_162] : memref<32x128xbf16, #tpu.memory_space<vmem>>, vector<16x128xbf16>
    %261 = tpu.concatenate %258, %259, %260 in 1 : vector<16x128xbf16>, vector<16x128xbf16>, vector<16x128xbf16> -> vector<16x384xbf16>
    %c2_163 = arith.constant 2 : index
    %c0_164 = arith.constant 0 : index
    %c0_165 = arith.constant 0 : index
    %262 = vector.load %arg5[%c2_163, %c0_164, %c0_165] : memref<7x384x128xbf16, #tpu.memory_space<vmem>>, vector<1x384x128xbf16>
    %263 = vector.shape_cast %262 : vector<1x384x128xbf16> to vector<384x128xbf16>
    %cst_166 = arith.constant dense<0.000000e+00> : vector<16x128xf32>
    %264 = tpu.matmul %261, %263, %cst_166 {dimension_numbers = #tpu.dot_dimension_numbers<[1], [0], [0], [1], [0, 0, 1, 1], [], []>} : vector<16x384xbf16>, vector<384x128xbf16>, vector<16x128xf32> -> vector<16x128xf32>
    %c2_167 = arith.constant 2 : index
    %c0_168 = arith.constant 0 : index
    %c0_169 = arith.constant 0 : index
    %265 = vector.load %arg6[%c2_167, %c0_168, %c0_169] : memref<7x1x8xf32, #tpu.memory_space<vmem>>, vector<1x1x8xf32>
    %266 = vector.shape_cast %265 : vector<1x1x8xf32> to vector<1x8xf32>
    %c2_170 = arith.constant 2 : index
    %c0_171 = arith.constant 0 : index
    %c0_172 = arith.constant 0 : index
    %267 = vector.load %arg7[%c2_170, %c0_171, %c0_172] : memref<7x1x8xf32, #tpu.memory_space<vmem>>, vector<1x1x8xf32>
    %268 = vector.shape_cast %267 : vector<1x1x8xf32> to vector<1x8xf32>
    %269 = arith.mulf %264, %0 : vector<16x128xf32>
    %cst_173 = arith.constant dense<0.000000e+00> : vector<128xf32>
    %270 = vector.multi_reduction <add>, %269, %cst_173 [0] : vector<16x128xf32> to vector<128xf32>
    %271 = vector.shape_cast %270 : vector<128xf32> to vector<1x128xf32>
    %272 = arith.mulf %269, %264 : vector<16x128xf32>
    %cst_174 = arith.constant dense<0.000000e+00> : vector<128xf32>
    %273 = vector.multi_reduction <add>, %272, %cst_174 [0] : vector<16x128xf32> to vector<128xf32>
    %274 = vector.shape_cast %273 : vector<128xf32> to vector<1x128xf32>
    %275 = tpu.concatenate %271, %274 in 0 : vector<1x128xf32>, vector<1x128xf32> -> vector<2x128xf32>
    %c0_175 = arith.constant 0 : index
    %c0_176 = arith.constant 0 : index
    %276 = vector.load %arg8[%c0_175, %c0_176] : memref<128x8xf32, #tpu.memory_space<vmem>>, vector<128x8xf32>
    %cst_177 = arith.constant dense<0.000000e+00> : vector<2x8xf32>
    %277 = tpu.matmul %275, %276, %cst_177 {dimension_numbers = #tpu.dot_dimension_numbers<[1], [0], [0], [1], [0, 0, 1, 1], [], []>} : vector<2x128xf32>, vector<128x8xf32>, vector<2x8xf32> -> vector<2x8xf32>
    %278 = vector.extract_strided_slice %277 {offsets = [0, 0], sizes = [1, 8], strides = [1, 1]} : vector<2x8xf32> to vector<1x8xf32>
    %cst_178 = arith.constant 3.125000e-02 : f32
    %279 = vector.broadcast %cst_178 : f32 to vector<1x8xf32>
    %280 = arith.mulf %278, %279 : vector<1x8xf32>
    %281 = vector.extract_strided_slice %277 {offsets = [1, 0], sizes = [1, 8], strides = [1, 1]} : vector<2x8xf32> to vector<1x8xf32>
    %cst_179 = arith.constant 3.125000e-02 : f32
    %282 = vector.broadcast %cst_179 : f32 to vector<1x8xf32>
    %283 = arith.mulf %281, %282 : vector<1x8xf32>
    %284 = arith.mulf %280, %280 : vector<1x8xf32>
    %285 = arith.subf %283, %284 : vector<1x8xf32>
    %cst_180 = arith.constant 0.000000e+00 : f32
    %286 = vector.broadcast %cst_180 : f32 to vector<1x8xf32>
    %287 = arith.maximumf %285, %286 : vector<1x8xf32>
    %cst_181 = arith.constant 9.99999974E-6 : f32
    %288 = vector.broadcast %cst_181 : f32 to vector<1x8xf32>
    %289 = arith.addf %287, %288 : vector<1x8xf32>
    %290 = math.rsqrt %289 : vector<1x8xf32>
    %291 = arith.mulf %266, %290 : vector<1x8xf32>
    %292 = arith.mulf %280, %291 : vector<1x8xf32>
    %293 = arith.subf %268, %292 : vector<1x8xf32>
    %294 = tpu.concatenate %291, %293 in 0 : vector<1x8xf32>, vector<1x8xf32> -> vector<2x8xf32>
    %c0_182 = arith.constant 0 : index
    %c0_183 = arith.constant 0 : index
    %295 = vector.load %arg9[%c0_182, %c0_183] : memref<8x128xf32, #tpu.memory_space<vmem>>, vector<8x128xf32>
    %cst_184 = arith.constant dense<0.000000e+00> : vector<2x128xf32>
    %296 = tpu.matmul %294, %295, %cst_184 {dimension_numbers = #tpu.dot_dimension_numbers<[1], [0], [0], [1], [0, 0, 1, 1], [], []>} : vector<2x8xf32>, vector<8x128xf32>, vector<2x128xf32> -> vector<2x128xf32>
    %297 = vector.extract_strided_slice %296 {offsets = [0, 0], sizes = [1, 128], strides = [1, 1]} : vector<2x128xf32> to vector<1x128xf32>
    %298 = vector.broadcast %297 : vector<1x128xf32> to vector<16x128xf32>
    %299 = arith.mulf %264, %298 : vector<16x128xf32>
    %300 = vector.extract_strided_slice %296 {offsets = [1, 0], sizes = [1, 128], strides = [1, 1]} : vector<2x128xf32> to vector<1x128xf32>
    %301 = vector.broadcast %300 : vector<1x128xf32> to vector<16x128xf32>
    %302 = arith.addf %299, %301 : vector<16x128xf32>
    %303 = arith.addf %302, %205 : vector<16x128xf32>
    %cst_185 = arith.constant 0.000000e+00 : f32
    %304 = vector.broadcast %cst_185 : f32 to vector<16x128xf32>
    %305 = arith.maximumf %303, %304 : vector<16x128xf32>
    %306 = arith.mulf %305, %0 : vector<16x128xf32>
    %307 = arith.truncf %306 : vector<16x128xf32> to vector<16x128xbf16>
    %c8_186 = arith.constant 8 : index
    %c0_187 = arith.constant 0 : index
    %308 = vector.load %arg11[%c8_186, %c0_187] : memref<32x128xbf16, #tpu.memory_space<vmem>>, vector<16x128xbf16>
    tpu.vector_store %arg11[%c8_186, %c0_187], %307 {strides = array<i32>} : memref<32x128xbf16, #tpu.memory_space<vmem>>, vector<16x128xbf16>,
    %c7_188 = arith.constant 7 : index
    %c0_189 = arith.constant 0 : index
    %309 = vector.load %arg11[%c7_188, %c0_189] : memref<32x128xbf16, #tpu.memory_space<vmem>>, vector<16x128xbf16>
    %c8_190 = arith.constant 8 : index
    %c0_191 = arith.constant 0 : index
    %310 = vector.load %arg11[%c8_190, %c0_191] : memref<32x128xbf16, #tpu.memory_space<vmem>>, vector<16x128xbf16>
    %c9_192 = arith.constant 9 : index
    %c0_193 = arith.constant 0 : index
    %311 = vector.load %arg11[%c9_192, %c0_193] : memref<32x128xbf16, #tpu.memory_space<vmem>>, vector<16x128xbf16>
    %312 = tpu.concatenate %309, %310, %311 in 1 : vector<16x128xbf16>, vector<16x128xbf16>, vector<16x128xbf16> -> vector<16x384xbf16>
    %c3 = arith.constant 3 : index
    %c0_194 = arith.constant 0 : index
    %c0_195 = arith.constant 0 : index
    %313 = vector.load %arg2[%c3, %c0_194, %c0_195] : memref<7x384x128xbf16, #tpu.memory_space<vmem>>, vector<1x384x128xbf16>
    %314 = vector.shape_cast %313 : vector<1x384x128xbf16> to vector<384x128xbf16>
    %cst_196 = arith.constant dense<0.000000e+00> : vector<16x128xf32>
    %315 = tpu.matmul %312, %314, %cst_196 {dimension_numbers = #tpu.dot_dimension_numbers<[1], [0], [0], [1], [0, 0, 1, 1], [], []>} : vector<16x384xbf16>, vector<384x128xbf16>, vector<16x128xf32> -> vector<16x128xf32>
    %c3_197 = arith.constant 3 : index
    %c0_198 = arith.constant 0 : index
    %c0_199 = arith.constant 0 : index
    %316 = vector.load %arg3[%c3_197, %c0_198, %c0_199] : memref<7x1x8xf32, #tpu.memory_space<vmem>>, vector<1x1x8xf32>
    %317 = vector.shape_cast %316 : vector<1x1x8xf32> to vector<1x8xf32>
    %c3_200 = arith.constant 3 : index
    %c0_201 = arith.constant 0 : index
    %c0_202 = arith.constant 0 : index
    %318 = vector.load %arg4[%c3_200, %c0_201, %c0_202] : memref<7x1x8xf32, #tpu.memory_space<vmem>>, vector<1x1x8xf32>
    %319 = vector.shape_cast %318 : vector<1x1x8xf32> to vector<1x8xf32>
    %320 = arith.mulf %315, %0 : vector<16x128xf32>
    %cst_203 = arith.constant dense<0.000000e+00> : vector<128xf32>
    %321 = vector.multi_reduction <add>, %320, %cst_203 [0] : vector<16x128xf32> to vector<128xf32>
    %322 = vector.shape_cast %321 : vector<128xf32> to vector<1x128xf32>
    %323 = arith.mulf %320, %315 : vector<16x128xf32>
    %cst_204 = arith.constant dense<0.000000e+00> : vector<128xf32>
    %324 = vector.multi_reduction <add>, %323, %cst_204 [0] : vector<16x128xf32> to vector<128xf32>
    %325 = vector.shape_cast %324 : vector<128xf32> to vector<1x128xf32>
    %326 = tpu.concatenate %322, %325 in 0 : vector<1x128xf32>, vector<1x128xf32> -> vector<2x128xf32>
    %c0_205 = arith.constant 0 : index
    %c0_206 = arith.constant 0 : index
    %327 = vector.load %arg8[%c0_205, %c0_206] : memref<128x8xf32, #tpu.memory_space<vmem>>, vector<128x8xf32>
    %cst_207 = arith.constant dense<0.000000e+00> : vector<2x8xf32>
    %328 = tpu.matmul %326, %327, %cst_207 {dimension_numbers = #tpu.dot_dimension_numbers<[1], [0], [0], [1], [0, 0, 1, 1], [], []>} : vector<2x128xf32>, vector<128x8xf32>, vector<2x8xf32> -> vector<2x8xf32>
    %329 = vector.extract_strided_slice %328 {offsets = [0, 0], sizes = [1, 8], strides = [1, 1]} : vector<2x8xf32> to vector<1x8xf32>
    %cst_208 = arith.constant 3.125000e-02 : f32
    %330 = vector.broadcast %cst_208 : f32 to vector<1x8xf32>
    %331 = arith.mulf %329, %330 : vector<1x8xf32>
    %332 = vector.extract_strided_slice %328 {offsets = [1, 0], sizes = [1, 8], strides = [1, 1]} : vector<2x8xf32> to vector<1x8xf32>
    %cst_209 = arith.constant 3.125000e-02 : f32
    %333 = vector.broadcast %cst_209 : f32 to vector<1x8xf32>
    %334 = arith.mulf %332, %333 : vector<1x8xf32>
    %335 = arith.mulf %331, %331 : vector<1x8xf32>
    %336 = arith.subf %334, %335 : vector<1x8xf32>
    %cst_210 = arith.constant 0.000000e+00 : f32
    %337 = vector.broadcast %cst_210 : f32 to vector<1x8xf32>
    %338 = arith.maximumf %336, %337 : vector<1x8xf32>
    %cst_211 = arith.constant 9.99999974E-6 : f32
    %339 = vector.broadcast %cst_211 : f32 to vector<1x8xf32>
    %340 = arith.addf %338, %339 : vector<1x8xf32>
    %341 = math.rsqrt %340 : vector<1x8xf32>
    %342 = arith.mulf %317, %341 : vector<1x8xf32>
    %343 = arith.mulf %331, %342 : vector<1x8xf32>
    %344 = arith.subf %319, %343 : vector<1x8xf32>
    %345 = tpu.concatenate %342, %344 in 0 : vector<1x8xf32>, vector<1x8xf32> -> vector<2x8xf32>
    %c0_212 = arith.constant 0 : index
    %c0_213 = arith.constant 0 : index
    %346 = vector.load %arg9[%c0_212, %c0_213] : memref<8x128xf32, #tpu.memory_space<vmem>>, vector<8x128xf32>
    %cst_214 = arith.constant dense<0.000000e+00> : vector<2x128xf32>
    %347 = tpu.matmul %345, %346, %cst_214 {dimension_numbers = #tpu.dot_dimension_numbers<[1], [0], [0], [1], [0, 0, 1, 1], [], []>} : vector<2x8xf32>, vector<8x128xf32>, vector<2x128xf32> -> vector<2x128xf32>
    %348 = vector.extract_strided_slice %347 {offsets = [0, 0], sizes = [1, 128], strides = [1, 1]} : vector<2x128xf32> to vector<1x128xf32>
    %349 = vector.broadcast %348 : vector<1x128xf32> to vector<16x128xf32>
    %350 = arith.mulf %315, %349 : vector<16x128xf32>
    %351 = vector.extract_strided_slice %347 {offsets = [1, 0], sizes = [1, 128], strides = [1, 1]} : vector<2x128xf32> to vector<1x128xf32>
    %352 = vector.broadcast %351 : vector<1x128xf32> to vector<16x128xf32>
    %353 = arith.addf %350, %352 : vector<16x128xf32>
    %cst_215 = arith.constant 0.000000e+00 : f32
    %354 = vector.broadcast %cst_215 : f32 to vector<16x128xf32>
    %355 = arith.maximumf %353, %354 : vector<16x128xf32>
    %356 = arith.mulf %355, %0 : vector<16x128xf32>
    %357 = arith.truncf %356 : vector<16x128xf32> to vector<16x128xbf16>
    %c8_216 = arith.constant 8 : index
    %c0_217 = arith.constant 0 : index
    %358 = vector.load %arg11[%c8_216, %c0_217] : memref<32x128xbf16, #tpu.memory_space<vmem>>, vector<16x128xbf16>
    tpu.vector_store %arg11[%c8_216, %c0_217], %357 {strides = array<i32>} : memref<32x128xbf16, #tpu.memory_space<vmem>>, vector<16x128xbf16>,
    %c7_218 = arith.constant 7 : index
    %c0_219 = arith.constant 0 : index
    %359 = vector.load %arg11[%c7_218, %c0_219] : memref<32x128xbf16, #tpu.memory_space<vmem>>, vector<16x128xbf16>
    %c8_220 = arith.constant 8 : index
    %c0_221 = arith.constant 0 : index
    %360 = vector.load %arg11[%c8_220, %c0_221] : memref<32x128xbf16, #tpu.memory_space<vmem>>, vector<16x128xbf16>
    %c9_222 = arith.constant 9 : index
    %c0_223 = arith.constant 0 : index
    %361 = vector.load %arg11[%c9_222, %c0_223] : memref<32x128xbf16, #tpu.memory_space<vmem>>, vector<16x128xbf16>
    %362 = tpu.concatenate %359, %360, %361 in 1 : vector<16x128xbf16>, vector<16x128xbf16>, vector<16x128xbf16> -> vector<16x384xbf16>
    %c3_224 = arith.constant 3 : index
    %c0_225 = arith.constant 0 : index
    %c0_226 = arith.constant 0 : index
    %363 = vector.load %arg5[%c3_224, %c0_225, %c0_226] : memref<7x384x128xbf16, #tpu.memory_space<vmem>>, vector<1x384x128xbf16>
    %364 = vector.shape_cast %363 : vector<1x384x128xbf16> to vector<384x128xbf16>
    %cst_227 = arith.constant dense<0.000000e+00> : vector<16x128xf32>
    %365 = tpu.matmul %362, %364, %cst_227 {dimension_numbers = #tpu.dot_dimension_numbers<[1], [0], [0], [1], [0, 0, 1, 1], [], []>} : vector<16x384xbf16>, vector<384x128xbf16>, vector<16x128xf32> -> vector<16x128xf32>
    %c3_228 = arith.constant 3 : index
    %c0_229 = arith.constant 0 : index
    %c0_230 = arith.constant 0 : index
    %366 = vector.load %arg6[%c3_228, %c0_229, %c0_230] : memref<7x1x8xf32, #tpu.memory_space<vmem>>, vector<1x1x8xf32>
    %367 = vector.shape_cast %366 : vector<1x1x8xf32> to vector<1x8xf32>
    %c3_231 = arith.constant 3 : index
    %c0_232 = arith.constant 0 : index
    %c0_233 = arith.constant 0 : index
    %368 = vector.load %arg7[%c3_231, %c0_232, %c0_233] : memref<7x1x8xf32, #tpu.memory_space<vmem>>, vector<1x1x8xf32>
    %369 = vector.shape_cast %368 : vector<1x1x8xf32> to vector<1x8xf32>
    %370 = arith.mulf %365, %0 : vector<16x128xf32>
    %cst_234 = arith.constant dense<0.000000e+00> : vector<128xf32>
    %371 = vector.multi_reduction <add>, %370, %cst_234 [0] : vector<16x128xf32> to vector<128xf32>
    %372 = vector.shape_cast %371 : vector<128xf32> to vector<1x128xf32>
    %373 = arith.mulf %370, %365 : vector<16x128xf32>
    %cst_235 = arith.constant dense<0.000000e+00> : vector<128xf32>
    %374 = vector.multi_reduction <add>, %373, %cst_235 [0] : vector<16x128xf32> to vector<128xf32>
    %375 = vector.shape_cast %374 : vector<128xf32> to vector<1x128xf32>
    %376 = tpu.concatenate %372, %375 in 0 : vector<1x128xf32>, vector<1x128xf32> -> vector<2x128xf32>
    %c0_236 = arith.constant 0 : index
    %c0_237 = arith.constant 0 : index
    %377 = vector.load %arg8[%c0_236, %c0_237] : memref<128x8xf32, #tpu.memory_space<vmem>>, vector<128x8xf32>
    %cst_238 = arith.constant dense<0.000000e+00> : vector<2x8xf32>
    %378 = tpu.matmul %376, %377, %cst_238 {dimension_numbers = #tpu.dot_dimension_numbers<[1], [0], [0], [1], [0, 0, 1, 1], [], []>} : vector<2x128xf32>, vector<128x8xf32>, vector<2x8xf32> -> vector<2x8xf32>
    %379 = vector.extract_strided_slice %378 {offsets = [0, 0], sizes = [1, 8], strides = [1, 1]} : vector<2x8xf32> to vector<1x8xf32>
    %cst_239 = arith.constant 3.125000e-02 : f32
    %380 = vector.broadcast %cst_239 : f32 to vector<1x8xf32>
    %381 = arith.mulf %379, %380 : vector<1x8xf32>
    %382 = vector.extract_strided_slice %378 {offsets = [1, 0], sizes = [1, 8], strides = [1, 1]} : vector<2x8xf32> to vector<1x8xf32>
    %cst_240 = arith.constant 3.125000e-02 : f32
    %383 = vector.broadcast %cst_240 : f32 to vector<1x8xf32>
    %384 = arith.mulf %382, %383 : vector<1x8xf32>
    %385 = arith.mulf %381, %381 : vector<1x8xf32>
    %386 = arith.subf %384, %385 : vector<1x8xf32>
    %cst_241 = arith.constant 0.000000e+00 : f32
    %387 = vector.broadcast %cst_241 : f32 to vector<1x8xf32>
    %388 = arith.maximumf %386, %387 : vector<1x8xf32>
    %cst_242 = arith.constant 9.99999974E-6 : f32
    %389 = vector.broadcast %cst_242 : f32 to vector<1x8xf32>
    %390 = arith.addf %388, %389 : vector<1x8xf32>
    %391 = math.rsqrt %390 : vector<1x8xf32>
    %392 = arith.mulf %367, %391 : vector<1x8xf32>
    %393 = arith.mulf %381, %392 : vector<1x8xf32>
    %394 = arith.subf %369, %393 : vector<1x8xf32>
    %395 = tpu.concatenate %392, %394 in 0 : vector<1x8xf32>, vector<1x8xf32> -> vector<2x8xf32>
    %c0_243 = arith.constant 0 : index
    %c0_244 = arith.constant 0 : index
    %396 = vector.load %arg9[%c0_243, %c0_244] : memref<8x128xf32, #tpu.memory_space<vmem>>, vector<8x128xf32>
    %cst_245 = arith.constant dense<0.000000e+00> : vector<2x128xf32>
    %397 = tpu.matmul %395, %396, %cst_245 {dimension_numbers = #tpu.dot_dimension_numbers<[1], [0], [0], [1], [0, 0, 1, 1], [], []>} : vector<2x8xf32>, vector<8x128xf32>, vector<2x128xf32> -> vector<2x128xf32>
    %398 = vector.extract_strided_slice %397 {offsets = [0, 0], sizes = [1, 128], strides = [1, 1]} : vector<2x128xf32> to vector<1x128xf32>
    %399 = vector.broadcast %398 : vector<1x128xf32> to vector<16x128xf32>
    %400 = arith.mulf %365, %399 : vector<16x128xf32>
    %401 = vector.extract_strided_slice %397 {offsets = [1, 0], sizes = [1, 128], strides = [1, 1]} : vector<2x128xf32> to vector<1x128xf32>
    %402 = vector.broadcast %401 : vector<1x128xf32> to vector<16x128xf32>
    %403 = arith.addf %400, %402 : vector<16x128xf32>
    %404 = arith.addf %403, %306 : vector<16x128xf32>
    %cst_246 = arith.constant 0.000000e+00 : f32
    %405 = vector.broadcast %cst_246 : f32 to vector<16x128xf32>
    %406 = arith.maximumf %404, %405 : vector<16x128xf32>
    %407 = arith.mulf %406, %0 : vector<16x128xf32>
    %408 = arith.truncf %407 : vector<16x128xf32> to vector<16x128xbf16>
    %c8_247 = arith.constant 8 : index
    %c0_248 = arith.constant 0 : index
    %409 = vector.load %arg11[%c8_247, %c0_248] : memref<32x128xbf16, #tpu.memory_space<vmem>>, vector<16x128xbf16>
    tpu.vector_store %arg11[%c8_247, %c0_248], %408 {strides = array<i32>} : memref<32x128xbf16, #tpu.memory_space<vmem>>, vector<16x128xbf16>,
    %c7_249 = arith.constant 7 : index
    %c0_250 = arith.constant 0 : index
    %410 = vector.load %arg11[%c7_249, %c0_250] : memref<32x128xbf16, #tpu.memory_space<vmem>>, vector<16x128xbf16>
    %c8_251 = arith.constant 8 : index
    %c0_252 = arith.constant 0 : index
    %411 = vector.load %arg11[%c8_251, %c0_252] : memref<32x128xbf16, #tpu.memory_space<vmem>>, vector<16x128xbf16>
    %c9_253 = arith.constant 9 : index
    %c0_254 = arith.constant 0 : index
    %412 = vector.load %arg11[%c9_253, %c0_254] : memref<32x128xbf16, #tpu.memory_space<vmem>>, vector<16x128xbf16>
    %413 = tpu.concatenate %410, %411, %412 in 1 : vector<16x128xbf16>, vector<16x128xbf16>, vector<16x128xbf16> -> vector<16x384xbf16>
    %c4 = arith.constant 4 : index
    %c0_255 = arith.constant 0 : index
    %c0_256 = arith.constant 0 : index
    %414 = vector.load %arg2[%c4, %c0_255, %c0_256] : memref<7x384x128xbf16, #tpu.memory_space<vmem>>, vector<1x384x128xbf16>
    %415 = vector.shape_cast %414 : vector<1x384x128xbf16> to vector<384x128xbf16>
    %cst_257 = arith.constant dense<0.000000e+00> : vector<16x128xf32>
    %416 = tpu.matmul %413, %415, %cst_257 {dimension_numbers = #tpu.dot_dimension_numbers<[1], [0], [0], [1], [0, 0, 1, 1], [], []>} : vector<16x384xbf16>, vector<384x128xbf16>, vector<16x128xf32> -> vector<16x128xf32>
    %c4_258 = arith.constant 4 : index
    %c0_259 = arith.constant 0 : index
    %c0_260 = arith.constant 0 : index
    %417 = vector.load %arg3[%c4_258, %c0_259, %c0_260] : memref<7x1x8xf32, #tpu.memory_space<vmem>>, vector<1x1x8xf32>
    %418 = vector.shape_cast %417 : vector<1x1x8xf32> to vector<1x8xf32>
    %c4_261 = arith.constant 4 : index
    %c0_262 = arith.constant 0 : index
    %c0_263 = arith.constant 0 : index
    %419 = vector.load %arg4[%c4_261, %c0_262, %c0_263] : memref<7x1x8xf32, #tpu.memory_space<vmem>>, vector<1x1x8xf32>
    %420 = vector.shape_cast %419 : vector<1x1x8xf32> to vector<1x8xf32>
    %421 = arith.mulf %416, %0 : vector<16x128xf32>
    %cst_264 = arith.constant dense<0.000000e+00> : vector<128xf32>
    %422 = vector.multi_reduction <add>, %421, %cst_264 [0] : vector<16x128xf32> to vector<128xf32>
    %423 = vector.shape_cast %422 : vector<128xf32> to vector<1x128xf32>
    %424 = arith.mulf %421, %416 : vector<16x128xf32>
    %cst_265 = arith.constant dense<0.000000e+00> : vector<128xf32>
    %425 = vector.multi_reduction <add>, %424, %cst_265 [0] : vector<16x128xf32> to vector<128xf32>
    %426 = vector.shape_cast %425 : vector<128xf32> to vector<1x128xf32>
    %427 = tpu.concatenate %423, %426 in 0 : vector<1x128xf32>, vector<1x128xf32> -> vector<2x128xf32>
    %c0_266 = arith.constant 0 : index
    %c0_267 = arith.constant 0 : index
    %428 = vector.load %arg8[%c0_266, %c0_267] : memref<128x8xf32, #tpu.memory_space<vmem>>, vector<128x8xf32>
    %cst_268 = arith.constant dense<0.000000e+00> : vector<2x8xf32>
    %429 = tpu.matmul %427, %428, %cst_268 {dimension_numbers = #tpu.dot_dimension_numbers<[1], [0], [0], [1], [0, 0, 1, 1], [], []>} : vector<2x128xf32>, vector<128x8xf32>, vector<2x8xf32> -> vector<2x8xf32>
    %430 = vector.extract_strided_slice %429 {offsets = [0, 0], sizes = [1, 8], strides = [1, 1]} : vector<2x8xf32> to vector<1x8xf32>
    %cst_269 = arith.constant 3.125000e-02 : f32
    %431 = vector.broadcast %cst_269 : f32 to vector<1x8xf32>
    %432 = arith.mulf %430, %431 : vector<1x8xf32>
    %433 = vector.extract_strided_slice %429 {offsets = [1, 0], sizes = [1, 8], strides = [1, 1]} : vector<2x8xf32> to vector<1x8xf32>
    %cst_270 = arith.constant 3.125000e-02 : f32
    %434 = vector.broadcast %cst_270 : f32 to vector<1x8xf32>
    %435 = arith.mulf %433, %434 : vector<1x8xf32>
    %436 = arith.mulf %432, %432 : vector<1x8xf32>
    %437 = arith.subf %435, %436 : vector<1x8xf32>
    %cst_271 = arith.constant 0.000000e+00 : f32
    %438 = vector.broadcast %cst_271 : f32 to vector<1x8xf32>
    %439 = arith.maximumf %437, %438 : vector<1x8xf32>
    %cst_272 = arith.constant 9.99999974E-6 : f32
    %440 = vector.broadcast %cst_272 : f32 to vector<1x8xf32>
    %441 = arith.addf %439, %440 : vector<1x8xf32>
    %442 = math.rsqrt %441 : vector<1x8xf32>
    %443 = arith.mulf %418, %442 : vector<1x8xf32>
    %444 = arith.mulf %432, %443 : vector<1x8xf32>
    %445 = arith.subf %420, %444 : vector<1x8xf32>
    %446 = tpu.concatenate %443, %445 in 0 : vector<1x8xf32>, vector<1x8xf32> -> vector<2x8xf32>
    %c0_273 = arith.constant 0 : index
    %c0_274 = arith.constant 0 : index
    %447 = vector.load %arg9[%c0_273, %c0_274] : memref<8x128xf32, #tpu.memory_space<vmem>>, vector<8x128xf32>
    %cst_275 = arith.constant dense<0.000000e+00> : vector<2x128xf32>
    %448 = tpu.matmul %446, %447, %cst_275 {dimension_numbers = #tpu.dot_dimension_numbers<[1], [0], [0], [1], [0, 0, 1, 1], [], []>} : vector<2x8xf32>, vector<8x128xf32>, vector<2x128xf32> -> vector<2x128xf32>
    %449 = vector.extract_strided_slice %448 {offsets = [0, 0], sizes = [1, 128], strides = [1, 1]} : vector<2x128xf32> to vector<1x128xf32>
    %450 = vector.broadcast %449 : vector<1x128xf32> to vector<16x128xf32>
    %451 = arith.mulf %416, %450 : vector<16x128xf32>
    %452 = vector.extract_strided_slice %448 {offsets = [1, 0], sizes = [1, 128], strides = [1, 1]} : vector<2x128xf32> to vector<1x128xf32>
    %453 = vector.broadcast %452 : vector<1x128xf32> to vector<16x128xf32>
    %454 = arith.addf %451, %453 : vector<16x128xf32>
    %cst_276 = arith.constant 0.000000e+00 : f32
    %455 = vector.broadcast %cst_276 : f32 to vector<16x128xf32>
    %456 = arith.maximumf %454, %455 : vector<16x128xf32>
    %457 = arith.mulf %456, %0 : vector<16x128xf32>
    %458 = arith.truncf %457 : vector<16x128xf32> to vector<16x128xbf16>
    %c8_277 = arith.constant 8 : index
    %c0_278 = arith.constant 0 : index
    %459 = vector.load %arg11[%c8_277, %c0_278] : memref<32x128xbf16, #tpu.memory_space<vmem>>, vector<16x128xbf16>
    tpu.vector_store %arg11[%c8_277, %c0_278], %458 {strides = array<i32>} : memref<32x128xbf16, #tpu.memory_space<vmem>>, vector<16x128xbf16>,
    %c7_279 = arith.constant 7 : index
    %c0_280 = arith.constant 0 : index
    %460 = vector.load %arg11[%c7_279, %c0_280] : memref<32x128xbf16, #tpu.memory_space<vmem>>, vector<16x128xbf16>
    %c8_281 = arith.constant 8 : index
    %c0_282 = arith.constant 0 : index
    %461 = vector.load %arg11[%c8_281, %c0_282] : memref<32x128xbf16, #tpu.memory_space<vmem>>, vector<16x128xbf16>
    %c9_283 = arith.constant 9 : index
    %c0_284 = arith.constant 0 : index
    %462 = vector.load %arg11[%c9_283, %c0_284] : memref<32x128xbf16, #tpu.memory_space<vmem>>, vector<16x128xbf16>
    %463 = tpu.concatenate %460, %461, %462 in 1 : vector<16x128xbf16>, vector<16x128xbf16>, vector<16x128xbf16> -> vector<16x384xbf16>
    %c4_285 = arith.constant 4 : index
    %c0_286 = arith.constant 0 : index
    %c0_287 = arith.constant 0 : index
    %464 = vector.load %arg5[%c4_285, %c0_286, %c0_287] : memref<7x384x128xbf16, #tpu.memory_space<vmem>>, vector<1x384x128xbf16>
    %465 = vector.shape_cast %464 : vector<1x384x128xbf16> to vector<384x128xbf16>
    %cst_288 = arith.constant dense<0.000000e+00> : vector<16x128xf32>
    %466 = tpu.matmul %463, %465, %cst_288 {dimension_numbers = #tpu.dot_dimension_numbers<[1], [0], [0], [1], [0, 0, 1, 1], [], []>} : vector<16x384xbf16>, vector<384x128xbf16>, vector<16x128xf32> -> vector<16x128xf32>
    %c4_289 = arith.constant 4 : index
    %c0_290 = arith.constant 0 : index
    %c0_291 = arith.constant 0 : index
    %467 = vector.load %arg6[%c4_289, %c0_290, %c0_291] : memref<7x1x8xf32, #tpu.memory_space<vmem>>, vector<1x1x8xf32>
    %468 = vector.shape_cast %467 : vector<1x1x8xf32> to vector<1x8xf32>
    %c4_292 = arith.constant 4 : index
    %c0_293 = arith.constant 0 : index
    %c0_294 = arith.constant 0 : index
    %469 = vector.load %arg7[%c4_292, %c0_293, %c0_294] : memref<7x1x8xf32, #tpu.memory_space<vmem>>, vector<1x1x8xf32>
    %470 = vector.shape_cast %469 : vector<1x1x8xf32> to vector<1x8xf32>
    %471 = arith.mulf %466, %0 : vector<16x128xf32>
    %cst_295 = arith.constant dense<0.000000e+00> : vector<128xf32>
    %472 = vector.multi_reduction <add>, %471, %cst_295 [0] : vector<16x128xf32> to vector<128xf32>
    %473 = vector.shape_cast %472 : vector<128xf32> to vector<1x128xf32>
    %474 = arith.mulf %471, %466 : vector<16x128xf32>
    %cst_296 = arith.constant dense<0.000000e+00> : vector<128xf32>
    %475 = vector.multi_reduction <add>, %474, %cst_296 [0] : vector<16x128xf32> to vector<128xf32>
    %476 = vector.shape_cast %475 : vector<128xf32> to vector<1x128xf32>
    %477 = tpu.concatenate %473, %476 in 0 : vector<1x128xf32>, vector<1x128xf32> -> vector<2x128xf32>
    %c0_297 = arith.constant 0 : index
    %c0_298 = arith.constant 0 : index
    %478 = vector.load %arg8[%c0_297, %c0_298] : memref<128x8xf32, #tpu.memory_space<vmem>>, vector<128x8xf32>
    %cst_299 = arith.constant dense<0.000000e+00> : vector<2x8xf32>
    %479 = tpu.matmul %477, %478, %cst_299 {dimension_numbers = #tpu.dot_dimension_numbers<[1], [0], [0], [1], [0, 0, 1, 1], [], []>} : vector<2x128xf32>, vector<128x8xf32>, vector<2x8xf32> -> vector<2x8xf32>
    %480 = vector.extract_strided_slice %479 {offsets = [0, 0], sizes = [1, 8], strides = [1, 1]} : vector<2x8xf32> to vector<1x8xf32>
    %cst_300 = arith.constant 3.125000e-02 : f32
    %481 = vector.broadcast %cst_300 : f32 to vector<1x8xf32>
    %482 = arith.mulf %480, %481 : vector<1x8xf32>
    %483 = vector.extract_strided_slice %479 {offsets = [1, 0], sizes = [1, 8], strides = [1, 1]} : vector<2x8xf32> to vector<1x8xf32>
    %cst_301 = arith.constant 3.125000e-02 : f32
    %484 = vector.broadcast %cst_301 : f32 to vector<1x8xf32>
    %485 = arith.mulf %483, %484 : vector<1x8xf32>
    %486 = arith.mulf %482, %482 : vector<1x8xf32>
    %487 = arith.subf %485, %486 : vector<1x8xf32>
    %cst_302 = arith.constant 0.000000e+00 : f32
    %488 = vector.broadcast %cst_302 : f32 to vector<1x8xf32>
    %489 = arith.maximumf %487, %488 : vector<1x8xf32>
    %cst_303 = arith.constant 9.99999974E-6 : f32
    %490 = vector.broadcast %cst_303 : f32 to vector<1x8xf32>
    %491 = arith.addf %489, %490 : vector<1x8xf32>
    %492 = math.rsqrt %491 : vector<1x8xf32>
    %493 = arith.mulf %468, %492 : vector<1x8xf32>
    %494 = arith.mulf %482, %493 : vector<1x8xf32>
    %495 = arith.subf %470, %494 : vector<1x8xf32>
    %496 = tpu.concatenate %493, %495 in 0 : vector<1x8xf32>, vector<1x8xf32> -> vector<2x8xf32>
    %c0_304 = arith.constant 0 : index
    %c0_305 = arith.constant 0 : index
    %497 = vector.load %arg9[%c0_304, %c0_305] : memref<8x128xf32, #tpu.memory_space<vmem>>, vector<8x128xf32>
    %cst_306 = arith.constant dense<0.000000e+00> : vector<2x128xf32>
    %498 = tpu.matmul %496, %497, %cst_306 {dimension_numbers = #tpu.dot_dimension_numbers<[1], [0], [0], [1], [0, 0, 1, 1], [], []>} : vector<2x8xf32>, vector<8x128xf32>, vector<2x128xf32> -> vector<2x128xf32>
    %499 = vector.extract_strided_slice %498 {offsets = [0, 0], sizes = [1, 128], strides = [1, 1]} : vector<2x128xf32> to vector<1x128xf32>
    %500 = vector.broadcast %499 : vector<1x128xf32> to vector<16x128xf32>
    %501 = arith.mulf %466, %500 : vector<16x128xf32>
    %502 = vector.extract_strided_slice %498 {offsets = [1, 0], sizes = [1, 128], strides = [1, 1]} : vector<2x128xf32> to vector<1x128xf32>
    %503 = vector.broadcast %502 : vector<1x128xf32> to vector<16x128xf32>
    %504 = arith.addf %501, %503 : vector<16x128xf32>
    %505 = arith.addf %504, %407 : vector<16x128xf32>
    %cst_307 = arith.constant 0.000000e+00 : f32
    %506 = vector.broadcast %cst_307 : f32 to vector<16x128xf32>
    %507 = arith.maximumf %505, %506 : vector<16x128xf32>
    %508 = arith.mulf %507, %0 : vector<16x128xf32>
    %509 = arith.truncf %508 : vector<16x128xf32> to vector<16x128xbf16>
    %c8_308 = arith.constant 8 : index
    %c0_309 = arith.constant 0 : index
    %510 = vector.load %arg11[%c8_308, %c0_309] : memref<32x128xbf16, #tpu.memory_space<vmem>>, vector<16x128xbf16>
    tpu.vector_store %arg11[%c8_308, %c0_309], %509 {strides = array<i32>} : memref<32x128xbf16, #tpu.memory_space<vmem>>, vector<16x128xbf16>,
    %c7_310 = arith.constant 7 : index
    %c0_311 = arith.constant 0 : index
    %511 = vector.load %arg11[%c7_310, %c0_311] : memref<32x128xbf16, #tpu.memory_space<vmem>>, vector<16x128xbf16>
    %c8_312 = arith.constant 8 : index
    %c0_313 = arith.constant 0 : index
    %512 = vector.load %arg11[%c8_312, %c0_313] : memref<32x128xbf16, #tpu.memory_space<vmem>>, vector<16x128xbf16>
    %c9_314 = arith.constant 9 : index
    %c0_315 = arith.constant 0 : index
    %513 = vector.load %arg11[%c9_314, %c0_315] : memref<32x128xbf16, #tpu.memory_space<vmem>>, vector<16x128xbf16>
    %514 = tpu.concatenate %511, %512, %513 in 1 : vector<16x128xbf16>, vector<16x128xbf16>, vector<16x128xbf16> -> vector<16x384xbf16>
    %c5 = arith.constant 5 : index
    %c0_316 = arith.constant 0 : index
    %c0_317 = arith.constant 0 : index
    %515 = vector.load %arg2[%c5, %c0_316, %c0_317] : memref<7x384x128xbf16, #tpu.memory_space<vmem>>, vector<1x384x128xbf16>
    %516 = vector.shape_cast %515 : vector<1x384x128xbf16> to vector<384x128xbf16>
    %cst_318 = arith.constant dense<0.000000e+00> : vector<16x128xf32>
    %517 = tpu.matmul %514, %516, %cst_318 {dimension_numbers = #tpu.dot_dimension_numbers<[1], [0], [0], [1], [0, 0, 1, 1], [], []>} : vector<16x384xbf16>, vector<384x128xbf16>, vector<16x128xf32> -> vector<16x128xf32>
    %c5_319 = arith.constant 5 : index
    %c0_320 = arith.constant 0 : index
    %c0_321 = arith.constant 0 : index
    %518 = vector.load %arg3[%c5_319, %c0_320, %c0_321] : memref<7x1x8xf32, #tpu.memory_space<vmem>>, vector<1x1x8xf32>
    %519 = vector.shape_cast %518 : vector<1x1x8xf32> to vector<1x8xf32>
    %c5_322 = arith.constant 5 : index
    %c0_323 = arith.constant 0 : index
    %c0_324 = arith.constant 0 : index
    %520 = vector.load %arg4[%c5_322, %c0_323, %c0_324] : memref<7x1x8xf32, #tpu.memory_space<vmem>>, vector<1x1x8xf32>
    %521 = vector.shape_cast %520 : vector<1x1x8xf32> to vector<1x8xf32>
    %522 = arith.mulf %517, %0 : vector<16x128xf32>
    %cst_325 = arith.constant dense<0.000000e+00> : vector<128xf32>
    %523 = vector.multi_reduction <add>, %522, %cst_325 [0] : vector<16x128xf32> to vector<128xf32>
    %524 = vector.shape_cast %523 : vector<128xf32> to vector<1x128xf32>
    %525 = arith.mulf %522, %517 : vector<16x128xf32>
    %cst_326 = arith.constant dense<0.000000e+00> : vector<128xf32>
    %526 = vector.multi_reduction <add>, %525, %cst_326 [0] : vector<16x128xf32> to vector<128xf32>
    %527 = vector.shape_cast %526 : vector<128xf32> to vector<1x128xf32>
    %528 = tpu.concatenate %524, %527 in 0 : vector<1x128xf32>, vector<1x128xf32> -> vector<2x128xf32>
    %c0_327 = arith.constant 0 : index
    %c0_328 = arith.constant 0 : index
    %529 = vector.load %arg8[%c0_327, %c0_328] : memref<128x8xf32, #tpu.memory_space<vmem>>, vector<128x8xf32>
    %cst_329 = arith.constant dense<0.000000e+00> : vector<2x8xf32>
    %530 = tpu.matmul %528, %529, %cst_329 {dimension_numbers = #tpu.dot_dimension_numbers<[1], [0], [0], [1], [0, 0, 1, 1], [], []>} : vector<2x128xf32>, vector<128x8xf32>, vector<2x8xf32> -> vector<2x8xf32>
    %531 = vector.extract_strided_slice %530 {offsets = [0, 0], sizes = [1, 8], strides = [1, 1]} : vector<2x8xf32> to vector<1x8xf32>
    %cst_330 = arith.constant 3.125000e-02 : f32
    %532 = vector.broadcast %cst_330 : f32 to vector<1x8xf32>
    %533 = arith.mulf %531, %532 : vector<1x8xf32>
    %534 = vector.extract_strided_slice %530 {offsets = [1, 0], sizes = [1, 8], strides = [1, 1]} : vector<2x8xf32> to vector<1x8xf32>
    %cst_331 = arith.constant 3.125000e-02 : f32
    %535 = vector.broadcast %cst_331 : f32 to vector<1x8xf32>
    %536 = arith.mulf %534, %535 : vector<1x8xf32>
    %537 = arith.mulf %533, %533 : vector<1x8xf32>
    %538 = arith.subf %536, %537 : vector<1x8xf32>
    %cst_332 = arith.constant 0.000000e+00 : f32
    %539 = vector.broadcast %cst_332 : f32 to vector<1x8xf32>
    %540 = arith.maximumf %538, %539 : vector<1x8xf32>
    %cst_333 = arith.constant 9.99999974E-6 : f32
    %541 = vector.broadcast %cst_333 : f32 to vector<1x8xf32>
    %542 = arith.addf %540, %541 : vector<1x8xf32>
    %543 = math.rsqrt %542 : vector<1x8xf32>
    %544 = arith.mulf %519, %543 : vector<1x8xf32>
    %545 = arith.mulf %533, %544 : vector<1x8xf32>
    %546 = arith.subf %521, %545 : vector<1x8xf32>
    %547 = tpu.concatenate %544, %546 in 0 : vector<1x8xf32>, vector<1x8xf32> -> vector<2x8xf32>
    %c0_334 = arith.constant 0 : index
    %c0_335 = arith.constant 0 : index
    %548 = vector.load %arg9[%c0_334, %c0_335] : memref<8x128xf32, #tpu.memory_space<vmem>>, vector<8x128xf32>
    %cst_336 = arith.constant dense<0.000000e+00> : vector<2x128xf32>
    %549 = tpu.matmul %547, %548, %cst_336 {dimension_numbers = #tpu.dot_dimension_numbers<[1], [0], [0], [1], [0, 0, 1, 1], [], []>} : vector<2x8xf32>, vector<8x128xf32>, vector<2x128xf32> -> vector<2x128xf32>
    %550 = vector.extract_strided_slice %549 {offsets = [0, 0], sizes = [1, 128], strides = [1, 1]} : vector<2x128xf32> to vector<1x128xf32>
    %551 = vector.broadcast %550 : vector<1x128xf32> to vector<16x128xf32>
    %552 = arith.mulf %517, %551 : vector<16x128xf32>
    %553 = vector.extract_strided_slice %549 {offsets = [1, 0], sizes = [1, 128], strides = [1, 1]} : vector<2x128xf32> to vector<1x128xf32>
    %554 = vector.broadcast %553 : vector<1x128xf32> to vector<16x128xf32>
    %555 = arith.addf %552, %554 : vector<16x128xf32>
    %cst_337 = arith.constant 0.000000e+00 : f32
    %556 = vector.broadcast %cst_337 : f32 to vector<16x128xf32>
    %557 = arith.maximumf %555, %556 : vector<16x128xf32>
    %558 = arith.mulf %557, %0 : vector<16x128xf32>
    %559 = arith.truncf %558 : vector<16x128xf32> to vector<16x128xbf16>
    %c8_338 = arith.constant 8 : index
    %c0_339 = arith.constant 0 : index
    %560 = vector.load %arg11[%c8_338, %c0_339] : memref<32x128xbf16, #tpu.memory_space<vmem>>, vector<16x128xbf16>
    tpu.vector_store %arg11[%c8_338, %c0_339], %559 {strides = array<i32>} : memref<32x128xbf16, #tpu.memory_space<vmem>>, vector<16x128xbf16>,
    %c7_340 = arith.constant 7 : index
    %c0_341 = arith.constant 0 : index
    %561 = vector.load %arg11[%c7_340, %c0_341] : memref<32x128xbf16, #tpu.memory_space<vmem>>, vector<16x128xbf16>
    %c8_342 = arith.constant 8 : index
    %c0_343 = arith.constant 0 : index
    %562 = vector.load %arg11[%c8_342, %c0_343] : memref<32x128xbf16, #tpu.memory_space<vmem>>, vector<16x128xbf16>
    %c9_344 = arith.constant 9 : index
    %c0_345 = arith.constant 0 : index
    %563 = vector.load %arg11[%c9_344, %c0_345] : memref<32x128xbf16, #tpu.memory_space<vmem>>, vector<16x128xbf16>
    %564 = tpu.concatenate %561, %562, %563 in 1 : vector<16x128xbf16>, vector<16x128xbf16>, vector<16x128xbf16> -> vector<16x384xbf16>
    %c5_346 = arith.constant 5 : index
    %c0_347 = arith.constant 0 : index
    %c0_348 = arith.constant 0 : index
    %565 = vector.load %arg5[%c5_346, %c0_347, %c0_348] : memref<7x384x128xbf16, #tpu.memory_space<vmem>>, vector<1x384x128xbf16>
    %566 = vector.shape_cast %565 : vector<1x384x128xbf16> to vector<384x128xbf16>
    %cst_349 = arith.constant dense<0.000000e+00> : vector<16x128xf32>
    %567 = tpu.matmul %564, %566, %cst_349 {dimension_numbers = #tpu.dot_dimension_numbers<[1], [0], [0], [1], [0, 0, 1, 1], [], []>} : vector<16x384xbf16>, vector<384x128xbf16>, vector<16x128xf32> -> vector<16x128xf32>
    %c5_350 = arith.constant 5 : index
    %c0_351 = arith.constant 0 : index
    %c0_352 = arith.constant 0 : index
    %568 = vector.load %arg6[%c5_350, %c0_351, %c0_352] : memref<7x1x8xf32, #tpu.memory_space<vmem>>, vector<1x1x8xf32>
    %569 = vector.shape_cast %568 : vector<1x1x8xf32> to vector<1x8xf32>
    %c5_353 = arith.constant 5 : index
    %c0_354 = arith.constant 0 : index
    %c0_355 = arith.constant 0 : index
    %570 = vector.load %arg7[%c5_353, %c0_354, %c0_355] : memref<7x1x8xf32, #tpu.memory_space<vmem>>, vector<1x1x8xf32>
    %571 = vector.shape_cast %570 : vector<1x1x8xf32> to vector<1x8xf32>
    %572 = arith.mulf %567, %0 : vector<16x128xf32>
    %cst_356 = arith.constant dense<0.000000e+00> : vector<128xf32>
    %573 = vector.multi_reduction <add>, %572, %cst_356 [0] : vector<16x128xf32> to vector<128xf32>
    %574 = vector.shape_cast %573 : vector<128xf32> to vector<1x128xf32>
    %575 = arith.mulf %572, %567 : vector<16x128xf32>
    %cst_357 = arith.constant dense<0.000000e+00> : vector<128xf32>
    %576 = vector.multi_reduction <add>, %575, %cst_357 [0] : vector<16x128xf32> to vector<128xf32>
    %577 = vector.shape_cast %576 : vector<128xf32> to vector<1x128xf32>
    %578 = tpu.concatenate %574, %577 in 0 : vector<1x128xf32>, vector<1x128xf32> -> vector<2x128xf32>
    %c0_358 = arith.constant 0 : index
    %c0_359 = arith.constant 0 : index
    %579 = vector.load %arg8[%c0_358, %c0_359] : memref<128x8xf32, #tpu.memory_space<vmem>>, vector<128x8xf32>
    %cst_360 = arith.constant dense<0.000000e+00> : vector<2x8xf32>
    %580 = tpu.matmul %578, %579, %cst_360 {dimension_numbers = #tpu.dot_dimension_numbers<[1], [0], [0], [1], [0, 0, 1, 1], [], []>} : vector<2x128xf32>, vector<128x8xf32>, vector<2x8xf32> -> vector<2x8xf32>
    %581 = vector.extract_strided_slice %580 {offsets = [0, 0], sizes = [1, 8], strides = [1, 1]} : vector<2x8xf32> to vector<1x8xf32>
    %cst_361 = arith.constant 3.125000e-02 : f32
    %582 = vector.broadcast %cst_361 : f32 to vector<1x8xf32>
    %583 = arith.mulf %581, %582 : vector<1x8xf32>
    %584 = vector.extract_strided_slice %580 {offsets = [1, 0], sizes = [1, 8], strides = [1, 1]} : vector<2x8xf32> to vector<1x8xf32>
    %cst_362 = arith.constant 3.125000e-02 : f32
    %585 = vector.broadcast %cst_362 : f32 to vector<1x8xf32>
    %586 = arith.mulf %584, %585 : vector<1x8xf32>
    %587 = arith.mulf %583, %583 : vector<1x8xf32>
    %588 = arith.subf %586, %587 : vector<1x8xf32>
    %cst_363 = arith.constant 0.000000e+00 : f32
    %589 = vector.broadcast %cst_363 : f32 to vector<1x8xf32>
    %590 = arith.maximumf %588, %589 : vector<1x8xf32>
    %cst_364 = arith.constant 9.99999974E-6 : f32
    %591 = vector.broadcast %cst_364 : f32 to vector<1x8xf32>
    %592 = arith.addf %590, %591 : vector<1x8xf32>
    %593 = math.rsqrt %592 : vector<1x8xf32>
    %594 = arith.mulf %569, %593 : vector<1x8xf32>
    %595 = arith.mulf %583, %594 : vector<1x8xf32>
    %596 = arith.subf %571, %595 : vector<1x8xf32>
    %597 = tpu.concatenate %594, %596 in 0 : vector<1x8xf32>, vector<1x8xf32> -> vector<2x8xf32>
    %c0_365 = arith.constant 0 : index
    %c0_366 = arith.constant 0 : index
    %598 = vector.load %arg9[%c0_365, %c0_366] : memref<8x128xf32, #tpu.memory_space<vmem>>, vector<8x128xf32>
    %cst_367 = arith.constant dense<0.000000e+00> : vector<2x128xf32>
    %599 = tpu.matmul %597, %598, %cst_367 {dimension_numbers = #tpu.dot_dimension_numbers<[1], [0], [0], [1], [0, 0, 1, 1], [], []>} : vector<2x8xf32>, vector<8x128xf32>, vector<2x128xf32> -> vector<2x128xf32>
    %600 = vector.extract_strided_slice %599 {offsets = [0, 0], sizes = [1, 128], strides = [1, 1]} : vector<2x128xf32> to vector<1x128xf32>
    %601 = vector.broadcast %600 : vector<1x128xf32> to vector<16x128xf32>
    %602 = arith.mulf %567, %601 : vector<16x128xf32>
    %603 = vector.extract_strided_slice %599 {offsets = [1, 0], sizes = [1, 128], strides = [1, 1]} : vector<2x128xf32> to vector<1x128xf32>
    %604 = vector.broadcast %603 : vector<1x128xf32> to vector<16x128xf32>
    %605 = arith.addf %602, %604 : vector<16x128xf32>
    %606 = arith.addf %605, %508 : vector<16x128xf32>
    %cst_368 = arith.constant 0.000000e+00 : f32
    %607 = vector.broadcast %cst_368 : f32 to vector<16x128xf32>
    %608 = arith.maximumf %606, %607 : vector<16x128xf32>
    %609 = arith.mulf %608, %0 : vector<16x128xf32>
    %610 = arith.truncf %609 : vector<16x128xf32> to vector<16x128xbf16>
    %c8_369 = arith.constant 8 : index
    %c0_370 = arith.constant 0 : index
    %611 = vector.load %arg11[%c8_369, %c0_370] : memref<32x128xbf16, #tpu.memory_space<vmem>>, vector<16x128xbf16>
    tpu.vector_store %arg11[%c8_369, %c0_370], %610 {strides = array<i32>} : memref<32x128xbf16, #tpu.memory_space<vmem>>, vector<16x128xbf16>,
    %c7_371 = arith.constant 7 : index
    %c0_372 = arith.constant 0 : index
    %612 = vector.load %arg11[%c7_371, %c0_372] : memref<32x128xbf16, #tpu.memory_space<vmem>>, vector<16x128xbf16>
    %c8_373 = arith.constant 8 : index
    %c0_374 = arith.constant 0 : index
    %613 = vector.load %arg11[%c8_373, %c0_374] : memref<32x128xbf16, #tpu.memory_space<vmem>>, vector<16x128xbf16>
    %c9_375 = arith.constant 9 : index
    %c0_376 = arith.constant 0 : index
    %614 = vector.load %arg11[%c9_375, %c0_376] : memref<32x128xbf16, #tpu.memory_space<vmem>>, vector<16x128xbf16>
    %615 = tpu.concatenate %612, %613, %614 in 1 : vector<16x128xbf16>, vector<16x128xbf16>, vector<16x128xbf16> -> vector<16x384xbf16>
    %c6 = arith.constant 6 : index
    %c0_377 = arith.constant 0 : index
    %c0_378 = arith.constant 0 : index
    %616 = vector.load %arg2[%c6, %c0_377, %c0_378] : memref<7x384x128xbf16, #tpu.memory_space<vmem>>, vector<1x384x128xbf16>
    %617 = vector.shape_cast %616 : vector<1x384x128xbf16> to vector<384x128xbf16>
    %cst_379 = arith.constant dense<0.000000e+00> : vector<16x128xf32>
    %618 = tpu.matmul %615, %617, %cst_379 {dimension_numbers = #tpu.dot_dimension_numbers<[1], [0], [0], [1], [0, 0, 1, 1], [], []>} : vector<16x384xbf16>, vector<384x128xbf16>, vector<16x128xf32> -> vector<16x128xf32>
    %c6_380 = arith.constant 6 : index
    %c0_381 = arith.constant 0 : index
    %c0_382 = arith.constant 0 : index
    %619 = vector.load %arg3[%c6_380, %c0_381, %c0_382] : memref<7x1x8xf32, #tpu.memory_space<vmem>>, vector<1x1x8xf32>
    %620 = vector.shape_cast %619 : vector<1x1x8xf32> to vector<1x8xf32>
    %c6_383 = arith.constant 6 : index
    %c0_384 = arith.constant 0 : index
    %c0_385 = arith.constant 0 : index
    %621 = vector.load %arg4[%c6_383, %c0_384, %c0_385] : memref<7x1x8xf32, #tpu.memory_space<vmem>>, vector<1x1x8xf32>
    %622 = vector.shape_cast %621 : vector<1x1x8xf32> to vector<1x8xf32>
    %623 = arith.mulf %618, %0 : vector<16x128xf32>
    %cst_386 = arith.constant dense<0.000000e+00> : vector<128xf32>
    %624 = vector.multi_reduction <add>, %623, %cst_386 [0] : vector<16x128xf32> to vector<128xf32>
    %625 = vector.shape_cast %624 : vector<128xf32> to vector<1x128xf32>
    %626 = arith.mulf %623, %618 : vector<16x128xf32>
    %cst_387 = arith.constant dense<0.000000e+00> : vector<128xf32>
    %627 = vector.multi_reduction <add>, %626, %cst_387 [0] : vector<16x128xf32> to vector<128xf32>
    %628 = vector.shape_cast %627 : vector<128xf32> to vector<1x128xf32>
    %629 = tpu.concatenate %625, %628 in 0 : vector<1x128xf32>, vector<1x128xf32> -> vector<2x128xf32>
    %c0_388 = arith.constant 0 : index
    %c0_389 = arith.constant 0 : index
    %630 = vector.load %arg8[%c0_388, %c0_389] : memref<128x8xf32, #tpu.memory_space<vmem>>, vector<128x8xf32>
    %cst_390 = arith.constant dense<0.000000e+00> : vector<2x8xf32>
    %631 = tpu.matmul %629, %630, %cst_390 {dimension_numbers = #tpu.dot_dimension_numbers<[1], [0], [0], [1], [0, 0, 1, 1], [], []>} : vector<2x128xf32>, vector<128x8xf32>, vector<2x8xf32> -> vector<2x8xf32>
    %632 = vector.extract_strided_slice %631 {offsets = [0, 0], sizes = [1, 8], strides = [1, 1]} : vector<2x8xf32> to vector<1x8xf32>
    %cst_391 = arith.constant 3.125000e-02 : f32
    %633 = vector.broadcast %cst_391 : f32 to vector<1x8xf32>
    %634 = arith.mulf %632, %633 : vector<1x8xf32>
    %635 = vector.extract_strided_slice %631 {offsets = [1, 0], sizes = [1, 8], strides = [1, 1]} : vector<2x8xf32> to vector<1x8xf32>
    %cst_392 = arith.constant 3.125000e-02 : f32
    %636 = vector.broadcast %cst_392 : f32 to vector<1x8xf32>
    %637 = arith.mulf %635, %636 : vector<1x8xf32>
    %638 = arith.mulf %634, %634 : vector<1x8xf32>
    %639 = arith.subf %637, %638 : vector<1x8xf32>
    %cst_393 = arith.constant 0.000000e+00 : f32
    %640 = vector.broadcast %cst_393 : f32 to vector<1x8xf32>
    %641 = arith.maximumf %639, %640 : vector<1x8xf32>
    %cst_394 = arith.constant 9.99999974E-6 : f32
    %642 = vector.broadcast %cst_394 : f32 to vector<1x8xf32>
    %643 = arith.addf %641, %642 : vector<1x8xf32>
    %644 = math.rsqrt %643 : vector<1x8xf32>
    %645 = arith.mulf %620, %644 : vector<1x8xf32>
    %646 = arith.mulf %634, %645 : vector<1x8xf32>
    %647 = arith.subf %622, %646 : vector<1x8xf32>
    %648 = tpu.concatenate %645, %647 in 0 : vector<1x8xf32>, vector<1x8xf32> -> vector<2x8xf32>
    %c0_395 = arith.constant 0 : index
    %c0_396 = arith.constant 0 : index
    %649 = vector.load %arg9[%c0_395, %c0_396] : memref<8x128xf32, #tpu.memory_space<vmem>>, vector<8x128xf32>
    %cst_397 = arith.constant dense<0.000000e+00> : vector<2x128xf32>
    %650 = tpu.matmul %648, %649, %cst_397 {dimension_numbers = #tpu.dot_dimension_numbers<[1], [0], [0], [1], [0, 0, 1, 1], [], []>} : vector<2x8xf32>, vector<8x128xf32>, vector<2x128xf32> -> vector<2x128xf32>
    %651 = vector.extract_strided_slice %650 {offsets = [0, 0], sizes = [1, 128], strides = [1, 1]} : vector<2x128xf32> to vector<1x128xf32>
    %652 = vector.broadcast %651 : vector<1x128xf32> to vector<16x128xf32>
    %653 = arith.mulf %618, %652 : vector<16x128xf32>
    %654 = vector.extract_strided_slice %650 {offsets = [1, 0], sizes = [1, 128], strides = [1, 1]} : vector<2x128xf32> to vector<1x128xf32>
    %655 = vector.broadcast %654 : vector<1x128xf32> to vector<16x128xf32>
    %656 = arith.addf %653, %655 : vector<16x128xf32>
    %cst_398 = arith.constant 0.000000e+00 : f32
    %657 = vector.broadcast %cst_398 : f32 to vector<16x128xf32>
    %658 = arith.maximumf %656, %657 : vector<16x128xf32>
    %659 = arith.mulf %658, %0 : vector<16x128xf32>
    %660 = arith.truncf %659 : vector<16x128xf32> to vector<16x128xbf16>
    %c8_399 = arith.constant 8 : index
    %c0_400 = arith.constant 0 : index
    %661 = vector.load %arg11[%c8_399, %c0_400] : memref<32x128xbf16, #tpu.memory_space<vmem>>, vector<16x128xbf16>
    tpu.vector_store %arg11[%c8_399, %c0_400], %660 {strides = array<i32>} : memref<32x128xbf16, #tpu.memory_space<vmem>>, vector<16x128xbf16>,
    %c7_401 = arith.constant 7 : index
    %c0_402 = arith.constant 0 : index
    %662 = vector.load %arg11[%c7_401, %c0_402] : memref<32x128xbf16, #tpu.memory_space<vmem>>, vector<16x128xbf16>
    %c8_403 = arith.constant 8 : index
    %c0_404 = arith.constant 0 : index
    %663 = vector.load %arg11[%c8_403, %c0_404] : memref<32x128xbf16, #tpu.memory_space<vmem>>, vector<16x128xbf16>
    %c9_405 = arith.constant 9 : index
    %c0_406 = arith.constant 0 : index
    %664 = vector.load %arg11[%c9_405, %c0_406] : memref<32x128xbf16, #tpu.memory_space<vmem>>, vector<16x128xbf16>
    %665 = tpu.concatenate %662, %663, %664 in 1 : vector<16x128xbf16>, vector<16x128xbf16>, vector<16x128xbf16> -> vector<16x384xbf16>
    %c6_407 = arith.constant 6 : index
    %c0_408 = arith.constant 0 : index
    %c0_409 = arith.constant 0 : index
    %666 = vector.load %arg5[%c6_407, %c0_408, %c0_409] : memref<7x384x128xbf16, #tpu.memory_space<vmem>>, vector<1x384x128xbf16>
    %667 = vector.shape_cast %666 : vector<1x384x128xbf16> to vector<384x128xbf16>
    %cst_410 = arith.constant dense<0.000000e+00> : vector<16x128xf32>
    %668 = tpu.matmul %665, %667, %cst_410 {dimension_numbers = #tpu.dot_dimension_numbers<[1], [0], [0], [1], [0, 0, 1, 1], [], []>} : vector<16x384xbf16>, vector<384x128xbf16>, vector<16x128xf32> -> vector<16x128xf32>
    %c6_411 = arith.constant 6 : index
    %c0_412 = arith.constant 0 : index
    %c0_413 = arith.constant 0 : index
    %669 = vector.load %arg6[%c6_411, %c0_412, %c0_413] : memref<7x1x8xf32, #tpu.memory_space<vmem>>, vector<1x1x8xf32>
    %670 = vector.shape_cast %669 : vector<1x1x8xf32> to vector<1x8xf32>
    %c6_414 = arith.constant 6 : index
    %c0_415 = arith.constant 0 : index
    %c0_416 = arith.constant 0 : index
    %671 = vector.load %arg7[%c6_414, %c0_415, %c0_416] : memref<7x1x8xf32, #tpu.memory_space<vmem>>, vector<1x1x8xf32>
    %672 = vector.shape_cast %671 : vector<1x1x8xf32> to vector<1x8xf32>
    %673 = arith.mulf %668, %0 : vector<16x128xf32>
    %cst_417 = arith.constant dense<0.000000e+00> : vector<128xf32>
    %674 = vector.multi_reduction <add>, %673, %cst_417 [0] : vector<16x128xf32> to vector<128xf32>
    %675 = vector.shape_cast %674 : vector<128xf32> to vector<1x128xf32>
    %676 = arith.mulf %673, %668 : vector<16x128xf32>
    %cst_418 = arith.constant dense<0.000000e+00> : vector<128xf32>
    %677 = vector.multi_reduction <add>, %676, %cst_418 [0] : vector<16x128xf32> to vector<128xf32>
    %678 = vector.shape_cast %677 : vector<128xf32> to vector<1x128xf32>
    %679 = tpu.concatenate %675, %678 in 0 : vector<1x128xf32>, vector<1x128xf32> -> vector<2x128xf32>
    %c0_419 = arith.constant 0 : index
    %c0_420 = arith.constant 0 : index
    %680 = vector.load %arg8[%c0_419, %c0_420] : memref<128x8xf32, #tpu.memory_space<vmem>>, vector<128x8xf32>
    %cst_421 = arith.constant dense<0.000000e+00> : vector<2x8xf32>
    %681 = tpu.matmul %679, %680, %cst_421 {dimension_numbers = #tpu.dot_dimension_numbers<[1], [0], [0], [1], [0, 0, 1, 1], [], []>} : vector<2x128xf32>, vector<128x8xf32>, vector<2x8xf32> -> vector<2x8xf32>
    %682 = vector.extract_strided_slice %681 {offsets = [0, 0], sizes = [1, 8], strides = [1, 1]} : vector<2x8xf32> to vector<1x8xf32>
    %cst_422 = arith.constant 3.125000e-02 : f32
    %683 = vector.broadcast %cst_422 : f32 to vector<1x8xf32>
    %684 = arith.mulf %682, %683 : vector<1x8xf32>
    %685 = vector.extract_strided_slice %681 {offsets = [1, 0], sizes = [1, 8], strides = [1, 1]} : vector<2x8xf32> to vector<1x8xf32>
    %cst_423 = arith.constant 3.125000e-02 : f32
    %686 = vector.broadcast %cst_423 : f32 to vector<1x8xf32>
    %687 = arith.mulf %685, %686 : vector<1x8xf32>
    %688 = arith.mulf %684, %684 : vector<1x8xf32>
    %689 = arith.subf %687, %688 : vector<1x8xf32>
    %cst_424 = arith.constant 0.000000e+00 : f32
    %690 = vector.broadcast %cst_424 : f32 to vector<1x8xf32>
    %691 = arith.maximumf %689, %690 : vector<1x8xf32>
    %cst_425 = arith.constant 9.99999974E-6 : f32
    %692 = vector.broadcast %cst_425 : f32 to vector<1x8xf32>
    %693 = arith.addf %691, %692 : vector<1x8xf32>
    %694 = math.rsqrt %693 : vector<1x8xf32>
    %695 = arith.mulf %670, %694 : vector<1x8xf32>
    %696 = arith.mulf %684, %695 : vector<1x8xf32>
    %697 = arith.subf %672, %696 : vector<1x8xf32>
    %698 = tpu.concatenate %695, %697 in 0 : vector<1x8xf32>, vector<1x8xf32> -> vector<2x8xf32>
    %c0_426 = arith.constant 0 : index
    %c0_427 = arith.constant 0 : index
    %699 = vector.load %arg9[%c0_426, %c0_427] : memref<8x128xf32, #tpu.memory_space<vmem>>, vector<8x128xf32>
    %cst_428 = arith.constant dense<0.000000e+00> : vector<2x128xf32>
    %700 = tpu.matmul %698, %699, %cst_428 {dimension_numbers = #tpu.dot_dimension_numbers<[1], [0], [0], [1], [0, 0, 1, 1], [], []>} : vector<2x8xf32>, vector<8x128xf32>, vector<2x128xf32> -> vector<2x128xf32>
    %701 = vector.extract_strided_slice %700 {offsets = [0, 0], sizes = [1, 128], strides = [1, 1]} : vector<2x128xf32> to vector<1x128xf32>
    %702 = vector.broadcast %701 : vector<1x128xf32> to vector<16x128xf32>
    %703 = arith.mulf %668, %702 : vector<16x128xf32>
    %704 = vector.extract_strided_slice %700 {offsets = [1, 0], sizes = [1, 128], strides = [1, 1]} : vector<2x128xf32> to vector<1x128xf32>
    %705 = vector.broadcast %704 : vector<1x128xf32> to vector<16x128xf32>
    %706 = arith.addf %703, %705 : vector<16x128xf32>
    %707 = arith.addf %706, %609 : vector<16x128xf32>
    %cst_429 = arith.constant 0.000000e+00 : f32
    %708 = vector.broadcast %cst_429 : f32 to vector<16x128xf32>
    %709 = arith.maximumf %707, %708 : vector<16x128xf32>
    %710 = arith.mulf %709, %0 : vector<16x128xf32>
    %cst_430 = arith.constant 0.000000e+00 : f32
    %711 = vector.broadcast %cst_430 : f32 to vector<16x128xf32>
    %712 = arith.cmpf ogt, %0, %711 : vector<16x128xf32>
    %cst_431 = arith.constant 3.000000e+38 : f32
    %713 = vector.broadcast %cst_431 : f32 to vector<16x128xf32>
    %714 = arith.select %712, %710, %713 : vector<16x128xi1>, vector<16x128xf32>
    %cst_432 = arith.constant dense<0x7F800000> : vector<16xf32>
    %715 = vector.multi_reduction <minimumf>, %714, %cst_432 [1] : vector<16x128xf32> to vector<16xf32>
    %716 = vector.shape_cast %715 : vector<16xf32> to vector<16x1xf32>
    %cst_433 = arith.constant dense<0x7F800000> : vector<1xf32>
    %717 = vector.multi_reduction <minimumf>, %716, %cst_433 [0] : vector<16x1xf32> to vector<1xf32>
    %718 = vector.shape_cast %717 : vector<1xf32> to vector<1x1xf32>
    %cst_434 = arith.constant 0.000000e+00 : f32
    %719 = vector.broadcast %cst_434 : f32 to vector<16x128xf32>
    %720 = arith.cmpf ogt, %0, %719 : vector<16x128xf32>
    %cst_435 = arith.constant 0.000000e+00 : f32
    %cst_436 = arith.constant 3.000000e+38 : f32
    %721 = arith.subf %cst_435, %cst_436 : f32
    %722 = vector.broadcast %721 : f32 to vector<16x128xf32>
    %723 = arith.select %720, %710, %722 : vector<16x128xi1>, vector<16x128xf32>
    %cst_437 = arith.constant dense<0xFF800000> : vector<16xf32>
    %724 = vector.multi_reduction <maximumf>, %723, %cst_437 [1] : vector<16x128xf32> to vector<16xf32>
    %725 = vector.shape_cast %724 : vector<16xf32> to vector<16x1xf32>
    %cst_438 = arith.constant dense<0xFF800000> : vector<1xf32>
    %726 = vector.multi_reduction <maximumf>, %725, %cst_438 [0] : vector<16x1xf32> to vector<1xf32>
    %727 = vector.shape_cast %726 : vector<1xf32> to vector<1x1xf32>
    %728 = arith.subf %727, %718 : vector<1x1xf32>
    %cst_439 = arith.constant 9.99999974E-6 : f32
    %729 = vector.broadcast %cst_439 : f32 to vector<1x1xf32>
    %730 = arith.addf %728, %729 : vector<1x1xf32>
    %731 = tpu.reciprocal %730 {approx = true} : vector<1x1xf32> -> vector<1x1xf32>
    %732 = vector.broadcast %718 : vector<1x1xf32> to vector<16x128xf32>
    %733 = arith.subf %710, %732 : vector<16x128xf32>
    %734 = vector.broadcast %731 : vector<1x1xf32> to vector<16x128xf32>
    %735 = arith.mulf %733, %734 : vector<16x128xf32>
    %c0_440 = arith.constant 0 : index
    %c0_441 = arith.constant 0 : index
    %736 = vector.load %arg10[%c0_440, %c0_441] : memref<16x128xf32, #tpu.memory_space<vmem>>, vector<16x128xf32>
    tpu.vector_store %arg10[%c0_440, %c0_441], %735 {strides = array<i32>} : memref<16x128xf32, #tpu.memory_space<vmem>>, vector<16x128xf32>,
    return
  }
}

</mosaic_0001>

<llo_original>
// kernel: _lambda_.3
$region0: #{_lambda_.3}
  #allocation0 [shape = 'u32[]', space=smem, size = 0x4, offset = 0x4, fixed_abs, tag = 'smem constant byte address 0x4 - core index']
  #allocation1 [shape = 'u32[144,128]{1,0:T(1,128)}', space=vmem, size = 0x12000, scoped, tag = 'internal scratch']
  %s0 = inlined_call_operand.vmem [shape: bf16[16,216], index: 0, kind: input, shape index: {}]
  %s1 = inlined_call_operand.hbm [shape: bf16[216,128], index: 1, kind: input, shape index: {}]
  %s2 = inlined_call_operand.vmem [shape: f32[1,8], index: 2, kind: input, shape index: {}]
  %s3 = inlined_call_operand.vmem [shape: f32[1,8], index: 3, kind: input, shape index: {}]
  %s4 = inlined_call_operand.hbm [shape: f32[128,8], index: 4, kind: input, shape index: {}]
  %s5 = inlined_call_operand.vmem [shape: f32[8,128], index: 5, kind: input, shape index: {}]
  %s6 = inlined_call_operand.vmem [shape: f32[16,128], index: 6, kind: output, shape index: {}]
  %s7 = sld [smem:[#allocation0]]
  $region42: #{_lambda_.3} parent=0
    _
  %s9 = ssub.s32 1, %s7
  %s10 = scalar_select 0, %s9, %s7
  $region1: #{_lambda_.3} parent=0
    #allocation2 [shape = 'u8[55296]{0}', space=vmem, size = 0xd800, scoped, tag = 'input window, operand 1, single buffered']
    #allocation3 [shape = 's32[1]{0}', space=sflag, size = 0x4, scoped, tag = 'scoped memory for _lambda_.3']
    #allocation4 [shape = 'u8[65536]{0}', space=vmem, size = 0x10000, scoped, tag = 'input window, operand 4, single buffered']
    #allocation5 [shape = 's32[1]{0}', space=sflag, size = 0x4, scoped, tag = 'scoped memory for _lambda_.3']
    %11 = vsyncpa [#allocation3], 0
    %12 = vsyncpa [#allocation5], 0
    // Predicated region
    $region2: #{_lambda_.3} parent=1 // pred_check
      _
    $region3: #{_lambda_.3} parent=1 // pred_check_branch
      %14 = sbr.rel (0) target = $region5
    $region4: #{_lambda_.3} parent=1 // pred_region
      _
    $region5: #{_lambda_.3} parent=1 // pred_fallthru
      _
    // Predicated region
    $region6: #{_lambda_.3} parent=1 // pred_check
      _
    $region7: #{_lambda_.3} parent=1 // pred_check_branch
      %16 = sbr.rel (0) target = $region9
    $region8: #{_lambda_.3} parent=1 // pred_region
      %s18 = ssub.s32 1728, 1728
      %19 = vsyncadd [#allocation3], %s18
      %s20 = sshll.u32 [#allocation2], 4
      %s21 = int_to_ptr.vmem [resolvable:$true] %s20
      %26 = dma.hbm_to_vmem [thread:$0]  %s1, 1728, %s21, [#allocation3], 64, 64, 4
    $region9: #{_lambda_.3} parent=1 // pred_fallthru
      _
    // Predicated region
    $region10: #{_lambda_.3} parent=1 // pred_check
      _
    $region11: #{_lambda_.3} parent=1 // pred_check_branch
      %28 = sbr.rel (0) target = $region13
    $region12: #{_lambda_.3} parent=1 // pred_region
      _
    $region13: #{_lambda_.3} parent=1 // pred_fallthru
      _
    // Predicated region
    $region14: #{_lambda_.3} parent=1 // pred_check
      _
    $region15: #{_lambda_.3} parent=1 // pred_check_branch
      %30 = sbr.rel (0) target = $region17
    $region16: #{_lambda_.3} parent=1 // pred_region
      _
    $region17: #{_lambda_.3} parent=1 // pred_fallthru
      _
    // Predicated region
    $region18: #{_lambda_.3} parent=1 // pred_check
      _
    $region19: #{_lambda_.3} parent=1 // pred_check_branch
      %32 = sbr.rel (0) target = $region21
    $region20: #{_lambda_.3} parent=1 // pred_region
      %s34 = ssub.s32 2048, 2048
      %35 = vsyncadd [#allocation5], %s34
      %s36 = sshll.u32 [#allocation4], 4
      %s37 = int_to_ptr.vmem [resolvable:$true] %s36
      %42 = dma.hbm_to_vmem [thread:$0]  %s4, 2048, %s37, [#allocation5], 128, 128, 8
    $region21: #{_lambda_.3} parent=1 // pred_fallthru
      _
    // Predicated region
    $region22: #{_lambda_.3} parent=1 // pred_check
      _
    $region23: #{_lambda_.3} parent=1 // pred_check_branch
      %44 = sbr.rel (0) target = $region25
    $region24: #{_lambda_.3} parent=1 // pred_region
      _
    $region25: #{_lambda_.3} parent=1 // pred_fallthru
      _
    // Predicated region
    $region26: #{_lambda_.3} parent=1 // pred_check
      _
    $region27: #{_lambda_.3} parent=1 // pred_check_branch
      %46 = sbr.rel (0) target = $region29
    $region28: #{_lambda_.3} parent=1 // pred_region
      %47 = dma.done [#allocation3], 1728
    $region29: #{_lambda_.3} parent=1 // pred_fallthru
      _
    // Predicated region
    $region30: #{_lambda_.3} parent=1 // pred_check
      _
    $region31: #{_lambda_.3} parent=1 // pred_check_branch
      %49 = sbr.rel (0) target = $region33
    $region32: #{_lambda_.3} parent=1 // pred_region
      %50 = dma.done [#allocation5], 2048
    $region33: #{_lambda_.3} parent=1 // pred_fallthru
      _
    %v52 = vld [vmem:[%s0] sm:$0xff]
    %v53 = vld [vmem:[%s0 + $0x8] sm:$0xff]
    %v54 = vld [vmem:[#allocation2] sm:$0xf]
    %v55 = vld [vmem:[#allocation2 + $0x4] sm:$0xf]
    %v56 = vld [vmem:[#allocation2 + $0x8] sm:$0xf]
    %v57 = vld [vmem:[#allocation2 + $0xc] sm:$0xf]
    %v58 = vld [vmem:[#allocation2 + $0x10] sm:$0xf]
    %v59 = vld [vmem:[#allocation2 + $0x14] sm:$0xf]
    %v60 = vld [vmem:[#allocation2 + $0x18] sm:$0xf]
    %v61 = vld [vmem:[#allocation2 + $0x1c] sm:$0xf]
    %v62 = vld [vmem:[#allocation2 + $0x20] sm:$0xf]
    %v63 = vld [vmem:[#allocation2 + $0x24] sm:$0xf]
    %v64 = vld [vmem:[#allocation2 + $0x28] sm:$0xf]
    %v65 = vld [vmem:[#allocation2 + $0x2c] sm:$0xf]
    %v66 = vld [vmem:[#allocation2 + $0x30] sm:$0xf]
    %v67 = vld [vmem:[#allocation2 + $0x34] sm:$0xf]
    %v68 = vld [vmem:[#allocation2 + $0x38] sm:$0xf]
    %v69 = vld [vmem:[#allocation2 + $0x3c] sm:$0xf]
    %v70 = vld [vmem:[#allocation2 + $0x40] sm:$0xf]
    %v71 = vld [vmem:[#allocation2 + $0x44] sm:$0xf]
    %v72 = vld [vmem:[#allocation2 + $0x48] sm:$0xf]
    %v73 = vld [vmem:[#allocation2 + $0x4c] sm:$0xf]
    %v74 = vld [vmem:[#allocation2 + $0x50] sm:$0xf]
    %v75 = vld [vmem:[#allocation2 + $0x54] sm:$0xf]
    %v76 = vld [vmem:[#allocation2 + $0x58] sm:$0xf]
    %v77 = vld [vmem:[#allocation2 + $0x5c] sm:$0xf]
    %v78 = vld [vmem:[#allocation2 + $0x60] sm:$0xf]
    %v79 = vld [vmem:[#allocation2 + $0x64] sm:$0xf]
    %v80 = vld [vmem:[#allocation2 + $0x68] sm:$0xf]
    %v83 = vunpack.c.l.b16 %v52
    %v84 = vunpack.c.h.b16 %v52
    %v85 = vunpack.c.l.b16 %v53
    %v86 = vunpack.c.h.b16 %v53
    %v87 = vpack.c.b16 %v85, %v83
    %v88 = vpack.c.b16 %v86, %v84
    %v117 = vunpack.c.l.b16 %v54
    %v118 = vunpack.c.l.b16 %v55
    %v119 = vunpack.c.l.b16 %v56
    %v120 = vunpack.c.l.b16 %v57
    %v121 = vunpack.c.l.b16 %v58
    %v122 = vunpack.c.l.b16 %v59
    %v123 = vunpack.c.l.b16 %v60
    %v124 = vunpack.c.l.b16 %v61
    %v125 = vunpack.c.l.b16 %v62
    %v126 = vunpack.c.l.b16 %v63
    %v127 = vunpack.c.l.b16 %v64
    %v128 = vunpack.c.l.b16 %v65
    %v129 = vunpack.c.l.b16 %v66
    %v130 = vunpack.c.l.b16 %v67
    %v131 = vunpack.c.l.b16 %v68
    %v132 = vunpack.c.l.b16 %v69
    %v133 = vunpack.c.l.b16 %v70
    %v134 = vunpack.c.l.b16 %v71
    %v135 = vunpack.c.l.b16 %v72
    %v136 = vunpack.c.l.b16 %v73
    %v137 = vunpack.c.l.b16 %v74
    %v138 = vunpack.c.l.b16 %v75
    %v139 = vunpack.c.l.b16 %v76
    %v140 = vunpack.c.l.b16 %v77
    %v141 = vunpack.c.l.b16 %v78
    %v142 = vunpack.c.l.b16 %v79
    %v143 = vunpack.c.l.b16 %v80
    %v144 = vpack.c.b16 %v118, %v117
    %v145 = vpack.c.b16 %v120, %v119
    %v146 = vpack.c.b16 %v122, %v121
    %v147 = vpack.c.b16 %v124, %v123
    %v148 = vpack.c.b16 %v126, %v125
    %v149 = vpack.c.b16 %v128, %v127
    %v150 = vpack.c.b16 %v130, %v129
    %v151 = vpack.c.b16 %v132, %v131
    %v152 = vpack.c.b16 %v134, %v133
    %v153 = vpack.c.b16 %v136, %v135
    %v154 = vpack.c.b16 %v138, %v137
    %v155 = vpack.c.b16 %v140, %v139
    %v156 = vpack.c.b16 %v142, %v141
    %v157 = vpack.c.b16 %v143, %v143
    %vm171 = vcmask 719872
    %v173 = vsel %vm171, %v88, 0
    %vm175 = vcmask 1043456
    %v177 = vsel %vm175, %v157, 0
    %179 = vmatprep.subr.bf16.mxu0 0
    %180 = vmatpush1.bf16.msra.mxu0 %v151
    %181 = vmatprep.subr.bf16.mxu0 0
    %182 = vmatpush1.bf16.msra.mxu0 %v150
    %183 = vmatprep.subr.bf16.mxu0 0
    %184 = vmatpush1.bf16.msra.mxu0 %v149
    %185 = vmatprep.subr.bf16.mxu0 0
    %186 = vmatpush1.bf16.msra.mxu0 %v148
    %187 = vmatprep.subr.bf16.mxu0 0
    %188 = vmatpush1.bf16.msra.mxu0 %v147
    %189 = vmatprep.subr.bf16.mxu0 0
    %190 = vmatpush1.bf16.msra.mxu0 %v146
    %191 = vmatprep.subr.bf16.mxu0 0
    %192 = vmatpush1.bf16.msra.mxu0 %v145
    %193 = vmatprep.subr.bf16.mxu0 0
    %194 = vmatpush1.bf16.msra.mxu0 %v144
    %195 = vmatprep.subr.bf16.mxu0 0
    %196 = vmatpush2.bf16.msra.mxu0 0
    %197 = vmatprep.subr.bf16.mxu0 0
    %198 = vmatpush2.bf16.msra.mxu0 0
    %199 = vmatprep.subr.bf16.mxu0 0
    %200 = vmatpush2.bf16.msra.mxu0 %v177
    %201 = vmatprep.subr.bf16.mxu0 0
    %202 = vmatpush2.bf16.msra.mxu0 %v156
    %203 = vmatprep.subr.bf16.mxu0 0
    %204 = vmatpush2.bf16.msra.mxu0 %v155
    %205 = vmatprep.subr.bf16.mxu0 0
    %206 = vmatpush2.bf16.msra.mxu0 %v154
    %207 = vmatprep.subr.bf16.mxu0 0
    %208 = vmatpush2.bf16.msra.mxu0 %v153
    %209 = vmatprep.subr.bf16.mxu0 0
    %210 = vmatpush2.bf16.msra.mxu0 %v152
    %211 = vmatprep.mubr.bf16.mxu0 %v173
    %212 = vmatmul.mubr.bf16.gmra.mxu0 %v87
    %v213 = vpop.f32.mrf.mxu0
    %v214 = vadd.f32 0.0, %v213
    %v215 = vpop.f32.mrf.mxu0
    %v216 = vpop.f32.mrf.mxu0
    %v217 = vadd.f32 0.0, %v216
    %v218 = vpop.f32.mrf.mxu0
    %219 = vdwg.mxu0
    %v220 = vadd.f32 %v214, %v217
    %v221 = vrot.slane %v220, 4
    %v222 = vadd.f32 %v220, %v221
    %v223 = vrot.slane %v222, 2
    %v224 = vadd.f32 %v222, %v223
    %v225 = vrot.slane %v224, 1
    %v226 = vadd.f32 %v224, %v225
    %v227 = vmul.f32 %v214, %v214
    %v228 = vmul.f32 %v217, %v217
    %v229 = vadd.f32 %v227, %v228
    %v230 = vrot.slane %v229, 4
    %v231 = vadd.f32 %v229, %v230
    %v232 = vrot.slane %v231, 2
    %v233 = vadd.f32 %v231, %v232
    %v234 = vrot.slane %v233, 1
    %v235 = vadd.f32 %v233, %v234
    %vm236 = vcmask 1040384
    %v237 = vsel %vm236, %v226, %v235
    %v238 = vld [vmem:[#allocation4] sm:$0xff]
    %v239 = vld [vmem:[#allocation4 + $0x8] sm:$0xff]
    %v240 = vld [vmem:[#allocation4 + $0x10] sm:$0xff]
    %v241 = vld [vmem:[#allocation4 + $0x18] sm:$0xff]
    %v242 = vld [vmem:[#allocation4 + $0x20] sm:$0xff]
    %v243 = vld [vmem:[#allocation4 + $0x28] sm:$0xff]
    %v244 = vld [vmem:[#allocation4 + $0x30] sm:$0xff]
    %v245 = vld [vmem:[#allocation4 + $0x38] sm:$0xff]
    %v246 = vld [vmem:[#allocation4 + $0x40] sm:$0xff]
    %v247 = vld [vmem:[#allocation4 + $0x48] sm:$0xff]
    %v248 = vld [vmem:[#allocation4 + $0x50] sm:$0xff]
    %v249 = vld [vmem:[#allocation4 + $0x58] sm:$0xff]
    %v250 = vld [vmem:[#allocation4 + $0x60] sm:$0xff]
    %v251 = vld [vmem:[#allocation4 + $0x68] sm:$0xff]
    %v252 = vld [vmem:[#allocation4 + $0x70] sm:$0xff]
    %v253 = vld [vmem:[#allocation4 + $0x78] sm:$0xff]
    %254 = vmatprep.subr.mxu0 0.0
    %255 = vmatpush1.msra.mxu0 %v253
    %256 = vmatprep.subr.mxu0 0.0
    %257 = vmatpush1.msra.mxu0 %v252
    %258 = vmatprep.subr.mxu0 0.0
    %259 = vmatpush1.msra.mxu0 %v251
    %260 = vmatprep.subr.mxu0 0.0
    %261 = vmatpush1.msra.mxu0 %v250
    %262 = vmatprep.subr.mxu0 0.0
    %263 = vmatpush1.msra.mxu0 %v249
    %264 = vmatprep.subr.mxu0 0.0
    %265 = vmatpush1.msra.mxu0 %v248
    %266 = vmatprep.subr.mxu0 0.0
    %267 = vmatpush1.msra.mxu0 %v247
    %268 = vmatprep.subr.mxu0 0.0
    %269 = vmatpush1.msra.mxu0 %v246
    %270 = vmatprep.subr.mxu0 0.0
    %271 = vmatpush1.msra.mxu0 %v245
    %272 = vmatprep.subr.mxu0 0.0
    %273 = vmatpush1.msra.mxu0 %v244
    %274 = vmatprep.subr.mxu0 0.0
    %275 = vmatpush1.msra.mxu0 %v243
    %276 = vmatprep.subr.mxu0 0.0
    %277 = vmatpush1.msra.mxu0 %v242
    %278 = vmatprep.subr.mxu0 0.0
    %279 = vmatpush1.msra.mxu0 %v241
    %280 = vmatprep.subr.mxu0 0.0
    %281 = vmatpush1.msra.mxu0 %v240
    %282 = vmatprep.subr.mxu0 0.0
    %283 = vmatpush1.msra.mxu0 %v239
    %284 = vmatprep.subr.mxu0 0.0
    %285 = vmatpush1.msra.mxu0 %v238
    %286 = vmatprep.subr.mxu0 0.0
    %287 = vmatpush2.msra.mxu0 0.0
    %288 = vmatprep.subr.mxu0 0.0
    %289 = vmatpush2.msra.mxu0 0.0
    %290 = vmatprep.subr.mxu0 0.0
    %291 = vmatpush2.msra.mxu0 0.0
    %292 = vmatprep.subr.mxu0 0.0
    %293 = vmatpush2.msra.mxu0 0.0
    %294 = vmatprep.subr.mxu0 0.0
    %295 = vmatpush2.msra.mxu0 0.0
    %296 = vmatprep.subr.mxu0 0.0
    %297 = vmatpush2.msra.mxu0 0.0
    %298 = vmatprep.subr.mxu0 0.0
    %299 = vmatpush2.msra.mxu0 0.0
    %300 = vmatprep.subr.mxu0 0.0
    %301 = vmatpush2.msra.mxu0 0.0
    %302 = vmatprep.subr.mxu0 0.0
    %303 = vmatpush2.msra.mxu0 0.0
    %304 = vmatprep.subr.mxu0 0.0
    %305 = vmatpush2.msra.mxu0 0.0
    %306 = vmatprep.subr.mxu0 0.0
    %307 = vmatpush2.msra.mxu0 0.0
    %308 = vmatprep.subr.mxu0 0.0
    %309 = vmatpush2.msra.mxu0 0.0
    %310 = vmatprep.subr.mxu0 0.0
    %311 = vmatpush2.msra.mxu0 0.0
    %312 = vmatprep.subr.mxu0 0.0
    %313 = vmatpush2.msra.mxu0 0.0
    %314 = vmatprep.subr.mxu0 0.0
    %315 = vmatpush2.msra.mxu0 0.0
    %316 = vmatprep.subr.mxu0 0.0
    %317 = vmatpush2.msra.mxu0 0.0
    %318 = vmatprep.mubr.f32.mxu0 0.0
    %319 = vmatmul.mubr.f32.gmra.mxu0 %v237
    %v320 = vpop.f32.mrf.mxu0
    %v321 = vadd.f32 0.0, %v320
    %v322 = vpop.f32.mrf.mxu0
    %323 = vdwg.mxu0
    %v324 = vmul.f32 %v321, 0.0078125
    %v325 = vmul.f32 %v324, %v324
    %v327 = vrot.slane %v325, 7
    %v329 = vsub.f32 %v324, %v327
    %v330 = vmax.f32 %v329, 0.0
    %v331 = vld [vmem:[%s2] sm:$0x1]
    %v332 = vadd.f32 %v330, 1e-05
    %v333 = vrsqrt.pop %v332
    %v336 = vunpack.c.l.s4 1966171168
    %v337 = vunpack.c.0.s8 %v336
    %v338 = vlaneseq
    %v339 = vshrl.u32 %v338, 7
    %v340 = vsub.s32 %v337, %v339
    %v341 = vrot.slane %v333, %v340
    %v342 = vcombine.high %v341, %v341
    %v344 = vunpack.c.l.s4 1966171168
    %v345 = vunpack.c.0.s8 %v344
    %v346 = vlaneseq
    %v347 = vshrl.u32 %v346, 7
    %v348 = vsub.s32 %v345, %v347
    %v349 = vrot.slane %v342, %v348
    %v351 = vmul.f32 %v331, %v349
    %v352 = vld [vmem:[%s3] sm:$0x1]
    %v353 = vmul.f32 %v324, %v351
    %v354 = vsub.f32 %v352, %v353
    %v356 = vlaneseq
    %v357 = vshrl.u32 %v356, 7
    %v358 = vsub.s32 0, %v357
    %v359 = vrot.slane %v354, %v358
    %v361 = vsel %vm236, %v351, %v359
    %v362 = vld [vmem:[%s5] sm:$0xff]
    %vm363 = vcmask 64512
    %v365 = vsel %vm363, %v361, 0
    %367 = vmatprep.subr.mxu0 0.0
    %368 = vmatpush1.msra.mxu0 0.0
    %369 = vmatprep.subr.mxu0 0.0
    %370 = vmatpush1.msra.mxu0 0.0
    %371 = vmatprep.subr.mxu0 0.0
    %372 = vmatpush1.msra.mxu0 0.0
    %373 = vmatprep.subr.mxu0 0.0
    %374 = vmatpush1.msra.mxu0 0.0
    %375 = vmatprep.subr.mxu0 0.0
    %376 = vmatpush1.msra.mxu0 0.0
    %377 = vmatprep.subr.mxu0 0.0
    %378 = vmatpush1.msra.mxu0 0.0
    %379 = vmatprep.subr.mxu0 0.0
    %380 = vmatpush1.msra.mxu0 0.0
    %381 = vmatprep.subr.mxu0 0.0
    %382 = vmatpush1.msra.mxu0 0.0
    %383 = vmatprep.subr.mxu0 0.0
    %384 = vmatpush1.msra.mxu0 0.0
    %385 = vmatprep.subr.mxu0 0.0
    %386 = vmatpush1.msra.mxu0 0.0
    %387 = vmatprep.subr.mxu0 0.0
    %388 = vmatpush1.msra.mxu0 0.0
    %389 = vmatprep.subr.mxu0 0.0
    %390 = vmatpush1.msra.mxu0 0.0
    %391 = vmatprep.subr.mxu0 0.0
    %392 = vmatpush1.msra.mxu0 0.0
    %393 = vmatprep.subr.mxu0 0.0
    %394 = vmatpush1.msra.mxu0 0.0
    %395 = vmatprep.subr.mxu0 0.0
    %396 = vmatpush1.msra.mxu0 0.0
    %397 = vmatprep.subr.mxu0 0.0
    %398 = vmatpush1.msra.mxu0 %v362
    %399 = vmatprep.subr.mxu0 0.0
    %400 = vmatpush2.msra.mxu0 0.0
    %401 = vmatprep.subr.mxu0 0.0
    %402 = vmatpush2.msra.mxu0 0.0
    %403 = vmatprep.subr.mxu0 0.0
    %404 = vmatpush2.msra.mxu0 0.0
    %405 = vmatprep.subr.mxu0 0.0
    %406 = vmatpush2.msra.mxu0 0.0
    %407 = vmatprep.subr.mxu0 0.0
    %408 = vmatpush2.msra.mxu0 0.0
    %409 = vmatprep.subr.mxu0 0.0
    %410 = vmatpush2.msra.mxu0 0.0
    %411 = vmatprep.subr.mxu0 0.0
    %412 = vmatpush2.msra.mxu0 0.0
    %413 = vmatprep.subr.mxu0 0.0
    %414 = vmatpush2.msra.mxu0 0.0
    %415 = vmatprep.subr.mxu0 0.0
    %416 = vmatpush2.msra.mxu0 0.0
    %417 = vmatprep.subr.mxu0 0.0
    %418 = vmatpush2.msra.mxu0 0.0
    %419 = vmatprep.subr.mxu0 0.0
    %420 = vmatpush2.msra.mxu0 0.0
    %421 = vmatprep.subr.mxu0 0.0
    %422 = vmatpush2.msra.mxu0 0.0
    %423 = vmatprep.subr.mxu0 0.0
    %424 = vmatpush2.msra.mxu0 0.0
    %425 = vmatprep.subr.mxu0 0.0
    %426 = vmatpush2.msra.mxu0 0.0
    %427 = vmatprep.subr.mxu0 0.0
    %428 = vmatpush2.msra.mxu0 0.0
    %429 = vmatprep.subr.mxu0 0.0
    %430 = vmatpush2.msra.mxu0 0.0
    %431 = vmatprep.mubr.f32.mxu0 0.0
    %432 = vmatmul.mubr.f32.gmra.mxu0 %v365
    %v433 = vpop.f32.mrf.mxu0
    %v434 = vadd.f32 0.0, %v433
    %v435 = vpop.f32.mrf.mxu0
    %436 = vdwg.mxu0
    %v437 = vlaneseq
    %v438 = vshrl.u32 %v437, 7
    %v439 = vsub.s32 0, %v438
    %v440 = vrot.slane %v434, %v439
    %v441 = vmul.f32 %v214, %v440
    %v442 = vmul.f32 %v217, %v440
    %v443 = vlaneseq
    %v444 = vshrl.u32 %v443, 7
    %v445 = vsub.s32 1, %v444
    %v446 = vrot.slane %v434, %v445
    %v447 = vadd.f32 %v441, %v446
    %v448 = vadd.f32 %v442, %v446
    %v449 = vmax.f32 %v447, 0.0
    %v450 = vmax.f32 %v448, 0.0
    %451 = vst [vmem:[%s6] sm:$0xff] %v449
    %452 = vst [vmem:[%s6 + $0x8] sm:$0xff] %v450
    // Predicated region
    $region34: #{_lambda_.3} parent=1 // pred_check
      _
    $region35: #{_lambda_.3} parent=1 // pred_check_branch
      %454 = sbr.rel (0) target = $region37
    $region36: #{_lambda_.3} parent=1 // pred_region
      _
    $region37: #{_lambda_.3} parent=1 // pred_fallthru
      _
    // Predicated region
    $region38: #{_lambda_.3} parent=1 // pred_check
      _
    $region39: #{_lambda_.3} parent=1 // pred_check_branch
      %456 = sbr.rel (0) target = $region41
    $region40: #{_lambda_.3} parent=1 // pred_region
      _
    $region41: #{_lambda_.3} parent=1 // pred_fallthru
      _
    %457 = vsyncpa [#allocation3], 1
    %458 = vsyncpa [#allocation5], 1

// kernel: _lambda_.4
$region0: #{_lambda_.4}
  #allocation0 [shape = 'u32[]', space=smem, size = 0x4, offset = 0x4, fixed_abs, tag = 'smem constant byte address 0x4 - core index']
  #allocation1 [shape = 'u32[144,128]{1,0:T(1,128)}', space=vmem, size = 0x12000, scoped, tag = 'internal scratch']
  %s0 = inlined_call_operand.vmem [shape: bf16[8,240], index: 0, kind: input, shape index: {}]
  %s1 = inlined_call_operand.hbm [shape: bf16[240,128], index: 1, kind: input, shape index: {}]
  %s2 = inlined_call_operand.vmem [shape: f32[1,8], index: 2, kind: input, shape index: {}]
  %s3 = inlined_call_operand.vmem [shape: f32[1,8], index: 3, kind: input, shape index: {}]
  %s4 = inlined_call_operand.hbm [shape: f32[128,8], index: 4, kind: input, shape index: {}]
  %s5 = inlined_call_operand.hbm [shape: f32[8,128], index: 5, kind: input, shape index: {}]
  %s6 = inlined_call_operand.vmem [shape: f32[8,128], index: 6, kind: output, shape index: {}]
  %s7 = sld [smem:[#allocation0]]
  $region46: #{_lambda_.4} parent=0
    _
  %s9 = ssub.s32 1, %s7
  %s10 = scalar_select 0, %s9, %s7
  $region1: #{_lambda_.4} parent=0
    #allocation2 [shape = 'u8[61440]{0}', space=vmem, size = 0xf000, scoped, tag = 'input window, operand 1, single buffered']
    #allocation3 [shape = 's32[1]{0}', space=sflag, size = 0x4, scoped, tag = 'scoped memory for _lambda_.4']
    #allocation4 [shape = 'u8[65536]{0}', space=vmem, size = 0x10000, scoped, tag = 'input window, operand 4, single buffered']
    #allocation5 [shape = 's32[1]{0}', space=sflag, size = 0x4, scoped, tag = 'scoped memory for _lambda_.4']
    #allocation6 [shape = 'u8[4096]{0}', space=vmem, size = 0x1000, scoped, tag = 'input window, operand 5, single buffered']
    %11 = vsyncpa [#allocation3], 0
    %12 = vsyncpa [#allocation5], 0
    // Predicated region
    $region2: #{_lambda_.4} parent=1 // pred_check
      _
    $region3: #{_lambda_.4} parent=1 // pred_check_branch
      %14 = sbr.rel (0) target = $region5
    $region4: #{_lambda_.4} parent=1 // pred_region
      _
    $region5: #{_lambda_.4} parent=1 // pred_fallthru
      _
    // Predicated region
    $region6: #{_lambda_.4} parent=1 // pred_check
      _
    $region7: #{_lambda_.4} parent=1 // pred_check_branch
      %16 = sbr.rel (0) target = $region9
    $region8: #{_lambda_.4} parent=1 // pred_region
      %s18 = ssub.s32 1920, 1920
      %19 = vsyncadd [#allocation3], %s18
      %s20 = sshll.u32 [#allocation2], 4
      %s21 = int_to_ptr.vmem [resolvable:$true] %s20
      %26 = dma.hbm_to_vmem [thread:$0]  %s1, 1920, %s21, [#allocation3], 64, 64, 4
    $region9: #{_lambda_.4} parent=1 // pred_fallthru
      _
    // Predicated region
    $region10: #{_lambda_.4} parent=1 // pred_check
      _
    $region11: #{_lambda_.4} parent=1 // pred_check_branch
      %28 = sbr.rel (0) target = $region13
    $region12: #{_lambda_.4} parent=1 // pred_region
      _
    $region13: #{_lambda_.4} parent=1 // pred_fallthru
      _
    // Predicated region
    $region14: #{_lambda_.4} parent=1 // pred_check
      _
    $region15: #{_lambda_.4} parent=1 // pred_check_branch
      %30 = sbr.rel (0) target = $region17
    $region16: #{_lambda_.4} parent=1 // pred_region
      _
    $region17: #{_lambda_.4} parent=1 // pred_fallthru
      _
    // Predicated region
    $region18: #{_lambda_.4} parent=1 // pred_check
      _
    $region19: #{_lambda_.4} parent=1 // pred_check_branch
      %32 = sbr.rel (0) target = $region21
    $region20: #{_lambda_.4} parent=1 // pred_region
      %s34 = ssub.s32 2048, 2048
      %35 = vsyncadd [#allocation5], %s34
      %s36 = sshll.u32 [#allocation4], 4
      %s37 = int_to_ptr.vmem [resolvable:$true] %s36
      %42 = dma.hbm_to_vmem [thread:$0]  %s4, 2048, %s37, [#allocation5], 128, 128, 8
    $region21: #{_lambda_.4} parent=1 // pred_fallthru
      _
    // Predicated region
    $region22: #{_lambda_.4} parent=1 // pred_check
      _
    $region23: #{_lambda_.4} parent=1 // pred_check_branch
      %44 = sbr.rel (0) target = $region25
    $region24: #{_lambda_.4} parent=1 // pred_region
      %s46 = ssub.s32 128, 128
      %47 = vsyncadd [#allocation5], %s46
      %s49 = sshll.u32 [#allocation6], 4
      %s50 = int_to_ptr.vmem [resolvable:$true] %s49
      %52 = dma.hbm_to_vmem [thread:$0]  %s5, 128, %s50, [#allocation5]
    $region25: #{_lambda_.4} parent=1 // pred_fallthru
      _
    // Predicated region
    $region26: #{_lambda_.4} parent=1 // pred_check
      _
    $region27: #{_lambda_.4} parent=1 // pred_check_branch
      %54 = sbr.rel (0) target = $region29
    $region28: #{_lambda_.4} parent=1 // pred_region
      %55 = dma.done [#allocation3], 1920
    $region29: #{_lambda_.4} parent=1 // pred_fallthru
      _
    // Predicated region
    $region30: #{_lambda_.4} parent=1 // pred_check
      _
    $region31: #{_lambda_.4} parent=1 // pred_check_branch
      %57 = sbr.rel (0) target = $region33
    $region32: #{_lambda_.4} parent=1 // pred_region
      %58 = dma.done [#allocation5], 2048
    $region33: #{_lambda_.4} parent=1 // pred_fallthru
      _
    // Predicated region
    $region34: #{_lambda_.4} parent=1 // pred_check
      _
    $region35: #{_lambda_.4} parent=1 // pred_check_branch
      %60 = sbr.rel (0) target = $region37
    $region36: #{_lambda_.4} parent=1 // pred_region
      %61 = dma.done [#allocation5], 128
    $region37: #{_lambda_.4} parent=1 // pred_fallthru
      _
    %v63 = vld [vmem:[%s0] sm:$0xff]
    %v64 = vld [vmem:[#allocation2] sm:$0xf]
    %v65 = vld [vmem:[#allocation2 + $0x4] sm:$0xf]
    %v66 = vld [vmem:[#allocation2 + $0x8] sm:$0xf]
    %v67 = vld [vmem:[#allocation2 + $0xc] sm:$0xf]
    %v68 = vld [vmem:[#allocation2 + $0x10] sm:$0xf]
    %v69 = vld [vmem:[#allocation2 + $0x14] sm:$0xf]
    %v70 = vld [vmem:[#allocation2 + $0x18] sm:$0xf]
    %v71 = vld [vmem:[#allocation2 + $0x1c] sm:$0xf]
    %v72 = vld [vmem:[#allocation2 + $0x20] sm:$0xf]
    %v73 = vld [vmem:[#allocation2 + $0x24] sm:$0xf]
    %v74 = vld [vmem:[#allocation2 + $0x28] sm:$0xf]
    %v75 = vld [vmem:[#allocation2 + $0x2c] sm:$0xf]
    %v76 = vld [vmem:[#allocation2 + $0x30] sm:$0xf]
    %v77 = vld [vmem:[#allocation2 + $0x34] sm:$0xf]
    %v78 = vld [vmem:[#allocation2 + $0x38] sm:$0xf]
    %v79 = vld [vmem:[#allocation2 + $0x3c] sm:$0xf]
    %v80 = vld [vmem:[#allocation2 + $0x40] sm:$0xf]
    %v81 = vld [vmem:[#allocation2 + $0x44] sm:$0xf]
    %v82 = vld [vmem:[#allocation2 + $0x48] sm:$0xf]
    %v83 = vld [vmem:[#allocation2 + $0x4c] sm:$0xf]
    %v84 = vld [vmem:[#allocation2 + $0x50] sm:$0xf]
    %v85 = vld [vmem:[#allocation2 + $0x54] sm:$0xf]
    %v86 = vld [vmem:[#allocation2 + $0x58] sm:$0xf]
    %v87 = vld [vmem:[#allocation2 + $0x5c] sm:$0xf]
    %v88 = vld [vmem:[#allocation2 + $0x60] sm:$0xf]
    %v89 = vld [vmem:[#allocation2 + $0x64] sm:$0xf]
    %v90 = vld [vmem:[#allocation2 + $0x68] sm:$0xf]
    %v91 = vld [vmem:[#allocation2 + $0x6c] sm:$0xf]
    %v92 = vld [vmem:[#allocation2 + $0x70] sm:$0xf]
    %v93 = vld [vmem:[#allocation2 + $0x74] sm:$0xf]
    %v95 = vunpack.c.l.b16 %v63
    %v96 = vunpack.c.h.b16 %v63
    %v97 = vpack.c.b16 %v95, %v95
    %v98 = vpack.c.b16 %v96, %v96
    %v130 = vunpack.c.l.b16 %v64
    %v131 = vunpack.c.l.b16 %v65
    %v132 = vunpack.c.l.b16 %v66
    %v133 = vunpack.c.l.b16 %v67
    %v134 = vunpack.c.l.b16 %v68
    %v135 = vunpack.c.l.b16 %v69
    %v136 = vunpack.c.l.b16 %v70
    %v137 = vunpack.c.l.b16 %v71
    %v138 = vunpack.c.l.b16 %v72
    %v139 = vunpack.c.l.b16 %v73
    %v140 = vunpack.c.l.b16 %v74
    %v141 = vunpack.c.l.b16 %v75
    %v142 = vunpack.c.l.b16 %v76
    %v143 = vunpack.c.l.b16 %v77
    %v144 = vunpack.c.l.b16 %v78
    %v145 = vunpack.c.l.b16 %v79
    %v146 = vunpack.c.l.b16 %v80
    %v147 = vunpack.c.l.b16 %v81
    %v148 = vunpack.c.l.b16 %v82
    %v149 = vunpack.c.l.b16 %v83
    %v150 = vunpack.c.l.b16 %v84
    %v151 = vunpack.c.l.b16 %v85
    %v152 = vunpack.c.l.b16 %v86
    %v153 = vunpack.c.l.b16 %v87
    %v154 = vunpack.c.l.b16 %v88
    %v155 = vunpack.c.l.b16 %v89
    %v156 = vunpack.c.l.b16 %v90
    %v157 = vunpack.c.l.b16 %v91
    %v158 = vunpack.c.l.b16 %v92
    %v159 = vunpack.c.l.b16 %v93
    %v160 = vpack.c.b16 %v131, %v130
    %v161 = vpack.c.b16 %v133, %v132
    %v162 = vpack.c.b16 %v135, %v134
    %v163 = vpack.c.b16 %v137, %v136
    %v164 = vpack.c.b16 %v139, %v138
    %v165 = vpack.c.b16 %v141, %v140
    %v166 = vpack.c.b16 %v143, %v142
    %v167 = vpack.c.b16 %v145, %v144
    %v168 = vpack.c.b16 %v147, %v146
    %v169 = vpack.c.b16 %v149, %v148
    %v170 = vpack.c.b16 %v151, %v150
    %v171 = vpack.c.b16 %v153, %v152
    %v172 = vpack.c.b16 %v155, %v154
    %v173 = vpack.c.b16 %v157, %v156
    %v174 = vpack.c.b16 %v159, %v158
    %vm190 = vcmask 916480
    %v192 = vsel %vm190, %v98, 0
    %194 = vmatprep.subr.bf16.mxu0 0
    %195 = vmatpush1.bf16.msra.mxu0 %v167
    %196 = vmatprep.subr.bf16.mxu0 0
    %197 = vmatpush1.bf16.msra.mxu0 %v166
    %198 = vmatprep.subr.bf16.mxu0 0
    %199 = vmatpush1.bf16.msra.mxu0 %v165
    %200 = vmatprep.subr.bf16.mxu0 0
    %201 = vmatpush1.bf16.msra.mxu0 %v164
    %202 = vmatprep.subr.bf16.mxu0 0
    %203 = vmatpush1.bf16.msra.mxu0 %v163
    %204 = vmatprep.subr.bf16.mxu0 0
    %205 = vmatpush1.bf16.msra.mxu0 %v162
    %206 = vmatprep.subr.bf16.mxu0 0
    %207 = vmatpush1.bf16.msra.mxu0 %v161
    %208 = vmatprep.subr.bf16.mxu0 0
    %209 = vmatpush1.bf16.msra.mxu0 %v160
    %210 = vmatprep.subr.bf16.mxu0 0
    %211 = vmatpush2.bf16.msra.mxu0 0
    %212 = vmatprep.subr.bf16.mxu0 0
    %213 = vmatpush2.bf16.msra.mxu0 %v174
    %214 = vmatprep.subr.bf16.mxu0 0
    %215 = vmatpush2.bf16.msra.mxu0 %v173
    %216 = vmatprep.subr.bf16.mxu0 0
    %217 = vmatpush2.bf16.msra.mxu0 %v172
    %218 = vmatprep.subr.bf16.mxu0 0
    %219 = vmatpush2.bf16.msra.mxu0 %v171
    %220 = vmatprep.subr.bf16.mxu0 0
    %221 = vmatpush2.bf16.msra.mxu0 %v170
    %222 = vmatprep.subr.bf16.mxu0 0
    %223 = vmatpush2.bf16.msra.mxu0 %v169
    %224 = vmatprep.subr.bf16.mxu0 0
    %225 = vmatpush2.bf16.msra.mxu0 %v168
    %226 = vmatprep.mubr.bf16.mxu0 %v192
    %227 = vmatmul.mubr.bf16.gmra.mxu0 %v97
    %v228 = vpop.f32.mrf.mxu0
    %v229 = vadd.f32 0.0, %v228
    %v230 = vpop.f32.mrf.mxu0
    %v231 = vpop.f32.mrf.mxu0
    %v232 = vpop.f32.mrf.mxu0
    %233 = vdwg.mxu0
    %v234 = vrot.slane %v229, 4
    %v235 = vadd.f32 %v229, %v234
    %v236 = vrot.slane %v235, 2
    %v237 = vadd.f32 %v235, %v236
    %v238 = vrot.slane %v237, 1
    %v239 = vadd.f32 %v237, %v238
    %v240 = vmul.f32 %v229, %v229
    %v241 = vrot.slane %v240, 4
    %v242 = vadd.f32 %v240, %v241
    %v243 = vrot.slane %v242, 2
    %v244 = vadd.f32 %v242, %v243
    %v245 = vrot.slane %v244, 1
    %v246 = vadd.f32 %v244, %v245
    %vm247 = vcmask 1040384
    %v248 = vsel %vm247, %v239, %v246
    %v249 = vld [vmem:[#allocation4] sm:$0xff]
    %v250 = vld [vmem:[#allocation4 + $0x8] sm:$0xff]
    %v251 = vld [vmem:[#allocation4 + $0x10] sm:$0xff]
    %v252 = vld [vmem:[#allocation4 + $0x18] sm:$0xff]
    %v253 = vld [vmem:[#allocation4 + $0x20] sm:$0xff]
    %v254 = vld [vmem:[#allocation4 + $0x28] sm:$0xff]
    %v255 = vld [vmem:[#allocation4 + $0x30] sm:$0xff]
    %v256 = vld [vmem:[#allocation4 + $0x38] sm:$0xff]
    %v257 = vld [vmem:[#allocation4 + $0x40] sm:$0xff]
    %v258 = vld [vmem:[#allocation4 + $0x48] sm:$0xff]
    %v259 = vld [vmem:[#allocation4 + $0x50] sm:$0xff]
    %v260 = vld [vmem:[#allocation4 + $0x58] sm:$0xff]
    %v261 = vld [vmem:[#allocation4 + $0x60] sm:$0xff]
    %v262 = vld [vmem:[#allocation4 + $0x68] sm:$0xff]
    %v263 = vld [vmem:[#allocation4 + $0x70] sm:$0xff]
    %v264 = vld [vmem:[#allocation4 + $0x78] sm:$0xff]
    %265 = vmatprep.subr.mxu0 0.0
    %266 = vmatpush1.msra.mxu0 %v264
    %267 = vmatprep.subr.mxu0 0.0
    %268 = vmatpush1.msra.mxu0 %v263
    %269 = vmatprep.subr.mxu0 0.0
    %270 = vmatpush1.msra.mxu0 %v262
    %271 = vmatprep.subr.mxu0 0.0
    %272 = vmatpush1.msra.mxu0 %v261
    %273 = vmatprep.subr.mxu0 0.0
    %274 = vmatpush1.msra.mxu0 %v260
    %275 = vmatprep.subr.mxu0 0.0
    %276 = vmatpush1.msra.mxu0 %v259
    %277 = vmatprep.subr.mxu0 0.0
    %278 = vmatpush1.msra.mxu0 %v258
    %279 = vmatprep.subr.mxu0 0.0
    %280 = vmatpush1.msra.mxu0 %v257
    %281 = vmatprep.subr.mxu0 0.0
    %282 = vmatpush1.msra.mxu0 %v256
    %283 = vmatprep.subr.mxu0 0.0
    %284 = vmatpush1.msra.mxu0 %v255
    %285 = vmatprep.subr.mxu0 0.0
    %286 = vmatpush1.msra.mxu0 %v254
    %287 = vmatprep.subr.mxu0 0.0
    %288 = vmatpush1.msra.mxu0 %v253
    %289 = vmatprep.subr.mxu0 0.0
    %290 = vmatpush1.msra.mxu0 %v252
    %291 = vmatprep.subr.mxu0 0.0
    %292 = vmatpush1.msra.mxu0 %v251
    %293 = vmatprep.subr.mxu0 0.0
    %294 = vmatpush1.msra.mxu0 %v250
    %295 = vmatprep.subr.mxu0 0.0
    %296 = vmatpush1.msra.mxu0 %v249
    %297 = vmatprep.subr.mxu0 0.0
    %298 = vmatpush2.msra.mxu0 0.0
    %299 = vmatprep.subr.mxu0 0.0
    %300 = vmatpush2.msra.mxu0 0.0
    %301 = vmatprep.subr.mxu0 0.0
    %302 = vmatpush2.msra.mxu0 0.0
    %303 = vmatprep.subr.mxu0 0.0
    %304 = vmatpush2.msra.mxu0 0.0
    %305 = vmatprep.subr.mxu0 0.0
    %306 = vmatpush2.msra.mxu0 0.0
    %307 = vmatprep.subr.mxu0 0.0
    %308 = vmatpush2.msra.mxu0 0.0
    %309 = vmatprep.subr.mxu0 0.0
    %310 = vmatpush2.msra.mxu0 0.0
    %311 = vmatprep.subr.mxu0 0.0
    %312 = vmatpush2.msra.mxu0 0.0
    %313 = vmatprep.subr.mxu0 0.0
    %314 = vmatpush2.msra.mxu0 0.0
    %315 = vmatprep.subr.mxu0 0.0
    %316 = vmatpush2.msra.mxu0 0.0
    %317 = vmatprep.subr.mxu0 0.0
    %318 = vmatpush2.msra.mxu0 0.0
    %319 = vmatprep.subr.mxu0 0.0
    %320 = vmatpush2.msra.mxu0 0.0
    %321 = vmatprep.subr.mxu0 0.0
    %322 = vmatpush2.msra.mxu0 0.0
    %323 = vmatprep.subr.mxu0 0.0
    %324 = vmatpush2.msra.mxu0 0.0
    %325 = vmatprep.subr.mxu0 0.0
    %326 = vmatpush2.msra.mxu0 0.0
    %327 = vmatprep.subr.mxu0 0.0
    %328 = vmatpush2.msra.mxu0 0.0
    %329 = vmatprep.mubr.f32.mxu0 0.0
    %330 = vmatmul.mubr.f32.gmra.mxu0 %v248
    %v331 = vpop.f32.mrf.mxu0
    %v332 = vadd.f32 0.0, %v331
    %v333 = vpop.f32.mrf.mxu0
    %334 = vdwg.mxu0
    %v335 = vmul.f32 %v332, 0.03125
    %v336 = vmul.f32 %v335, %v335
    %v338 = vrot.slane %v336, 7
    %v340 = vsub.f32 %v335, %v338
    %v341 = vmax.f32 %v340, 0.0
    %v342 = vld [vmem:[%s2] sm:$0x1]
    %v343 = vadd.f32 %v341, 1e-05
    %v344 = vrsqrt.pop %v343
    %v347 = vunpack.c.l.s4 1966171168
    %v348 = vunpack.c.0.s8 %v347
    %v349 = vlaneseq
    %v350 = vshrl.u32 %v349, 7
    %v351 = vsub.s32 %v348, %v350
    %v352 = vrot.slane %v344, %v351
    %v353 = vcombine.high %v352, %v352
    %v355 = vunpack.c.l.s4 1966171168
    %v356 = vunpack.c.0.s8 %v355
    %v357 = vlaneseq
    %v358 = vshrl.u32 %v357, 7
    %v359 = vsub.s32 %v356, %v358
    %v360 = vrot.slane %v353, %v359
    %v362 = vmul.f32 %v342, %v360
    %v363 = vld [vmem:[%s3] sm:$0x1]
    %v364 = vmul.f32 %v335, %v362
    %v365 = vsub.f32 %v363, %v364
    %v367 = vlaneseq
    %v368 = vshrl.u32 %v367, 7
    %v369 = vsub.s32 0, %v368
    %v370 = vrot.slane %v365, %v369
    %v372 = vsel %vm247, %v362, %v370
    %v373 = vld [vmem:[#allocation6] sm:$0xff]
    %vm374 = vcmask 64512
    %v376 = vsel %vm374, %v372, 0
    %378 = vmatprep.subr.mxu0 0.0
    %379 = vmatpush1.msra.mxu0 0.0
    %380 = vmatprep.subr.mxu0 0.0
    %381 = vmatpush1.msra.mxu0 0.0
    %382 = vmatprep.subr.mxu0 0.0
    %383 = vmatpush1.msra.mxu0 0.0
    %384 = vmatprep.subr.mxu0 0.0
    %385 = vmatpush1.msra.mxu0 0.0
    %386 = vmatprep.subr.mxu0 0.0
    %387 = vmatpush1.msra.mxu0 0.0
    %388 = vmatprep.subr.mxu0 0.0
    %389 = vmatpush1.msra.mxu0 0.0
    %390 = vmatprep.subr.mxu0 0.0
    %391 = vmatpush1.msra.mxu0 0.0
    %392 = vmatprep.subr.mxu0 0.0
    %393 = vmatpush1.msra.mxu0 0.0
    %394 = vmatprep.subr.mxu0 0.0
    %395 = vmatpush1.msra.mxu0 0.0
    %396 = vmatprep.subr.mxu0 0.0
    %397 = vmatpush1.msra.mxu0 0.0
    %398 = vmatprep.subr.mxu0 0.0
    %399 = vmatpush1.msra.mxu0 0.0
    %400 = vmatprep.subr.mxu0 0.0
    %401 = vmatpush1.msra.mxu0 0.0
    %402 = vmatprep.subr.mxu0 0.0
    %403 = vmatpush1.msra.mxu0 0.0
    %404 = vmatprep.subr.mxu0 0.0
    %405 = vmatpush1.msra.mxu0 0.0
    %406 = vmatprep.subr.mxu0 0.0
    %407 = vmatpush1.msra.mxu0 0.0
    %408 = vmatprep.subr.mxu0 0.0
    %409 = vmatpush1.msra.mxu0 %v373
    %410 = vmatprep.subr.mxu0 0.0
    %411 = vmatpush2.msra.mxu0 0.0
    %412 = vmatprep.subr.mxu0 0.0
    %413 = vmatpush2.msra.mxu0 0.0
    %414 = vmatprep.subr.mxu0 0.0
    %415 = vmatpush2.msra.mxu0 0.0
    %416 = vmatprep.subr.mxu0 0.0
    %417 = vmatpush2.msra.mxu0 0.0
    %418 = vmatprep.subr.mxu0 0.0
    %419 = vmatpush2.msra.mxu0 0.0
    %420 = vmatprep.subr.mxu0 0.0
    %421 = vmatpush2.msra.mxu0 0.0
    %422 = vmatprep.subr.mxu0 0.0
    %423 = vmatpush2.msra.mxu0 0.0
    %424 = vmatprep.subr.mxu0 0.0
    %425 = vmatpush2.msra.mxu0 0.0
    %426 = vmatprep.subr.mxu0 0.0
    %427 = vmatpush2.msra.mxu0 0.0
    %428 = vmatprep.subr.mxu0 0.0
    %429 = vmatpush2.msra.mxu0 0.0
    %430 = vmatprep.subr.mxu0 0.0
    %431 = vmatpush2.msra.mxu0 0.0
    %432 = vmatprep.subr.mxu0 0.0
    %433 = vmatpush2.msra.mxu0 0.0
    %434 = vmatprep.subr.mxu0 0.0
    %435 = vmatpush2.msra.mxu0 0.0
    %436 = vmatprep.subr.mxu0 0.0
    %437 = vmatpush2.msra.mxu0 0.0
    %438 = vmatprep.subr.mxu0 0.0
    %439 = vmatpush2.msra.mxu0 0.0
    %440 = vmatprep.subr.mxu0 0.0
    %441 = vmatpush2.msra.mxu0 0.0
    %442 = vmatprep.mubr.f32.mxu0 0.0
    %443 = vmatmul.mubr.f32.gmra.mxu0 %v376
    %v444 = vpop.f32.mrf.mxu0
    %v445 = vadd.f32 0.0, %v444
    %v446 = vpop.f32.mrf.mxu0
    %447 = vdwg.mxu0
    %v448 = vlaneseq
    %v449 = vshrl.u32 %v448, 7
    %v450 = vsub.s32 0, %v449
    %v451 = vrot.slane %v445, %v450
    %v452 = vmul.f32 %v229, %v451
    %v453 = vlaneseq
    %v454 = vshrl.u32 %v453, 7
    %v455 = vsub.s32 1, %v454
    %v456 = vrot.slane %v445, %v455
    %v457 = vadd.f32 %v452, %v456
    %v458 = vmax.f32 %v457, 0.0
    %459 = vst [vmem:[%s6] sm:$0xff] %v458
    // Predicated region
    $region38: #{_lambda_.4} parent=1 // pred_check
      _
    $region39: #{_lambda_.4} parent=1 // pred_check_branch
      %461 = sbr.rel (0) target = $region41
    $region40: #{_lambda_.4} parent=1 // pred_region
      _
    $region41: #{_lambda_.4} parent=1 // pred_fallthru
      _
    // Predicated region
    $region42: #{_lambda_.4} parent=1 // pred_check
      _
    $region43: #{_lambda_.4} parent=1 // pred_check_branch
      %463 = sbr.rel (0) target = $region45
    $region44: #{_lambda_.4} parent=1 // pred_region
      _
    $region45: #{_lambda_.4} parent=1 // pred_fallthru
      _
    %464 = vsyncpa [#allocation3], 1
    %465 = vsyncpa [#allocation5], 1

// kernel: _lambda_.5
$region0: #{_lambda_.5}
  #allocation0 [shape = 'u32[]', space=smem, size = 0x4, offset = 0x4, fixed_abs, tag = 'smem constant byte address 0x4 - core index']
  #allocation1 [shape = 'u32[144,128]{1,0:T(1,128)}', space=vmem, size = 0x12000, scoped, tag = 'internal scratch']
  #allocation2 [shape = 'bf16[32,128]{1,0:T(8,128)(2,1)}', space=vmem, size = 0x2000, scoped, tag = 'scratch operand']
  %s0 = inlined_call_operand.vmem [shape: f32[16,128], index: 0, kind: input, shape index: {}]
  %s1 = inlined_call_operand.vmem [shape: f32[16,128], index: 1, kind: input, shape index: {}]
  %s2 = inlined_call_operand.vmem [shape: bf16[7,384,128], index: 2, kind: input, shape index: {}]
  %s3 = inlined_call_operand.vmem [shape: f32[7,1,8], index: 3, kind: input, shape index: {}, may-alias: {3,6}]
  %s4 = inlined_call_operand.vmem [shape: f32[7,1,8], index: 4, kind: input, shape index: {}, may-alias: {4,7}]
  %s5 = inlined_call_operand.vmem [shape: bf16[7,384,128], index: 5, kind: input, shape index: {}]
  %s6 = inlined_call_operand.vmem [shape: f32[7,1,8], index: 6, kind: input, shape index: {}, may-alias: {3,6}]
  %s7 = inlined_call_operand.vmem [shape: f32[7,1,8], index: 7, kind: input, shape index: {}, may-alias: {4,7}]
  %s8 = inlined_call_operand.hbm [shape: f32[128,8], index: 8, kind: input, shape index: {}]
  %s9 = inlined_call_operand.vmem [shape: f32[8,128], index: 9, kind: input, shape index: {}]
  %s10 = inlined_call_operand.vmem [shape: f32[16,128], index: 10, kind: output, shape index: {}]
  %s11 = sld [smem:[#allocation0]]
  $region54: #{_lambda_.5} parent=0
    _
  %s13 = ssub.s32 1, %s11
  %s14 = scalar_select 0, %s13, %s11
  $region1: #{_lambda_.5} parent=0
    #allocation3 [shape = 'u8[65536]{0}', space=vmem, size = 0x10000, scoped, tag = 'input window, operand 8, single buffered']
    #allocation4 [shape = 's32[1]{0}', space=sflag, size = 0x4, scoped, tag = 'scoped memory for _lambda_.5']
    %15 = vsyncpa [#allocation4], 0
    // Predicated region
    $region2: #{_lambda_.5} parent=1 // pred_check
      _
    $region3: #{_lambda_.5} parent=1 // pred_check_branch
      %17 = sbr.rel (0) target = $region5
    $region4: #{_lambda_.5} parent=1 // pred_region
      _
    $region5: #{_lambda_.5} parent=1 // pred_fallthru
      _
    // Predicated region
    $region6: #{_lambda_.5} parent=1 // pred_check
      _
    $region7: #{_lambda_.5} parent=1 // pred_check_branch
      %19 = sbr.rel (0) target = $region9
    $region8: #{_lambda_.5} parent=1 // pred_region
      _
    $region9: #{_lambda_.5} parent=1 // pred_fallthru
      _
    // Predicated region
    $region10: #{_lambda_.5} parent=1 // pred_check
      _
    $region11: #{_lambda_.5} parent=1 // pred_check_branch
      %21 = sbr.rel (0) target = $region13
    $region12: #{_lambda_.5} parent=1 // pred_region
      _
    $region13: #{_lambda_.5} parent=1 // pred_fallthru
      _
    // Predicated region
    $region14: #{_lambda_.5} parent=1 // pred_check
      _
    $region15: #{_lambda_.5} parent=1 // pred_check_branch
      %23 = sbr.rel (0) target = $region17
    $region16: #{_lambda_.5} parent=1 // pred_region
      _
    $region17: #{_lambda_.5} parent=1 // pred_fallthru
      _
    // Predicated region
    $region18: #{_lambda_.5} parent=1 // pred_check
      _
    $region19: #{_lambda_.5} parent=1 // pred_check_branch
      %25 = sbr.rel (0) target = $region21
    $region20: #{_lambda_.5} parent=1 // pred_region
      _
    $region21: #{_lambda_.5} parent=1 // pred_fallthru
      _
    // Predicated region
    $region22: #{_lambda_.5} parent=1 // pred_check
      _
    $region23: #{_lambda_.5} parent=1 // pred_check_branch
      %27 = sbr.rel (0) target = $region25
    $region24: #{_lambda_.5} parent=1 // pred_region
      _
    $region25: #{_lambda_.5} parent=1 // pred_fallthru
      _
    // Predicated region
    $region26: #{_lambda_.5} parent=1 // pred_check
      _
    $region27: #{_lambda_.5} parent=1 // pred_check_branch
      %29 = sbr.rel (0) target = $region29
    $region28: #{_lambda_.5} parent=1 // pred_region
      _
    $region29: #{_lambda_.5} parent=1 // pred_fallthru
      _
    // Predicated region
    $region30: #{_lambda_.5} parent=1 // pred_check
      _
    $region31: #{_lambda_.5} parent=1 // pred_check_branch
      %31 = sbr.rel (0) target = $region33
    $region32: #{_lambda_.5} parent=1 // pred_region
      _
    $region33: #{_lambda_.5} parent=1 // pred_fallthru
      _
    // Predicated region
    $region34: #{_lambda_.5} parent=1 // pred_check
      _
    $region35: #{_lambda_.5} parent=1 // pred_check_branch
      %33 = sbr.rel (0) target = $region37
    $region36: #{_lambda_.5} parent=1 // pred_region
      %s35 = ssub.s32 2048, 2048
      %36 = vsyncadd [#allocation4], %s35
      %s37 = sshll.u32 [#allocation3], 4
      %s38 = int_to_ptr.vmem [resolvable:$true] %s37
      %43 = dma.hbm_to_vmem [thread:$0]  %s8, 2048, %s38, [#allocation4], 128, 128, 8
    $region37: #{_lambda_.5} parent=1 // pred_fallthru
      _
    // Predicated region
    $region38: #{_lambda_.5} parent=1 // pred_check
      _
    $region39: #{_lambda_.5} parent=1 // pred_check_branch
      %45 = sbr.rel (0) target = $region41
    $region40: #{_lambda_.5} parent=1 // pred_region
      _
    $region41: #{_lambda_.5} parent=1 // pred_fallthru
      _
    // Predicated region
    $region42: #{_lambda_.5} parent=1 // pred_check
      _
    $region43: #{_lambda_.5} parent=1 // pred_check_branch
      %47 = sbr.rel (0) target = $region45
    $region44: #{_lambda_.5} parent=1 // pred_region
      %48 = dma.done [#allocation4], 2048
    $region45: #{_lambda_.5} parent=1 // pred_fallthru
      _
    %v50 = vld [vmem:[%s1] sm:$0xff]
    %v51 = vld [vmem:[%s1 + $0x8] sm:$0xff]
    %v52 = vld [vmem:[%s0] sm:$0xff]
    %v53 = vld [vmem:[%s0 + $0x8] sm:$0xff]
    %54 = vst [vmem:[#allocation2] sm:$0xf] 0
    %55 = vst [vmem:[#allocation2 + $0x4] sm:$0xf] 0
    %56 = vst [vmem:[#allocation2 + $0x8] sm:$0xf] 0
    %57 = vst [vmem:[#allocation2 + $0xc] sm:$0xf] 0
    %v58 = vpack.c.bf16 %v53, %v52
    %v60 = vunpack.c.l.b16 %v58
    %v61 = vunpack.c.h.b16 %v58
    %v62 = vpack.c.b16 %v60, %v60
    %v63 = vpack.c.b16 %v61, %v61
    %66 = vst [vmem:[#allocation2 + $0x4] sm:$0xf] %v62
    %67 = vst [vmem:[#allocation2 + $0x8] sm:$0xf] %v63
    %v68 = vld [vmem:[#allocation2] sm:$0x8]
    %v69 = vld [vmem:[#allocation2 + $0x4] sm:$0xf]
    %v70 = vld [vmem:[#allocation2 + $0x8] sm:$0xf]
    %v71 = vld [vmem:[#allocation2 + $0x4] sm:$0xf]
    %v72 = vld [vmem:[#allocation2 + $0x8] sm:$0xf]
    %v73 = vld [vmem:[#allocation2 + $0xc] sm:$0x1]
    %v77 = vunpack.c.l.b16 %v68
    %v78 = vunpack.c.l.b16 %v69
    %v79 = vunpack.c.l.b16 %v70
    %v80 = vpack.c.b16 %v78, %v77
    %v81 = vpack.c.b16 %v79, %v79
    %v82 = vpack.c.b16 %v79, %v78
    %v84 = vshrl.u32 %v82, 16
    %v86 = vrot.slane %v84, 4
    %v87 = vshll.u32 %v82, 16
    %v89 = vrot.slane %v87, 5
    %v90 = vor.u32 %v86, %v89
    %v94 = vunpack.c.l.b16 %v71
    %v95 = vunpack.c.l.b16 %v72
    %v96 = vunpack.c.l.b16 %v73
    %v97 = vpack.c.b16 %v95, %v94
    %v98 = vpack.c.b16 %v96, %v96
    %vm99 = vcmask 1042432
    %v100 = vrot.slane %v97, 5
    %v101 = vrot.slane %v98, 5
    %v102 = vsel %vm99, %v100, %v101
    %v103 = vld [vmem:[%s2] sm:$0xf]
    %v104 = vld [vmem:[%s2 + $0x4] sm:$0xf]
    %v105 = vld [vmem:[%s2 + $0x8] sm:$0xf]
    %v106 = vld [vmem:[%s2 + $0xc] sm:$0xf]
    %v107 = vld [vmem:[%s2 + $0x10] sm:$0xf]
    %v108 = vld [vmem:[%s2 + $0x14] sm:$0xf]
    %v109 = vld [vmem:[%s2 + $0x18] sm:$0xf]
    %v110 = vld [vmem:[%s2 + $0x1c] sm:$0xf]
    %v111 = vld [vmem:[%s2 + $0x20] sm:$0xf]
    %v112 = vld [vmem:[%s2 + $0x24] sm:$0xf]
    %v113 = vld [vmem:[%s2 + $0x28] sm:$0xf]
    %v114 = vld [vmem:[%s2 + $0x2c] sm:$0xf]
    %v115 = vld [vmem:[%s2 + $0x30] sm:$0xf]
    %v116 = vld [vmem:[%s2 + $0x34] sm:$0xf]
    %v117 = vld [vmem:[%s2 + $0x38] sm:$0xf]
    %v118 = vld [vmem:[%s2 + $0x3c] sm:$0xf]
    %v119 = vld [vmem:[%s2 + $0x40] sm:$0xf]
    %v120 = vld [vmem:[%s2 + $0x44] sm:$0xf]
    %v121 = vld [vmem:[%s2 + $0x48] sm:$0xf]
    %v122 = vld [vmem:[%s2 + $0x4c] sm:$0xf]
    %v123 = vld [vmem:[%s2 + $0x50] sm:$0xf]
    %v124 = vld [vmem:[%s2 + $0x54] sm:$0xf]
    %v125 = vld [vmem:[%s2 + $0x58] sm:$0xf]
    %v126 = vld [vmem:[%s2 + $0x5c] sm:$0xf]
    %v127 = vld [vmem:[%s2 + $0x60] sm:$0xf]
    %v128 = vld [vmem:[%s2 + $0x64] sm:$0xf]
    %v129 = vld [vmem:[%s2 + $0x68] sm:$0xf]
    %v130 = vld [vmem:[%s2 + $0x6c] sm:$0xf]
    %v131 = vld [vmem:[%s2 + $0x70] sm:$0xf]
    %v132 = vld [vmem:[%s2 + $0x74] sm:$0xf]
    %v133 = vld [vmem:[%s2 + $0x78] sm:$0xf]
    %v134 = vld [vmem:[%s2 + $0x7c] sm:$0xf]
    %v135 = vld [vmem:[%s2 + $0x80] sm:$0xf]
    %v136 = vld [vmem:[%s2 + $0x84] sm:$0xf]
    %v137 = vld [vmem:[%s2 + $0x88] sm:$0xf]
    %v138 = vld [vmem:[%s2 + $0x8c] sm:$0xf]
    %v139 = vld [vmem:[%s2 + $0x90] sm:$0xf]
    %v140 = vld [vmem:[%s2 + $0x94] sm:$0xf]
    %v141 = vld [vmem:[%s2 + $0x98] sm:$0xf]
    %v142 = vld [vmem:[%s2 + $0x9c] sm:$0xf]
    %v143 = vld [vmem:[%s2 + $0xa0] sm:$0xf]
    %v144 = vld [vmem:[%s2 + $0xa4] sm:$0xf]
    %v145 = vld [vmem:[%s2 + $0xa8] sm:$0xf]
    %v146 = vld [vmem:[%s2 + $0xac] sm:$0xf]
    %v147 = vld [vmem:[%s2 + $0xb0] sm:$0xf]
    %v148 = vld [vmem:[%s2 + $0xb4] sm:$0xf]
    %v149 = vld [vmem:[%s2 + $0xb8] sm:$0xf]
    %v150 = vld [vmem:[%s2 + $0xbc] sm:$0xf]
    %vm151 = vsmask.f32 4352
    %v153 = vshrl.u32 %v80, 16
    %v155 = vrot.slane %v153, 3
    %v156 = vshll.u32 %v80, 16
    %v158 = vrot.slane %v156, 4
    %v159 = vor.u32 %v155, %v158
    %v161 = vshrl.u32 %v81, 16
    %v163 = vrot.slane %v161, 3
    %v164 = vshll.u32 %v81, 16
    %v166 = vrot.slane %v164, 4
    %v167 = vor.u32 %v163, %v166
    %v168 = vsel %vm151, %v159, %v167
    %v170 = vshrl.u32 %v90, 16
    %v172 = vrot.slane %v170, 3
    %v173 = vshll.u32 %v90, 16
    %v175 = vrot.slane %v173, 4
    %v176 = vor.u32 %v172, %v175
    %v177 = vsel %vm151, %v176, %v176
    %v179 = vshrl.u32 %v100, 16
    %v181 = vrot.slane %v179, 3
    %v182 = vshll.u32 %v100, 16
    %v184 = vrot.slane %v182, 4
    %v185 = vor.u32 %v181, %v184
    %v187 = vshrl.u32 %v102, 16
    %v189 = vrot.slane %v187, 3
    %v190 = vshll.u32 %v102, 16
    %v192 = vrot.slane %v190, 4
    %v193 = vor.u32 %v189, %v192
    %v194 = vsel %vm151, %v185, %v193
    %v246 = vunpack.c.l.b16 %v103
    %v247 = vunpack.c.l.b16 %v104
    %v248 = vunpack.c.l.b16 %v105
    %v249 = vunpack.c.l.b16 %v106
    %v250 = vunpack.c.l.b16 %v107
    %v251 = vunpack.c.l.b16 %v108
    %v252 = vunpack.c.l.b16 %v109
    %v253 = vunpack.c.l.b16 %v110
    %v254 = vunpack.c.l.b16 %v111
    %v255 = vunpack.c.l.b16 %v112
    %v256 = vunpack.c.l.b16 %v113
    %v257 = vunpack.c.l.b16 %v114
    %v258 = vunpack.c.l.b16 %v115
    %v259 = vunpack.c.l.b16 %v116
    %v260 = vunpack.c.l.b16 %v117
    %v261 = vunpack.c.l.b16 %v118
    %v262 = vunpack.c.l.b16 %v119
    %v263 = vunpack.c.l.b16 %v120
    %v264 = vunpack.c.l.b16 %v121
    %v265 = vunpack.c.l.b16 %v122
    %v266 = vunpack.c.l.b16 %v123
    %v267 = vunpack.c.l.b16 %v124
    %v268 = vunpack.c.l.b16 %v125
    %v269 = vunpack.c.l.b16 %v126
    %v270 = vunpack.c.l.b16 %v127
    %v271 = vunpack.c.l.b16 %v128
    %v272 = vunpack.c.l.b16 %v129
    %v273 = vunpack.c.l.b16 %v130
    %v274 = vunpack.c.l.b16 %v131
    %v275 = vunpack.c.l.b16 %v132
    %v276 = vunpack.c.l.b16 %v133
    %v277 = vunpack.c.l.b16 %v134
    %v278 = vunpack.c.l.b16 %v135
    %v279 = vunpack.c.l.b16 %v136
    %v280 = vunpack.c.l.b16 %v137
    %v281 = vunpack.c.l.b16 %v138
    %v282 = vunpack.c.l.b16 %v139
    %v283 = vunpack.c.l.b16 %v140
    %v284 = vunpack.c.l.b16 %v141
    %v285 = vunpack.c.l.b16 %v142
    %v286 = vunpack.c.l.b16 %v143
    %v287 = vunpack.c.l.b16 %v144
    %v288 = vunpack.c.l.b16 %v145
    %v289 = vunpack.c.l.b16 %v146
    %v290 = vunpack.c.l.b16 %v147
    %v291 = vunpack.c.l.b16 %v148
    %v292 = vunpack.c.l.b16 %v149
    %v293 = vunpack.c.l.b16 %v150
    %v294 = vpack.c.b16 %v247, %v246
    %v295 = vpack.c.b16 %v249, %v248
    %v296 = vpack.c.b16 %v251, %v250
    %v297 = vpack.c.b16 %v253, %v252
    %v298 = vpack.c.b16 %v255, %v254
    %v299 = vpack.c.b16 %v257, %v256
    %v300 = vpack.c.b16 %v259, %v258
    %v301 = vpack.c.b16 %v261, %v260
    %v302 = vpack.c.b16 %v263, %v262
    %v303 = vpack.c.b16 %v265, %v264
    %v304 = vpack.c.b16 %v267, %v266
    %v305 = vpack.c.b16 %v269, %v268
    %v306 = vpack.c.b16 %v271, %v270
    %v307 = vpack.c.b16 %v273, %v272
    %v308 = vpack.c.b16 %v275, %v274
    %v309 = vpack.c.b16 %v277, %v276
    %v310 = vpack.c.b16 %v279, %v278
    %v311 = vpack.c.b16 %v281, %v280
    %v312 = vpack.c.b16 %v283, %v282
    %v313 = vpack.c.b16 %v285, %v284
    %v314 = vpack.c.b16 %v287, %v286
    %v315 = vpack.c.b16 %v289, %v288
    %v316 = vpack.c.b16 %v291, %v290
    %v317 = vpack.c.b16 %v293, %v292
    %342 = vmatprep.subr.bf16.mxu0 0
    %343 = vmatpush1.bf16.msra.mxu0 %v301
    %344 = vmatprep.subr.bf16.mxu0 0
    %345 = vmatpush1.bf16.msra.mxu0 %v300
    %346 = vmatprep.subr.bf16.mxu0 0
    %347 = vmatpush1.bf16.msra.mxu0 %v299
    %348 = vmatprep.subr.bf16.mxu0 0
    %349 = vmatpush1.bf16.msra.mxu0 %v298
    %350 = vmatprep.subr.bf16.mxu0 0
    %351 = vmatpush1.bf16.msra.mxu0 %v297
    %352 = vmatprep.subr.bf16.mxu0 0
    %353 = vmatpush1.bf16.msra.mxu0 %v296
    %354 = vmatprep.subr.bf16.mxu0 0
    %355 = vmatpush1.bf16.msra.mxu0 %v295
    %356 = vmatprep.subr.bf16.mxu0 0
    %357 = vmatpush1.bf16.msra.mxu0 %v294
    %358 = vmatprep.subr.bf16.mxu0 0
    %359 = vmatpush2.bf16.msra.mxu0 %v309
    %360 = vmatprep.subr.bf16.mxu0 0
    %361 = vmatpush2.bf16.msra.mxu0 %v308
    %362 = vmatprep.subr.bf16.mxu0 0
    %363 = vmatpush2.bf16.msra.mxu0 %v307
    %364 = vmatprep.subr.bf16.mxu0 0
    %365 = vmatpush2.bf16.msra.mxu0 %v306
    %366 = vmatprep.subr.bf16.mxu0 0
    %367 = vmatpush2.bf16.msra.mxu0 %v305
    %368 = vmatprep.subr.bf16.mxu0 0
    %369 = vmatpush2.bf16.msra.mxu0 %v304
    %370 = vmatprep.subr.bf16.mxu0 0
    %371 = vmatpush2.bf16.msra.mxu0 %v303
    %372 = vmatprep.subr.bf16.mxu0 0
    %373 = vmatpush2.bf16.msra.mxu0 %v302
    %374 = vmatprep.mubr.bf16.mxu0 %v177
    %375 = vmatmul.mubr.bf16.gmra.mxu0 %v168
    %v376 = vpop.f32.mrf.mxu0
    %v377 = vadd.f32 0.0, %v376
    %v378 = vpop.f32.mrf.mxu0
    %v379 = vpop.f32.mrf.mxu0
    %v380 = vadd.f32 0.0, %v379
    %v381 = vpop.f32.mrf.mxu0
    %382 = vdwg.mxu0
    %383 = vmatprep.subr.bf16.mxu0 0
    %384 = vmatpush1.bf16.msra.mxu0 %v317
    %385 = vmatprep.subr.bf16.mxu0 0
    %386 = vmatpush1.bf16.msra.mxu0 %v316
    %387 = vmatprep.subr.bf16.mxu0 0
    %388 = vmatpush1.bf16.msra.mxu0 %v315
    %389 = vmatprep.subr.bf16.mxu0 0
    %390 = vmatpush1.bf16.msra.mxu0 %v314
    %391 = vmatprep.subr.bf16.mxu0 0
    %392 = vmatpush1.bf16.msra.mxu0 %v313
    %393 = vmatprep.subr.bf16.mxu0 0
    %394 = vmatpush1.bf16.msra.mxu0 %v312
    %395 = vmatprep.subr.bf16.mxu0 0
    %396 = vmatpush1.bf16.msra.mxu0 %v311
    %397 = vmatprep.subr.bf16.mxu0 0
    %398 = vmatpush1.bf16.msra.mxu0 %v310
    %399 = vmatprep.subr.bf16.mxu0 0
    %400 = vmatpush2.bf16.msra.mxu0 0
    %401 = vmatprep.subr.bf16.mxu0 0
    %402 = vmatpush2.bf16.msra.mxu0 0
    %403 = vmatprep.subr.bf16.mxu0 0
    %404 = vmatpush2.bf16.msra.mxu0 0
    %405 = vmatprep.subr.bf16.mxu0 0
    %406 = vmatpush2.bf16.msra.mxu0 0
    %407 = vmatprep.subr.bf16.mxu0 0
    %408 = vmatpush2.bf16.msra.mxu0 0
    %409 = vmatprep.subr.bf16.mxu0 0
    %410 = vmatpush2.bf16.msra.mxu0 0
    %411 = vmatprep.subr.bf16.mxu0 0
    %412 = vmatpush2.bf16.msra.mxu0 0
    %413 = vmatprep.subr.bf16.mxu0 0
    %414 = vmatpush2.bf16.msra.mxu0 0
    %415 = vmatprep.mubr.bf16.mxu0 0
    %416 = vmatmul.mubr.bf16.gmra.mxu0 %v194
    %v417 = vpop.f32.mrf.mxu0
    %v418 = vadd.f32 %v377, %v417
    %v419 = vpop.f32.mrf.mxu0
    %v420 = vpop.f32.mrf.mxu0
    %v421 = vadd.f32 %v380, %v420
    %v422 = vpop.f32.mrf.mxu0
    %423 = vdwg.mxu0
    %v424 = vld [vmem:[%s3] sm:$0x1]
    %v425 = vld [vmem:[%s4] sm:$0x1]
    %v426 = vmul.f32 %v418, %v50
    %v427 = vmul.f32 %v421, %v51
    %v428 = vadd.f32 %v426, %v427
    %v429 = vrot.slane %v428, 4
    %v430 = vadd.f32 %v428, %v429
    %v431 = vrot.slane %v430, 2
    %v432 = vadd.f32 %v430, %v431
    %v433 = vrot.slane %v432, 1
    %v434 = vadd.f32 %v432, %v433
    %v435 = vmul.f32 %v426, %v418
    %v436 = vmul.f32 %v427, %v421
    %v437 = vadd.f32 %v435, %v436
    %v438 = vrot.slane %v437, 4
    %v439 = vadd.f32 %v437, %v438
    %v440 = vrot.slane %v439, 2
    %v441 = vadd.f32 %v439, %v440
    %v442 = vrot.slane %v441, 1
    %v443 = vadd.f32 %v441, %v442
    %vm444 = vcmask 1040384
    %v445 = vsel %vm444, %v434, %v443
    %v446 = vld [vmem:[#allocation3] sm:$0xff]
    %v447 = vld [vmem:[#allocation3 + $0x8] sm:$0xff]
    %v448 = vld [vmem:[#allocation3 + $0x10] sm:$0xff]
    %v449 = vld [vmem:[#allocation3 + $0x18] sm:$0xff]
    %v450 = vld [vmem:[#allocation3 + $0x20] sm:$0xff]
    %v451 = vld [vmem:[#allocation3 + $0x28] sm:$0xff]
    %v452 = vld [vmem:[#allocation3 + $0x30] sm:$0xff]
    %v453 = vld [vmem:[#allocation3 + $0x38] sm:$0xff]
    %v454 = vld [vmem:[#allocation3 + $0x40] sm:$0xff]
    %v455 = vld [vmem:[#allocation3 + $0x48] sm:$0xff]
    %v456 = vld [vmem:[#allocation3 + $0x50] sm:$0xff]
    %v457 = vld [vmem:[#allocation3 + $0x58] sm:$0xff]
    %v458 = vld [vmem:[#allocation3 + $0x60] sm:$0xff]
    %v459 = vld [vmem:[#allocation3 + $0x68] sm:$0xff]
    %v460 = vld [vmem:[#allocation3 + $0x70] sm:$0xff]
    %v461 = vld [vmem:[#allocation3 + $0x78] sm:$0xff]
    %462 = vmatprep.subr.mxu0 0.0
    %463 = vmatpush1.msra.mxu0 %v461
    %464 = vmatprep.subr.mxu0 0.0
    %465 = vmatpush1.msra.mxu0 %v460
    %466 = vmatprep.subr.mxu0 0.0
    %467 = vmatpush1.msra.mxu0 %v459
    %468 = vmatprep.subr.mxu0 0.0
    %469 = vmatpush1.msra.mxu0 %v458
    %470 = vmatprep.subr.mxu0 0.0
    %471 = vmatpush1.msra.mxu0 %v457
    %472 = vmatprep.subr.mxu0 0.0
    %473 = vmatpush1.msra.mxu0 %v456
    %474 = vmatprep.subr.mxu0 0.0
    %475 = vmatpush1.msra.mxu0 %v455
    %476 = vmatprep.subr.mxu0 0.0
    %477 = vmatpush1.msra.mxu0 %v454
    %478 = vmatprep.subr.mxu0 0.0
    %479 = vmatpush1.msra.mxu0 %v453
    %480 = vmatprep.subr.mxu0 0.0
    %481 = vmatpush1.msra.mxu0 %v452
    %482 = vmatprep.subr.mxu0 0.0
    %483 = vmatpush1.msra.mxu0 %v451
    %484 = vmatprep.subr.mxu0 0.0
    %485 = vmatpush1.msra.mxu0 %v450
    %486 = vmatprep.subr.mxu0 0.0
    %487 = vmatpush1.msra.mxu0 %v449
    %488 = vmatprep.subr.mxu0 0.0
    %489 = vmatpush1.msra.mxu0 %v448
    %490 = vmatprep.subr.mxu0 0.0
    %491 = vmatpush1.msra.mxu0 %v447
    %492 = vmatprep.subr.mxu0 0.0
    %493 = vmatpush1.msra.mxu0 %v446
    %494 = vmatprep.subr.mxu0 0.0
    %495 = vmatpush2.msra.mxu0 0.0
    %496 = vmatprep.subr.mxu0 0.0
    %497 = vmatpush2.msra.mxu0 0.0
    %498 = vmatprep.subr.mxu0 0.0
    %499 = vmatpush2.msra.mxu0 0.0
    %500 = vmatprep.subr.mxu0 0.0
    %501 = vmatpush2.msra.mxu0 0.0
    %502 = vmatprep.subr.mxu0 0.0
    %503 = vmatpush2.msra.mxu0 0.0
    %504 = vmatprep.subr.mxu0 0.0
    %505 = vmatpush2.msra.mxu0 0.0
    %506 = vmatprep.subr.mxu0 0.0
    %507 = vmatpush2.msra.mxu0 0.0
    %508 = vmatprep.subr.mxu0 0.0
    %509 = vmatpush2.msra.mxu0 0.0
    %510 = vmatprep.subr.mxu0 0.0
    %511 = vmatpush2.msra.mxu0 0.0
    %512 = vmatprep.subr.mxu0 0.0
    %513 = vmatpush2.msra.mxu0 0.0
    %514 = vmatprep.subr.mxu0 0.0
    %515 = vmatpush2.msra.mxu0 0.0
    %516 = vmatprep.subr.mxu0 0.0
    %517 = vmatpush2.msra.mxu0 0.0
    %518 = vmatprep.subr.mxu0 0.0
    %519 = vmatpush2.msra.mxu0 0.0
    %520 = vmatprep.subr.mxu0 0.0
    %521 = vmatpush2.msra.mxu0 0.0
    %522 = vmatprep.subr.mxu0 0.0
    %523 = vmatpush2.msra.mxu0 0.0
    %524 = vmatprep.subr.mxu0 0.0
    %525 = vmatpush2.msra.mxu0 0.0
    %526 = vmatprep.mubr.f32.mxu0 0.0
    %527 = vmatmul.mubr.f32.gmra.mxu0 %v445
    %v528 = vpop.f32.mrf.mxu0
    %v529 = vadd.f32 0.0, %v528
    %v530 = vpop.f32.mrf.mxu0
    %531 = vdwg.mxu0
    %v532 = vmul.f32 %v529, 0.03125
    %v533 = vmul.f32 %v532, %v532
    %v535 = vrot.slane %v533, 7
    %v537 = vsub.f32 %v532, %v535
    %v538 = vmax.f32 %v537, 0.0
    %v539 = vadd.f32 %v538, 1e-05
    %v540 = vrsqrt.pop %v539
    %v543 = vunpack.c.l.s4 1966171168
    %v544 = vunpack.c.0.s8 %v543
    %v545 = vlaneseq
    %v546 = vshrl.u32 %v545, 7
    %v547 = vsub.s32 %v544, %v546
    %v548 = vrot.slane %v540, %v547
    %v549 = vcombine.high %v548, %v548
    %v551 = vunpack.c.l.s4 1966171168
    %v552 = vunpack.c.0.s8 %v551
    %v553 = vlaneseq
    %v554 = vshrl.u32 %v553, 7
    %v555 = vsub.s32 %v552, %v554
    %v556 = vrot.slane %v549, %v555
    %v558 = vmul.f32 %v424, %v556
    %v559 = vmul.f32 %v532, %v558
    %v560 = vsub.f32 %v425, %v559
    %v562 = vlaneseq
    %v563 = vshrl.u32 %v562, 7
    %v564 = vsub.s32 0, %v563
    %v565 = vrot.slane %v560, %v564
    %v567 = vsel %vm444, %v558, %v565
    %v568 = vld [vmem:[%s9] sm:$0xff]
    %vm569 = vcmask 64512
    %v571 = vsel %vm569, %v567, 0
    %573 = vmatprep.subr.mxu0 0.0
    %574 = vmatpush1.msra.mxu0 0.0
    %575 = vmatprep.subr.mxu0 0.0
    %576 = vmatpush1.msra.mxu0 0.0
    %577 = vmatprep.subr.mxu0 0.0
    %578 = vmatpush1.msra.mxu0 0.0
    %579 = vmatprep.subr.mxu0 0.0
    %580 = vmatpush1.msra.mxu0 0.0
    %581 = vmatprep.subr.mxu0 0.0
    %582 = vmatpush1.msra.mxu0 0.0
    %583 = vmatprep.subr.mxu0 0.0
    %584 = vmatpush1.msra.mxu0 0.0
    %585 = vmatprep.subr.mxu0 0.0
    %586 = vmatpush1.msra.mxu0 0.0
    %587 = vmatprep.subr.mxu0 0.0
    %588 = vmatpush1.msra.mxu0 0.0
    %589 = vmatprep.subr.mxu0 0.0
    %590 = vmatpush1.msra.mxu0 0.0
    %591 = vmatprep.subr.mxu0 0.0
    %592 = vmatpush1.msra.mxu0 0.0
    %593 = vmatprep.subr.mxu0 0.0
    %594 = vmatpush1.msra.mxu0 0.0
    %595 = vmatprep.subr.mxu0 0.0
    %596 = vmatpush1.msra.mxu0 0.0
    %597 = vmatprep.subr.mxu0 0.0
    %598 = vmatpush1.msra.mxu0 0.0
    %599 = vmatprep.subr.mxu0 0.0
    %600 = vmatpush1.msra.mxu0 0.0
    %601 = vmatprep.subr.mxu0 0.0
    %602 = vmatpush1.msra.mxu0 0.0
    %603 = vmatprep.subr.mxu0 0.0
    %604 = vmatpush1.msra.mxu0 %v568
    %605 = vmatprep.subr.mxu0 0.0
    %606 = vmatpush2.msra.mxu0 0.0
    %607 = vmatprep.subr.mxu0 0.0
    %608 = vmatpush2.msra.mxu0 0.0
    %609 = vmatprep.subr.mxu0 0.0
    %610 = vmatpush2.msra.mxu0 0.0
    %611 = vmatprep.subr.mxu0 0.0
    %612 = vmatpush2.msra.mxu0 0.0
    %613 = vmatprep.subr.mxu0 0.0
    %614 = vmatpush2.msra.mxu0 0.0
    %615 = vmatprep.subr.mxu0 0.0
    %616 = vmatpush2.msra.mxu0 0.0
    %617 = vmatprep.subr.mxu0 0.0
    %618 = vmatpush2.msra.mxu0 0.0
    %619 = vmatprep.subr.mxu0 0.0
    %620 = vmatpush2.msra.mxu0 0.0
    %621 = vmatprep.subr.mxu0 0.0
    %622 = vmatpush2.msra.mxu0 0.0
    %623 = vmatprep.subr.mxu0 0.0
    %624 = vmatpush2.msra.mxu0 0.0
    %625 = vmatprep.subr.mxu0 0.0
    %626 = vmatpush2.msra.mxu0 0.0
    %627 = vmatprep.subr.mxu0 0.0
    %628 = vmatpush2.msra.mxu0 0.0
    %629 = vmatprep.subr.mxu0 0.0
    %630 = vmatpush2.msra.mxu0 0.0
    %631 = vmatprep.subr.mxu0 0.0
    %632 = vmatpush2.msra.mxu0 0.0
    %633 = vmatprep.subr.mxu0 0.0
    %634 = vmatpush2.msra.mxu0 0.0
    %635 = vmatprep.subr.mxu0 0.0
    %636 = vmatpush2.msra.mxu0 0.0
    %637 = vmatprep.mubr.f32.mxu0 0.0
    %638 = vmatmul.mubr.f32.gmra.mxu0 %v571
    %v639 = vpop.f32.mrf.mxu0
    %v640 = vadd.f32 0.0, %v639
    %v641 = vpop.f32.mrf.mxu0
    %642 = vdwg.mxu0
    %v643 = vlaneseq
    %v644 = vshrl.u32 %v643, 7
    %v645 = vsub.s32 0, %v644
    %v646 = vrot.slane %v640, %v645
    %v647 = vmul.f32 %v418, %v646
    %v648 = vmul.f32 %v421, %v646
    %v649 = vlaneseq
    %v650 = vshrl.u32 %v649, 7
    %v651 = vsub.s32 1, %v650
    %v652 = vrot.slane %v640, %v651
    %v653 = vadd.f32 %v647, %v652
    %v654 = vadd.f32 %v648, %v652
    %v655 = vmax.f32 %v653, 0.0
    %v656 = vmax.f32 %v654, 0.0
    %v657 = vmul.f32 %v655, %v50
    %v658 = vmul.f32 %v656, %v51
    %v659 = vpack.c.bf16 %v658, %v657
    %v661 = vunpack.c.l.b16 %v659
    %v662 = vunpack.c.h.b16 %v659
    %v663 = vpack.c.b16 %v661, %v661
    %v664 = vpack.c.b16 %v662, %v662
    %667 = vst [vmem:[#allocation2 + $0x4] sm:$0xf] %v663
    %668 = vst [vmem:[#allocation2 + $0x8] sm:$0xf] %v664
    %v669 = vld [vmem:[#allocation2] sm:$0x8]
    %v670 = vld [vmem:[#allocation2 + $0x4] sm:$0xf]
    %v671 = vld [vmem:[#allocation2 + $0x8] sm:$0xf]
    %v672 = vld [vmem:[#allocation2 + $0x4] sm:$0xf]
    %v673 = vld [vmem:[#allocation2 + $0x8] sm:$0xf]
    %v674 = vld [vmem:[#allocation2 + $0xc] sm:$0x1]
    %v678 = vunpack.c.l.b16 %v669
    %v679 = vunpack.c.l.b16 %v670
    %v680 = vunpack.c.l.b16 %v671
    %v681 = vpack.c.b16 %v679, %v678
    %v682 = vpack.c.b16 %v680, %v680
    %v683 = vpack.c.b16 %v680, %v679
    %v685 = vshrl.u32 %v683, 16
    %v687 = vrot.slane %v685, 4
    %v688 = vshll.u32 %v683, 16
    %v690 = vrot.slane %v688, 5
    %v691 = vor.u32 %v687, %v690
    %v695 = vunpack.c.l.b16 %v672
    %v696 = vunpack.c.l.b16 %v673
    %v697 = vunpack.c.l.b16 %v674
    %v698 = vpack.c.b16 %v696, %v695
    %v699 = vpack.c.b16 %v697, %v697
    %v700 = vrot.slane %v698, 5
    %v701 = vrot.slane %v699, 5
    %v702 = vsel %vm99, %v700, %v701
    %v703 = vld [vmem:[%s5] sm:$0xf]
    %v704 = vld [vmem:[%s5 + $0x4] sm:$0xf]
    %v705 = vld [vmem:[%s5 + $0x8] sm:$0xf]
    %v706 = vld [vmem:[%s5 + $0xc] sm:$0xf]
    %v707 = vld [vmem:[%s5 + $0x10] sm:$0xf]
    %v708 = vld [vmem:[%s5 + $0x14] sm:$0xf]
    %v709 = vld [vmem:[%s5 + $0x18] sm:$0xf]
    %v710 = vld [vmem:[%s5 + $0x1c] sm:$0xf]
    %v711 = vld [vmem:[%s5 + $0x20] sm:$0xf]
    %v712 = vld [vmem:[%s5 + $0x24] sm:$0xf]
    %v713 = vld [vmem:[%s5 + $0x28] sm:$0xf]
    %v714 = vld [vmem:[%s5 + $0x2c] sm:$0xf]
    %v715 = vld [vmem:[%s5 + $0x30] sm:$0xf]
    %v716 = vld [vmem:[%s5 + $0x34] sm:$0xf]
    %v717 = vld [vmem:[%s5 + $0x38] sm:$0xf]
    %v718 = vld [vmem:[%s5 + $0x3c] sm:$0xf]
    %v719 = vld [vmem:[%s5 + $0x40] sm:$0xf]
    %v720 = vld [vmem:[%s5 + $0x44] sm:$0xf]
    %v721 = vld [vmem:[%s5 + $0x48] sm:$0xf]
    %v722 = vld [vmem:[%s5 + $0x4c] sm:$0xf]
    %v723 = vld [vmem:[%s5 + $0x50] sm:$0xf]
    %v724 = vld [vmem:[%s5 + $0x54] sm:$0xf]
    %v725 = vld [vmem:[%s5 + $0x58] sm:$0xf]
    %v726 = vld [vmem:[%s5 + $0x5c] sm:$0xf]
    %v727 = vld [vmem:[%s5 + $0x60] sm:$0xf]
    %v728 = vld [vmem:[%s5 + $0x64] sm:$0xf]
    %v729 = vld [vmem:[%s5 + $0x68] sm:$0xf]
    %v730 = vld [vmem:[%s5 + $0x6c] sm:$0xf]
    %v731 = vld [vmem:[%s5 + $0x70] sm:$0xf]
    %v732 = vld [vmem:[%s5 + $0x74] sm:$0xf]
    %v733 = vld [vmem:[%s5 + $0x78] sm:$0xf]
    %v734 = vld [vmem:[%s5 + $0x7c] sm:$0xf]
    %v735 = vld [vmem:[%s5 + $0x80] sm:$0xf]
    %v736 = vld [vmem:[%s5 + $0x84] sm:$0xf]
    %v737 = vld [vmem:[%s5 + $0x88] sm:$0xf]
    %v738 = vld [vmem:[%s5 + $0x8c] sm:$0xf]
    %v739 = vld [vmem:[%s5 + $0x90] sm:$0xf]
    %v740 = vld [vmem:[%s5 + $0x94] sm:$0xf]
    %v741 = vld [vmem:[%s5 + $0x98] sm:$0xf]
    %v742 = vld [vmem:[%s5 + $0x9c] sm:$0xf]
    %v743 = vld [vmem:[%s5 + $0xa0] sm:$0xf]
    %v744 = vld [vmem:[%s5 + $0xa4] sm:$0xf]
    %v745 = vld [vmem:[%s5 + $0xa8] sm:$0xf]
    %v746 = vld [vmem:[%s5 + $0xac] sm:$0xf]
    %v747 = vld [vmem:[%s5 + $0xb0] sm:$0xf]
    %v748 = vld [vmem:[%s5 + $0xb4] sm:$0xf]
    %v749 = vld [vmem:[%s5 + $0xb8] sm:$0xf]
    %v750 = vld [vmem:[%s5 + $0xbc] sm:$0xf]
    %v752 = vshrl.u32 %v681, 16
    %v754 = vrot.slane %v752, 3
    %v755 = vshll.u32 %v681, 16
    %v757 = vrot.slane %v755, 4
    %v758 = vor.u32 %v754, %v757
    %v760 = vshrl.u32 %v682, 16
    %v762 = vrot.slane %v760, 3
    %v763 = vshll.u32 %v682, 16
    %v765 = vrot.slane %v763, 4
    %v766 = vor.u32 %v762, %v765
    %v767 = vsel %vm151, %v758, %v766
    %v769 = vshrl.u32 %v691, 16
    %v771 = vrot.slane %v769, 3
    %v772 = vshll.u32 %v691, 16
    %v774 = vrot.slane %v772, 4
    %v775 = vor.u32 %v771, %v774
    %v776 = vsel %vm151, %v775, %v775
    %v778 = vshrl.u32 %v700, 16
    %v780 = vrot.slane %v778, 3
    %v781 = vshll.u32 %v700, 16
    %v783 = vrot.slane %v781, 4
    %v784 = vor.u32 %v780, %v783
    %v786 = vshrl.u32 %v702, 16
    %v788 = vrot.slane %v786, 3
    %v789 = vshll.u32 %v702, 16
    %v791 = vrot.slane %v789, 4
    %v792 = vor.u32 %v788, %v791
    %v793 = vsel %vm151, %v784, %v792
    %v845 = vunpack.c.l.b16 %v703
    %v846 = vunpack.c.l.b16 %v704
    %v847 = vunpack.c.l.b16 %v705
    %v848 = vunpack.c.l.b16 %v706
    %v849 = vunpack.c.l.b16 %v707
    %v850 = vunpack.c.l.b16 %v708
    %v851 = vunpack.c.l.b16 %v709
    %v852 = vunpack.c.l.b16 %v710
    %v853 = vunpack.c.l.b16 %v711
    %v854 = vunpack.c.l.b16 %v712
    %v855 = vunpack.c.l.b16 %v713
    %v856 = vunpack.c.l.b16 %v714
    %v857 = vunpack.c.l.b16 %v715
    %v858 = vunpack.c.l.b16 %v716
    %v859 = vunpack.c.l.b16 %v717
    %v860 = vunpack.c.l.b16 %v718
    %v861 = vunpack.c.l.b16 %v719
    %v862 = vunpack.c.l.b16 %v720
    %v863 = vunpack.c.l.b16 %v721
    %v864 = vunpack.c.l.b16 %v722
    %v865 = vunpack.c.l.b16 %v723
    %v866 = vunpack.c.l.b16 %v724
    %v867 = vunpack.c.l.b16 %v725
    %v868 = vunpack.c.l.b16 %v726
    %v869 = vunpack.c.l.b16 %v727
    %v870 = vunpack.c.l.b16 %v728
    %v871 = vunpack.c.l.b16 %v729
    %v872 = vunpack.c.l.b16 %v730
    %v873 = vunpack.c.l.b16 %v731
    %v874 = vunpack.c.l.b16 %v732
    %v875 = vunpack.c.l.b16 %v733
    %v876 = vunpack.c.l.b16 %v734
    %v877 = vunpack.c.l.b16 %v735
    %v878 = vunpack.c.l.b16 %v736
    %v879 = vunpack.c.l.b16 %v737
    %v880 = vunpack.c.l.b16 %v738
    %v881 = vunpack.c.l.b16 %v739
    %v882 = vunpack.c.l.b16 %v740
    %v883 = vunpack.c.l.b16 %v741
    %v884 = vunpack.c.l.b16 %v742
    %v885 = vunpack.c.l.b16 %v743
    %v886 = vunpack.c.l.b16 %v744
    %v887 = vunpack.c.l.b16 %v745
    %v888 = vunpack.c.l.b16 %v746
    %v889 = vunpack.c.l.b16 %v747
    %v890 = vunpack.c.l.b16 %v748
    %v891 = vunpack.c.l.b16 %v749
    %v892 = vunpack.c.l.b16 %v750
    %v893 = vpack.c.b16 %v846, %v845
    %v894 = vpack.c.b16 %v848, %v847
    %v895 = vpack.c.b16 %v850, %v849
    %v896 = vpack.c.b16 %v852, %v851
    %v897 = vpack.c.b16 %v854, %v853
    %v898 = vpack.c.b16 %v856, %v855
    %v899 = vpack.c.b16 %v858, %v857
    %v900 = vpack.c.b16 %v860, %v859
    %v901 = vpack.c.b16 %v862, %v861
    %v902 = vpack.c.b16 %v864, %v863
    %v903 = vpack.c.b16 %v866, %v865
    %v904 = vpack.c.b16 %v868, %v867
    %v905 = vpack.c.b16 %v870, %v869
    %v906 = vpack.c.b16 %v872, %v871
    %v907 = vpack.c.b16 %v874, %v873
    %v908 = vpack.c.b16 %v876, %v875
    %v909 = vpack.c.b16 %v878, %v877
    %v910 = vpack.c.b16 %v880, %v879
    %v911 = vpack.c.b16 %v882, %v881
    %v912 = vpack.c.b16 %v884, %v883
    %v913 = vpack.c.b16 %v886, %v885
    %v914 = vpack.c.b16 %v888, %v887
    %v915 = vpack.c.b16 %v890, %v889
    %v916 = vpack.c.b16 %v892, %v891
    %941 = vmatprep.subr.bf16.mxu0 0
    %942 = vmatpush1.bf16.msra.mxu0 %v900
    %943 = vmatprep.subr.bf16.mxu0 0
    %944 = vmatpush1.bf16.msra.mxu0 %v899
    %945 = vmatprep.subr.bf16.mxu0 0
    %946 = vmatpush1.bf16.msra.mxu0 %v898
    %947 = vmatprep.subr.bf16.mxu0 0
    %948 = vmatpush1.bf16.msra.mxu0 %v897
    %949 = vmatprep.subr.bf16.mxu0 0
    %950 = vmatpush1.bf16.msra.mxu0 %v896
    %951 = vmatprep.subr.bf16.mxu0 0
    %952 = vmatpush1.bf16.msra.mxu0 %v895
    %953 = vmatprep.subr.bf16.mxu0 0
    %954 = vmatpush1.bf16.msra.mxu0 %v894
    %955 = vmatprep.subr.bf16.mxu0 0
    %956 = vmatpush1.bf16.msra.mxu0 %v893
    %957 = vmatprep.subr.bf16.mxu0 0
    %958 = vmatpush2.bf16.msra.mxu0 %v908
    %959 = vmatprep.subr.bf16.mxu0 0
    %960 = vmatpush2.bf16.msra.mxu0 %v907
    %961 = vmatprep.subr.bf16.mxu0 0
    %962 = vmatpush2.bf16.msra.mxu0 %v906
    %963 = vmatprep.subr.bf16.mxu0 0
    %964 = vmatpush2.bf16.msra.mxu0 %v905
    %965 = vmatprep.subr.bf16.mxu0 0
    %966 = vmatpush2.bf16.msra.mxu0 %v904
    %967 = vmatprep.subr.bf16.mxu0 0
    %968 = vmatpush2.bf16.msra.mxu0 %v903
    %969 = vmatprep.subr.bf16.mxu0 0
    %970 = vmatpush2.bf16.msra.mxu0 %v902
    %971 = vmatprep.subr.bf16.mxu0 0
    %972 = vmatpush2.bf16.msra.mxu0 %v901
    %973 = vmatprep.mubr.bf16.mxu0 %v776
    %974 = vmatmul.mubr.bf16.gmra.mxu0 %v767
    %v975 = vpop.f32.mrf.mxu0
    %v976 = vadd.f32 0.0, %v975
    %v977 = vpop.f32.mrf.mxu0
    %v978 = vpop.f32.mrf.mxu0
    %v979 = vadd.f32 0.0, %v978
    %v980 = vpop.f32.mrf.mxu0
    %981 = vdwg.mxu0
    %982 = vmatprep.subr.bf16.mxu0 0
    %983 = vmatpush1.bf16.msra.mxu0 %v916
    %984 = vmatprep.subr.bf16.mxu0 0
    %985 = vmatpush1.bf16.msra.mxu0 %v915
    %986 = vmatprep.subr.bf16.mxu0 0
    %987 = vmatpush1.bf16.msra.mxu0 %v914
    %988 = vmatprep.subr.bf16.mxu0 0
    %989 = vmatpush1.bf16.msra.mxu0 %v913
    %990 = vmatprep.subr.bf16.mxu0 0
    %991 = vmatpush1.bf16.msra.mxu0 %v912
    %992 = vmatprep.subr.bf16.mxu0 0
    %993 = vmatpush1.bf16.msra.mxu0 %v911
    %994 = vmatprep.subr.bf16.mxu0 0
    %995 = vmatpush1.bf16.msra.mxu0 %v910
    %996 = vmatprep.subr.bf16.mxu0 0
    %997 = vmatpush1.bf16.msra.mxu0 %v909
    %998 = vmatprep.subr.bf16.mxu0 0
    %999 = vmatpush2.bf16.msra.mxu0 0
    %1000 = vmatprep.subr.bf16.mxu0 0
    %1001 = vmatpush2.bf16.msra.mxu0 0
    %1002 = vmatprep.subr.bf16.mxu0 0
    %1003 = vmatpush2.bf16.msra.mxu0 0
    %1004 = vmatprep.subr.bf16.mxu0 0
    %1005 = vmatpush2.bf16.msra.mxu0 0
    %1006 = vmatprep.subr.bf16.mxu0 0
    %1007 = vmatpush2.bf16.msra.mxu0 0
    %1008 = vmatprep.subr.bf16.mxu0 0
    %1009 = vmatpush2.bf16.msra.mxu0 0
    %1010 = vmatprep.subr.bf16.mxu0 0
    %1011 = vmatpush2.bf16.msra.mxu0 0
    %1012 = vmatprep.subr.bf16.mxu0 0
    %1013 = vmatpush2.bf16.msra.mxu0 0
    %1014 = vmatprep.mubr.bf16.mxu0 0
    %1015 = vmatmul.mubr.bf16.gmra.mxu0 %v793
    %v1016 = vpop.f32.mrf.mxu0
    %v1017 = vadd.f32 %v976, %v1016
    %v1018 = vpop.f32.mrf.mxu0
    %v1019 = vpop.f32.mrf.mxu0
    %v1020 = vadd.f32 %v979, %v1019
    %v1021 = vpop.f32.mrf.mxu0
    %1022 = vdwg.mxu0
    %v1023 = vld [vmem:[%s6] sm:$0x1]
    %v1024 = vld [vmem:[%s7] sm:$0x1]
    %v1025 = vmul.f32 %v1017, %v50
    %v1026 = vmul.f32 %v1020, %v51
    %v1027 = vadd.f32 %v1025, %v1026
    %v1028 = vrot.slane %v1027, 4
    %v1029 = vadd.f32 %v1027, %v1028
    %v1030 = vrot.slane %v1029, 2
    %v1031 = vadd.f32 %v1029, %v1030
    %v1032 = vrot.slane %v1031, 1
    %v1033 = vadd.f32 %v1031, %v1032
    %v1034 = vmul.f32 %v1025, %v1017
    %v1035 = vmul.f32 %v1026, %v1020
    %v1036 = vadd.f32 %v1034, %v1035
    %v1037 = vrot.slane %v1036, 4
    %v1038 = vadd.f32 %v1036, %v1037
    %v1039 = vrot.slane %v1038, 2
    %v1040 = vadd.f32 %v1038, %v1039
    %v1041 = vrot.slane %v1040, 1
    %v1042 = vadd.f32 %v1040, %v1041
    %v1043 = vsel %vm444, %v1033, %v1042
    %v1044 = vld [vmem:[#allocation3] sm:$0xff]
    %v1045 = vld [vmem:[#allocation3 + $0x8] sm:$0xff]
    %v1046 = vld [vmem:[#allocation3 + $0x10] sm:$0xff]
    %v1047 = vld [vmem:[#allocation3 + $0x18] sm:$0xff]
    %v1048 = vld [vmem:[#allocation3 + $0x20] sm:$0xff]
    %v1049 = vld [vmem:[#allocation3 + $0x28] sm:$0xff]
    %v1050 = vld [vmem:[#allocation3 + $0x30] sm:$0xff]
    %v1051 = vld [vmem:[#allocation3 + $0x38] sm:$0xff]
    %v1052 = vld [vmem:[#allocation3 + $0x40] sm:$0xff]
    %v1053 = vld [vmem:[#allocation3 + $0x48] sm:$0xff]
    %v1054 = vld [vmem:[#allocation3 + $0x50] sm:$0xff]
    %v1055 = vld [vmem:[#allocation3 + $0x58] sm:$0xff]
    %v1056 = vld [vmem:[#allocation3 + $0x60] sm:$0xff]
    %v1057 = vld [vmem:[#allocation3 + $0x68] sm:$0xff]
    %v1058 = vld [vmem:[#allocation3 + $0x70] sm:$0xff]
    %v1059 = vld [vmem:[#allocation3 + $0x78] sm:$0xff]
    %1060 = vmatprep.subr.mxu0 0.0
    %1061 = vmatpush1.msra.mxu0 %v1059
    %1062 = vmatprep.subr.mxu0 0.0
    %1063 = vmatpush1.msra.mxu0 %v1058
    %1064 = vmatprep.subr.mxu0 0.0
    %1065 = vmatpush1.msra.mxu0 %v1057
    %1066 = vmatprep.subr.mxu0 0.0
    %1067 = vmatpush1.msra.mxu0 %v1056
    %1068 = vmatprep.subr.mxu0 0.0
    %1069 = vmatpush1.msra.mxu0 %v1055
    %1070 = vmatprep.subr.mxu0 0.0
    %1071 = vmatpush1.msra.mxu0 %v1054
    %1072 = vmatprep.subr.mxu0 0.0
    %1073 = vmatpush1.msra.mxu0 %v1053
    %1074 = vmatprep.subr.mxu0 0.0
    %1075 = vmatpush1.msra.mxu0 %v1052
    %1076 = vmatprep.subr.mxu0 0.0
    %1077 = vmatpush1.msra.mxu0 %v1051
    %1078 = vmatprep.subr.mxu0 0.0
    %1079 = vmatpush1.msra.mxu0 %v1050
    %1080 = vmatprep.subr.mxu0 0.0
    %1081 = vmatpush1.msra.mxu0 %v1049
    %1082 = vmatprep.subr.mxu0 0.0
    %1083 = vmatpush1.msra.mxu0 %v1048
    %1084 = vmatprep.subr.mxu0 0.0
    %1085 = vmatpush1.msra.mxu0 %v1047
    %1086 = vmatprep.subr.mxu0 0.0
    %1087 = vmatpush1.msra.mxu0 %v1046
    %1088 = vmatprep.subr.mxu0 0.0
    %1089 = vmatpush1.msra.mxu0 %v1045
    %1090 = vmatprep.subr.mxu0 0.0
    %1091 = vmatpush1.msra.mxu0 %v1044
    %1092 = vmatprep.subr.mxu0 0.0
    %1093 = vmatpush2.msra.mxu0 0.0
    %1094 = vmatprep.subr.mxu0 0.0
    %1095 = vmatpush2.msra.mxu0 0.0
    %1096 = vmatprep.subr.mxu0 0.0
    %1097 = vmatpush2.msra.mxu0 0.0
    %1098 = vmatprep.subr.mxu0 0.0
    %1099 = vmatpush2.msra.mxu0 0.0
    %1100 = vmatprep.subr.mxu0 0.0
    %1101 = vmatpush2.msra.mxu0 0.0
    %1102 = vmatprep.subr.mxu0 0.0
    %1103 = vmatpush2.msra.mxu0 0.0
    %1104 = vmatprep.subr.mxu0 0.0
    %1105 = vmatpush2.msra.mxu0 0.0
    %1106 = vmatprep.subr.mxu0 0.0
    %1107 = vmatpush2.msra.mxu0 0.0
    %1108 = vmatprep.subr.mxu0 0.0
    %1109 = vmatpush2.msra.mxu0 0.0
    %1110 = vmatprep.subr.mxu0 0.0
    %1111 = vmatpush2.msra.mxu0 0.0
    %1112 = vmatprep.subr.mxu0 0.0
    %1113 = vmatpush2.msra.mxu0 0.0
    %1114 = vmatprep.subr.mxu0 0.0
    %1115 = vmatpush2.msra.mxu0 0.0
    %1116 = vmatprep.subr.mxu0 0.0
    %1117 = vmatpush2.msra.mxu0 0.0
    %1118 = vmatprep.subr.mxu0 0.0
    %1119 = vmatpush2.msra.mxu0 0.0
    %1120 = vmatprep.subr.mxu0 0.0
    %1121 = vmatpush2.msra.mxu0 0.0
    %1122 = vmatprep.subr.mxu0 0.0
    %1123 = vmatpush2.msra.mxu0 0.0
    %1124 = vmatprep.mubr.f32.mxu0 0.0
    %1125 = vmatmul.mubr.f32.gmra.mxu0 %v1043
    %v1126 = vpop.f32.mrf.mxu0
    %v1127 = vadd.f32 0.0, %v1126
    %v1128 = vpop.f32.mrf.mxu0
    %1129 = vdwg.mxu0
    %v1130 = vmul.f32 %v1127, 0.03125
    %v1131 = vmul.f32 %v1130, %v1130
    %v1133 = vrot.slane %v1131, 7
    %v1135 = vsub.f32 %v1130, %v1133
    %v1136 = vmax.f32 %v1135, 0.0
    %v1137 = vadd.f32 %v1136, 1e-05
    %v1138 = vrsqrt.pop %v1137
    %v1141 = vunpack.c.l.s4 1966171168
    %v1142 = vunpack.c.0.s8 %v1141
    %v1143 = vlaneseq
    %v1144 = vshrl.u32 %v1143, 7
    %v1145 = vsub.s32 %v1142, %v1144
    %v1146 = vrot.slane %v1138, %v1145
    %v1147 = vcombine.high %v1146, %v1146
    %v1149 = vunpack.c.l.s4 1966171168
    %v1150 = vunpack.c.0.s8 %v1149
    %v1151 = vlaneseq
    %v1152 = vshrl.u32 %v1151, 7
    %v1153 = vsub.s32 %v1150, %v1152
    %v1154 = vrot.slane %v1147, %v1153
    %v1156 = vmul.f32 %v1023, %v1154
    %v1157 = vmul.f32 %v1130, %v1156
    %v1158 = vsub.f32 %v1024, %v1157
    %v1160 = vlaneseq
    %v1161 = vshrl.u32 %v1160, 7
    %v1162 = vsub.s32 0, %v1161
    %v1163 = vrot.slane %v1158, %v1162
    %v1165 = vsel %vm444, %v1156, %v1163
    %v1166 = vld [vmem:[%s9] sm:$0xff]
    %v1168 = vsel %vm569, %v1165, 0
    %1170 = vmatprep.subr.mxu0 0.0
    %1171 = vmatpush1.msra.mxu0 0.0
    %1172 = vmatprep.subr.mxu0 0.0
    %1173 = vmatpush1.msra.mxu0 0.0
    %1174 = vmatprep.subr.mxu0 0.0
    %1175 = vmatpush1.msra.mxu0 0.0
    %1176 = vmatprep.subr.mxu0 0.0
    %1177 = vmatpush1.msra.mxu0 0.0
    %1178 = vmatprep.subr.mxu0 0.0
    %1179 = vmatpush1.msra.mxu0 0.0
    %1180 = vmatprep.subr.mxu0 0.0
    %1181 = vmatpush1.msra.mxu0 0.0
    %1182 = vmatprep.subr.mxu0 0.0
    %1183 = vmatpush1.msra.mxu0 0.0
    %1184 = vmatprep.subr.mxu0 0.0
    %1185 = vmatpush1.msra.mxu0 0.0
    %1186 = vmatprep.subr.mxu0 0.0
    %1187 = vmatpush1.msra.mxu0 0.0
    %1188 = vmatprep.subr.mxu0 0.0
    %1189 = vmatpush1.msra.mxu0 0.0
    %1190 = vmatprep.subr.mxu0 0.0
    %1191 = vmatpush1.msra.mxu0 0.0
    %1192 = vmatprep.subr.mxu0 0.0
    %1193 = vmatpush1.msra.mxu0 0.0
    %1194 = vmatprep.subr.mxu0 0.0
    %1195 = vmatpush1.msra.mxu0 0.0
    %1196 = vmatprep.subr.mxu0 0.0
    %1197 = vmatpush1.msra.mxu0 0.0
    %1198 = vmatprep.subr.mxu0 0.0
    %1199 = vmatpush1.msra.mxu0 0.0
    %1200 = vmatprep.subr.mxu0 0.0
    %1201 = vmatpush1.msra.mxu0 %v1166
    %1202 = vmatprep.subr.mxu0 0.0
    %1203 = vmatpush2.msra.mxu0 0.0
    %1204 = vmatprep.subr.mxu0 0.0
    %1205 = vmatpush2.msra.mxu0 0.0
    %1206 = vmatprep.subr.mxu0 0.0
    %1207 = vmatpush2.msra.mxu0 0.0
    %1208 = vmatprep.subr.mxu0 0.0
    %1209 = vmatpush2.msra.mxu0 0.0
    %1210 = vmatprep.subr.mxu0 0.0
    %1211 = vmatpush2.msra.mxu0 0.0
    %1212 = vmatprep.subr.mxu0 0.0
    %1213 = vmatpush2.msra.mxu0 0.0
    %1214 = vmatprep.subr.mxu0 0.0
    %1215 = vmatpush2.msra.mxu0 0.0
    %1216 = vmatprep.subr.mxu0 0.0
    %1217 = vmatpush2.msra.mxu0 0.0
    %1218 = vmatprep.subr.mxu0 0.0
    %1219 = vmatpush2.msra.mxu0 0.0
    %1220 = vmatprep.subr.mxu0 0.0
    %1221 = vmatpush2.msra.mxu0 0.0
    %1222 = vmatprep.subr.mxu0 0.0
    %1223 = vmatpush2.msra.mxu0 0.0
    %1224 = vmatprep.subr.mxu0 0.0
    %1225 = vmatpush2.msra.mxu0 0.0
    %1226 = vmatprep.subr.mxu0 0.0
    %1227 = vmatpush2.msra.mxu0 0.0
    %1228 = vmatprep.subr.mxu0 0.0
    %1229 = vmatpush2.msra.mxu0 0.0
    %1230 = vmatprep.subr.mxu0 0.0
    %1231 = vmatpush2.msra.mxu0 0.0
    %1232 = vmatprep.subr.mxu0 0.0
    %1233 = vmatpush2.msra.mxu0 0.0
    %1234 = vmatprep.mubr.f32.mxu0 0.0
    %1235 = vmatmul.mubr.f32.gmra.mxu0 %v1168
    %v1236 = vpop.f32.mrf.mxu0
    %v1237 = vadd.f32 0.0, %v1236
    %v1238 = vpop.f32.mrf.mxu0
    %1239 = vdwg.mxu0
    %v1240 = vlaneseq
    %v1241 = vshrl.u32 %v1240, 7
    %v1242 = vsub.s32 0, %v1241
    %v1243 = vrot.slane %v1237, %v1242
    %v1244 = vmul.f32 %v1017, %v1243
    %v1245 = vmul.f32 %v1020, %v1243
    %v1246 = vlaneseq
    %v1247 = vshrl.u32 %v1246, 7
    %v1248 = vsub.s32 1, %v1247
    %v1249 = vrot.slane %v1237, %v1248
    %v1250 = vadd.f32 %v1244, %v1249
    %v1251 = vadd.f32 %v1245, %v1249
    %v1252 = vadd.f32 %v1250, %v52
    %v1253 = vadd.f32 %v1251, %v53
    %v1254 = vmax.f32 %v1252, 0.0
    %v1255 = vmax.f32 %v1253, 0.0
    %v1256 = vmul.f32 %v1254, %v50
    %v1257 = vmul.f32 %v1255, %v51
    %v1258 = vpack.c.bf16 %v1257, %v1256
    %v1260 = vunpack.c.l.b16 %v1258
    %v1261 = vunpack.c.h.b16 %v1258
    %v1262 = vpack.c.b16 %v1260, %v1260
    %v1263 = vpack.c.b16 %v1261, %v1261
    %1266 = vst [vmem:[#allocation2 + $0x4] sm:$0xf] %v1262
    %1267 = vst [vmem:[#allocation2 + $0x8] sm:$0xf] %v1263
    %v1268 = vld [vmem:[#allocation2] sm:$0x8]
    %v1269 = vld [vmem:[#allocation2 + $0x4] sm:$0xf]
    %v1270 = vld [vmem:[#allocation2 + $0x8] sm:$0xf]
    %v1271 = vld [vmem:[#allocation2 + $0x4] sm:$0xf]
    %v1272 = vld [vmem:[#allocation2 + $0x8] sm:$0xf]
    %v1273 = vld [vmem:[#allocation2 + $0xc] sm:$0x1]
    %v1277 = vunpack.c.l.b16 %v1268
    %v1278 = vunpack.c.l.b16 %v1269
    %v1279 = vunpack.c.l.b16 %v1270
    %v1280 = vpack.c.b16 %v1278, %v1277
    %v1281 = vpack.c.b16 %v1279, %v1279
    %v1282 = vpack.c.b16 %v1279, %v1278
    %v1284 = vshrl.u32 %v1282, 16
    %v1286 = vrot.slane %v1284, 4
    %v1287 = vshll.u32 %v1282, 16
    %v1289 = vrot.slane %v1287, 5
    %v1290 = vor.u32 %v1286, %v1289
    %v1294 = vunpack.c.l.b16 %v1271
    %v1295 = vunpack.c.l.b16 %v1272
    %v1296 = vunpack.c.l.b16 %v1273
    %v1297 = vpack.c.b16 %v1295, %v1294
    %v1298 = vpack.c.b16 %v1296, %v1296
    %v1299 = vrot.slane %v1297, 5
    %v1300 = vrot.slane %v1298, 5
    %v1301 = vsel %vm99, %v1299, %v1300
    %s1302 = scalar_lea.vmem %s2, 192
    %v1303 = vld [vmem:[%s1302] sm:$0xf]
    %v1304 = vld [vmem:[%s1302 + $0x4] sm:$0xf]
    %v1305 = vld [vmem:[%s1302 + $0x8] sm:$0xf]
    %v1306 = vld [vmem:[%s1302 + $0xc] sm:$0xf]
    %v1307 = vld [vmem:[%s1302 + $0x10] sm:$0xf]
    %v1308 = vld [vmem:[%s1302 + $0x14] sm:$0xf]
    %v1309 = vld [vmem:[%s1302 + $0x18] sm:$0xf]
    %v1310 = vld [vmem:[%s1302 + $0x1c] sm:$0xf]
    %v1311 = vld [vmem:[%s1302 + $0x20] sm:$0xf]
    %v1312 = vld [vmem:[%s1302 + $0x24] sm:$0xf]
    %v1313 = vld [vmem:[%s1302 + $0x28] sm:$0xf]
    %v1314 = vld [vmem:[%s1302 + $0x2c] sm:$0xf]
    %v1315 = vld [vmem:[%s1302 + $0x30] sm:$0xf]
    %v1316 = vld [vmem:[%s1302 + $0x34] sm:$0xf]
    %v1317 = vld [vmem:[%s1302 + $0x38] sm:$0xf]
    %v1318 = vld [vmem:[%s1302 + $0x3c] sm:$0xf]
    %v1319 = vld [vmem:[%s1302 + $0x40] sm:$0xf]
    %v1320 = vld [vmem:[%s1302 + $0x44] sm:$0xf]
    %v1321 = vld [vmem:[%s1302 + $0x48] sm:$0xf]
    %v1322 = vld [vmem:[%s1302 + $0x4c] sm:$0xf]
    %v1323 = vld [vmem:[%s1302 + $0x50] sm:$0xf]
    %v1324 = vld [vmem:[%s1302 + $0x54] sm:$0xf]
    %v1325 = vld [vmem:[%s1302 + $0x58] sm:$0xf]
    %v1326 = vld [vmem:[%s1302 + $0x5c] sm:$0xf]
    %v1327 = vld [vmem:[%s1302 + $0x60] sm:$0xf]
    %v1328 = vld [vmem:[%s1302 + $0x64] sm:$0xf]
    %v1329 = vld [vmem:[%s1302 + $0x68] sm:$0xf]
    %v1330 = vld [vmem:[%s1302 + $0x6c] sm:$0xf]
    %v1331 = vld [vmem:[%s1302 + $0x70] sm:$0xf]
    %v1332 = vld [vmem:[%s1302 + $0x74] sm:$0xf]
    %v1333 = vld [vmem:[%s1302 + $0x78] sm:$0xf]
    %v1334 = vld [vmem:[%s1302 + $0x7c] sm:$0xf]
    %v1335 = vld [vmem:[%s1302 + $0x80] sm:$0xf]
    %v1336 = vld [vmem:[%s1302 + $0x84] sm:$0xf]
    %v1337 = vld [vmem:[%s1302 + $0x88] sm:$0xf]
    %v1338 = vld [vmem:[%s1302 + $0x8c] sm:$0xf]
    %v1339 = vld [vmem:[%s1302 + $0x90] sm:$0xf]
    %v1340 = vld [vmem:[%s1302 + $0x94] sm:$0xf]
    %v1341 = vld [vmem:[%s1302 + $0x98] sm:$0xf]
    %v1342 = vld [vmem:[%s1302 + $0x9c] sm:$0xf]
    %v1343 = vld [vmem:[%s1302 + $0xa0] sm:$0xf]
    %v1344 = vld [vmem:[%s1302 + $0xa4] sm:$0xf]
    %v1345 = vld [vmem:[%s1302 + $0xa8] sm:$0xf]
    %v1346 = vld [vmem:[%s1302 + $0xac] sm:$0xf]
    %v1347 = vld [vmem:[%s1302 + $0xb0] sm:$0xf]
    %v1348 = vld [vmem:[%s1302 + $0xb4] sm:$0xf]
    %v1349 = vld [vmem:[%s1302 + $0xb8] sm:$0xf]
    %v1350 = vld [vmem:[%s1302 + $0xbc] sm:$0xf]
    %v1352 = vshrl.u32 %v1280, 16
    %v1354 = vrot.slane %v1352, 3
    %v1355 = vshll.u32 %v1280, 16
    %v1357 = vrot.slane %v1355, 4
    %v1358 = vor.u32 %v1354, %v1357
    %v1360 = vshrl.u32 %v1281, 16
    %v1362 = vrot.slane %v1360, 3
    %v1363 = vshll.u32 %v1281, 16
    %v1365 = vrot.slane %v1363, 4
    %v1366 = vor.u32 %v1362, %v1365
    %v1367 = vsel %vm151, %v1358, %v1366
    %v1369 = vshrl.u32 %v1290, 16
    %v1371 = vrot.slane %v1369, 3
    %v1372 = vshll.u32 %v1290, 16
    %v1374 = vrot.slane %v1372, 4
    %v1375 = vor.u32 %v1371, %v1374
    %v1376 = vsel %vm151, %v1375, %v1375
    %v1378 = vshrl.u32 %v1299, 16
    %v1380 = vrot.slane %v1378, 3
    %v1381 = vshll.u32 %v1299, 16
    %v1383 = vrot.slane %v1381, 4
    %v1384 = vor.u32 %v1380, %v1383
    %v1386 = vshrl.u32 %v1301, 16
    %v1388 = vrot.slane %v1386, 3
    %v1389 = vshll.u32 %v1301, 16
    %v1391 = vrot.slane %v1389, 4
    %v1392 = vor.u32 %v1388, %v1391
    %v1393 = vsel %vm151, %v1384, %v1392
    %v1445 = vunpack.c.l.b16 %v1303
    %v1446 = vunpack.c.l.b16 %v1304
    %v1447 = vunpack.c.l.b16 %v1305
    %v1448 = vunpack.c.l.b16 %v1306
    %v1449 = vunpack.c.l.b16 %v1307
    %v1450 = vunpack.c.l.b16 %v1308
    %v1451 = vunpack.c.l.b16 %v1309
    %v1452 = vunpack.c.l.b16 %v1310
    %v1453 = vunpack.c.l.b16 %v1311
    %v1454 = vunpack.c.l.b16 %v1312
    %v1455 = vunpack.c.l.b16 %v1313
    %v1456 = vunpack.c.l.b16 %v1314
    %v1457 = vunpack.c.l.b16 %v1315
    %v1458 = vunpack.c.l.b16 %v1316
    %v1459 = vunpack.c.l.b16 %v1317
    %v1460 = vunpack.c.l.b16 %v1318
    %v1461 = vunpack.c.l.b16 %v1319
    %v1462 = vunpack.c.l.b16 %v1320
    %v1463 = vunpack.c.l.b16 %v1321
    %v1464 = vunpack.c.l.b16 %v1322
    %v1465 = vunpack.c.l.b16 %v1323
    %v1466 = vunpack.c.l.b16 %v1324
    %v1467 = vunpack.c.l.b16 %v1325
    %v1468 = vunpack.c.l.b16 %v1326
    %v1469 = vunpack.c.l.b16 %v1327
    %v1470 = vunpack.c.l.b16 %v1328
    %v1471 = vunpack.c.l.b16 %v1329
    %v1472 = vunpack.c.l.b16 %v1330
    %v1473 = vunpack.c.l.b16 %v1331
    %v1474 = vunpack.c.l.b16 %v1332
    %v1475 = vunpack.c.l.b16 %v1333
    %v1476 = vunpack.c.l.b16 %v1334
    %v1477 = vunpack.c.l.b16 %v1335
    %v1478 = vunpack.c.l.b16 %v1336
    %v1479 = vunpack.c.l.b16 %v1337
    %v1480 = vunpack.c.l.b16 %v1338
    %v1481 = vunpack.c.l.b16 %v1339
    %v1482 = vunpack.c.l.b16 %v1340
    %v1483 = vunpack.c.l.b16 %v1341
    %v1484 = vunpack.c.l.b16 %v1342
    %v1485 = vunpack.c.l.b16 %v1343
    %v1486 = vunpack.c.l.b16 %v1344
    %v1487 = vunpack.c.l.b16 %v1345
    %v1488 = vunpack.c.l.b16 %v1346
    %v1489 = vunpack.c.l.b16 %v1347
    %v1490 = vunpack.c.l.b16 %v1348
    %v1491 = vunpack.c.l.b16 %v1349
    %v1492 = vunpack.c.l.b16 %v1350
    %v1493 = vpack.c.b16 %v1446, %v1445
    %v1494 = vpack.c.b16 %v1448, %v1447
    %v1495 = vpack.c.b16 %v1450, %v1449
    %v1496 = vpack.c.b16 %v1452, %v1451
    %v1497 = vpack.c.b16 %v1454, %v1453
    %v1498 = vpack.c.b16 %v1456, %v1455
    %v1499 = vpack.c.b16 %v1458, %v1457
    %v1500 = vpack.c.b16 %v1460, %v1459
    %v1501 = vpack.c.b16 %v1462, %v1461
    %v1502 = vpack.c.b16 %v1464, %v1463
    %v1503 = vpack.c.b16 %v1466, %v1465
    %v1504 = vpack.c.b16 %v1468, %v1467
    %v1505 = vpack.c.b16 %v1470, %v1469
    %v1506 = vpack.c.b16 %v1472, %v1471
    %v1507 = vpack.c.b16 %v1474, %v1473
    %v1508 = vpack.c.b16 %v1476, %v1475
    %v1509 = vpack.c.b16 %v1478, %v1477
    %v1510 = vpack.c.b16 %v1480, %v1479
    %v1511 = vpack.c.b16 %v1482, %v1481
    %v1512 = vpack.c.b16 %v1484, %v1483
    %v1513 = vpack.c.b16 %v1486, %v1485
    %v1514 = vpack.c.b16 %v1488, %v1487
    %v1515 = vpack.c.b16 %v1490, %v1489
    %v1516 = vpack.c.b16 %v1492, %v1491
    %1541 = vmatprep.subr.bf16.mxu0 0
    %1542 = vmatpush1.bf16.msra.mxu0 %v1500
    %1543 = vmatprep.subr.bf16.mxu0 0
    %1544 = vmatpush1.bf16.msra.mxu0 %v1499
    %1545 = vmatprep.subr.bf16.mxu0 0
    %1546 = vmatpush1.bf16.msra.mxu0 %v1498
    %1547 = vmatprep.subr.bf16.mxu0 0
    %1548 = vmatpush1.bf16.msra.mxu0 %v1497
    %1549 = vmatprep.subr.bf16.mxu0 0
    %1550 = vmatpush1.bf16.msra.mxu0 %v1496
    %1551 = vmatprep.subr.bf16.mxu0 0
    %1552 = vmatpush1.bf16.msra.mxu0 %v1495
    %1553 = vmatprep.subr.bf16.mxu0 0
    %1554 = vmatpush1.bf16.msra.mxu0 %v1494
    %1555 = vmatprep.subr.bf16.mxu0 0
    %1556 = vmatpush1.bf16.msra.mxu0 %v1493
    %1557 = vmatprep.subr.bf16.mxu0 0
    %1558 = vmatpush2.bf16.msra.mxu0 %v1508
    %1559 = vmatprep.subr.bf16.mxu0 0
    %1560 = vmatpush2.bf16.msra.mxu0 %v1507
    %1561 = vmatprep.subr.bf16.mxu0 0
    %1562 = vmatpush2.bf16.msra.mxu0 %v1506
    %1563 = vmatprep.subr.bf16.mxu0 0
    %1564 = vmatpush2.bf16.msra.mxu0 %v1505
    %1565 = vmatprep.subr.bf16.mxu0 0
    %1566 = vmatpush2.bf16.msra.mxu0 %v1504
    %1567 = vmatprep.subr.bf16.mxu0 0
    %1568 = vmatpush2.bf16.msra.mxu0 %v1503
    %1569 = vmatprep.subr.bf16.mxu0 0
    %1570 = vmatpush2.bf16.msra.mxu0 %v1502
    %1571 = vmatprep.subr.bf16.mxu0 0
    %1572 = vmatpush2.bf16.msra.mxu0 %v1501
    %1573 = vmatprep.mubr.bf16.mxu0 %v1376
    %1574 = vmatmul.mubr.bf16.gmra.mxu0 %v1367
    %v1575 = vpop.f32.mrf.mxu0
    %v1576 = vadd.f32 0.0, %v1575
    %v1577 = vpop.f32.mrf.mxu0
    %v1578 = vpop.f32.mrf.mxu0
    %v1579 = vadd.f32 0.0, %v1578
    %v1580 = vpop.f32.mrf.mxu0
    %1581 = vdwg.mxu0
    %1582 = vmatprep.subr.bf16.mxu0 0
    %1583 = vmatpush1.bf16.msra.mxu0 %v1516
    %1584 = vmatprep.subr.bf16.mxu0 0
    %1585 = vmatpush1.bf16.msra.mxu0 %v1515
    %1586 = vmatprep.subr.bf16.mxu0 0
    %1587 = vmatpush1.bf16.msra.mxu0 %v1514
    %1588 = vmatprep.subr.bf16.mxu0 0
    %1589 = vmatpush1.bf16.msra.mxu0 %v1513
    %1590 = vmatprep.subr.bf16.mxu0 0
    %1591 = vmatpush1.bf16.msra.mxu0 %v1512
    %1592 = vmatprep.subr.bf16.mxu0 0
    %1593 = vmatpush1.bf16.msra.mxu0 %v1511
    %1594 = vmatprep.subr.bf16.mxu0 0
    %1595 = vmatpush1.bf16.msra.mxu0 %v1510
    %1596 = vmatprep.subr.bf16.mxu0 0
    %1597 = vmatpush1.bf16.msra.mxu0 %v1509
    %1598 = vmatprep.subr.bf16.mxu0 0
    %1599 = vmatpush2.bf16.msra.mxu0 0
    %1600 = vmatprep.subr.bf16.mxu0 0
    %1601 = vmatpush2.bf16.msra.mxu0 0
    %1602 = vmatprep.subr.bf16.mxu0 0
    %1603 = vmatpush2.bf16.msra.mxu0 0
    %1604 = vmatprep.subr.bf16.mxu0 0
    %1605 = vmatpush2.bf16.msra.mxu0 0
    %1606 = vmatprep.subr.bf16.mxu0 0
    %1607 = vmatpush2.bf16.msra.mxu0 0
    %1608 = vmatprep.subr.bf16.mxu0 0
    %1609 = vmatpush2.bf16.msra.mxu0 0
    %1610 = vmatprep.subr.bf16.mxu0 0
    %1611 = vmatpush2.bf16.msra.mxu0 0
    %1612 = vmatprep.subr.bf16.mxu0 0
    %1613 = vmatpush2.bf16.msra.mxu0 0
    %1614 = vmatprep.mubr.bf16.mxu0 0
    %1615 = vmatmul.mubr.bf16.gmra.mxu0 %v1393
    %v1616 = vpop.f32.mrf.mxu0
    %v1617 = vadd.f32 %v1576, %v1616
    %v1618 = vpop.f32.mrf.mxu0
    %v1619 = vpop.f32.mrf.mxu0
    %v1620 = vadd.f32 %v1579, %v1619
    %v1621 = vpop.f32.mrf.mxu0
    %1622 = vdwg.mxu0
    %s1623 = scalar_lea.vmem %s3, 1
    %v1624 = vld [vmem:[%s1623] sm:$0x1]
    %s1625 = scalar_lea.vmem %s4, 1
    %v1626 = vld [vmem:[%s1625] sm:$0x1]
    %v1627 = vmul.f32 %v1617, %v50
    %v1628 = vmul.f32 %v1620, %v51
    %v1629 = vadd.f32 %v1627, %v1628
    %v1630 = vrot.slane %v1629, 4
    %v1631 = vadd.f32 %v1629, %v1630
    %v1632 = vrot.slane %v1631, 2
    %v1633 = vadd.f32 %v1631, %v1632
    %v1634 = vrot.slane %v1633, 1
    %v1635 = vadd.f32 %v1633, %v1634
    %v1636 = vmul.f32 %v1627, %v1617
    %v1637 = vmul.f32 %v1628, %v1620
    %v1638 = vadd.f32 %v1636, %v1637
    %v1639 = vrot.slane %v1638, 4
    %v1640 = vadd.f32 %v1638, %v1639
    %v1641 = vrot.slane %v1640, 2
    %v1642 = vadd.f32 %v1640, %v1641
    %v1643 = vrot.slane %v1642, 1
    %v1644 = vadd.f32 %v1642, %v1643
    %v1645 = vsel %vm444, %v1635, %v1644
    %v1646 = vld [vmem:[#allocation3] sm:$0xff]
    %v1647 = vld [vmem:[#allocation3 + $0x8] sm:$0xff]
    %v1648 = vld [vmem:[#allocation3 + $0x10] sm:$0xff]
    %v1649 = vld [vmem:[#allocation3 + $0x18] sm:$0xff]
    %v1650 = vld [vmem:[#allocation3 + $0x20] sm:$0xff]
    %v1651 = vld [vmem:[#allocation3 + $0x28] sm:$0xff]
    %v1652 = vld [vmem:[#allocation3 + $0x30] sm:$0xff]
    %v1653 = vld [vmem:[#allocation3 + $0x38] sm:$0xff]
    %v1654 = vld [vmem:[#allocation3 + $0x40] sm:$0xff]
    %v1655 = vld [vmem:[#allocation3 + $0x48] sm:$0xff]
    %v1656 = vld [vmem:[#allocation3 + $0x50] sm:$0xff]
    %v1657 = vld [vmem:[#allocation3 + $0x58] sm:$0xff]
    %v1658 = vld [vmem:[#allocation3 + $0x60] sm:$0xff]
    %v1659 = vld [vmem:[#allocation3 + $0x68] sm:$0xff]
    %v1660 = vld [vmem:[#allocation3 + $0x70] sm:$0xff]
    %v1661 = vld [vmem:[#allocation3 + $0x78] sm:$0xff]
    %1662 = vmatprep.subr.mxu0 0.0
    %1663 = vmatpush1.msra.mxu0 %v1661
    %1664 = vmatprep.subr.mxu0 0.0
    %1665 = vmatpush1.msra.mxu0 %v1660
    %1666 = vmatprep.subr.mxu0 0.0
    %1667 = vmatpush1.msra.mxu0 %v1659
    %1668 = vmatprep.subr.mxu0 0.0
    %1669 = vmatpush1.msra.mxu0 %v1658
    %1670 = vmatprep.subr.mxu0 0.0
    %1671 = vmatpush1.msra.mxu0 %v1657
    %1672 = vmatprep.subr.mxu0 0.0
    %1673 = vmatpush1.msra.mxu0 %v1656
    %1674 = vmatprep.subr.mxu0 0.0
    %1675 = vmatpush1.msra.mxu0 %v1655
    %1676 = vmatprep.subr.mxu0 0.0
    %1677 = vmatpush1.msra.mxu0 %v1654
    %1678 = vmatprep.subr.mxu0 0.0
    %1679 = vmatpush1.msra.mxu0 %v1653
    %1680 = vmatprep.subr.mxu0 0.0
    %1681 = vmatpush1.msra.mxu0 %v1652
    %1682 = vmatprep.subr.mxu0 0.0
    %1683 = vmatpush1.msra.mxu0 %v1651
    %1684 = vmatprep.subr.mxu0 0.0
    %1685 = vmatpush1.msra.mxu0 %v1650
    %1686 = vmatprep.subr.mxu0 0.0
    %1687 = vmatpush1.msra.mxu0 %v1649
    %1688 = vmatprep.subr.mxu0 0.0
    %1689 = vmatpush1.msra.mxu0 %v1648
    %1690 = vmatprep.subr.mxu0 0.0
    %1691 = vmatpush1.msra.mxu0 %v1647
    %1692 = vmatprep.subr.mxu0 0.0
    %1693 = vmatpush1.msra.mxu0 %v1646
    %1694 = vmatprep.subr.mxu0 0.0
    %1695 = vmatpush2.msra.mxu0 0.0
    %1696 = vmatprep.subr.mxu0 0.0
    %1697 = vmatpush2.msra.mxu0 0.0
    %1698 = vmatprep.subr.mxu0 0.0
    %1699 = vmatpush2.msra.mxu0 0.0
    %1700 = vmatprep.subr.mxu0 0.0
    %1701 = vmatpush2.msra.mxu0 0.0
    %1702 = vmatprep.subr.mxu0 0.0
    %1703 = vmatpush2.msra.mxu0 0.0
    %1704 = vmatprep.subr.mxu0 0.0
    %1705 = vmatpush2.msra.mxu0 0.0
    %1706 = vmatprep.subr.mxu0 0.0
    %1707 = vmatpush2.msra.mxu0 0.0
    %1708 = vmatprep.subr.mxu0 0.0
    %1709 = vmatpush2.msra.mxu0 0.0
    %1710 = vmatprep.subr.mxu0 0.0
    %1711 = vmatpush2.msra.mxu0 0.0
    %1712 = vmatprep.subr.mxu0 0.0
    %1713 = vmatpush2.msra.mxu0 0.0
    %1714 = vmatprep.subr.mxu0 0.0
    %1715 = vmatpush2.msra.mxu0 0.0
    %1716 = vmatprep.subr.mxu0 0.0
    %1717 = vmatpush2.msra.mxu0 0.0
    %1718 = vmatprep.subr.mxu0 0.0
    %1719 = vmatpush2.msra.mxu0 0.0
    %1720 = vmatprep.subr.mxu0 0.0
    %1721 = vmatpush2.msra.mxu0 0.0
    %1722 = vmatprep.subr.mxu0 0.0
    %1723 = vmatpush2.msra.mxu0 0.0
    %1724 = vmatprep.subr.mxu0 0.0
    %1725 = vmatpush2.msra.mxu0 0.0
    %1726 = vmatprep.mubr.f32.mxu0 0.0
    %1727 = vmatmul.mubr.f32.gmra.mxu0 %v1645
    %v1728 = vpop.f32.mrf.mxu0
    %v1729 = vadd.f32 0.0, %v1728
    %v1730 = vpop.f32.mrf.mxu0
    %1731 = vdwg.mxu0
    %v1732 = vmul.f32 %v1729, 0.03125
    %v1733 = vmul.f32 %v1732, %v1732
    %v1735 = vrot.slane %v1733, 7
    %v1737 = vsub.f32 %v1732, %v1735
    %v1738 = vmax.f32 %v1737, 0.0
    %v1739 = vadd.f32 %v1738, 1e-05
    %v1740 = vrsqrt.pop %v1739
    %v1743 = vunpack.c.l.s4 1966171168
    %v1744 = vunpack.c.0.s8 %v1743
    %v1745 = vlaneseq
    %v1746 = vshrl.u32 %v1745, 7
    %v1747 = vsub.s32 %v1744, %v1746
    %v1748 = vrot.slane %v1740, %v1747
    %v1749 = vcombine.high %v1748, %v1748
    %v1751 = vunpack.c.l.s4 1966171168
    %v1752 = vunpack.c.0.s8 %v1751
    %v1753 = vlaneseq
    %v1754 = vshrl.u32 %v1753, 7
    %v1755 = vsub.s32 %v1752, %v1754
    %v1756 = vrot.slane %v1749, %v1755
    %v1758 = vmul.f32 %v1624, %v1756
    %v1759 = vmul.f32 %v1732, %v1758
    %v1760 = vsub.f32 %v1626, %v1759
    %v1762 = vlaneseq
    %v1763 = vshrl.u32 %v1762, 7
    %v1764 = vsub.s32 0, %v1763
    %v1765 = vrot.slane %v1760, %v1764
    %v1767 = vsel %vm444, %v1758, %v1765
    %v1768 = vld [vmem:[%s9] sm:$0xff]
    %v1770 = vsel %vm569, %v1767, 0
    %1772 = vmatprep.subr.mxu0 0.0
    %1773 = vmatpush1.msra.mxu0 0.0
    %1774 = vmatprep.subr.mxu0 0.0
    %1775 = vmatpush1.msra.mxu0 0.0
    %1776 = vmatprep.subr.mxu0 0.0
    %1777 = vmatpush1.msra.mxu0 0.0
    %1778 = vmatprep.subr.mxu0 0.0
    %1779 = vmatpush1.msra.mxu0 0.0
    %1780 = vmatprep.subr.mxu0 0.0
    %1781 = vmatpush1.msra.mxu0 0.0
    %1782 = vmatprep.subr.mxu0 0.0
    %1783 = vmatpush1.msra.mxu0 0.0
    %1784 = vmatprep.subr.mxu0 0.0
    %1785 = vmatpush1.msra.mxu0 0.0
    %1786 = vmatprep.subr.mxu0 0.0
    %1787 = vmatpush1.msra.mxu0 0.0
    %1788 = vmatprep.subr.mxu0 0.0
    %1789 = vmatpush1.msra.mxu0 0.0
    %1790 = vmatprep.subr.mxu0 0.0
    %1791 = vmatpush1.msra.mxu0 0.0
    %1792 = vmatprep.subr.mxu0 0.0
    %1793 = vmatpush1.msra.mxu0 0.0
    %1794 = vmatprep.subr.mxu0 0.0
    %1795 = vmatpush1.msra.mxu0 0.0
    %1796 = vmatprep.subr.mxu0 0.0
    %1797 = vmatpush1.msra.mxu0 0.0
    %1798 = vmatprep.subr.mxu0 0.0
    %1799 = vmatpush1.msra.mxu0 0.0
    %1800 = vmatprep.subr.mxu0 0.0
    %1801 = vmatpush1.msra.mxu0 0.0
    %1802 = vmatprep.subr.mxu0 0.0
    %1803 = vmatpush1.msra.mxu0 %v1768
    %1804 = vmatprep.subr.mxu0 0.0
    %1805 = vmatpush2.msra.mxu0 0.0
    %1806 = vmatprep.subr.mxu0 0.0
    %1807 = vmatpush2.msra.mxu0 0.0
    %1808 = vmatprep.subr.mxu0 0.0
    %1809 = vmatpush2.msra.mxu0 0.0
    %1810 = vmatprep.subr.mxu0 0.0
    %1811 = vmatpush2.msra.mxu0 0.0
    %1812 = vmatprep.subr.mxu0 0.0
    %1813 = vmatpush2.msra.mxu0 0.0
    %1814 = vmatprep.subr.mxu0 0.0
    %1815 = vmatpush2.msra.mxu0 0.0
    %1816 = vmatprep.subr.mxu0 0.0
    %1817 = vmatpush2.msra.mxu0 0.0
    %1818 = vmatprep.subr.mxu0 0.0
    %1819 = vmatpush2.msra.mxu0 0.0
    %1820 = vmatprep.subr.mxu0 0.0
    %1821 = vmatpush2.msra.mxu0 0.0
    %1822 = vmatprep.subr.mxu0 0.0
    %1823 = vmatpush2.msra.mxu0 0.0
    %1824 = vmatprep.subr.mxu0 0.0
    %1825 = vmatpush2.msra.mxu0 0.0
    %1826 = vmatprep.subr.mxu0 0.0
    %1827 = vmatpush2.msra.mxu0 0.0
    %1828 = vmatprep.subr.mxu0 0.0
    %1829 = vmatpush2.msra.mxu0 0.0
    %1830 = vmatprep.subr.mxu0 0.0
    %1831 = vmatpush2.msra.mxu0 0.0
    %1832 = vmatprep.subr.mxu0 0.0
    %1833 = vmatpush2.msra.mxu0 0.0
    %1834 = vmatprep.subr.mxu0 0.0
    %1835 = vmatpush2.msra.mxu0 0.0
    %1836 = vmatprep.mubr.f32.mxu0 0.0
    %1837 = vmatmul.mubr.f32.gmra.mxu0 %v1770
    %v1838 = vpop.f32.mrf.mxu0
    %v1839 = vadd.f32 0.0, %v1838
    %v1840 = vpop.f32.mrf.mxu0
    %1841 = vdwg.mxu0
    %v1842 = vlaneseq
    %v1843 = vshrl.u32 %v1842, 7
    %v1844 = vsub.s32 0, %v1843
    %v1845 = vrot.slane %v1839, %v1844
    %v1846 = vmul.f32 %v1617, %v1845
    %v1847 = vmul.f32 %v1620, %v1845
    %v1848 = vlaneseq
    %v1849 = vshrl.u32 %v1848, 7
    %v1850 = vsub.s32 1, %v1849
    %v1851 = vrot.slane %v1839, %v1850
    %v1852 = vadd.f32 %v1846, %v1851
    %v1853 = vadd.f32 %v1847, %v1851
    %v1854 = vmax.f32 %v1852, 0.0
    %v1855 = vmax.f32 %v1853, 0.0
    %v1856 = vmul.f32 %v1854, %v50
    %v1857 = vmul.f32 %v1855, %v51
    %v1858 = vpack.c.bf16 %v1857, %v1856
    %v1860 = vunpack.c.l.b16 %v1858
    %v1861 = vunpack.c.h.b16 %v1858
    %v1862 = vpack.c.b16 %v1860, %v1860
    %v1863 = vpack.c.b16 %v1861, %v1861
    %1866 = vst [vmem:[#allocation2 + $0x4] sm:$0xf] %v1862
    %1867 = vst [vmem:[#allocation2 + $0x8] sm:$0xf] %v1863
    %v1868 = vld [vmem:[#allocation2] sm:$0x8]
    %v1869 = vld [vmem:[#allocation2 + $0x4] sm:$0xf]
    %v1870 = vld [vmem:[#allocation2 + $0x8] sm:$0xf]
    %v1871 = vld [vmem:[#allocation2 + $0x4] sm:$0xf]
    %v1872 = vld [vmem:[#allocation2 + $0x8] sm:$0xf]
    %v1873 = vld [vmem:[#allocation2 + $0xc] sm:$0x1]
    %v1877 = vunpack.c.l.b16 %v1868
    %v1878 = vunpack.c.l.b16 %v1869
    %v1879 = vunpack.c.l.b16 %v1870
    %v1880 = vpack.c.b16 %v1878, %v1877
    %v1881 = vpack.c.b16 %v1879, %v1879
    %v1882 = vpack.c.b16 %v1879, %v1878
    %v1884 = vshrl.u32 %v1882, 16
    %v1886 = vrot.slane %v1884, 4
    %v1887 = vshll.u32 %v1882, 16
    %v1889 = vrot.slane %v1887, 5
    %v1890 = vor.u32 %v1886, %v1889
    %v1894 = vunpack.c.l.b16 %v1871
    %v1895 = vunpack.c.l.b16 %v1872
    %v1896 = vunpack.c.l.b16 %v1873
    %v1897 = vpack.c.b16 %v1895, %v1894
    %v1898 = vpack.c.b16 %v1896, %v1896
    %v1899 = vrot.slane %v1897, 5
    %v1900 = vrot.slane %v1898, 5
    %v1901 = vsel %vm99, %v1899, %v1900
    %s1902 = scalar_lea.vmem %s5, 192
    %v1903 = vld [vmem:[%s1902] sm:$0xf]
    %v1904 = vld [vmem:[%s1902 + $0x4] sm:$0xf]
    %v1905 = vld [vmem:[%s1902 + $0x8] sm:$0xf]
    %v1906 = vld [vmem:[%s1902 + $0xc] sm:$0xf]
    %v1907 = vld [vmem:[%s1902 + $0x10] sm:$0xf]
    %v1908 = vld [vmem:[%s1902 + $0x14] sm:$0xf]
    %v1909 = vld [vmem:[%s1902 + $0x18] sm:$0xf]
    %v1910 = vld [vmem:[%s1902 + $0x1c] sm:$0xf]
    %v1911 = vld [vmem:[%s1902 + $0x20] sm:$0xf]
    %v1912 = vld [vmem:[%s1902 + $0x24] sm:$0xf]
    %v1913 = vld [vmem:[%s1902 + $0x28] sm:$0xf]
    %v1914 = vld [vmem:[%s1902 + $0x2c] sm:$0xf]
    %v1915 = vld [vmem:[%s1902 + $0x30] sm:$0xf]
    %v1916 = vld [vmem:[%s1902 + $0x34] sm:$0xf]
    %v1917 = vld [vmem:[%s1902 + $0x38] sm:$0xf]
    %v1918 = vld [vmem:[%s1902 + $0x3c] sm:$0xf]
    %v1919 = vld [vmem:[%s1902 + $0x40] sm:$0xf]
    %v1920 = vld [vmem:[%s1902 + $0x44] sm:$0xf]
    %v1921 = vld [vmem:[%s1902 + $0x48] sm:$0xf]
    %v1922 = vld [vmem:[%s1902 + $0x4c] sm:$0xf]
    %v1923 = vld [vmem:[%s1902 + $0x50] sm:$0xf]
    %v1924 = vld [vmem:[%s1902 + $0x54] sm:$0xf]
    %v1925 = vld [vmem:[%s1902 + $0x58] sm:$0xf]
    %v1926 = vld [vmem:[%s1902 + $0x5c] sm:$0xf]
    %v1927 = vld [vmem:[%s1902 + $0x60] sm:$0xf]
    %v1928 = vld [vmem:[%s1902 + $0x64] sm:$0xf]
    %v1929 = vld [vmem:[%s1902 + $0x68] sm:$0xf]
    %v1930 = vld [vmem:[%s1902 + $0x6c] sm:$0xf]
    %v1931 = vld [vmem:[%s1902 + $0x70] sm:$0xf]
    %v1932 = vld [vmem:[%s1902 + $0x74] sm:$0xf]
    %v1933 = vld [vmem:[%s1902 + $0x78] sm:$0xf]
    %v1934 = vld [vmem:[%s1902 + $0x7c] sm:$0xf]
    %v1935 = vld [vmem:[%s1902 + $0x80] sm:$0xf]
    %v1936 = vld [vmem:[%s1902 + $0x84] sm:$0xf]
    %v1937 = vld [vmem:[%s1902 + $0x88] sm:$0xf]
    %v1938 = vld [vmem:[%s1902 + $0x8c] sm:$0xf]
    %v1939 = vld [vmem:[%s1902 + $0x90] sm:$0xf]
    %v1940 = vld [vmem:[%s1902 + $0x94] sm:$0xf]
    %v1941 = vld [vmem:[%s1902 + $0x98] sm:$0xf]
    %v1942 = vld [vmem:[%s1902 + $0x9c] sm:$0xf]
    %v1943 = vld [vmem:[%s1902 + $0xa0] sm:$0xf]
    %v1944 = vld [vmem:[%s1902 + $0xa4] sm:$0xf]
    %v1945 = vld [vmem:[%s1902 + $0xa8] sm:$0xf]
    %v1946 = vld [vmem:[%s1902 + $0xac] sm:$0xf]
    %v1947 = vld [vmem:[%s1902 + $0xb0] sm:$0xf]
    %v1948 = vld [vmem:[%s1902 + $0xb4] sm:$0xf]
    %v1949 = vld [vmem:[%s1902 + $0xb8] sm:$0xf]
    %v1950 = vld [vmem:[%s1902 + $0xbc] sm:$0xf]
    %v1952 = vshrl.u32 %v1880, 16
    %v1954 = vrot.slane %v1952, 3
    %v1955 = vshll.u32 %v1880, 16
    %v1957 = vrot.slane %v1955, 4
    %v1958 = vor.u32 %v1954, %v1957
    %v1960 = vshrl.u32 %v1881, 16
    %v1962 = vrot.slane %v1960, 3
    %v1963 = vshll.u32 %v1881, 16
    %v1965 = vrot.slane %v1963, 4
    %v1966 = vor.u32 %v1962, %v1965
    %v1967 = vsel %vm151, %v1958, %v1966
    %v1969 = vshrl.u32 %v1890, 16
    %v1971 = vrot.slane %v1969, 3
    %v1972 = vshll.u32 %v1890, 16
    %v1974 = vrot.slane %v1972, 4
    %v1975 = vor.u32 %v1971, %v1974
    %v1976 = vsel %vm151, %v1975, %v1975
    %v1978 = vshrl.u32 %v1899, 16
    %v1980 = vrot.slane %v1978, 3
    %v1981 = vshll.u32 %v1899, 16
    %v1983 = vrot.slane %v1981, 4
    %v1984 = vor.u32 %v1980, %v1983
    %v1986 = vshrl.u32 %v1901, 16
    %v1988 = vrot.slane %v1986, 3
    %v1989 = vshll.u32 %v1901, 16
    %v1991 = vrot.slane %v1989, 4
    %v1992 = vor.u32 %v1988, %v1991
    %v1993 = vsel %vm151, %v1984, %v1992
    %v2045 = vunpack.c.l.b16 %v1903
    %v2046 = vunpack.c.l.b16 %v1904
    %v2047 = vunpack.c.l.b16 %v1905
    %v2048 = vunpack.c.l.b16 %v1906
    %v2049 = vunpack.c.l.b16 %v1907
    %v2050 = vunpack.c.l.b16 %v1908
    %v2051 = vunpack.c.l.b16 %v1909
    %v2052 = vunpack.c.l.b16 %v1910
    %v2053 = vunpack.c.l.b16 %v1911
    %v2054 = vunpack.c.l.b16 %v1912
    %v2055 = vunpack.c.l.b16 %v1913
    %v2056 = vunpack.c.l.b16 %v1914
    %v2057 = vunpack.c.l.b16 %v1915
    %v2058 = vunpack.c.l.b16 %v1916
    %v2059 = vunpack.c.l.b16 %v1917
    %v2060 = vunpack.c.l.b16 %v1918
    %v2061 = vunpack.c.l.b16 %v1919
    %v2062 = vunpack.c.l.b16 %v1920
    %v2063 = vunpack.c.l.b16 %v1921
    %v2064 = vunpack.c.l.b16 %v1922
    %v2065 = vunpack.c.l.b16 %v1923
    %v2066 = vunpack.c.l.b16 %v1924
    %v2067 = vunpack.c.l.b16 %v1925
    %v2068 = vunpack.c.l.b16 %v1926
    %v2069 = vunpack.c.l.b16 %v1927
    %v2070 = vunpack.c.l.b16 %v1928
    %v2071 = vunpack.c.l.b16 %v1929
    %v2072 = vunpack.c.l.b16 %v1930
    %v2073 = vunpack.c.l.b16 %v1931
    %v2074 = vunpack.c.l.b16 %v1932
    %v2075 = vunpack.c.l.b16 %v1933
    %v2076 = vunpack.c.l.b16 %v1934
    %v2077 = vunpack.c.l.b16 %v1935
    %v2078 = vunpack.c.l.b16 %v1936
    %v2079 = vunpack.c.l.b16 %v1937
    %v2080 = vunpack.c.l.b16 %v1938
    %v2081 = vunpack.c.l.b16 %v1939
    %v2082 = vunpack.c.l.b16 %v1940
    %v2083 = vunpack.c.l.b16 %v1941
    %v2084 = vunpack.c.l.b16 %v1942
    %v2085 = vunpack.c.l.b16 %v1943
    %v2086 = vunpack.c.l.b16 %v1944
    %v2087 = vunpack.c.l.b16 %v1945
    %v2088 = vunpack.c.l.b16 %v1946
    %v2089 = vunpack.c.l.b16 %v1947
    %v2090 = vunpack.c.l.b16 %v1948
    %v2091 = vunpack.c.l.b16 %v1949
    %v2092 = vunpack.c.l.b16 %v1950
    %v2093 = vpack.c.b16 %v2046, %v2045
    %v2094 = vpack.c.b16 %v2048, %v2047
    %v2095 = vpack.c.b16 %v2050, %v2049
    %v2096 = vpack.c.b16 %v2052, %v2051
    %v2097 = vpack.c.b16 %v2054, %v2053
    %v2098 = vpack.c.b16 %v2056, %v2055
    %v2099 = vpack.c.b16 %v2058, %v2057
    %v2100 = vpack.c.b16 %v2060, %v2059
    %v2101 = vpack.c.b16 %v2062, %v2061
    %v2102 = vpack.c.b16 %v2064, %v2063
    %v2103 = vpack.c.b16 %v2066, %v2065
    %v2104 = vpack.c.b16 %v2068, %v2067
    %v2105 = vpack.c.b16 %v2070, %v2069
    %v2106 = vpack.c.b16 %v2072, %v2071
    %v2107 = vpack.c.b16 %v2074, %v2073
    %v2108 = vpack.c.b16 %v2076, %v2075
    %v2109 = vpack.c.b16 %v2078, %v2077
    %v2110 = vpack.c.b16 %v2080, %v2079
    %v2111 = vpack.c.b16 %v2082, %v2081
    %v2112 = vpack.c.b16 %v2084, %v2083
    %v2113 = vpack.c.b16 %v2086, %v2085
    %v2114 = vpack.c.b16 %v2088, %v2087
    %v2115 = vpack.c.b16 %v2090, %v2089
    %v2116 = vpack.c.b16 %v2092, %v2091
    %2141 = vmatprep.subr.bf16.mxu0 0
    %2142 = vmatpush1.bf16.msra.mxu0 %v2100
    %2143 = vmatprep.subr.bf16.mxu0 0
    %2144 = vmatpush1.bf16.msra.mxu0 %v2099
    %2145 = vmatprep.subr.bf16.mxu0 0
    %2146 = vmatpush1.bf16.msra.mxu0 %v2098
    %2147 = vmatprep.subr.bf16.mxu0 0
    %2148 = vmatpush1.bf16.msra.mxu0 %v2097
    %2149 = vmatprep.subr.bf16.mxu0 0
    %2150 = vmatpush1.bf16.msra.mxu0 %v2096
    %2151 = vmatprep.subr.bf16.mxu0 0
    %2152 = vmatpush1.bf16.msra.mxu0 %v2095
    %2153 = vmatprep.subr.bf16.mxu0 0
    %2154 = vmatpush1.bf16.msra.mxu0 %v2094
    %2155 = vmatprep.subr.bf16.mxu0 0
    %2156 = vmatpush1.bf16.msra.mxu0 %v2093
    %2157 = vmatprep.subr.bf16.mxu0 0
    %2158 = vmatpush2.bf16.msra.mxu0 %v2108
    %2159 = vmatprep.subr.bf16.mxu0 0
    %2160 = vmatpush2.bf16.msra.mxu0 %v2107
    %2161 = vmatprep.subr.bf16.mxu0 0
    %2162 = vmatpush2.bf16.msra.mxu0 %v2106
    %2163 = vmatprep.subr.bf16.mxu0 0
    %2164 = vmatpush2.bf16.msra.mxu0 %v2105
    %2165 = vmatprep.subr.bf16.mxu0 0
    %2166 = vmatpush2.bf16.msra.mxu0 %v2104
    %2167 = vmatprep.subr.bf16.mxu0 0
    %2168 = vmatpush2.bf16.msra.mxu0 %v2103
    %2169 = vmatprep.subr.bf16.mxu0 0
    %2170 = vmatpush2.bf16.msra.mxu0 %v2102
    %2171 = vmatprep.subr.bf16.mxu0 0
    %2172 = vmatpush2.bf16.msra.mxu0 %v2101
    %2173 = vmatprep.mubr.bf16.mxu0 %v1976
    %2174 = vmatmul.mubr.bf16.gmra.mxu0 %v1967
    %v2175 = vpop.f32.mrf.mxu0
    %v2176 = vadd.f32 0.0, %v2175
    %v2177 = vpop.f32.mrf.mxu0
    %v2178 = vpop.f32.mrf.mxu0
    %v2179 = vadd.f32 0.0, %v2178
    %v2180 = vpop.f32.mrf.mxu0
    %2181 = vdwg.mxu0
    %2182 = vmatprep.subr.bf16.mxu0 0
    %2183 = vmatpush1.bf16.msra.mxu0 %v2116
    %2184 = vmatprep.subr.bf16.mxu0 0
    %2185 = vmatpush1.bf16.msra.mxu0 %v2115
    %2186 = vmatprep.subr.bf16.mxu0 0
    %2187 = vmatpush1.bf16.msra.mxu0 %v2114
    %2188 = vmatprep.subr.bf16.mxu0 0
    %2189 = vmatpush1.bf16.msra.mxu0 %v2113
    %2190 = vmatprep.subr.bf16.mxu0 0
    %2191 = vmatpush1.bf16.msra.mxu0 %v2112
    %2192 = vmatprep.subr.bf16.mxu0 0
    %2193 = vmatpush1.bf16.msra.mxu0 %v2111
    %2194 = vmatprep.subr.bf16.mxu0 0
    %2195 = vmatpush1.bf16.msra.mxu0 %v2110
    %2196 = vmatprep.subr.bf16.mxu0 0
    %2197 = vmatpush1.bf16.msra.mxu0 %v2109
    %2198 = vmatprep.subr.bf16.mxu0 0
    %2199 = vmatpush2.bf16.msra.mxu0 0
    %2200 = vmatprep.subr.bf16.mxu0 0
    %2201 = vmatpush2.bf16.msra.mxu0 0
    %2202 = vmatprep.subr.bf16.mxu0 0
    %2203 = vmatpush2.bf16.msra.mxu0 0
    %2204 = vmatprep.subr.bf16.mxu0 0
    %2205 = vmatpush2.bf16.msra.mxu0 0
    %2206 = vmatprep.subr.bf16.mxu0 0
    %2207 = vmatpush2.bf16.msra.mxu0 0
    %2208 = vmatprep.subr.bf16.mxu0 0
    %2209 = vmatpush2.bf16.msra.mxu0 0
    %2210 = vmatprep.subr.bf16.mxu0 0
    %2211 = vmatpush2.bf16.msra.mxu0 0
    %2212 = vmatprep.subr.bf16.mxu0 0
    %2213 = vmatpush2.bf16.msra.mxu0 0
    %2214 = vmatprep.mubr.bf16.mxu0 0
    %2215 = vmatmul.mubr.bf16.gmra.mxu0 %v1993
    %v2216 = vpop.f32.mrf.mxu0
    %v2217 = vadd.f32 %v2176, %v2216
    %v2218 = vpop.f32.mrf.mxu0
    %v2219 = vpop.f32.mrf.mxu0
    %v2220 = vadd.f32 %v2179, %v2219
    %v2221 = vpop.f32.mrf.mxu0
    %2222 = vdwg.mxu0
    %s2223 = scalar_lea.vmem %s6, 1
    %v2224 = vld [vmem:[%s2223] sm:$0x1]
    %s2225 = scalar_lea.vmem %s7, 1
    %v2226 = vld [vmem:[%s2225] sm:$0x1]
    %v2227 = vmul.f32 %v2217, %v50
    %v2228 = vmul.f32 %v2220, %v51
    %v2229 = vadd.f32 %v2227, %v2228
    %v2230 = vrot.slane %v2229, 4
    %v2231 = vadd.f32 %v2229, %v2230
    %v2232 = vrot.slane %v2231, 2
    %v2233 = vadd.f32 %v2231, %v2232
    %v2234 = vrot.slane %v2233, 1
    %v2235 = vadd.f32 %v2233, %v2234
    %v2236 = vmul.f32 %v2227, %v2217
    %v2237 = vmul.f32 %v2228, %v2220
    %v2238 = vadd.f32 %v2236, %v2237
    %v2239 = vrot.slane %v2238, 4
    %v2240 = vadd.f32 %v2238, %v2239
    %v2241 = vrot.slane %v2240, 2
    %v2242 = vadd.f32 %v2240, %v2241
    %v2243 = vrot.slane %v2242, 1
    %v2244 = vadd.f32 %v2242, %v2243
    %v2245 = vsel %vm444, %v2235, %v2244
    %v2246 = vld [vmem:[#allocation3] sm:$0xff]
    %v2247 = vld [vmem:[#allocation3 + $0x8] sm:$0xff]
    %v2248 = vld [vmem:[#allocation3 + $0x10] sm:$0xff]
    %v2249 = vld [vmem:[#allocation3 + $0x18] sm:$0xff]
    %v2250 = vld [vmem:[#allocation3 + $0x20] sm:$0xff]
    %v2251 = vld [vmem:[#allocation3 + $0x28] sm:$0xff]
    %v2252 = vld [vmem:[#allocation3 + $0x30] sm:$0xff]
    %v2253 = vld [vmem:[#allocation3 + $0x38] sm:$0xff]
    %v2254 = vld [vmem:[#allocation3 + $0x40] sm:$0xff]
    %v2255 = vld [vmem:[#allocation3 + $0x48] sm:$0xff]
    %v2256 = vld [vmem:[#allocation3 + $0x50] sm:$0xff]
    %v2257 = vld [vmem:[#allocation3 + $0x58] sm:$0xff]
    %v2258 = vld [vmem:[#allocation3 + $0x60] sm:$0xff]
    %v2259 = vld [vmem:[#allocation3 + $0x68] sm:$0xff]
    %v2260 = vld [vmem:[#allocation3 + $0x70] sm:$0xff]
    %v2261 = vld [vmem:[#allocation3 + $0x78] sm:$0xff]
    %2262 = vmatprep.subr.mxu0 0.0
    %2263 = vmatpush1.msra.mxu0 %v2261
    %2264 = vmatprep.subr.mxu0 0.0
    %2265 = vmatpush1.msra.mxu0 %v2260
    %2266 = vmatprep.subr.mxu0 0.0
    %2267 = vmatpush1.msra.mxu0 %v2259
    %2268 = vmatprep.subr.mxu0 0.0
    %2269 = vmatpush1.msra.mxu0 %v2258
    %2270 = vmatprep.subr.mxu0 0.0
    %2271 = vmatpush1.msra.mxu0 %v2257
    %2272 = vmatprep.subr.mxu0 0.0
    %2273 = vmatpush1.msra.mxu0 %v2256
    %2274 = vmatprep.subr.mxu0 0.0
    %2275 = vmatpush1.msra.mxu0 %v2255
    %2276 = vmatprep.subr.mxu0 0.0
    %2277 = vmatpush1.msra.mxu0 %v2254
    %2278 = vmatprep.subr.mxu0 0.0
    %2279 = vmatpush1.msra.mxu0 %v2253
    %2280 = vmatprep.subr.mxu0 0.0
    %2281 = vmatpush1.msra.mxu0 %v2252
    %2282 = vmatprep.subr.mxu0 0.0
    %2283 = vmatpush1.msra.mxu0 %v2251
    %2284 = vmatprep.subr.mxu0 0.0
    %2285 = vmatpush1.msra.mxu0 %v2250
    %2286 = vmatprep.subr.mxu0 0.0
    %2287 = vmatpush1.msra.mxu0 %v2249
    %2288 = vmatprep.subr.mxu0 0.0
    %2289 = vmatpush1.msra.mxu0 %v2248
    %2290 = vmatprep.subr.mxu0 0.0
    %2291 = vmatpush1.msra.mxu0 %v2247
    %2292 = vmatprep.subr.mxu0 0.0
    %2293 = vmatpush1.msra.mxu0 %v2246
    %2294 = vmatprep.subr.mxu0 0.0
    %2295 = vmatpush2.msra.mxu0 0.0
    %2296 = vmatprep.subr.mxu0 0.0
    %2297 = vmatpush2.msra.mxu0 0.0
    %2298 = vmatprep.subr.mxu0 0.0
    %2299 = vmatpush2.msra.mxu0 0.0
    %2300 = vmatprep.subr.mxu0 0.0
    %2301 = vmatpush2.msra.mxu0 0.0
    %2302 = vmatprep.subr.mxu0 0.0
    %2303 = vmatpush2.msra.mxu0 0.0
    %2304 = vmatprep.subr.mxu0 0.0
    %2305 = vmatpush2.msra.mxu0 0.0
    %2306 = vmatprep.subr.mxu0 0.0
    %2307 = vmatpush2.msra.mxu0 0.0
    %2308 = vmatprep.subr.mxu0 0.0
    %2309 = vmatpush2.msra.mxu0 0.0
    %2310 = vmatprep.subr.mxu0 0.0
    %2311 = vmatpush2.msra.mxu0 0.0
    %2312 = vmatprep.subr.mxu0 0.0
    %2313 = vmatpush2.msra.mxu0 0.0
    %2314 = vmatprep.subr.mxu0 0.0
    %2315 = vmatpush2.msra.mxu0 0.0
    %2316 = vmatprep.subr.mxu0 0.0
    %2317 = vmatpush2.msra.mxu0 0.0
    %2318 = vmatprep.subr.mxu0 0.0
    %2319 = vmatpush2.msra.mxu0 0.0
    %2320 = vmatprep.subr.mxu0 0.0
    %2321 = vmatpush2.msra.mxu0 0.0
    %2322 = vmatprep.subr.mxu0 0.0
    %2323 = vmatpush2.msra.mxu0 0.0
    %2324 = vmatprep.subr.mxu0 0.0
    %2325 = vmatpush2.msra.mxu0 0.0
    %2326 = vmatprep.mubr.f32.mxu0 0.0
    %2327 = vmatmul.mubr.f32.gmra.mxu0 %v2245
    %v2328 = vpop.f32.mrf.mxu0
    %v2329 = vadd.f32 0.0, %v2328
    %v2330 = vpop.f32.mrf.mxu0
    %2331 = vdwg.mxu0
    %v2332 = vmul.f32 %v2329, 0.03125
    %v2333 = vmul.f32 %v2332, %v2332
    %v2335 = vrot.slane %v2333, 7
    %v2337 = vsub.f32 %v2332, %v2335
    %v2338 = vmax.f32 %v2337, 0.0
    %v2339 = vadd.f32 %v2338, 1e-05
    %v2340 = vrsqrt.pop %v2339
    %v2343 = vunpack.c.l.s4 1966171168
    %v2344 = vunpack.c.0.s8 %v2343
    %v2345 = vlaneseq
    %v2346 = vshrl.u32 %v2345, 7
    %v2347 = vsub.s32 %v2344, %v2346
    %v2348 = vrot.slane %v2340, %v2347
    %v2349 = vcombine.high %v2348, %v2348
    %v2351 = vunpack.c.l.s4 1966171168
    %v2352 = vunpack.c.0.s8 %v2351
    %v2353 = vlaneseq
    %v2354 = vshrl.u32 %v2353, 7
    %v2355 = vsub.s32 %v2352, %v2354
    %v2356 = vrot.slane %v2349, %v2355
    %v2358 = vmul.f32 %v2224, %v2356
    %v2359 = vmul.f32 %v2332, %v2358
    %v2360 = vsub.f32 %v2226, %v2359
    %v2362 = vlaneseq
    %v2363 = vshrl.u32 %v2362, 7
    %v2364 = vsub.s32 0, %v2363
    %v2365 = vrot.slane %v2360, %v2364
    %v2367 = vsel %vm444, %v2358, %v2365
    %v2368 = vld [vmem:[%s9] sm:$0xff]
    %v2370 = vsel %vm569, %v2367, 0
    %2372 = vmatprep.subr.mxu0 0.0
    %2373 = vmatpush1.msra.mxu0 0.0
    %2374 = vmatprep.subr.mxu0 0.0
    %2375 = vmatpush1.msra.mxu0 0.0
    %2376 = vmatprep.subr.mxu0 0.0
    %2377 = vmatpush1.msra.mxu0 0.0
    %2378 = vmatprep.subr.mxu0 0.0
    %2379 = vmatpush1.msra.mxu0 0.0
    %2380 = vmatprep.subr.mxu0 0.0
    %2381 = vmatpush1.msra.mxu0 0.0
    %2382 = vmatprep.subr.mxu0 0.0
    %2383 = vmatpush1.msra.mxu0 0.0
    %2384 = vmatprep.subr.mxu0 0.0
    %2385 = vmatpush1.msra.mxu0 0.0
    %2386 = vmatprep.subr.mxu0 0.0
    %2387 = vmatpush1.msra.mxu0 0.0
    %2388 = vmatprep.subr.mxu0 0.0
    %2389 = vmatpush1.msra.mxu0 0.0
    %2390 = vmatprep.subr.mxu0 0.0
    %2391 = vmatpush1.msra.mxu0 0.0
    %2392 = vmatprep.subr.mxu0 0.0
    %2393 = vmatpush1.msra.mxu0 0.0
    %2394 = vmatprep.subr.mxu0 0.0
    %2395 = vmatpush1.msra.mxu0 0.0
    %2396 = vmatprep.subr.mxu0 0.0
    %2397 = vmatpush1.msra.mxu0 0.0
    %2398 = vmatprep.subr.mxu0 0.0
    %2399 = vmatpush1.msra.mxu0 0.0
    %2400 = vmatprep.subr.mxu0 0.0
    %2401 = vmatpush1.msra.mxu0 0.0
    %2402 = vmatprep.subr.mxu0 0.0
    %2403 = vmatpush1.msra.mxu0 %v2368
    %2404 = vmatprep.subr.mxu0 0.0
    %2405 = vmatpush2.msra.mxu0 0.0
    %2406 = vmatprep.subr.mxu0 0.0
    %2407 = vmatpush2.msra.mxu0 0.0
    %2408 = vmatprep.subr.mxu0 0.0
    %2409 = vmatpush2.msra.mxu0 0.0
    %2410 = vmatprep.subr.mxu0 0.0
    %2411 = vmatpush2.msra.mxu0 0.0
    %2412 = vmatprep.subr.mxu0 0.0
    %2413 = vmatpush2.msra.mxu0 0.0
    %2414 = vmatprep.subr.mxu0 0.0
    %2415 = vmatpush2.msra.mxu0 0.0
    %2416 = vmatprep.subr.mxu0 0.0
    %2417 = vmatpush2.msra.mxu0 0.0
    %2418 = vmatprep.subr.mxu0 0.0
    %2419 = vmatpush2.msra.mxu0 0.0
    %2420 = vmatprep.subr.mxu0 0.0
    %2421 = vmatpush2.msra.mxu0 0.0
    %2422 = vmatprep.subr.mxu0 0.0
    %2423 = vmatpush2.msra.mxu0 0.0
    %2424 = vmatprep.subr.mxu0 0.0
    %2425 = vmatpush2.msra.mxu0 0.0
    %2426 = vmatprep.subr.mxu0 0.0
    %2427 = vmatpush2.msra.mxu0 0.0
    %2428 = vmatprep.subr.mxu0 0.0
    %2429 = vmatpush2.msra.mxu0 0.0
    %2430 = vmatprep.subr.mxu0 0.0
    %2431 = vmatpush2.msra.mxu0 0.0
    %2432 = vmatprep.subr.mxu0 0.0
    %2433 = vmatpush2.msra.mxu0 0.0
    %2434 = vmatprep.subr.mxu0 0.0
    %2435 = vmatpush2.msra.mxu0 0.0
    %2436 = vmatprep.mubr.f32.mxu0 0.0
    %2437 = vmatmul.mubr.f32.gmra.mxu0 %v2370
    %v2438 = vpop.f32.mrf.mxu0
    %v2439 = vadd.f32 0.0, %v2438
    %v2440 = vpop.f32.mrf.mxu0
    %2441 = vdwg.mxu0
    %v2442 = vlaneseq
    %v2443 = vshrl.u32 %v2442, 7
    %v2444 = vsub.s32 0, %v2443
    %v2445 = vrot.slane %v2439, %v2444
    %v2446 = vmul.f32 %v2217, %v2445
    %v2447 = vmul.f32 %v2220, %v2445
    %v2448 = vlaneseq
    %v2449 = vshrl.u32 %v2448, 7
    %v2450 = vsub.s32 1, %v2449
    %v2451 = vrot.slane %v2439, %v2450
    %v2452 = vadd.f32 %v2446, %v2451
    %v2453 = vadd.f32 %v2447, %v2451
    %v2454 = vadd.f32 %v2452, %v1256
    %v2455 = vadd.f32 %v2453, %v1257
    %v2456 = vmax.f32 %v2454, 0.0
    %v2457 = vmax.f32 %v2455, 0.0
    %v2458 = vmul.f32 %v2456, %v50
    %v2459 = vmul.f32 %v2457, %v51
    %v2460 = vpack.c.bf16 %v2459, %v2458
    %v2462 = vunpack.c.l.b16 %v2460
    %v2463 = vunpack.c.h.b16 %v2460
    %v2464 = vpack.c.b16 %v2462, %v2462
    %v2465 = vpack.c.b16 %v2463, %v2463
    %2468 = vst [vmem:[#allocation2 + $0x4] sm:$0xf] %v2464
    %2469 = vst [vmem:[#allocation2 + $0x8] sm:$0xf] %v2465
    %v2470 = vld [vmem:[#allocation2] sm:$0x8]
    %v2471 = vld [vmem:[#allocation2 + $0x4] sm:$0xf]
    %v2472 = vld [vmem:[#allocation2 + $0x8] sm:$0xf]
    %v2473 = vld [vmem:[#allocation2 + $0x4] sm:$0xf]
    %v2474 = vld [vmem:[#allocation2 + $0x8] sm:$0xf]
    %v2475 = vld [vmem:[#allocation2 + $0xc] sm:$0x1]
    %v2479 = vunpack.c.l.b16 %v2470
    %v2480 = vunpack.c.l.b16 %v2471
    %v2481 = vunpack.c.l.b16 %v2472
    %v2482 = vpack.c.b16 %v2480, %v2479
    %v2483 = vpack.c.b16 %v2481, %v2481
    %v2484 = vpack.c.b16 %v2481, %v2480
    %v2486 = vshrl.u32 %v2484, 16
    %v2488 = vrot.slane %v2486, 4
    %v2489 = vshll.u32 %v2484, 16
    %v2491 = vrot.slane %v2489, 5
    %v2492 = vor.u32 %v2488, %v2491
    %v2496 = vunpack.c.l.b16 %v2473
    %v2497 = vunpack.c.l.b16 %v2474
    %v2498 = vunpack.c.l.b16 %v2475
    %v2499 = vpack.c.b16 %v2497, %v2496
    %v2500 = vpack.c.b16 %v2498, %v2498
    %v2501 = vrot.slane %v2499, 5
    %v2502 = vrot.slane %v2500, 5
    %v2503 = vsel %vm99, %v2501, %v2502
    %s2504 = scalar_lea.vmem %s2, 384
    %v2505 = vld [vmem:[%s2504] sm:$0xf]
    %v2506 = vld [vmem:[%s2504 + $0x4] sm:$0xf]
    %v2507 = vld [vmem:[%s2504 + $0x8] sm:$0xf]
    %v2508 = vld [vmem:[%s2504 + $0xc] sm:$0xf]
    %v2509 = vld [vmem:[%s2504 + $0x10] sm:$0xf]
    %v2510 = vld [vmem:[%s2504 + $0x14] sm:$0xf]
    %v2511 = vld [vmem:[%s2504 + $0x18] sm:$0xf]
    %v2512 = vld [vmem:[%s2504 + $0x1c] sm:$0xf]
    %v2513 = vld [vmem:[%s2504 + $0x20] sm:$0xf]
    %v2514 = vld [vmem:[%s2504 + $0x24] sm:$0xf]
    %v2515 = vld [vmem:[%s2504 + $0x28] sm:$0xf]
    %v2516 = vld [vmem:[%s2504 + $0x2c] sm:$0xf]
    %v2517 = vld [vmem:[%s2504 + $0x30] sm:$0xf]
    %v2518 = vld [vmem:[%s2504 + $0x34] sm:$0xf]
    %v2519 = vld [vmem:[%s2504 + $0x38] sm:$0xf]
    %v2520 = vld [vmem:[%s2504 + $0x3c] sm:$0xf]
    %v2521 = vld [vmem:[%s2504 + $0x40] sm:$0xf]
    %v2522 = vld [vmem:[%s2504 + $0x44] sm:$0xf]
    %v2523 = vld [vmem:[%s2504 + $0x48] sm:$0xf]
    %v2524 = vld [vmem:[%s2504 + $0x4c] sm:$0xf]
    %v2525 = vld [vmem:[%s2504 + $0x50] sm:$0xf]
    %v2526 = vld [vmem:[%s2504 + $0x54] sm:$0xf]
    %v2527 = vld [vmem:[%s2504 + $0x58] sm:$0xf]
    %v2528 = vld [vmem:[%s2504 + $0x5c] sm:$0xf]
    %v2529 = vld [vmem:[%s2504 + $0x60] sm:$0xf]
    %v2530 = vld [vmem:[%s2504 + $0x64] sm:$0xf]
    %v2531 = vld [vmem:[%s2504 + $0x68] sm:$0xf]
    %v2532 = vld [vmem:[%s2504 + $0x6c] sm:$0xf]
    %v2533 = vld [vmem:[%s2504 + $0x70] sm:$0xf]
    %v2534 = vld [vmem:[%s2504 + $0x74] sm:$0xf]
    %v2535 = vld [vmem:[%s2504 + $0x78] sm:$0xf]
    %v2536 = vld [vmem:[%s2504 + $0x7c] sm:$0xf]
    %v2537 = vld [vmem:[%s2504 + $0x80] sm:$0xf]
    %v2538 = vld [vmem:[%s2504 + $0x84] sm:$0xf]
    %v2539 = vld [vmem:[%s2504 + $0x88] sm:$0xf]
    %v2540 = vld [vmem:[%s2504 + $0x8c] sm:$0xf]
    %v2541 = vld [vmem:[%s2504 + $0x90] sm:$0xf]
    %v2542 = vld [vmem:[%s2504 + $0x94] sm:$0xf]
    %v2543 = vld [vmem:[%s2504 + $0x98] sm:$0xf]
    %v2544 = vld [vmem:[%s2504 + $0x9c] sm:$0xf]
    %v2545 = vld [vmem:[%s2504 + $0xa0] sm:$0xf]
    %v2546 = vld [vmem:[%s2504 + $0xa4] sm:$0xf]
    %v2547 = vld [vmem:[%s2504 + $0xa8] sm:$0xf]
    %v2548 = vld [vmem:[%s2504 + $0xac] sm:$0xf]
    %v2549 = vld [vmem:[%s2504 + $0xb0] sm:$0xf]
    %v2550 = vld [vmem:[%s2504 + $0xb4] sm:$0xf]
    %v2551 = vld [vmem:[%s2504 + $0xb8] sm:$0xf]
    %v2552 = vld [vmem:[%s2504 + $0xbc] sm:$0xf]
    %v2554 = vshrl.u32 %v2482, 16
    %v2556 = vrot.slane %v2554, 3
    %v2557 = vshll.u32 %v2482, 16
    %v2559 = vrot.slane %v2557, 4
    %v2560 = vor.u32 %v2556, %v2559
    %v2562 = vshrl.u32 %v2483, 16
    %v2564 = vrot.slane %v2562, 3
    %v2565 = vshll.u32 %v2483, 16
    %v2567 = vrot.slane %v2565, 4
    %v2568 = vor.u32 %v2564, %v2567
    %v2569 = vsel %vm151, %v2560, %v2568
    %v2571 = vshrl.u32 %v2492, 16
    %v2573 = vrot.slane %v2571, 3
    %v2574 = vshll.u32 %v2492, 16
    %v2576 = vrot.slane %v2574, 4
    %v2577 = vor.u32 %v2573, %v2576
    %v2578 = vsel %vm151, %v2577, %v2577
    %v2580 = vshrl.u32 %v2501, 16
    %v2582 = vrot.slane %v2580, 3
    %v2583 = vshll.u32 %v2501, 16
    %v2585 = vrot.slane %v2583, 4
    %v2586 = vor.u32 %v2582, %v2585
    %v2588 = vshrl.u32 %v2503, 16
    %v2590 = vrot.slane %v2588, 3
    %v2591 = vshll.u32 %v2503, 16
    %v2593 = vrot.slane %v2591, 4
    %v2594 = vor.u32 %v2590, %v2593
    %v2595 = vsel %vm151, %v2586, %v2594
    %v2647 = vunpack.c.l.b16 %v2505
    %v2648 = vunpack.c.l.b16 %v2506
    %v2649 = vunpack.c.l.b16 %v2507
    %v2650 = vunpack.c.l.b16 %v2508
    %v2651 = vunpack.c.l.b16 %v2509
    %v2652 = vunpack.c.l.b16 %v2510
    %v2653 = vunpack.c.l.b16 %v2511
    %v2654 = vunpack.c.l.b16 %v2512
    %v2655 = vunpack.c.l.b16 %v2513
    %v2656 = vunpack.c.l.b16 %v2514
    %v2657 = vunpack.c.l.b16 %v2515
    %v2658 = vunpack.c.l.b16 %v2516
    %v2659 = vunpack.c.l.b16 %v2517
    %v2660 = vunpack.c.l.b16 %v2518
    %v2661 = vunpack.c.l.b16 %v2519
    %v2662 = vunpack.c.l.b16 %v2520
    %v2663 = vunpack.c.l.b16 %v2521
    %v2664 = vunpack.c.l.b16 %v2522
    %v2665 = vunpack.c.l.b16 %v2523
    %v2666 = vunpack.c.l.b16 %v2524
    %v2667 = vunpack.c.l.b16 %v2525
    %v2668 = vunpack.c.l.b16 %v2526
    %v2669 = vunpack.c.l.b16 %v2527
    %v2670 = vunpack.c.l.b16 %v2528
    %v2671 = vunpack.c.l.b16 %v2529
    %v2672 = vunpack.c.l.b16 %v2530
    %v2673 = vunpack.c.l.b16 %v2531
    %v2674 = vunpack.c.l.b16 %v2532
    %v2675 = vunpack.c.l.b16 %v2533
    %v2676 = vunpack.c.l.b16 %v2534
    %v2677 = vunpack.c.l.b16 %v2535
    %v2678 = vunpack.c.l.b16 %v2536
    %v2679 = vunpack.c.l.b16 %v2537
    %v2680 = vunpack.c.l.b16 %v2538
    %v2681 = vunpack.c.l.b16 %v2539
    %v2682 = vunpack.c.l.b16 %v2540
    %v2683 = vunpack.c.l.b16 %v2541
    %v2684 = vunpack.c.l.b16 %v2542
    %v2685 = vunpack.c.l.b16 %v2543
    %v2686 = vunpack.c.l.b16 %v2544
    %v2687 = vunpack.c.l.b16 %v2545
    %v2688 = vunpack.c.l.b16 %v2546
    %v2689 = vunpack.c.l.b16 %v2547
    %v2690 = vunpack.c.l.b16 %v2548
    %v2691 = vunpack.c.l.b16 %v2549
    %v2692 = vunpack.c.l.b16 %v2550
    %v2693 = vunpack.c.l.b16 %v2551
    %v2694 = vunpack.c.l.b16 %v2552
    %v2695 = vpack.c.b16 %v2648, %v2647
    %v2696 = vpack.c.b16 %v2650, %v2649
    %v2697 = vpack.c.b16 %v2652, %v2651
    %v2698 = vpack.c.b16 %v2654, %v2653
    %v2699 = vpack.c.b16 %v2656, %v2655
    %v2700 = vpack.c.b16 %v2658, %v2657
    %v2701 = vpack.c.b16 %v2660, %v2659
    %v2702 = vpack.c.b16 %v2662, %v2661
    %v2703 = vpack.c.b16 %v2664, %v2663
    %v2704 = vpack.c.b16 %v2666, %v2665
    %v2705 = vpack.c.b16 %v2668, %v2667
    %v2706 = vpack.c.b16 %v2670, %v2669
    %v2707 = vpack.c.b16 %v2672, %v2671
    %v2708 = vpack.c.b16 %v2674, %v2673
    %v2709 = vpack.c.b16 %v2676, %v2675
    %v2710 = vpack.c.b16 %v2678, %v2677
    %v2711 = vpack.c.b16 %v2680, %v2679
    %v2712 = vpack.c.b16 %v2682, %v2681
    %v2713 = vpack.c.b16 %v2684, %v2683
    %v2714 = vpack.c.b16 %v2686, %v2685
    %v2715 = vpack.c.b16 %v2688, %v2687
    %v2716 = vpack.c.b16 %v2690, %v2689
    %v2717 = vpack.c.b16 %v2692, %v2691
    %v2718 = vpack.c.b16 %v2694, %v2693
    %2743 = vmatprep.subr.bf16.mxu0 0
    %2744 = vmatpush1.bf16.msra.mxu0 %v2702
    %2745 = vmatprep.subr.bf16.mxu0 0
    %2746 = vmatpush1.bf16.msra.mxu0 %v2701
    %2747 = vmatprep.subr.bf16.mxu0 0
    %2748 = vmatpush1.bf16.msra.mxu0 %v2700
    %2749 = vmatprep.subr.bf16.mxu0 0
    %2750 = vmatpush1.bf16.msra.mxu0 %v2699
    %2751 = vmatprep.subr.bf16.mxu0 0
    %2752 = vmatpush1.bf16.msra.mxu0 %v2698
    %2753 = vmatprep.subr.bf16.mxu0 0
    %2754 = vmatpush1.bf16.msra.mxu0 %v2697
    %2755 = vmatprep.subr.bf16.mxu0 0
    %2756 = vmatpush1.bf16.msra.mxu0 %v2696
    %2757 = vmatprep.subr.bf16.mxu0 0
    %2758 = vmatpush1.bf16.msra.mxu0 %v2695
    %2759 = vmatprep.subr.bf16.mxu0 0
    %2760 = vmatpush2.bf16.msra.mxu0 %v2710
    %2761 = vmatprep.subr.bf16.mxu0 0
    %2762 = vmatpush2.bf16.msra.mxu0 %v2709
    %2763 = vmatprep.subr.bf16.mxu0 0
    %2764 = vmatpush2.bf16.msra.mxu0 %v2708
    %2765 = vmatprep.subr.bf16.mxu0 0
    %2766 = vmatpush2.bf16.msra.mxu0 %v2707
    %2767 = vmatprep.subr.bf16.mxu0 0
    %2768 = vmatpush2.bf16.msra.mxu0 %v2706
    %2769 = vmatprep.subr.bf16.mxu0 0
    %2770 = vmatpush2.bf16.msra.mxu0 %v2705
    %2771 = vmatprep.subr.bf16.mxu0 0
    %2772 = vmatpush2.bf16.msra.mxu0 %v2704
    %2773 = vmatprep.subr.bf16.mxu0 0
    %2774 = vmatpush2.bf16.msra.mxu0 %v2703
    %2775 = vmatprep.mubr.bf16.mxu0 %v2578
    %2776 = vmatmul.mubr.bf16.gmra.mxu0 %v2569
    %v2777 = vpop.f32.mrf.mxu0
    %v2778 = vadd.f32 0.0, %v2777
    %v2779 = vpop.f32.mrf.mxu0
    %v2780 = vpop.f32.mrf.mxu0
    %v2781 = vadd.f32 0.0, %v2780
    %v2782 = vpop.f32.mrf.mxu0
    %2783 = vdwg.mxu0
    %2784 = vmatprep.subr.bf16.mxu0 0
    %2785 = vmatpush1.bf16.msra.mxu0 %v2718
    %2786 = vmatprep.subr.bf16.mxu0 0
    %2787 = vmatpush1.bf16.msra.mxu0 %v2717
    %2788 = vmatprep.subr.bf16.mxu0 0
    %2789 = vmatpush1.bf16.msra.mxu0 %v2716
    %2790 = vmatprep.subr.bf16.mxu0 0
    %2791 = vmatpush1.bf16.msra.mxu0 %v2715
    %2792 = vmatprep.subr.bf16.mxu0 0
    %2793 = vmatpush1.bf16.msra.mxu0 %v2714
    %2794 = vmatprep.subr.bf16.mxu0 0
    %2795 = vmatpush1.bf16.msra.mxu0 %v2713
    %2796 = vmatprep.subr.bf16.mxu0 0
    %2797 = vmatpush1.bf16.msra.mxu0 %v2712
    %2798 = vmatprep.subr.bf16.mxu0 0
    %2799 = vmatpush1.bf16.msra.mxu0 %v2711
    %2800 = vmatprep.subr.bf16.mxu0 0
    %2801 = vmatpush2.bf16.msra.mxu0 0
    %2802 = vmatprep.subr.bf16.mxu0 0
    %2803 = vmatpush2.bf16.msra.mxu0 0
    %2804 = vmatprep.subr.bf16.mxu0 0
    %2805 = vmatpush2.bf16.msra.mxu0 0
    %2806 = vmatprep.subr.bf16.mxu0 0
    %2807 = vmatpush2.bf16.msra.mxu0 0
    %2808 = vmatprep.subr.bf16.mxu0 0
    %2809 = vmatpush2.bf16.msra.mxu0 0
    %2810 = vmatprep.subr.bf16.mxu0 0
    %2811 = vmatpush2.bf16.msra.mxu0 0
    %2812 = vmatprep.subr.bf16.mxu0 0
    %2813 = vmatpush2.bf16.msra.mxu0 0
    %2814 = vmatprep.subr.bf16.mxu0 0
    %2815 = vmatpush2.bf16.msra.mxu0 0
    %2816 = vmatprep.mubr.bf16.mxu0 0
    %2817 = vmatmul.mubr.bf16.gmra.mxu0 %v2595
    %v2818 = vpop.f32.mrf.mxu0
    %v2819 = vadd.f32 %v2778, %v2818
    %v2820 = vpop.f32.mrf.mxu0
    %v2821 = vpop.f32.mrf.mxu0
    %v2822 = vadd.f32 %v2781, %v2821
    %v2823 = vpop.f32.mrf.mxu0
    %2824 = vdwg.mxu0
    %s2825 = scalar_lea.vmem %s3, 2
    %v2826 = vld [vmem:[%s2825] sm:$0x1]
    %s2827 = scalar_lea.vmem %s4, 2
    %v2828 = vld [vmem:[%s2827] sm:$0x1]
    %v2829 = vmul.f32 %v2819, %v50
    %v2830 = vmul.f32 %v2822, %v51
    %v2831 = vadd.f32 %v2829, %v2830
    %v2832 = vrot.slane %v2831, 4
    %v2833 = vadd.f32 %v2831, %v2832
    %v2834 = vrot.slane %v2833, 2
    %v2835 = vadd.f32 %v2833, %v2834
    %v2836 = vrot.slane %v2835, 1
    %v2837 = vadd.f32 %v2835, %v2836
    %v2838 = vmul.f32 %v2829, %v2819
    %v2839 = vmul.f32 %v2830, %v2822
    %v2840 = vadd.f32 %v2838, %v2839
    %v2841 = vrot.slane %v2840, 4
    %v2842 = vadd.f32 %v2840, %v2841
    %v2843 = vrot.slane %v2842, 2
    %v2844 = vadd.f32 %v2842, %v2843
    %v2845 = vrot.slane %v2844, 1
    %v2846 = vadd.f32 %v2844, %v2845
    %v2847 = vsel %vm444, %v2837, %v2846
    %v2848 = vld [vmem:[#allocation3] sm:$0xff]
    %v2849 = vld [vmem:[#allocation3 + $0x8] sm:$0xff]
    %v2850 = vld [vmem:[#allocation3 + $0x10] sm:$0xff]
    %v2851 = vld [vmem:[#allocation3 + $0x18] sm:$0xff]
    %v2852 = vld [vmem:[#allocation3 + $0x20] sm:$0xff]
    %v2853 = vld [vmem:[#allocation3 + $0x28] sm:$0xff]
    %v2854 = vld [vmem:[#allocation3 + $0x30] sm:$0xff]
    %v2855 = vld [vmem:[#allocation3 + $0x38] sm:$0xff]
    %v2856 = vld [vmem:[#allocation3 + $0x40] sm:$0xff]
    %v2857 = vld [vmem:[#allocation3 + $0x48] sm:$0xff]
    %v2858 = vld [vmem:[#allocation3 + $0x50] sm:$0xff]
    %v2859 = vld [vmem:[#allocation3 + $0x58] sm:$0xff]
    %v2860 = vld [vmem:[#allocation3 + $0x60] sm:$0xff]
    %v2861 = vld [vmem:[#allocation3 + $0x68] sm:$0xff]
    %v2862 = vld [vmem:[#allocation3 + $0x70] sm:$0xff]
    %v2863 = vld [vmem:[#allocation3 + $0x78] sm:$0xff]
    %2864 = vmatprep.subr.mxu0 0.0
    %2865 = vmatpush1.msra.mxu0 %v2863
    %2866 = vmatprep.subr.mxu0 0.0
    %2867 = vmatpush1.msra.mxu0 %v2862
    %2868 = vmatprep.subr.mxu0 0.0
    %2869 = vmatpush1.msra.mxu0 %v2861
    %2870 = vmatprep.subr.mxu0 0.0
    %2871 = vmatpush1.msra.mxu0 %v2860
    %2872 = vmatprep.subr.mxu0 0.0
    %2873 = vmatpush1.msra.mxu0 %v2859
    %2874 = vmatprep.subr.mxu0 0.0
    %2875 = vmatpush1.msra.mxu0 %v2858
    %2876 = vmatprep.subr.mxu0 0.0
    %2877 = vmatpush1.msra.mxu0 %v2857
    %2878 = vmatprep.subr.mxu0 0.0
    %2879 = vmatpush1.msra.mxu0 %v2856
    %2880 = vmatprep.subr.mxu0 0.0
    %2881 = vmatpush1.msra.mxu0 %v2855
    %2882 = vmatprep.subr.mxu0 0.0
    %2883 = vmatpush1.msra.mxu0 %v2854
    %2884 = vmatprep.subr.mxu0 0.0
    %2885 = vmatpush1.msra.mxu0 %v2853
    %2886 = vmatprep.subr.mxu0 0.0
    %2887 = vmatpush1.msra.mxu0 %v2852
    %2888 = vmatprep.subr.mxu0 0.0
    %2889 = vmatpush1.msra.mxu0 %v2851
    %2890 = vmatprep.subr.mxu0 0.0
    %2891 = vmatpush1.msra.mxu0 %v2850
    %2892 = vmatprep.subr.mxu0 0.0
    %2893 = vmatpush1.msra.mxu0 %v2849
    %2894 = vmatprep.subr.mxu0 0.0
    %2895 = vmatpush1.msra.mxu0 %v2848
    %2896 = vmatprep.subr.mxu0 0.0
    %2897 = vmatpush2.msra.mxu0 0.0
    %2898 = vmatprep.subr.mxu0 0.0
    %2899 = vmatpush2.msra.mxu0 0.0
    %2900 = vmatprep.subr.mxu0 0.0
    %2901 = vmatpush2.msra.mxu0 0.0
    %2902 = vmatprep.subr.mxu0 0.0
    %2903 = vmatpush2.msra.mxu0 0.0
    %2904 = vmatprep.subr.mxu0 0.0
    %2905 = vmatpush2.msra.mxu0 0.0
    %2906 = vmatprep.subr.mxu0 0.0
    %2907 = vmatpush2.msra.mxu0 0.0
    %2908 = vmatprep.subr.mxu0 0.0
    %2909 = vmatpush2.msra.mxu0 0.0
    %2910 = vmatprep.subr.mxu0 0.0
    %2911 = vmatpush2.msra.mxu0 0.0
    %2912 = vmatprep.subr.mxu0 0.0
    %2913 = vmatpush2.msra.mxu0 0.0
    %2914 = vmatprep.subr.mxu0 0.0
    %2915 = vmatpush2.msra.mxu0 0.0
    %2916 = vmatprep.subr.mxu0 0.0
    %2917 = vmatpush2.msra.mxu0 0.0
    %2918 = vmatprep.subr.mxu0 0.0
    %2919 = vmatpush2.msra.mxu0 0.0
    %2920 = vmatprep.subr.mxu0 0.0
    %2921 = vmatpush2.msra.mxu0 0.0
    %2922 = vmatprep.subr.mxu0 0.0
    %2923 = vmatpush2.msra.mxu0 0.0
    %2924 = vmatprep.subr.mxu0 0.0
    %2925 = vmatpush2.msra.mxu0 0.0
    %2926 = vmatprep.subr.mxu0 0.0
    %2927 = vmatpush2.msra.mxu0 0.0
    %2928 = vmatprep.mubr.f32.mxu0 0.0
    %2929 = vmatmul.mubr.f32.gmra.mxu0 %v2847
    %v2930 = vpop.f32.mrf.mxu0
    %v2931 = vadd.f32 0.0, %v2930
    %v2932 = vpop.f32.mrf.mxu0
    %2933 = vdwg.mxu0
    %v2934 = vmul.f32 %v2931, 0.03125
    %v2935 = vmul.f32 %v2934, %v2934
    %v2937 = vrot.slane %v2935, 7
    %v2939 = vsub.f32 %v2934, %v2937
    %v2940 = vmax.f32 %v2939, 0.0
    %v2941 = vadd.f32 %v2940, 1e-05
    %v2942 = vrsqrt.pop %v2941
    %v2945 = vunpack.c.l.s4 1966171168
    %v2946 = vunpack.c.0.s8 %v2945
    %v2947 = vlaneseq
    %v2948 = vshrl.u32 %v2947, 7
    %v2949 = vsub.s32 %v2946, %v2948
    %v2950 = vrot.slane %v2942, %v2949
    %v2951 = vcombine.high %v2950, %v2950
    %v2953 = vunpack.c.l.s4 1966171168
    %v2954 = vunpack.c.0.s8 %v2953
    %v2955 = vlaneseq
    %v2956 = vshrl.u32 %v2955, 7
    %v2957 = vsub.s32 %v2954, %v2956
    %v2958 = vrot.slane %v2951, %v2957
    %v2960 = vmul.f32 %v2826, %v2958
    %v2961 = vmul.f32 %v2934, %v2960
    %v2962 = vsub.f32 %v2828, %v2961
    %v2964 = vlaneseq
    %v2965 = vshrl.u32 %v2964, 7
    %v2966 = vsub.s32 0, %v2965
    %v2967 = vrot.slane %v2962, %v2966
    %v2969 = vsel %vm444, %v2960, %v2967
    %v2970 = vld [vmem:[%s9] sm:$0xff]
    %v2972 = vsel %vm569, %v2969, 0
    %2974 = vmatprep.subr.mxu0 0.0
    %2975 = vmatpush1.msra.mxu0 0.0
    %2976 = vmatprep.subr.mxu0 0.0
    %2977 = vmatpush1.msra.mxu0 0.0
    %2978 = vmatprep.subr.mxu0 0.0
    %2979 = vmatpush1.msra.mxu0 0.0
    %2980 = vmatprep.subr.mxu0 0.0
    %2981 = vmatpush1.msra.mxu0 0.0
    %2982 = vmatprep.subr.mxu0 0.0
    %2983 = vmatpush1.msra.mxu0 0.0
    %2984 = vmatprep.subr.mxu0 0.0
    %2985 = vmatpush1.msra.mxu0 0.0
    %2986 = vmatprep.subr.mxu0 0.0
    %2987 = vmatpush1.msra.mxu0 0.0
    %2988 = vmatprep.subr.mxu0 0.0
    %2989 = vmatpush1.msra.mxu0 0.0
    %2990 = vmatprep.subr.mxu0 0.0
    %2991 = vmatpush1.msra.mxu0 0.0
    %2992 = vmatprep.subr.mxu0 0.0
    %2993 = vmatpush1.msra.mxu0 0.0
    %2994 = vmatprep.subr.mxu0 0.0
    %2995 = vmatpush1.msra.mxu0 0.0
    %2996 = vmatprep.subr.mxu0 0.0
    %2997 = vmatpush1.msra.mxu0 0.0
    %2998 = vmatprep.subr.mxu0 0.0
    %2999 = vmatpush1.msra.mxu0 0.0
    %3000 = vmatprep.subr.mxu0 0.0
    %3001 = vmatpush1.msra.mxu0 0.0
    %3002 = vmatprep.subr.mxu0 0.0
    %3003 = vmatpush1.msra.mxu0 0.0
    %3004 = vmatprep.subr.mxu0 0.0
    %3005 = vmatpush1.msra.mxu0 %v2970
    %3006 = vmatprep.subr.mxu0 0.0
    %3007 = vmatpush2.msra.mxu0 0.0
    %3008 = vmatprep.subr.mxu0 0.0
    %3009 = vmatpush2.msra.mxu0 0.0
    %3010 = vmatprep.subr.mxu0 0.0
    %3011 = vmatpush2.msra.mxu0 0.0
    %3012 = vmatprep.subr.mxu0 0.0
    %3013 = vmatpush2.msra.mxu0 0.0
    %3014 = vmatprep.subr.mxu0 0.0
    %3015 = vmatpush2.msra.mxu0 0.0
    %3016 = vmatprep.subr.mxu0 0.0
    %3017 = vmatpush2.msra.mxu0 0.0
    %3018 = vmatprep.subr.mxu0 0.0
    %3019 = vmatpush2.msra.mxu0 0.0
    %3020 = vmatprep.subr.mxu0 0.0
    %3021 = vmatpush2.msra.mxu0 0.0
    %3022 = vmatprep.subr.mxu0 0.0
    %3023 = vmatpush2.msra.mxu0 0.0
    %3024 = vmatprep.subr.mxu0 0.0
    %3025 = vmatpush2.msra.mxu0 0.0
    %3026 = vmatprep.subr.mxu0 0.0
    %3027 = vmatpush2.msra.mxu0 0.0
    %3028 = vmatprep.subr.mxu0 0.0
    %3029 = vmatpush2.msra.mxu0 0.0
    %3030 = vmatprep.subr.mxu0 0.0
    %3031 = vmatpush2.msra.mxu0 0.0
    %3032 = vmatprep.subr.mxu0 0.0
    %3033 = vmatpush2.msra.mxu0 0.0
    %3034 = vmatprep.subr.mxu0 0.0
    %3035 = vmatpush2.msra.mxu0 0.0
    %3036 = vmatprep.subr.mxu0 0.0
    %3037 = vmatpush2.msra.mxu0 0.0
    %3038 = vmatprep.mubr.f32.mxu0 0.0
    %3039 = vmatmul.mubr.f32.gmra.mxu0 %v2972
    %v3040 = vpop.f32.mrf.mxu0
    %v3041 = vadd.f32 0.0, %v3040
    %v3042 = vpop.f32.mrf.mxu0
    %3043 = vdwg.mxu0
    %v3044 = vlaneseq
    %v3045 = vshrl.u32 %v3044, 7
    %v3046 = vsub.s32 0, %v3045
    %v3047 = vrot.slane %v3041, %v3046
    %v3048 = vmul.f32 %v2819, %v3047
    %v3049 = vmul.f32 %v2822, %v3047
    %v3050 = vlaneseq
    %v3051 = vshrl.u32 %v3050, 7
    %v3052 = vsub.s32 1, %v3051
    %v3053 = vrot.slane %v3041, %v3052
    %v3054 = vadd.f32 %v3048, %v3053
    %v3055 = vadd.f32 %v3049, %v3053
    %v3056 = vmax.f32 %v3054, 0.0
    %v3057 = vmax.f32 %v3055, 0.0
    %v3058 = vmul.f32 %v3056, %v50
    %v3059 = vmul.f32 %v3057, %v51
    %v3060 = vpack.c.bf16 %v3059, %v3058
    %v3062 = vunpack.c.l.b16 %v3060
    %v3063 = vunpack.c.h.b16 %v3060
    %v3064 = vpack.c.b16 %v3062, %v3062
    %v3065 = vpack.c.b16 %v3063, %v3063
    %3068 = vst [vmem:[#allocation2 + $0x4] sm:$0xf] %v3064
    %3069 = vst [vmem:[#allocation2 + $0x8] sm:$0xf] %v3065
    %v3070 = vld [vmem:[#allocation2] sm:$0x8]
    %v3071 = vld [vmem:[#allocation2 + $0x4] sm:$0xf]
    %v3072 = vld [vmem:[#allocation2 + $0x8] sm:$0xf]
    %v3073 = vld [vmem:[#allocation2 + $0x4] sm:$0xf]
    %v3074 = vld [vmem:[#allocation2 + $0x8] sm:$0xf]
    %v3075 = vld [vmem:[#allocation2 + $0xc] sm:$0x1]
    %v3079 = vunpack.c.l.b16 %v3070
    %v3080 = vunpack.c.l.b16 %v3071
    %v3081 = vunpack.c.l.b16 %v3072
    %v3082 = vpack.c.b16 %v3080, %v3079
    %v3083 = vpack.c.b16 %v3081, %v3081
    %v3084 = vpack.c.b16 %v3081, %v3080
    %v3086 = vshrl.u32 %v3084, 16
    %v3088 = vrot.slane %v3086, 4
    %v3089 = vshll.u32 %v3084, 16
    %v3091 = vrot.slane %v3089, 5
    %v3092 = vor.u32 %v3088, %v3091
    %v3096 = vunpack.c.l.b16 %v3073
    %v3097 = vunpack.c.l.b16 %v3074
    %v3098 = vunpack.c.l.b16 %v3075
    %v3099 = vpack.c.b16 %v3097, %v3096
    %v3100 = vpack.c.b16 %v3098, %v3098
    %v3101 = vrot.slane %v3099, 5
    %v3102 = vrot.slane %v3100, 5
    %v3103 = vsel %vm99, %v3101, %v3102
    %s3104 = scalar_lea.vmem %s5, 384
    %v3105 = vld [vmem:[%s3104] sm:$0xf]
    %v3106 = vld [vmem:[%s3104 + $0x4] sm:$0xf]
    %v3107 = vld [vmem:[%s3104 + $0x8] sm:$0xf]
    %v3108 = vld [vmem:[%s3104 + $0xc] sm:$0xf]
    %v3109 = vld [vmem:[%s3104 + $0x10] sm:$0xf]
    %v3110 = vld [vmem:[%s3104 + $0x14] sm:$0xf]
    %v3111 = vld [vmem:[%s3104 + $0x18] sm:$0xf]
    %v3112 = vld [vmem:[%s3104 + $0x1c] sm:$0xf]
    %v3113 = vld [vmem:[%s3104 + $0x20] sm:$0xf]
    %v3114 = vld [vmem:[%s3104 + $0x24] sm:$0xf]
    %v3115 = vld [vmem:[%s3104 + $0x28] sm:$0xf]
    %v3116 = vld [vmem:[%s3104 + $0x2c] sm:$0xf]
    %v3117 = vld [vmem:[%s3104 + $0x30] sm:$0xf]
    %v3118 = vld [vmem:[%s3104 + $0x34] sm:$0xf]
    %v3119 = vld [vmem:[%s3104 + $0x38] sm:$0xf]
    %v3120 = vld [vmem:[%s3104 + $0x3c] sm:$0xf]
    %v3121 = vld [vmem:[%s3104 + $0x40] sm:$0xf]
    %v3122 = vld [vmem:[%s3104 + $0x44] sm:$0xf]
    %v3123 = vld [vmem:[%s3104 + $0x48] sm:$0xf]
    %v3124 = vld [vmem:[%s3104 + $0x4c] sm:$0xf]
    %v3125 = vld [vmem:[%s3104 + $0x50] sm:$0xf]
    %v3126 = vld [vmem:[%s3104 + $0x54] sm:$0xf]
    %v3127 = vld [vmem:[%s3104 + $0x58] sm:$0xf]
    %v3128 = vld [vmem:[%s3104 + $0x5c] sm:$0xf]
    %v3129 = vld [vmem:[%s3104 + $0x60] sm:$0xf]
    %v3130 = vld [vmem:[%s3104 + $0x64] sm:$0xf]
    %v3131 = vld [vmem:[%s3104 + $0x68] sm:$0xf]
    %v3132 = vld [vmem:[%s3104 + $0x6c] sm:$0xf]
    %v3133 = vld [vmem:[%s3104 + $0x70] sm:$0xf]
    %v3134 = vld [vmem:[%s3104 + $0x74] sm:$0xf]
    %v3135 = vld [vmem:[%s3104 + $0x78] sm:$0xf]
    %v3136 = vld [vmem:[%s3104 + $0x7c] sm:$0xf]
    %v3137 = vld [vmem:[%s3104 + $0x80] sm:$0xf]
    %v3138 = vld [vmem:[%s3104 + $0x84] sm:$0xf]
    %v3139 = vld [vmem:[%s3104 + $0x88] sm:$0xf]
    %v3140 = vld [vmem:[%s3104 + $0x8c] sm:$0xf]
    %v3141 = vld [vmem:[%s3104 + $0x90] sm:$0xf]
    %v3142 = vld [vmem:[%s3104 + $0x94] sm:$0xf]
    %v3143 = vld [vmem:[%s3104 + $0x98] sm:$0xf]
    %v3144 = vld [vmem:[%s3104 + $0x9c] sm:$0xf]
    %v3145 = vld [vmem:[%s3104 + $0xa0] sm:$0xf]
    %v3146 = vld [vmem:[%s3104 + $0xa4] sm:$0xf]
    %v3147 = vld [vmem:[%s3104 + $0xa8] sm:$0xf]
    %v3148 = vld [vmem:[%s3104 + $0xac] sm:$0xf]
    %v3149 = vld [vmem:[%s3104 + $0xb0] sm:$0xf]
    %v3150 = vld [vmem:[%s3104 + $0xb4] sm:$0xf]
    %v3151 = vld [vmem:[%s3104 + $0xb8] sm:$0xf]
    %v3152 = vld [vmem:[%s3104 + $0xbc] sm:$0xf]
    %v3154 = vshrl.u32 %v3082, 16
    %v3156 = vrot.slane %v3154, 3
    %v3157 = vshll.u32 %v3082, 16
    %v3159 = vrot.slane %v3157, 4
    %v3160 = vor.u32 %v3156, %v3159
    %v3162 = vshrl.u32 %v3083, 16
    %v3164 = vrot.slane %v3162, 3
    %v3165 = vshll.u32 %v3083, 16
    %v3167 = vrot.slane %v3165, 4
    %v3168 = vor.u32 %v3164, %v3167
    %v3169 = vsel %vm151, %v3160, %v3168
    %v3171 = vshrl.u32 %v3092, 16
    %v3173 = vrot.slane %v3171, 3
    %v3174 = vshll.u32 %v3092, 16
    %v3176 = vrot.slane %v3174, 4
    %v3177 = vor.u32 %v3173, %v3176
    %v3178 = vsel %vm151, %v3177, %v3177
    %v3180 = vshrl.u32 %v3101, 16
    %v3182 = vrot.slane %v3180, 3
    %v3183 = vshll.u32 %v3101, 16
    %v3185 = vrot.slane %v3183, 4
    %v3186 = vor.u32 %v3182, %v3185
    %v3188 = vshrl.u32 %v3103, 16
    %v3190 = vrot.slane %v3188, 3
    %v3191 = vshll.u32 %v3103, 16
    %v3193 = vrot.slane %v3191, 4
    %v3194 = vor.u32 %v3190, %v3193
    %v3195 = vsel %vm151, %v3186, %v3194
    %v3247 = vunpack.c.l.b16 %v3105
    %v3248 = vunpack.c.l.b16 %v3106
    %v3249 = vunpack.c.l.b16 %v3107
    %v3250 = vunpack.c.l.b16 %v3108
    %v3251 = vunpack.c.l.b16 %v3109
    %v3252 = vunpack.c.l.b16 %v3110
    %v3253 = vunpack.c.l.b16 %v3111
    %v3254 = vunpack.c.l.b16 %v3112
    %v3255 = vunpack.c.l.b16 %v3113
    %v3256 = vunpack.c.l.b16 %v3114
    %v3257 = vunpack.c.l.b16 %v3115
    %v3258 = vunpack.c.l.b16 %v3116
    %v3259 = vunpack.c.l.b16 %v3117
    %v3260 = vunpack.c.l.b16 %v3118
    %v3261 = vunpack.c.l.b16 %v3119
    %v3262 = vunpack.c.l.b16 %v3120
    %v3263 = vunpack.c.l.b16 %v3121
    %v3264 = vunpack.c.l.b16 %v3122
    %v3265 = vunpack.c.l.b16 %v3123
    %v3266 = vunpack.c.l.b16 %v3124
    %v3267 = vunpack.c.l.b16 %v3125
    %v3268 = vunpack.c.l.b16 %v3126
    %v3269 = vunpack.c.l.b16 %v3127
    %v3270 = vunpack.c.l.b16 %v3128
    %v3271 = vunpack.c.l.b16 %v3129
    %v3272 = vunpack.c.l.b16 %v3130
    %v3273 = vunpack.c.l.b16 %v3131
    %v3274 = vunpack.c.l.b16 %v3132
    %v3275 = vunpack.c.l.b16 %v3133
    %v3276 = vunpack.c.l.b16 %v3134
    %v3277 = vunpack.c.l.b16 %v3135
    %v3278 = vunpack.c.l.b16 %v3136
    %v3279 = vunpack.c.l.b16 %v3137
    %v3280 = vunpack.c.l.b16 %v3138
    %v3281 = vunpack.c.l.b16 %v3139
    %v3282 = vunpack.c.l.b16 %v3140
    %v3283 = vunpack.c.l.b16 %v3141
    %v3284 = vunpack.c.l.b16 %v3142
    %v3285 = vunpack.c.l.b16 %v3143
    %v3286 = vunpack.c.l.b16 %v3144
    %v3287 = vunpack.c.l.b16 %v3145
    %v3288 = vunpack.c.l.b16 %v3146
    %v3289 = vunpack.c.l.b16 %v3147
    %v3290 = vunpack.c.l.b16 %v3148
    %v3291 = vunpack.c.l.b16 %v3149
    %v3292 = vunpack.c.l.b16 %v3150
    %v3293 = vunpack.c.l.b16 %v3151
    %v3294 = vunpack.c.l.b16 %v3152
    %v3295 = vpack.c.b16 %v3248, %v3247
    %v3296 = vpack.c.b16 %v3250, %v3249
    %v3297 = vpack.c.b16 %v3252, %v3251
    %v3298 = vpack.c.b16 %v3254, %v3253
    %v3299 = vpack.c.b16 %v3256, %v3255
    %v3300 = vpack.c.b16 %v3258, %v3257
    %v3301 = vpack.c.b16 %v3260, %v3259
    %v3302 = vpack.c.b16 %v3262, %v3261
    %v3303 = vpack.c.b16 %v3264, %v3263
    %v3304 = vpack.c.b16 %v3266, %v3265
    %v3305 = vpack.c.b16 %v3268, %v3267
    %v3306 = vpack.c.b16 %v3270, %v3269
    %v3307 = vpack.c.b16 %v3272, %v3271
    %v3308 = vpack.c.b16 %v3274, %v3273
    %v3309 = vpack.c.b16 %v3276, %v3275
    %v3310 = vpack.c.b16 %v3278, %v3277
    %v3311 = vpack.c.b16 %v3280, %v3279
    %v3312 = vpack.c.b16 %v3282, %v3281
    %v3313 = vpack.c.b16 %v3284, %v3283
    %v3314 = vpack.c.b16 %v3286, %v3285
    %v3315 = vpack.c.b16 %v3288, %v3287
    %v3316 = vpack.c.b16 %v3290, %v3289
    %v3317 = vpack.c.b16 %v3292, %v3291
    %v3318 = vpack.c.b16 %v3294, %v3293
    %3343 = vmatprep.subr.bf16.mxu0 0
    %3344 = vmatpush1.bf16.msra.mxu0 %v3302
    %3345 = vmatprep.subr.bf16.mxu0 0
    %3346 = vmatpush1.bf16.msra.mxu0 %v3301
    %3347 = vmatprep.subr.bf16.mxu0 0
    %3348 = vmatpush1.bf16.msra.mxu0 %v3300
    %3349 = vmatprep.subr.bf16.mxu0 0
    %3350 = vmatpush1.bf16.msra.mxu0 %v3299
    %3351 = vmatprep.subr.bf16.mxu0 0
    %3352 = vmatpush1.bf16.msra.mxu0 %v3298
    %3353 = vmatprep.subr.bf16.mxu0 0
    %3354 = vmatpush1.bf16.msra.mxu0 %v3297
    %3355 = vmatprep.subr.bf16.mxu0 0
    %3356 = vmatpush1.bf16.msra.mxu0 %v3296
    %3357 = vmatprep.subr.bf16.mxu0 0
    %3358 = vmatpush1.bf16.msra.mxu0 %v3295
    %3359 = vmatprep.subr.bf16.mxu0 0
    %3360 = vmatpush2.bf16.msra.mxu0 %v3310
    %3361 = vmatprep.subr.bf16.mxu0 0
    %3362 = vmatpush2.bf16.msra.mxu0 %v3309
    %3363 = vmatprep.subr.bf16.mxu0 0
    %3364 = vmatpush2.bf16.msra.mxu0 %v3308
    %3365 = vmatprep.subr.bf16.mxu0 0
    %3366 = vmatpush2.bf16.msra.mxu0 %v3307
    %3367 = vmatprep.subr.bf16.mxu0 0
    %3368 = vmatpush2.bf16.msra.mxu0 %v3306
    %3369 = vmatprep.subr.bf16.mxu0 0
    %3370 = vmatpush2.bf16.msra.mxu0 %v3305
    %3371 = vmatprep.subr.bf16.mxu0 0
    %3372 = vmatpush2.bf16.msra.mxu0 %v3304
    %3373 = vmatprep.subr.bf16.mxu0 0
    %3374 = vmatpush2.bf16.msra.mxu0 %v3303
    %3375 = vmatprep.mubr.bf16.mxu0 %v3178
    %3376 = vmatmul.mubr.bf16.gmra.mxu0 %v3169
    %v3377 = vpop.f32.mrf.mxu0
    %v3378 = vadd.f32 0.0, %v3377
    %v3379 = vpop.f32.mrf.mxu0
    %v3380 = vpop.f32.mrf.mxu0
    %v3381 = vadd.f32 0.0, %v3380
    %v3382 = vpop.f32.mrf.mxu0
    %3383 = vdwg.mxu0
    %3384 = vmatprep.subr.bf16.mxu0 0
    %3385 = vmatpush1.bf16.msra.mxu0 %v3318
    %3386 = vmatprep.subr.bf16.mxu0 0
    %3387 = vmatpush1.bf16.msra.mxu0 %v3317
    %3388 = vmatprep.subr.bf16.mxu0 0
    %3389 = vmatpush1.bf16.msra.mxu0 %v3316
    %3390 = vmatprep.subr.bf16.mxu0 0
    %3391 = vmatpush1.bf16.msra.mxu0 %v3315
    %3392 = vmatprep.subr.bf16.mxu0 0
    %3393 = vmatpush1.bf16.msra.mxu0 %v3314
    %3394 = vmatprep.subr.bf16.mxu0 0
    %3395 = vmatpush1.bf16.msra.mxu0 %v3313
    %3396 = vmatprep.subr.bf16.mxu0 0
    %3397 = vmatpush1.bf16.msra.mxu0 %v3312
    %3398 = vmatprep.subr.bf16.mxu0 0
    %3399 = vmatpush1.bf16.msra.mxu0 %v3311
    %3400 = vmatprep.subr.bf16.mxu0 0
    %3401 = vmatpush2.bf16.msra.mxu0 0
    %3402 = vmatprep.subr.bf16.mxu0 0
    %3403 = vmatpush2.bf16.msra.mxu0 0
    %3404 = vmatprep.subr.bf16.mxu0 0
    %3405 = vmatpush2.bf16.msra.mxu0 0
    %3406 = vmatprep.subr.bf16.mxu0 0
    %3407 = vmatpush2.bf16.msra.mxu0 0
    %3408 = vmatprep.subr.bf16.mxu0 0
    %3409 = vmatpush2.bf16.msra.mxu0 0
    %3410 = vmatprep.subr.bf16.mxu0 0
    %3411 = vmatpush2.bf16.msra.mxu0 0
    %3412 = vmatprep.subr.bf16.mxu0 0
    %3413 = vmatpush2.bf16.msra.mxu0 0
    %3414 = vmatprep.subr.bf16.mxu0 0
    %3415 = vmatpush2.bf16.msra.mxu0 0
    %3416 = vmatprep.mubr.bf16.mxu0 0
    %3417 = vmatmul.mubr.bf16.gmra.mxu0 %v3195
    %v3418 = vpop.f32.mrf.mxu0
    %v3419 = vadd.f32 %v3378, %v3418
    %v3420 = vpop.f32.mrf.mxu0
    %v3421 = vpop.f32.mrf.mxu0
    %v3422 = vadd.f32 %v3381, %v3421
    %v3423 = vpop.f32.mrf.mxu0
    %3424 = vdwg.mxu0
    %s3425 = scalar_lea.vmem %s6, 2
    %v3426 = vld [vmem:[%s3425] sm:$0x1]
    %s3427 = scalar_lea.vmem %s7, 2
    %v3428 = vld [vmem:[%s3427] sm:$0x1]
    %v3429 = vmul.f32 %v3419, %v50
    %v3430 = vmul.f32 %v3422, %v51
    %v3431 = vadd.f32 %v3429, %v3430
    %v3432 = vrot.slane %v3431, 4
    %v3433 = vadd.f32 %v3431, %v3432
    %v3434 = vrot.slane %v3433, 2
    %v3435 = vadd.f32 %v3433, %v3434
    %v3436 = vrot.slane %v3435, 1
    %v3437 = vadd.f32 %v3435, %v3436
    %v3438 = vmul.f32 %v3429, %v3419
    %v3439 = vmul.f32 %v3430, %v3422
    %v3440 = vadd.f32 %v3438, %v3439
    %v3441 = vrot.slane %v3440, 4
    %v3442 = vadd.f32 %v3440, %v3441
    %v3443 = vrot.slane %v3442, 2
    %v3444 = vadd.f32 %v3442, %v3443
    %v3445 = vrot.slane %v3444, 1
    %v3446 = vadd.f32 %v3444, %v3445
    %v3447 = vsel %vm444, %v3437, %v3446
    %v3448 = vld [vmem:[#allocation3] sm:$0xff]
    %v3449 = vld [vmem:[#allocation3 + $0x8] sm:$0xff]
    %v3450 = vld [vmem:[#allocation3 + $0x10] sm:$0xff]
    %v3451 = vld [vmem:[#allocation3 + $0x18] sm:$0xff]
    %v3452 = vld [vmem:[#allocation3 + $0x20] sm:$0xff]
    %v3453 = vld [vmem:[#allocation3 + $0x28] sm:$0xff]
    %v3454 = vld [vmem:[#allocation3 + $0x30] sm:$0xff]
    %v3455 = vld [vmem:[#allocation3 + $0x38] sm:$0xff]
    %v3456 = vld [vmem:[#allocation3 + $0x40] sm:$0xff]
    %v3457 = vld [vmem:[#allocation3 + $0x48] sm:$0xff]
    %v3458 = vld [vmem:[#allocation3 + $0x50] sm:$0xff]
    %v3459 = vld [vmem:[#allocation3 + $0x58] sm:$0xff]
    %v3460 = vld [vmem:[#allocation3 + $0x60] sm:$0xff]
    %v3461 = vld [vmem:[#allocation3 + $0x68] sm:$0xff]
    %v3462 = vld [vmem:[#allocation3 + $0x70] sm:$0xff]
    %v3463 = vld [vmem:[#allocation3 + $0x78] sm:$0xff]
    %3464 = vmatprep.subr.mxu0 0.0
    %3465 = vmatpush1.msra.mxu0 %v3463
    %3466 = vmatprep.subr.mxu0 0.0
    %3467 = vmatpush1.msra.mxu0 %v3462
    %3468 = vmatprep.subr.mxu0 0.0
    %3469 = vmatpush1.msra.mxu0 %v3461
    %3470 = vmatprep.subr.mxu0 0.0
    %3471 = vmatpush1.msra.mxu0 %v3460
    %3472 = vmatprep.subr.mxu0 0.0
    %3473 = vmatpush1.msra.mxu0 %v3459
    %3474 = vmatprep.subr.mxu0 0.0
    %3475 = vmatpush1.msra.mxu0 %v3458
    %3476 = vmatprep.subr.mxu0 0.0
    %3477 = vmatpush1.msra.mxu0 %v3457
    %3478 = vmatprep.subr.mxu0 0.0
    %3479 = vmatpush1.msra.mxu0 %v3456
    %3480 = vmatprep.subr.mxu0 0.0
    %3481 = vmatpush1.msra.mxu0 %v3455
    %3482 = vmatprep.subr.mxu0 0.0
    %3483 = vmatpush1.msra.mxu0 %v3454
    %3484 = vmatprep.subr.mxu0 0.0
    %3485 = vmatpush1.msra.mxu0 %v3453
    %3486 = vmatprep.subr.mxu0 0.0
    %3487 = vmatpush1.msra.mxu0 %v3452
    %3488 = vmatprep.subr.mxu0 0.0
    %3489 = vmatpush1.msra.mxu0 %v3451
    %3490 = vmatprep.subr.mxu0 0.0
    %3491 = vmatpush1.msra.mxu0 %v3450
    %3492 = vmatprep.subr.mxu0 0.0
    %3493 = vmatpush1.msra.mxu0 %v3449
    %3494 = vmatprep.subr.mxu0 0.0
    %3495 = vmatpush1.msra.mxu0 %v3448
    %3496 = vmatprep.subr.mxu0 0.0
    %3497 = vmatpush2.msra.mxu0 0.0
    %3498 = vmatprep.subr.mxu0 0.0
    %3499 = vmatpush2.msra.mxu0 0.0
    %3500 = vmatprep.subr.mxu0 0.0
    %3501 = vmatpush2.msra.mxu0 0.0
    %3502 = vmatprep.subr.mxu0 0.0
    %3503 = vmatpush2.msra.mxu0 0.0
    %3504 = vmatprep.subr.mxu0 0.0
    %3505 = vmatpush2.msra.mxu0 0.0
    %3506 = vmatprep.subr.mxu0 0.0
    %3507 = vmatpush2.msra.mxu0 0.0
    %3508 = vmatprep.subr.mxu0 0.0
    %3509 = vmatpush2.msra.mxu0 0.0
    %3510 = vmatprep.subr.mxu0 0.0
    %3511 = vmatpush2.msra.mxu0 0.0
    %3512 = vmatprep.subr.mxu0 0.0
    %3513 = vmatpush2.msra.mxu0 0.0
    %3514 = vmatprep.subr.mxu0 0.0
    %3515 = vmatpush2.msra.mxu0 0.0
    %3516 = vmatprep.subr.mxu0 0.0
    %3517 = vmatpush2.msra.mxu0 0.0
    %3518 = vmatprep.subr.mxu0 0.0
    %3519 = vmatpush2.msra.mxu0 0.0
    %3520 = vmatprep.subr.mxu0 0.0
    %3521 = vmatpush2.msra.mxu0 0.0
    %3522 = vmatprep.subr.mxu0 0.0
    %3523 = vmatpush2.msra.mxu0 0.0
    %3524 = vmatprep.subr.mxu0 0.0
    %3525 = vmatpush2.msra.mxu0 0.0
    %3526 = vmatprep.subr.mxu0 0.0
    %3527 = vmatpush2.msra.mxu0 0.0
    %3528 = vmatprep.mubr.f32.mxu0 0.0
    %3529 = vmatmul.mubr.f32.gmra.mxu0 %v3447
    %v3530 = vpop.f32.mrf.mxu0
    %v3531 = vadd.f32 0.0, %v3530
    %v3532 = vpop.f32.mrf.mxu0
    %3533 = vdwg.mxu0
    %v3534 = vmul.f32 %v3531, 0.03125
    %v3535 = vmul.f32 %v3534, %v3534
    %v3537 = vrot.slane %v3535, 7
    %v3539 = vsub.f32 %v3534, %v3537
    %v3540 = vmax.f32 %v3539, 0.0
    %v3541 = vadd.f32 %v3540, 1e-05
    %v3542 = vrsqrt.pop %v3541
    %v3545 = vunpack.c.l.s4 1966171168
    %v3546 = vunpack.c.0.s8 %v3545
    %v3547 = vlaneseq
    %v3548 = vshrl.u32 %v3547, 7
    %v3549 = vsub.s32 %v3546, %v3548
    %v3550 = vrot.slane %v3542, %v3549
    %v3551 = vcombine.high %v3550, %v3550
    %v3553 = vunpack.c.l.s4 1966171168
    %v3554 = vunpack.c.0.s8 %v3553
    %v3555 = vlaneseq
    %v3556 = vshrl.u32 %v3555, 7
    %v3557 = vsub.s32 %v3554, %v3556
    %v3558 = vrot.slane %v3551, %v3557
    %v3560 = vmul.f32 %v3426, %v3558
    %v3561 = vmul.f32 %v3534, %v3560
    %v3562 = vsub.f32 %v3428, %v3561
    %v3564 = vlaneseq
    %v3565 = vshrl.u32 %v3564, 7
    %v3566 = vsub.s32 0, %v3565
    %v3567 = vrot.slane %v3562, %v3566
    %v3569 = vsel %vm444, %v3560, %v3567
    %v3570 = vld [vmem:[%s9] sm:$0xff]
    %v3572 = vsel %vm569, %v3569, 0
    %3574 = vmatprep.subr.mxu0 0.0
    %3575 = vmatpush1.msra.mxu0 0.0
    %3576 = vmatprep.subr.mxu0 0.0
    %3577 = vmatpush1.msra.mxu0 0.0
    %3578 = vmatprep.subr.mxu0 0.0
    %3579 = vmatpush1.msra.mxu0 0.0
    %3580 = vmatprep.subr.mxu0 0.0
    %3581 = vmatpush1.msra.mxu0 0.0
    %3582 = vmatprep.subr.mxu0 0.0
    %3583 = vmatpush1.msra.mxu0 0.0
    %3584 = vmatprep.subr.mxu0 0.0
    %3585 = vmatpush1.msra.mxu0 0.0
    %3586 = vmatprep.subr.mxu0 0.0
    %3587 = vmatpush1.msra.mxu0 0.0
    %3588 = vmatprep.subr.mxu0 0.0
    %3589 = vmatpush1.msra.mxu0 0.0
    %3590 = vmatprep.subr.mxu0 0.0
    %3591 = vmatpush1.msra.mxu0 0.0
    %3592 = vmatprep.subr.mxu0 0.0
    %3593 = vmatpush1.msra.mxu0 0.0
    %3594 = vmatprep.subr.mxu0 0.0
    %3595 = vmatpush1.msra.mxu0 0.0
    %3596 = vmatprep.subr.mxu0 0.0
    %3597 = vmatpush1.msra.mxu0 0.0
    %3598 = vmatprep.subr.mxu0 0.0
    %3599 = vmatpush1.msra.mxu0 0.0
    %3600 = vmatprep.subr.mxu0 0.0
    %3601 = vmatpush1.msra.mxu0 0.0
    %3602 = vmatprep.subr.mxu0 0.0
    %3603 = vmatpush1.msra.mxu0 0.0
    %3604 = vmatprep.subr.mxu0 0.0
    %3605 = vmatpush1.msra.mxu0 %v3570
    %3606 = vmatprep.subr.mxu0 0.0
    %3607 = vmatpush2.msra.mxu0 0.0
    %3608 = vmatprep.subr.mxu0 0.0
    %3609 = vmatpush2.msra.mxu0 0.0
    %3610 = vmatprep.subr.mxu0 0.0
    %3611 = vmatpush2.msra.mxu0 0.0
    %3612 = vmatprep.subr.mxu0 0.0
    %3613 = vmatpush2.msra.mxu0 0.0
    %3614 = vmatprep.subr.mxu0 0.0
    %3615 = vmatpush2.msra.mxu0 0.0
    %3616 = vmatprep.subr.mxu0 0.0
    %3617 = vmatpush2.msra.mxu0 0.0
    %3618 = vmatprep.subr.mxu0 0.0
    %3619 = vmatpush2.msra.mxu0 0.0
    %3620 = vmatprep.subr.mxu0 0.0
    %3621 = vmatpush2.msra.mxu0 0.0
    %3622 = vmatprep.subr.mxu0 0.0
    %3623 = vmatpush2.msra.mxu0 0.0
    %3624 = vmatprep.subr.mxu0 0.0
    %3625 = vmatpush2.msra.mxu0 0.0
    %3626 = vmatprep.subr.mxu0 0.0
    %3627 = vmatpush2.msra.mxu0 0.0
    %3628 = vmatprep.subr.mxu0 0.0
    %3629 = vmatpush2.msra.mxu0 0.0
    %3630 = vmatprep.subr.mxu0 0.0
    %3631 = vmatpush2.msra.mxu0 0.0
    %3632 = vmatprep.subr.mxu0 0.0
    %3633 = vmatpush2.msra.mxu0 0.0
    %3634 = vmatprep.subr.mxu0 0.0
    %3635 = vmatpush2.msra.mxu0 0.0
    %3636 = vmatprep.subr.mxu0 0.0
    %3637 = vmatpush2.msra.mxu0 0.0
    %3638 = vmatprep.mubr.f32.mxu0 0.0
    %3639 = vmatmul.mubr.f32.gmra.mxu0 %v3572
    %v3640 = vpop.f32.mrf.mxu0
    %v3641 = vadd.f32 0.0, %v3640
    %v3642 = vpop.f32.mrf.mxu0
    %3643 = vdwg.mxu0
    %v3644 = vlaneseq
    %v3645 = vshrl.u32 %v3644, 7
    %v3646 = vsub.s32 0, %v3645
    %v3647 = vrot.slane %v3641, %v3646
    %v3648 = vmul.f32 %v3419, %v3647
    %v3649 = vmul.f32 %v3422, %v3647
    %v3650 = vlaneseq
    %v3651 = vshrl.u32 %v3650, 7
    %v3652 = vsub.s32 1, %v3651
    %v3653 = vrot.slane %v3641, %v3652
    %v3654 = vadd.f32 %v3648, %v3653
    %v3655 = vadd.f32 %v3649, %v3653
    %v3656 = vadd.f32 %v3654, %v2458
    %v3657 = vadd.f32 %v3655, %v2459
    %v3658 = vmax.f32 %v3656, 0.0
    %v3659 = vmax.f32 %v3657, 0.0
    %v3660 = vmul.f32 %v3658, %v50
    %v3661 = vmul.f32 %v3659, %v51
    %v3662 = vpack.c.bf16 %v3661, %v3660
    %v3664 = vunpack.c.l.b16 %v3662
    %v3665 = vunpack.c.h.b16 %v3662
    %v3666 = vpack.c.b16 %v3664, %v3664
    %v3667 = vpack.c.b16 %v3665, %v3665
    %3670 = vst [vmem:[#allocation2 + $0x4] sm:$0xf] %v3666
    %3671 = vst [vmem:[#allocation2 + $0x8] sm:$0xf] %v3667
    %v3672 = vld [vmem:[#allocation2] sm:$0x8]
    %v3673 = vld [vmem:[#allocation2 + $0x4] sm:$0xf]
    %v3674 = vld [vmem:[#allocation2 + $0x8] sm:$0xf]
    %v3675 = vld [vmem:[#allocation2 + $0x4] sm:$0xf]
    %v3676 = vld [vmem:[#allocation2 + $0x8] sm:$0xf]
    %v3677 = vld [vmem:[#allocation2 + $0xc] sm:$0x1]
    %v3681 = vunpack.c.l.b16 %v3672
    %v3682 = vunpack.c.l.b16 %v3673
    %v3683 = vunpack.c.l.b16 %v3674
    %v3684 = vpack.c.b16 %v3682, %v3681
    %v3685 = vpack.c.b16 %v3683, %v3683
    %v3686 = vpack.c.b16 %v3683, %v3682
    %v3688 = vshrl.u32 %v3686, 16
    %v3690 = vrot.slane %v3688, 4
    %v3691 = vshll.u32 %v3686, 16
    %v3693 = vrot.slane %v3691, 5
    %v3694 = vor.u32 %v3690, %v3693
    %v3698 = vunpack.c.l.b16 %v3675
    %v3699 = vunpack.c.l.b16 %v3676
    %v3700 = vunpack.c.l.b16 %v3677
    %v3701 = vpack.c.b16 %v3699, %v3698
    %v3702 = vpack.c.b16 %v3700, %v3700
    %v3703 = vrot.slane %v3701, 5
    %v3704 = vrot.slane %v3702, 5
    %v3705 = vsel %vm99, %v3703, %v3704
    %s3706 = scalar_lea.vmem %s2, 576
    %v3707 = vld [vmem:[%s3706] sm:$0xf]
    %v3708 = vld [vmem:[%s3706 + $0x4] sm:$0xf]
    %v3709 = vld [vmem:[%s3706 + $0x8] sm:$0xf]
    %v3710 = vld [vmem:[%s3706 + $0xc] sm:$0xf]
    %v3711 = vld [vmem:[%s3706 + $0x10] sm:$0xf]
    %v3712 = vld [vmem:[%s3706 + $0x14] sm:$0xf]
    %v3713 = vld [vmem:[%s3706 + $0x18] sm:$0xf]
    %v3714 = vld [vmem:[%s3706 + $0x1c] sm:$0xf]
    %v3715 = vld [vmem:[%s3706 + $0x20] sm:$0xf]
    %v3716 = vld [vmem:[%s3706 + $0x24] sm:$0xf]
    %v3717 = vld [vmem:[%s3706 + $0x28] sm:$0xf]
    %v3718 = vld [vmem:[%s3706 + $0x2c] sm:$0xf]
    %v3719 = vld [vmem:[%s3706 + $0x30] sm:$0xf]
    %v3720 = vld [vmem:[%s3706 + $0x34] sm:$0xf]
    %v3721 = vld [vmem:[%s3706 + $0x38] sm:$0xf]
    %v3722 = vld [vmem:[%s3706 + $0x3c] sm:$0xf]
    %v3723 = vld [vmem:[%s3706 + $0x40] sm:$0xf]
    %v3724 = vld [vmem:[%s3706 + $0x44] sm:$0xf]
    %v3725 = vld [vmem:[%s3706 + $0x48] sm:$0xf]
    %v3726 = vld [vmem:[%s3706 + $0x4c] sm:$0xf]
    %v3727 = vld [vmem:[%s3706 + $0x50] sm:$0xf]
    %v3728 = vld [vmem:[%s3706 + $0x54] sm:$0xf]
    %v3729 = vld [vmem:[%s3706 + $0x58] sm:$0xf]
    %v3730 = vld [vmem:[%s3706 + $0x5c] sm:$0xf]
    %v3731 = vld [vmem:[%s3706 + $0x60] sm:$0xf]
    %v3732 = vld [vmem:[%s3706 + $0x64] sm:$0xf]
    %v3733 = vld [vmem:[%s3706 + $0x68] sm:$0xf]
    %v3734 = vld [vmem:[%s3706 + $0x6c] sm:$0xf]
    %v3735 = vld [vmem:[%s3706 + $0x70] sm:$0xf]
    %v3736 = vld [vmem:[%s3706 + $0x74] sm:$0xf]
    %v3737 = vld [vmem:[%s3706 + $0x78] sm:$0xf]
    %v3738 = vld [vmem:[%s3706 + $0x7c] sm:$0xf]
    %v3739 = vld [vmem:[%s3706 + $0x80] sm:$0xf]
    %v3740 = vld [vmem:[%s3706 + $0x84] sm:$0xf]
    %v3741 = vld [vmem:[%s3706 + $0x88] sm:$0xf]
    %v3742 = vld [vmem:[%s3706 + $0x8c] sm:$0xf]
    %v3743 = vld [vmem:[%s3706 + $0x90] sm:$0xf]
    %v3744 = vld [vmem:[%s3706 + $0x94] sm:$0xf]
    %v3745 = vld [vmem:[%s3706 + $0x98] sm:$0xf]
    %v3746 = vld [vmem:[%s3706 + $0x9c] sm:$0xf]
    %v3747 = vld [vmem:[%s3706 + $0xa0] sm:$0xf]
    %v3748 = vld [vmem:[%s3706 + $0xa4] sm:$0xf]
    %v3749 = vld [vmem:[%s3706 + $0xa8] sm:$0xf]
    %v3750 = vld [vmem:[%s3706 + $0xac] sm:$0xf]
    %v3751 = vld [vmem:[%s3706 + $0xb0] sm:$0xf]
    %v3752 = vld [vmem:[%s3706 + $0xb4] sm:$0xf]
    %v3753 = vld [vmem:[%s3706 + $0xb8] sm:$0xf]
    %v3754 = vld [vmem:[%s3706 + $0xbc] sm:$0xf]
    %v3756 = vshrl.u32 %v3684, 16
    %v3758 = vrot.slane %v3756, 3
    %v3759 = vshll.u32 %v3684, 16
    %v3761 = vrot.slane %v3759, 4
    %v3762 = vor.u32 %v3758, %v3761
    %v3764 = vshrl.u32 %v3685, 16
    %v3766 = vrot.slane %v3764, 3
    %v3767 = vshll.u32 %v3685, 16
    %v3769 = vrot.slane %v3767, 4
    %v3770 = vor.u32 %v3766, %v3769
    %v3771 = vsel %vm151, %v3762, %v3770
    %v3773 = vshrl.u32 %v3694, 16
    %v3775 = vrot.slane %v3773, 3
    %v3776 = vshll.u32 %v3694, 16
    %v3778 = vrot.slane %v3776, 4
    %v3779 = vor.u32 %v3775, %v3778
    %v3780 = vsel %vm151, %v3779, %v3779
    %v3782 = vshrl.u32 %v3703, 16
    %v3784 = vrot.slane %v3782, 3
    %v3785 = vshll.u32 %v3703, 16
    %v3787 = vrot.slane %v3785, 4
    %v3788 = vor.u32 %v3784, %v3787
    %v3790 = vshrl.u32 %v3705, 16
    %v3792 = vrot.slane %v3790, 3
    %v3793 = vshll.u32 %v3705, 16
    %v3795 = vrot.slane %v3793, 4
    %v3796 = vor.u32 %v3792, %v3795
    %v3797 = vsel %vm151, %v3788, %v3796
    %v3849 = vunpack.c.l.b16 %v3707
    %v3850 = vunpack.c.l.b16 %v3708
    %v3851 = vunpack.c.l.b16 %v3709
    %v3852 = vunpack.c.l.b16 %v3710
    %v3853 = vunpack.c.l.b16 %v3711
    %v3854 = vunpack.c.l.b16 %v3712
    %v3855 = vunpack.c.l.b16 %v3713
    %v3856 = vunpack.c.l.b16 %v3714
    %v3857 = vunpack.c.l.b16 %v3715
    %v3858 = vunpack.c.l.b16 %v3716
    %v3859 = vunpack.c.l.b16 %v3717
    %v3860 = vunpack.c.l.b16 %v3718
    %v3861 = vunpack.c.l.b16 %v3719
    %v3862 = vunpack.c.l.b16 %v3720
    %v3863 = vunpack.c.l.b16 %v3721
    %v3864 = vunpack.c.l.b16 %v3722
    %v3865 = vunpack.c.l.b16 %v3723
    %v3866 = vunpack.c.l.b16 %v3724
    %v3867 = vunpack.c.l.b16 %v3725
    %v3868 = vunpack.c.l.b16 %v3726
    %v3869 = vunpack.c.l.b16 %v3727
    %v3870 = vunpack.c.l.b16 %v3728
    %v3871 = vunpack.c.l.b16 %v3729
    %v3872 = vunpack.c.l.b16 %v3730
    %v3873 = vunpack.c.l.b16 %v3731
    %v3874 = vunpack.c.l.b16 %v3732
    %v3875 = vunpack.c.l.b16 %v3733
    %v3876 = vunpack.c.l.b16 %v3734
    %v3877 = vunpack.c.l.b16 %v3735
    %v3878 = vunpack.c.l.b16 %v3736
    %v3879 = vunpack.c.l.b16 %v3737
    %v3880 = vunpack.c.l.b16 %v3738
    %v3881 = vunpack.c.l.b16 %v3739
    %v3882 = vunpack.c.l.b16 %v3740
    %v3883 = vunpack.c.l.b16 %v3741
    %v3884 = vunpack.c.l.b16 %v3742
    %v3885 = vunpack.c.l.b16 %v3743
    %v3886 = vunpack.c.l.b16 %v3744
    %v3887 = vunpack.c.l.b16 %v3745
    %v3888 = vunpack.c.l.b16 %v3746
    %v3889 = vunpack.c.l.b16 %v3747
    %v3890 = vunpack.c.l.b16 %v3748
    %v3891 = vunpack.c.l.b16 %v3749
    %v3892 = vunpack.c.l.b16 %v3750
    %v3893 = vunpack.c.l.b16 %v3751
    %v3894 = vunpack.c.l.b16 %v3752
    %v3895 = vunpack.c.l.b16 %v3753
    %v3896 = vunpack.c.l.b16 %v3754
    %v3897 = vpack.c.b16 %v3850, %v3849
    %v3898 = vpack.c.b16 %v3852, %v3851
    %v3899 = vpack.c.b16 %v3854, %v3853
    %v3900 = vpack.c.b16 %v3856, %v3855
    %v3901 = vpack.c.b16 %v3858, %v3857
    %v3902 = vpack.c.b16 %v3860, %v3859
    %v3903 = vpack.c.b16 %v3862, %v3861
    %v3904 = vpack.c.b16 %v3864, %v3863
    %v3905 = vpack.c.b16 %v3866, %v3865
    %v3906 = vpack.c.b16 %v3868, %v3867
    %v3907 = vpack.c.b16 %v3870, %v3869
    %v3908 = vpack.c.b16 %v3872, %v3871
    %v3909 = vpack.c.b16 %v3874, %v3873
    %v3910 = vpack.c.b16 %v3876, %v3875
    %v3911 = vpack.c.b16 %v3878, %v3877
    %v3912 = vpack.c.b16 %v3880, %v3879
    %v3913 = vpack.c.b16 %v3882, %v3881
    %v3914 = vpack.c.b16 %v3884, %v3883
    %v3915 = vpack.c.b16 %v3886, %v3885
    %v3916 = vpack.c.b16 %v3888, %v3887
    %v3917 = vpack.c.b16 %v3890, %v3889
    %v3918 = vpack.c.b16 %v3892, %v3891
    %v3919 = vpack.c.b16 %v3894, %v3893
    %v3920 = vpack.c.b16 %v3896, %v3895
    %3945 = vmatprep.subr.bf16.mxu0 0
    %3946 = vmatpush1.bf16.msra.mxu0 %v3904
    %3947 = vmatprep.subr.bf16.mxu0 0
    %3948 = vmatpush1.bf16.msra.mxu0 %v3903
    %3949 = vmatprep.subr.bf16.mxu0 0
    %3950 = vmatpush1.bf16.msra.mxu0 %v3902
    %3951 = vmatprep.subr.bf16.mxu0 0
    %3952 = vmatpush1.bf16.msra.mxu0 %v3901
    %3953 = vmatprep.subr.bf16.mxu0 0
    %3954 = vmatpush1.bf16.msra.mxu0 %v3900
    %3955 = vmatprep.subr.bf16.mxu0 0
    %3956 = vmatpush1.bf16.msra.mxu0 %v3899
    %3957 = vmatprep.subr.bf16.mxu0 0
    %3958 = vmatpush1.bf16.msra.mxu0 %v3898
    %3959 = vmatprep.subr.bf16.mxu0 0
    %3960 = vmatpush1.bf16.msra.mxu0 %v3897
    %3961 = vmatprep.subr.bf16.mxu0 0
    %3962 = vmatpush2.bf16.msra.mxu0 %v3912
    %3963 = vmatprep.subr.bf16.mxu0 0
    %3964 = vmatpush2.bf16.msra.mxu0 %v3911
    %3965 = vmatprep.subr.bf16.mxu0 0
    %3966 = vmatpush2.bf16.msra.mxu0 %v3910
    %3967 = vmatprep.subr.bf16.mxu0 0
    %3968 = vmatpush2.bf16.msra.mxu0 %v3909
    %3969 = vmatprep.subr.bf16.mxu0 0
    %3970 = vmatpush2.bf16.msra.mxu0 %v3908
    %3971 = vmatprep.subr.bf16.mxu0 0
    %3972 = vmatpush2.bf16.msra.mxu0 %v3907
    %3973 = vmatprep.subr.bf16.mxu0 0
    %3974 = vmatpush2.bf16.msra.mxu0 %v3906
    %3975 = vmatprep.subr.bf16.mxu0 0
    %3976 = vmatpush2.bf16.msra.mxu0 %v3905
    %3977 = vmatprep.mubr.bf16.mxu0 %v3780
    %3978 = vmatmul.mubr.bf16.gmra.mxu0 %v3771
    %v3979 = vpop.f32.mrf.mxu0
    %v3980 = vadd.f32 0.0, %v3979
    %v3981 = vpop.f32.mrf.mxu0
    %v3982 = vpop.f32.mrf.mxu0
    %v3983 = vadd.f32 0.0, %v3982
    %v3984 = vpop.f32.mrf.mxu0
    %3985 = vdwg.mxu0
    %3986 = vmatprep.subr.bf16.mxu0 0
    %3987 = vmatpush1.bf16.msra.mxu0 %v3920
    %3988 = vmatprep.subr.bf16.mxu0 0
    %3989 = vmatpush1.bf16.msra.mxu0 %v3919
    %3990 = vmatprep.subr.bf16.mxu0 0
    %3991 = vmatpush1.bf16.msra.mxu0 %v3918
    %3992 = vmatprep.subr.bf16.mxu0 0
    %3993 = vmatpush1.bf16.msra.mxu0 %v3917
    %3994 = vmatprep.subr.bf16.mxu0 0
    %3995 = vmatpush1.bf16.msra.mxu0 %v3916
    %3996 = vmatprep.subr.bf16.mxu0 0
    %3997 = vmatpush1.bf16.msra.mxu0 %v3915
    %3998 = vmatprep.subr.bf16.mxu0 0
    %3999 = vmatpush1.bf16.msra.mxu0 %v3914
    %4000 = vmatprep.subr.bf16.mxu0 0
    %4001 = vmatpush1.bf16.msra.mxu0 %v3913
    %4002 = vmatprep.subr.bf16.mxu0 0
    %4003 = vmatpush2.bf16.msra.mxu0 0
    %4004 = vmatprep.subr.bf16.mxu0 0
    %4005 = vmatpush2.bf16.msra.mxu0 0
    %4006 = vmatprep.subr.bf16.mxu0 0
    %4007 = vmatpush2.bf16.msra.mxu0 0
    %4008 = vmatprep.subr.bf16.mxu0 0
    %4009 = vmatpush2.bf16.msra.mxu0 0
    %4010 = vmatprep.subr.bf16.mxu0 0
    %4011 = vmatpush2.bf16.msra.mxu0 0
    %4012 = vmatprep.subr.bf16.mxu0 0
    %4013 = vmatpush2.bf16.msra.mxu0 0
    %4014 = vmatprep.subr.bf16.mxu0 0
    %4015 = vmatpush2.bf16.msra.mxu0 0
    %4016 = vmatprep.subr.bf16.mxu0 0
    %4017 = vmatpush2.bf16.msra.mxu0 0
    %4018 = vmatprep.mubr.bf16.mxu0 0
    %4019 = vmatmul.mubr.bf16.gmra.mxu0 %v3797
    %v4020 = vpop.f32.mrf.mxu0
    %v4021 = vadd.f32 %v3980, %v4020
    %v4022 = vpop.f32.mrf.mxu0
    %v4023 = vpop.f32.mrf.mxu0
    %v4024 = vadd.f32 %v3983, %v4023
    %v4025 = vpop.f32.mrf.mxu0
    %4026 = vdwg.mxu0
    %s4027 = scalar_lea.vmem %s3, 3
    %v4028 = vld [vmem:[%s4027] sm:$0x1]
    %s4029 = scalar_lea.vmem %s4, 3
    %v4030 = vld [vmem:[%s4029] sm:$0x1]
    %v4031 = vmul.f32 %v4021, %v50
    %v4032 = vmul.f32 %v4024, %v51
    %v4033 = vadd.f32 %v4031, %v4032
    %v4034 = vrot.slane %v4033, 4
    %v4035 = vadd.f32 %v4033, %v4034
    %v4036 = vrot.slane %v4035, 2
    %v4037 = vadd.f32 %v4035, %v4036
    %v4038 = vrot.slane %v4037, 1
    %v4039 = vadd.f32 %v4037, %v4038
    %v4040 = vmul.f32 %v4031, %v4021
    %v4041 = vmul.f32 %v4032, %v4024
    %v4042 = vadd.f32 %v4040, %v4041
    %v4043 = vrot.slane %v4042, 4
    %v4044 = vadd.f32 %v4042, %v4043
    %v4045 = vrot.slane %v4044, 2
    %v4046 = vadd.f32 %v4044, %v4045
    %v4047 = vrot.slane %v4046, 1
    %v4048 = vadd.f32 %v4046, %v4047
    %v4049 = vsel %vm444, %v4039, %v4048
    %v4050 = vld [vmem:[#allocation3] sm:$0xff]
    %v4051 = vld [vmem:[#allocation3 + $0x8] sm:$0xff]
    %v4052 = vld [vmem:[#allocation3 + $0x10] sm:$0xff]
    %v4053 = vld [vmem:[#allocation3 + $0x18] sm:$0xff]
    %v4054 = vld [vmem:[#allocation3 + $0x20] sm:$0xff]
    %v4055 = vld [vmem:[#allocation3 + $0x28] sm:$0xff]
    %v4056 = vld [vmem:[#allocation3 + $0x30] sm:$0xff]
    %v4057 = vld [vmem:[#allocation3 + $0x38] sm:$0xff]
    %v4058 = vld [vmem:[#allocation3 + $0x40] sm:$0xff]
    %v4059 = vld [vmem:[#allocation3 + $0x48] sm:$0xff]
    %v4060 = vld [vmem:[#allocation3 + $0x50] sm:$0xff]
    %v4061 = vld [vmem:[#allocation3 + $0x58] sm:$0xff]
    %v4062 = vld [vmem:[#allocation3 + $0x60] sm:$0xff]
    %v4063 = vld [vmem:[#allocation3 + $0x68] sm:$0xff]
    %v4064 = vld [vmem:[#allocation3 + $0x70] sm:$0xff]
    %v4065 = vld [vmem:[#allocation3 + $0x78] sm:$0xff]
    %4066 = vmatprep.subr.mxu0 0.0
    %4067 = vmatpush1.msra.mxu0 %v4065
    %4068 = vmatprep.subr.mxu0 0.0
    %4069 = vmatpush1.msra.mxu0 %v4064
    %4070 = vmatprep.subr.mxu0 0.0
    %4071 = vmatpush1.msra.mxu0 %v4063
    %4072 = vmatprep.subr.mxu0 0.0
    %4073 = vmatpush1.msra.mxu0 %v4062
    %4074 = vmatprep.subr.mxu0 0.0
    %4075 = vmatpush1.msra.mxu0 %v4061
    %4076 = vmatprep.subr.mxu0 0.0
    %4077 = vmatpush1.msra.mxu0 %v4060
    %4078 = vmatprep.subr.mxu0 0.0
    %4079 = vmatpush1.msra.mxu0 %v4059
    %4080 = vmatprep.subr.mxu0 0.0
    %4081 = vmatpush1.msra.mxu0 %v4058
    %4082 = vmatprep.subr.mxu0 0.0
    %4083 = vmatpush1.msra.mxu0 %v4057
    %4084 = vmatprep.subr.mxu0 0.0
    %4085 = vmatpush1.msra.mxu0 %v4056
    %4086 = vmatprep.subr.mxu0 0.0
    %4087 = vmatpush1.msra.mxu0 %v4055
    %4088 = vmatprep.subr.mxu0 0.0
    %4089 = vmatpush1.msra.mxu0 %v4054
    %4090 = vmatprep.subr.mxu0 0.0
    %4091 = vmatpush1.msra.mxu0 %v4053
    %4092 = vmatprep.subr.mxu0 0.0
    %4093 = vmatpush1.msra.mxu0 %v4052
    %4094 = vmatprep.subr.mxu0 0.0
    %4095 = vmatpush1.msra.mxu0 %v4051
    %4096 = vmatprep.subr.mxu0 0.0
    %4097 = vmatpush1.msra.mxu0 %v4050
    %4098 = vmatprep.subr.mxu0 0.0
    %4099 = vmatpush2.msra.mxu0 0.0
    %4100 = vmatprep.subr.mxu0 0.0
    %4101 = vmatpush2.msra.mxu0 0.0
    %4102 = vmatprep.subr.mxu0 0.0
    %4103 = vmatpush2.msra.mxu0 0.0
    %4104 = vmatprep.subr.mxu0 0.0
    %4105 = vmatpush2.msra.mxu0 0.0
    %4106 = vmatprep.subr.mxu0 0.0
    %4107 = vmatpush2.msra.mxu0 0.0
    %4108 = vmatprep.subr.mxu0 0.0
    %4109 = vmatpush2.msra.mxu0 0.0
    %4110 = vmatprep.subr.mxu0 0.0
    %4111 = vmatpush2.msra.mxu0 0.0
    %4112 = vmatprep.subr.mxu0 0.0
    %4113 = vmatpush2.msra.mxu0 0.0
    %4114 = vmatprep.subr.mxu0 0.0
    %4115 = vmatpush2.msra.mxu0 0.0
    %4116 = vmatprep.subr.mxu0 0.0
    %4117 = vmatpush2.msra.mxu0 0.0
    %4118 = vmatprep.subr.mxu0 0.0
    %4119 = vmatpush2.msra.mxu0 0.0
    %4120 = vmatprep.subr.mxu0 0.0
    %4121 = vmatpush2.msra.mxu0 0.0
    %4122 = vmatprep.subr.mxu0 0.0
    %4123 = vmatpush2.msra.mxu0 0.0
    %4124 = vmatprep.subr.mxu0 0.0
    %4125 = vmatpush2.msra.mxu0 0.0
    %4126 = vmatprep.subr.mxu0 0.0
    %4127 = vmatpush2.msra.mxu0 0.0
    %4128 = vmatprep.subr.mxu0 0.0
    %4129 = vmatpush2.msra.mxu0 0.0
    %4130 = vmatprep.mubr.f32.mxu0 0.0
    %4131 = vmatmul.mubr.f32.gmra.mxu0 %v4049
    %v4132 = vpop.f32.mrf.mxu0
    %v4133 = vadd.f32 0.0, %v4132
    %v4134 = vpop.f32.mrf.mxu0
    %4135 = vdwg.mxu0
    %v4136 = vmul.f32 %v4133, 0.03125
    %v4137 = vmul.f32 %v4136, %v4136
    %v4139 = vrot.slane %v4137, 7
    %v4141 = vsub.f32 %v4136, %v4139
    %v4142 = vmax.f32 %v4141, 0.0
    %v4143 = vadd.f32 %v4142, 1e-05
    %v4144 = vrsqrt.pop %v4143
    %v4147 = vunpack.c.l.s4 1966171168
    %v4148 = vunpack.c.0.s8 %v4147
    %v4149 = vlaneseq
    %v4150 = vshrl.u32 %v4149, 7
    %v4151 = vsub.s32 %v4148, %v4150
    %v4152 = vrot.slane %v4144, %v4151
    %v4153 = vcombine.high %v4152, %v4152
    %v4155 = vunpack.c.l.s4 1966171168
    %v4156 = vunpack.c.0.s8 %v4155
    %v4157 = vlaneseq
    %v4158 = vshrl.u32 %v4157, 7
    %v4159 = vsub.s32 %v4156, %v4158
    %v4160 = vrot.slane %v4153, %v4159
    %v4162 = vmul.f32 %v4028, %v4160
    %v4163 = vmul.f32 %v4136, %v4162
    %v4164 = vsub.f32 %v4030, %v4163
    %v4166 = vlaneseq
    %v4167 = vshrl.u32 %v4166, 7
    %v4168 = vsub.s32 0, %v4167
    %v4169 = vrot.slane %v4164, %v4168
    %v4171 = vsel %vm444, %v4162, %v4169
    %v4172 = vld [vmem:[%s9] sm:$0xff]
    %v4174 = vsel %vm569, %v4171, 0
    %4176 = vmatprep.subr.mxu0 0.0
    %4177 = vmatpush1.msra.mxu0 0.0
    %4178 = vmatprep.subr.mxu0 0.0
    %4179 = vmatpush1.msra.mxu0 0.0
    %4180 = vmatprep.subr.mxu0 0.0
    %4181 = vmatpush1.msra.mxu0 0.0
    %4182 = vmatprep.subr.mxu0 0.0
    %4183 = vmatpush1.msra.mxu0 0.0
    %4184 = vmatprep.subr.mxu0 0.0
    %4185 = vmatpush1.msra.mxu0 0.0
    %4186 = vmatprep.subr.mxu0 0.0
    %4187 = vmatpush1.msra.mxu0 0.0
    %4188 = vmatprep.subr.mxu0 0.0
    %4189 = vmatpush1.msra.mxu0 0.0
    %4190 = vmatprep.subr.mxu0 0.0
    %4191 = vmatpush1.msra.mxu0 0.0
    %4192 = vmatprep.subr.mxu0 0.0
    %4193 = vmatpush1.msra.mxu0 0.0
    %4194 = vmatprep.subr.mxu0 0.0
    %4195 = vmatpush1.msra.mxu0 0.0
    %4196 = vmatprep.subr.mxu0 0.0
    %4197 = vmatpush1.msra.mxu0 0.0
    %4198 = vmatprep.subr.mxu0 0.0
    %4199 = vmatpush1.msra.mxu0 0.0
    %4200 = vmatprep.subr.mxu0 0.0
    %4201 = vmatpush1.msra.mxu0 0.0
    %4202 = vmatprep.subr.mxu0 0.0
    %4203 = vmatpush1.msra.mxu0 0.0
    %4204 = vmatprep.subr.mxu0 0.0
    %4205 = vmatpush1.msra.mxu0 0.0
    %4206 = vmatprep.subr.mxu0 0.0
    %4207 = vmatpush1.msra.mxu0 %v4172
    %4208 = vmatprep.subr.mxu0 0.0
    %4209 = vmatpush2.msra.mxu0 0.0
    %4210 = vmatprep.subr.mxu0 0.0
    %4211 = vmatpush2.msra.mxu0 0.0
    %4212 = vmatprep.subr.mxu0 0.0
    %4213 = vmatpush2.msra.mxu0 0.0
    %4214 = vmatprep.subr.mxu0 0.0
    %4215 = vmatpush2.msra.mxu0 0.0
    %4216 = vmatprep.subr.mxu0 0.0
    %4217 = vmatpush2.msra.mxu0 0.0
    %4218 = vmatprep.subr.mxu0 0.0
    %4219 = vmatpush2.msra.mxu0 0.0
    %4220 = vmatprep.subr.mxu0 0.0
    %4221 = vmatpush2.msra.mxu0 0.0
    %4222 = vmatprep.subr.mxu0 0.0
    %4223 = vmatpush2.msra.mxu0 0.0
    %4224 = vmatprep.subr.mxu0 0.0
    %4225 = vmatpush2.msra.mxu0 0.0
    %4226 = vmatprep.subr.mxu0 0.0
    %4227 = vmatpush2.msra.mxu0 0.0
    %4228 = vmatprep.subr.mxu0 0.0
    %4229 = vmatpush2.msra.mxu0 0.0
    %4230 = vmatprep.subr.mxu0 0.0
    %4231 = vmatpush2.msra.mxu0 0.0
    %4232 = vmatprep.subr.mxu0 0.0
    %4233 = vmatpush2.msra.mxu0 0.0
    %4234 = vmatprep.subr.mxu0 0.0
    %4235 = vmatpush2.msra.mxu0 0.0
    %4236 = vmatprep.subr.mxu0 0.0
    %4237 = vmatpush2.msra.mxu0 0.0
    %4238 = vmatprep.subr.mxu0 0.0
    %4239 = vmatpush2.msra.mxu0 0.0
    %4240 = vmatprep.mubr.f32.mxu0 0.0
    %4241 = vmatmul.mubr.f32.gmra.mxu0 %v4174
    %v4242 = vpop.f32.mrf.mxu0
    %v4243 = vadd.f32 0.0, %v4242
    %v4244 = vpop.f32.mrf.mxu0
    %4245 = vdwg.mxu0
    %v4246 = vlaneseq
    %v4247 = vshrl.u32 %v4246, 7
    %v4248 = vsub.s32 0, %v4247
    %v4249 = vrot.slane %v4243, %v4248
    %v4250 = vmul.f32 %v4021, %v4249
    %v4251 = vmul.f32 %v4024, %v4249
    %v4252 = vlaneseq
    %v4253 = vshrl.u32 %v4252, 7
    %v4254 = vsub.s32 1, %v4253
    %v4255 = vrot.slane %v4243, %v4254
    %v4256 = vadd.f32 %v4250, %v4255
    %v4257 = vadd.f32 %v4251, %v4255
    %v4258 = vmax.f32 %v4256, 0.0
    %v4259 = vmax.f32 %v4257, 0.0
    %v4260 = vmul.f32 %v4258, %v50
    %v4261 = vmul.f32 %v4259, %v51
    %v4262 = vpack.c.bf16 %v4261, %v4260
    %v4264 = vunpack.c.l.b16 %v4262
    %v4265 = vunpack.c.h.b16 %v4262
    %v4266 = vpack.c.b16 %v4264, %v4264
    %v4267 = vpack.c.b16 %v4265, %v4265
    %4270 = vst [vmem:[#allocation2 + $0x4] sm:$0xf] %v4266
    %4271 = vst [vmem:[#allocation2 + $0x8] sm:$0xf] %v4267
    %v4272 = vld [vmem:[#allocation2] sm:$0x8]
    %v4273 = vld [vmem:[#allocation2 + $0x4] sm:$0xf]
    %v4274 = vld [vmem:[#allocation2 + $0x8] sm:$0xf]
    %v4275 = vld [vmem:[#allocation2 + $0x4] sm:$0xf]
    %v4276 = vld [vmem:[#allocation2 + $0x8] sm:$0xf]
    %v4277 = vld [vmem:[#allocation2 + $0xc] sm:$0x1]
    %v4281 = vunpack.c.l.b16 %v4272
    %v4282 = vunpack.c.l.b16 %v4273
    %v4283 = vunpack.c.l.b16 %v4274
    %v4284 = vpack.c.b16 %v4282, %v4281
    %v4285 = vpack.c.b16 %v4283, %v4283
    %v4286 = vpack.c.b16 %v4283, %v4282
    %v4288 = vshrl.u32 %v4286, 16
    %v4290 = vrot.slane %v4288, 4
    %v4291 = vshll.u32 %v4286, 16
    %v4293 = vrot.slane %v4291, 5
    %v4294 = vor.u32 %v4290, %v4293
    %v4298 = vunpack.c.l.b16 %v4275
    %v4299 = vunpack.c.l.b16 %v4276
    %v4300 = vunpack.c.l.b16 %v4277
    %v4301 = vpack.c.b16 %v4299, %v4298
    %v4302 = vpack.c.b16 %v4300, %v4300
    %v4303 = vrot.slane %v4301, 5
    %v4304 = vrot.slane %v4302, 5
    %v4305 = vsel %vm99, %v4303, %v4304
    %s4306 = scalar_lea.vmem %s5, 576
    %v4307 = vld [vmem:[%s4306] sm:$0xf]
    %v4308 = vld [vmem:[%s4306 + $0x4] sm:$0xf]
    %v4309 = vld [vmem:[%s4306 + $0x8] sm:$0xf]
    %v4310 = vld [vmem:[%s4306 + $0xc] sm:$0xf]
    %v4311 = vld [vmem:[%s4306 + $0x10] sm:$0xf]
    %v4312 = vld [vmem:[%s4306 + $0x14] sm:$0xf]
    %v4313 = vld [vmem:[%s4306 + $0x18] sm:$0xf]
    %v4314 = vld [vmem:[%s4306 + $0x1c] sm:$0xf]
    %v4315 = vld [vmem:[%s4306 + $0x20] sm:$0xf]
    %v4316 = vld [vmem:[%s4306 + $0x24] sm:$0xf]
    %v4317 = vld [vmem:[%s4306 + $0x28] sm:$0xf]
    %v4318 = vld [vmem:[%s4306 + $0x2c] sm:$0xf]
    %v4319 = vld [vmem:[%s4306 + $0x30] sm:$0xf]
    %v4320 = vld [vmem:[%s4306 + $0x34] sm:$0xf]
    %v4321 = vld [vmem:[%s4306 + $0x38] sm:$0xf]
    %v4322 = vld [vmem:[%s4306 + $0x3c] sm:$0xf]
    %v4323 = vld [vmem:[%s4306 + $0x40] sm:$0xf]
    %v4324 = vld [vmem:[%s4306 + $0x44] sm:$0xf]
    %v4325 = vld [vmem:[%s4306 + $0x48] sm:$0xf]
    %v4326 = vld [vmem:[%s4306 + $0x4c] sm:$0xf]
    %v4327 = vld [vmem:[%s4306 + $0x50] sm:$0xf]
    %v4328 = vld [vmem:[%s4306 + $0x54] sm:$0xf]
    %v4329 = vld [vmem:[%s4306 + $0x58] sm:$0xf]
    %v4330 = vld [vmem:[%s4306 + $0x5c] sm:$0xf]
    %v4331 = vld [vmem:[%s4306 + $0x60] sm:$0xf]
    %v4332 = vld [vmem:[%s4306 + $0x64] sm:$0xf]
    %v4333 = vld [vmem:[%s4306 + $0x68] sm:$0xf]
    %v4334 = vld [vmem:[%s4306 + $0x6c] sm:$0xf]
    %v4335 = vld [vmem:[%s4306 + $0x70] sm:$0xf]
    %v4336 = vld [vmem:[%s4306 + $0x74] sm:$0xf]
    %v4337 = vld [vmem:[%s4306 + $0x78] sm:$0xf]
    %v4338 = vld [vmem:[%s4306 + $0x7c] sm:$0xf]
    %v4339 = vld [vmem:[%s4306 + $0x80] sm:$0xf]
    %v4340 = vld [vmem:[%s4306 + $0x84] sm:$0xf]
    %v4341 = vld [vmem:[%s4306 + $0x88] sm:$0xf]
    %v4342 = vld [vmem:[%s4306 + $0x8c] sm:$0xf]
    %v4343 = vld [vmem:[%s4306 + $0x90] sm:$0xf]
    %v4344 = vld [vmem:[%s4306 + $0x94] sm:$0xf]
    %v4345 = vld [vmem:[%s4306 + $0x98] sm:$0xf]
    %v4346 = vld [vmem:[%s4306 + $0x9c] sm:$0xf]
    %v4347 = vld [vmem:[%s4306 + $0xa0] sm:$0xf]
    %v4348 = vld [vmem:[%s4306 + $0xa4] sm:$0xf]
    %v4349 = vld [vmem:[%s4306 + $0xa8] sm:$0xf]
    %v4350 = vld [vmem:[%s4306 + $0xac] sm:$0xf]
    %v4351 = vld [vmem:[%s4306 + $0xb0] sm:$0xf]
    %v4352 = vld [vmem:[%s4306 + $0xb4] sm:$0xf]
    %v4353 = vld [vmem:[%s4306 + $0xb8] sm:$0xf]
    %v4354 = vld [vmem:[%s4306 + $0xbc] sm:$0xf]
    %v4356 = vshrl.u32 %v4284, 16
    %v4358 = vrot.slane %v4356, 3
    %v4359 = vshll.u32 %v4284, 16
    %v4361 = vrot.slane %v4359, 4
    %v4362 = vor.u32 %v4358, %v4361
    %v4364 = vshrl.u32 %v4285, 16
    %v4366 = vrot.slane %v4364, 3
    %v4367 = vshll.u32 %v4285, 16
    %v4369 = vrot.slane %v4367, 4
    %v4370 = vor.u32 %v4366, %v4369
    %v4371 = vsel %vm151, %v4362, %v4370
    %v4373 = vshrl.u32 %v4294, 16
    %v4375 = vrot.slane %v4373, 3
    %v4376 = vshll.u32 %v4294, 16
    %v4378 = vrot.slane %v4376, 4
    %v4379 = vor.u32 %v4375, %v4378
    %v4380 = vsel %vm151, %v4379, %v4379
    %v4382 = vshrl.u32 %v4303, 16
    %v4384 = vrot.slane %v4382, 3
    %v4385 = vshll.u32 %v4303, 16
    %v4387 = vrot.slane %v4385, 4
    %v4388 = vor.u32 %v4384, %v4387
    %v4390 = vshrl.u32 %v4305, 16
    %v4392 = vrot.slane %v4390, 3
    %v4393 = vshll.u32 %v4305, 16
    %v4395 = vrot.slane %v4393, 4
    %v4396 = vor.u32 %v4392, %v4395
    %v4397 = vsel %vm151, %v4388, %v4396
    %v4449 = vunpack.c.l.b16 %v4307
    %v4450 = vunpack.c.l.b16 %v4308
    %v4451 = vunpack.c.l.b16 %v4309
    %v4452 = vunpack.c.l.b16 %v4310
    %v4453 = vunpack.c.l.b16 %v4311
    %v4454 = vunpack.c.l.b16 %v4312
    %v4455 = vunpack.c.l.b16 %v4313
    %v4456 = vunpack.c.l.b16 %v4314
    %v4457 = vunpack.c.l.b16 %v4315
    %v4458 = vunpack.c.l.b16 %v4316
    %v4459 = vunpack.c.l.b16 %v4317
    %v4460 = vunpack.c.l.b16 %v4318
    %v4461 = vunpack.c.l.b16 %v4319
    %v4462 = vunpack.c.l.b16 %v4320
    %v4463 = vunpack.c.l.b16 %v4321
    %v4464 = vunpack.c.l.b16 %v4322
    %v4465 = vunpack.c.l.b16 %v4323
    %v4466 = vunpack.c.l.b16 %v4324
    %v4467 = vunpack.c.l.b16 %v4325
    %v4468 = vunpack.c.l.b16 %v4326
    %v4469 = vunpack.c.l.b16 %v4327
    %v4470 = vunpack.c.l.b16 %v4328
    %v4471 = vunpack.c.l.b16 %v4329
    %v4472 = vunpack.c.l.b16 %v4330
    %v4473 = vunpack.c.l.b16 %v4331
    %v4474 = vunpack.c.l.b16 %v4332
    %v4475 = vunpack.c.l.b16 %v4333
    %v4476 = vunpack.c.l.b16 %v4334
    %v4477 = vunpack.c.l.b16 %v4335
    %v4478 = vunpack.c.l.b16 %v4336
    %v4479 = vunpack.c.l.b16 %v4337
    %v4480 = vunpack.c.l.b16 %v4338
    %v4481 = vunpack.c.l.b16 %v4339
    %v4482 = vunpack.c.l.b16 %v4340
    %v4483 = vunpack.c.l.b16 %v4341
    %v4484 = vunpack.c.l.b16 %v4342
    %v4485 = vunpack.c.l.b16 %v4343
    %v4486 = vunpack.c.l.b16 %v4344
    %v4487 = vunpack.c.l.b16 %v4345
    %v4488 = vunpack.c.l.b16 %v4346
    %v4489 = vunpack.c.l.b16 %v4347
    %v4490 = vunpack.c.l.b16 %v4348
    %v4491 = vunpack.c.l.b16 %v4349
    %v4492 = vunpack.c.l.b16 %v4350
    %v4493 = vunpack.c.l.b16 %v4351
    %v4494 = vunpack.c.l.b16 %v4352
    %v4495 = vunpack.c.l.b16 %v4353
    %v4496 = vunpack.c.l.b16 %v4354
    %v4497 = vpack.c.b16 %v4450, %v4449
    %v4498 = vpack.c.b16 %v4452, %v4451
    %v4499 = vpack.c.b16 %v4454, %v4453
    %v4500 = vpack.c.b16 %v4456, %v4455
    %v4501 = vpack.c.b16 %v4458, %v4457
    %v4502 = vpack.c.b16 %v4460, %v4459
    %v4503 = vpack.c.b16 %v4462, %v4461
    %v4504 = vpack.c.b16 %v4464, %v4463
    %v4505 = vpack.c.b16 %v4466, %v4465
    %v4506 = vpack.c.b16 %v4468, %v4467
    %v4507 = vpack.c.b16 %v4470, %v4469
    %v4508 = vpack.c.b16 %v4472, %v4471
    %v4509 = vpack.c.b16 %v4474, %v4473
    %v4510 = vpack.c.b16 %v4476, %v4475
    %v4511 = vpack.c.b16 %v4478, %v4477
    %v4512 = vpack.c.b16 %v4480, %v4479
    %v4513 = vpack.c.b16 %v4482, %v4481
    %v4514 = vpack.c.b16 %v4484, %v4483
    %v4515 = vpack.c.b16 %v4486, %v4485
    %v4516 = vpack.c.b16 %v4488, %v4487
    %v4517 = vpack.c.b16 %v4490, %v4489
    %v4518 = vpack.c.b16 %v4492, %v4491
    %v4519 = vpack.c.b16 %v4494, %v4493
    %v4520 = vpack.c.b16 %v4496, %v4495
    %4545 = vmatprep.subr.bf16.mxu0 0
    %4546 = vmatpush1.bf16.msra.mxu0 %v4504
    %4547 = vmatprep.subr.bf16.mxu0 0
    %4548 = vmatpush1.bf16.msra.mxu0 %v4503
    %4549 = vmatprep.subr.bf16.mxu0 0
    %4550 = vmatpush1.bf16.msra.mxu0 %v4502
    %4551 = vmatprep.subr.bf16.mxu0 0
    %4552 = vmatpush1.bf16.msra.mxu0 %v4501
    %4553 = vmatprep.subr.bf16.mxu0 0
    %4554 = vmatpush1.bf16.msra.mxu0 %v4500
    %4555 = vmatprep.subr.bf16.mxu0 0
    %4556 = vmatpush1.bf16.msra.mxu0 %v4499
    %4557 = vmatprep.subr.bf16.mxu0 0
    %4558 = vmatpush1.bf16.msra.mxu0 %v4498
    %4559 = vmatprep.subr.bf16.mxu0 0
    %4560 = vmatpush1.bf16.msra.mxu0 %v4497
    %4561 = vmatprep.subr.bf16.mxu0 0
    %4562 = vmatpush2.bf16.msra.mxu0 %v4512
    %4563 = vmatprep.subr.bf16.mxu0 0
    %4564 = vmatpush2.bf16.msra.mxu0 %v4511
    %4565 = vmatprep.subr.bf16.mxu0 0
    %4566 = vmatpush2.bf16.msra.mxu0 %v4510
    %4567 = vmatprep.subr.bf16.mxu0 0
    %4568 = vmatpush2.bf16.msra.mxu0 %v4509
    %4569 = vmatprep.subr.bf16.mxu0 0
    %4570 = vmatpush2.bf16.msra.mxu0 %v4508
    %4571 = vmatprep.subr.bf16.mxu0 0
    %4572 = vmatpush2.bf16.msra.mxu0 %v4507
    %4573 = vmatprep.subr.bf16.mxu0 0
    %4574 = vmatpush2.bf16.msra.mxu0 %v4506
    %4575 = vmatprep.subr.bf16.mxu0 0
    %4576 = vmatpush2.bf16.msra.mxu0 %v4505
    %4577 = vmatprep.mubr.bf16.mxu0 %v4380
    %4578 = vmatmul.mubr.bf16.gmra.mxu0 %v4371
    %v4579 = vpop.f32.mrf.mxu0
    %v4580 = vadd.f32 0.0, %v4579
    %v4581 = vpop.f32.mrf.mxu0
    %v4582 = vpop.f32.mrf.mxu0
    %v4583 = vadd.f32 0.0, %v4582
    %v4584 = vpop.f32.mrf.mxu0
    %4585 = vdwg.mxu0
    %4586 = vmatprep.subr.bf16.mxu0 0
    %4587 = vmatpush1.bf16.msra.mxu0 %v4520
    %4588 = vmatprep.subr.bf16.mxu0 0
    %4589 = vmatpush1.bf16.msra.mxu0 %v4519
    %4590 = vmatprep.subr.bf16.mxu0 0
    %4591 = vmatpush1.bf16.msra.mxu0 %v4518
    %4592 = vmatprep.subr.bf16.mxu0 0
    %4593 = vmatpush1.bf16.msra.mxu0 %v4517
    %4594 = vmatprep.subr.bf16.mxu0 0
    %4595 = vmatpush1.bf16.msra.mxu0 %v4516
    %4596 = vmatprep.subr.bf16.mxu0 0
    %4597 = vmatpush1.bf16.msra.mxu0 %v4515
    %4598 = vmatprep.subr.bf16.mxu0 0
    %4599 = vmatpush1.bf16.msra.mxu0 %v4514
    %4600 = vmatprep.subr.bf16.mxu0 0
    %4601 = vmatpush1.bf16.msra.mxu0 %v4513
    %4602 = vmatprep.subr.bf16.mxu0 0
    %4603 = vmatpush2.bf16.msra.mxu0 0
    %4604 = vmatprep.subr.bf16.mxu0 0
    %4605 = vmatpush2.bf16.msra.mxu0 0
    %4606 = vmatprep.subr.bf16.mxu0 0
    %4607 = vmatpush2.bf16.msra.mxu0 0
    %4608 = vmatprep.subr.bf16.mxu0 0
    %4609 = vmatpush2.bf16.msra.mxu0 0
    %4610 = vmatprep.subr.bf16.mxu0 0
    %4611 = vmatpush2.bf16.msra.mxu0 0
    %4612 = vmatprep.subr.bf16.mxu0 0
    %4613 = vmatpush2.bf16.msra.mxu0 0
    %4614 = vmatprep.subr.bf16.mxu0 0
    %4615 = vmatpush2.bf16.msra.mxu0 0
    %4616 = vmatprep.subr.bf16.mxu0 0
    %4617 = vmatpush2.bf16.msra.mxu0 0
    %4618 = vmatprep.mubr.bf16.mxu0 0
    %4619 = vmatmul.mubr.bf16.gmra.mxu0 %v4397
    %v4620 = vpop.f32.mrf.mxu0
    %v4621 = vadd.f32 %v4580, %v4620
    %v4622 = vpop.f32.mrf.mxu0
    %v4623 = vpop.f32.mrf.mxu0
    %v4624 = vadd.f32 %v4583, %v4623
    %v4625 = vpop.f32.mrf.mxu0
    %4626 = vdwg.mxu0
    %s4627 = scalar_lea.vmem %s6, 3
    %v4628 = vld [vmem:[%s4627] sm:$0x1]
    %s4629 = scalar_lea.vmem %s7, 3
    %v4630 = vld [vmem:[%s4629] sm:$0x1]
    %v4631 = vmul.f32 %v4621, %v50
    %v4632 = vmul.f32 %v4624, %v51
    %v4633 = vadd.f32 %v4631, %v4632
    %v4634 = vrot.slane %v4633, 4
    %v4635 = vadd.f32 %v4633, %v4634
    %v4636 = vrot.slane %v4635, 2
    %v4637 = vadd.f32 %v4635, %v4636
    %v4638 = vrot.slane %v4637, 1
    %v4639 = vadd.f32 %v4637, %v4638
    %v4640 = vmul.f32 %v4631, %v4621
    %v4641 = vmul.f32 %v4632, %v4624
    %v4642 = vadd.f32 %v4640, %v4641
    %v4643 = vrot.slane %v4642, 4
    %v4644 = vadd.f32 %v4642, %v4643
    %v4645 = vrot.slane %v4644, 2
    %v4646 = vadd.f32 %v4644, %v4645
    %v4647 = vrot.slane %v4646, 1
    %v4648 = vadd.f32 %v4646, %v4647
    %v4649 = vsel %vm444, %v4639, %v4648
    %v4650 = vld [vmem:[#allocation3] sm:$0xff]
    %v4651 = vld [vmem:[#allocation3 + $0x8] sm:$0xff]
    %v4652 = vld [vmem:[#allocation3 + $0x10] sm:$0xff]
    %v4653 = vld [vmem:[#allocation3 + $0x18] sm:$0xff]
    %v4654 = vld [vmem:[#allocation3 + $0x20] sm:$0xff]
    %v4655 = vld [vmem:[#allocation3 + $0x28] sm:$0xff]
    %v4656 = vld [vmem:[#allocation3 + $0x30] sm:$0xff]
    %v4657 = vld [vmem:[#allocation3 + $0x38] sm:$0xff]
    %v4658 = vld [vmem:[#allocation3 + $0x40] sm:$0xff]
    %v4659 = vld [vmem:[#allocation3 + $0x48] sm:$0xff]
    %v4660 = vld [vmem:[#allocation3 + $0x50] sm:$0xff]
    %v4661 = vld [vmem:[#allocation3 + $0x58] sm:$0xff]
    %v4662 = vld [vmem:[#allocation3 + $0x60] sm:$0xff]
    %v4663 = vld [vmem:[#allocation3 + $0x68] sm:$0xff]
    %v4664 = vld [vmem:[#allocation3 + $0x70] sm:$0xff]
    %v4665 = vld [vmem:[#allocation3 + $0x78] sm:$0xff]
    %4666 = vmatprep.subr.mxu0 0.0
    %4667 = vmatpush1.msra.mxu0 %v4665
    %4668 = vmatprep.subr.mxu0 0.0
    %4669 = vmatpush1.msra.mxu0 %v4664
    %4670 = vmatprep.subr.mxu0 0.0
    %4671 = vmatpush1.msra.mxu0 %v4663
    %4672 = vmatprep.subr.mxu0 0.0
    %4673 = vmatpush1.msra.mxu0 %v4662
    %4674 = vmatprep.subr.mxu0 0.0
    %4675 = vmatpush1.msra.mxu0 %v4661
    %4676 = vmatprep.subr.mxu0 0.0
    %4677 = vmatpush1.msra.mxu0 %v4660
    %4678 = vmatprep.subr.mxu0 0.0
    %4679 = vmatpush1.msra.mxu0 %v4659
    %4680 = vmatprep.subr.mxu0 0.0
    %4681 = vmatpush1.msra.mxu0 %v4658
    %4682 = vmatprep.subr.mxu0 0.0
    %4683 = vmatpush1.msra.mxu0 %v4657
    %4684 = vmatprep.subr.mxu0 0.0
    %4685 = vmatpush1.msra.mxu0 %v4656
    %4686 = vmatprep.subr.mxu0 0.0
    %4687 = vmatpush1.msra.mxu0 %v4655
    %4688 = vmatprep.subr.mxu0 0.0
    %4689 = vmatpush1.msra.mxu0 %v4654
    %4690 = vmatprep.subr.mxu0 0.0
    %4691 = vmatpush1.msra.mxu0 %v4653
    %4692 = vmatprep.subr.mxu0 0.0
    %4693 = vmatpush1.msra.mxu0 %v4652
    %4694 = vmatprep.subr.mxu0 0.0
    %4695 = vmatpush1.msra.mxu0 %v4651
    %4696 = vmatprep.subr.mxu0 0.0
    %4697 = vmatpush1.msra.mxu0 %v4650
    %4698 = vmatprep.subr.mxu0 0.0
    %4699 = vmatpush2.msra.mxu0 0.0
    %4700 = vmatprep.subr.mxu0 0.0
    %4701 = vmatpush2.msra.mxu0 0.0
    %4702 = vmatprep.subr.mxu0 0.0
    %4703 = vmatpush2.msra.mxu0 0.0
    %4704 = vmatprep.subr.mxu0 0.0
    %4705 = vmatpush2.msra.mxu0 0.0
    %4706 = vmatprep.subr.mxu0 0.0
    %4707 = vmatpush2.msra.mxu0 0.0
    %4708 = vmatprep.subr.mxu0 0.0
    %4709 = vmatpush2.msra.mxu0 0.0
    %4710 = vmatprep.subr.mxu0 0.0
    %4711 = vmatpush2.msra.mxu0 0.0
    %4712 = vmatprep.subr.mxu0 0.0
    %4713 = vmatpush2.msra.mxu0 0.0
    %4714 = vmatprep.subr.mxu0 0.0
    %4715 = vmatpush2.msra.mxu0 0.0
    %4716 = vmatprep.subr.mxu0 0.0
    %4717 = vmatpush2.msra.mxu0 0.0
    %4718 = vmatprep.subr.mxu0 0.0
    %4719 = vmatpush2.msra.mxu0 0.0
    %4720 = vmatprep.subr.mxu0 0.0
    %4721 = vmatpush2.msra.mxu0 0.0
    %4722 = vmatprep.subr.mxu0 0.0
    %4723 = vmatpush2.msra.mxu0 0.0
    %4724 = vmatprep.subr.mxu0 0.0
    %4725 = vmatpush2.msra.mxu0 0.0
    %4726 = vmatprep.subr.mxu0 0.0
    %4727 = vmatpush2.msra.mxu0 0.0
    %4728 = vmatprep.subr.mxu0 0.0
    %4729 = vmatpush2.msra.mxu0 0.0
    %4730 = vmatprep.mubr.f32.mxu0 0.0
    %4731 = vmatmul.mubr.f32.gmra.mxu0 %v4649
    %v4732 = vpop.f32.mrf.mxu0
    %v4733 = vadd.f32 0.0, %v4732
    %v4734 = vpop.f32.mrf.mxu0
    %4735 = vdwg.mxu0
    %v4736 = vmul.f32 %v4733, 0.03125
    %v4737 = vmul.f32 %v4736, %v4736
    %v4739 = vrot.slane %v4737, 7
    %v4741 = vsub.f32 %v4736, %v4739
    %v4742 = vmax.f32 %v4741, 0.0
    %v4743 = vadd.f32 %v4742, 1e-05
    %v4744 = vrsqrt.pop %v4743
    %v4747 = vunpack.c.l.s4 1966171168
    %v4748 = vunpack.c.0.s8 %v4747
    %v4749 = vlaneseq
    %v4750 = vshrl.u32 %v4749, 7
    %v4751 = vsub.s32 %v4748, %v4750
    %v4752 = vrot.slane %v4744, %v4751
    %v4753 = vcombine.high %v4752, %v4752
    %v4755 = vunpack.c.l.s4 1966171168
    %v4756 = vunpack.c.0.s8 %v4755
    %v4757 = vlaneseq
    %v4758 = vshrl.u32 %v4757, 7
    %v4759 = vsub.s32 %v4756, %v4758
    %v4760 = vrot.slane %v4753, %v4759
    %v4762 = vmul.f32 %v4628, %v4760
    %v4763 = vmul.f32 %v4736, %v4762
    %v4764 = vsub.f32 %v4630, %v4763
    %v4766 = vlaneseq
    %v4767 = vshrl.u32 %v4766, 7
    %v4768 = vsub.s32 0, %v4767
    %v4769 = vrot.slane %v4764, %v4768
    %v4771 = vsel %vm444, %v4762, %v4769
    %v4772 = vld [vmem:[%s9] sm:$0xff]
    %v4774 = vsel %vm569, %v4771, 0
    %4776 = vmatprep.subr.mxu0 0.0
    %4777 = vmatpush1.msra.mxu0 0.0
    %4778 = vmatprep.subr.mxu0 0.0
    %4779 = vmatpush1.msra.mxu0 0.0
    %4780 = vmatprep.subr.mxu0 0.0
    %4781 = vmatpush1.msra.mxu0 0.0
    %4782 = vmatprep.subr.mxu0 0.0
    %4783 = vmatpush1.msra.mxu0 0.0
    %4784 = vmatprep.subr.mxu0 0.0
    %4785 = vmatpush1.msra.mxu0 0.0
    %4786 = vmatprep.subr.mxu0 0.0
    %4787 = vmatpush1.msra.mxu0 0.0
    %4788 = vmatprep.subr.mxu0 0.0
    %4789 = vmatpush1.msra.mxu0 0.0
    %4790 = vmatprep.subr.mxu0 0.0
    %4791 = vmatpush1.msra.mxu0 0.0
    %4792 = vmatprep.subr.mxu0 0.0
    %4793 = vmatpush1.msra.mxu0 0.0
    %4794 = vmatprep.subr.mxu0 0.0
    %4795 = vmatpush1.msra.mxu0 0.0
    %4796 = vmatprep.subr.mxu0 0.0
    %4797 = vmatpush1.msra.mxu0 0.0
    %4798 = vmatprep.subr.mxu0 0.0
    %4799 = vmatpush1.msra.mxu0 0.0
    %4800 = vmatprep.subr.mxu0 0.0
    %4801 = vmatpush1.msra.mxu0 0.0
    %4802 = vmatprep.subr.mxu0 0.0
    %4803 = vmatpush1.msra.mxu0 0.0
    %4804 = vmatprep.subr.mxu0 0.0
    %4805 = vmatpush1.msra.mxu0 0.0
    %4806 = vmatprep.subr.mxu0 0.0
    %4807 = vmatpush1.msra.mxu0 %v4772
    %4808 = vmatprep.subr.mxu0 0.0
    %4809 = vmatpush2.msra.mxu0 0.0
    %4810 = vmatprep.subr.mxu0 0.0
    %4811 = vmatpush2.msra.mxu0 0.0
    %4812 = vmatprep.subr.mxu0 0.0
    %4813 = vmatpush2.msra.mxu0 0.0
    %4814 = vmatprep.subr.mxu0 0.0
    %4815 = vmatpush2.msra.mxu0 0.0
    %4816 = vmatprep.subr.mxu0 0.0
    %4817 = vmatpush2.msra.mxu0 0.0
    %4818 = vmatprep.subr.mxu0 0.0
    %4819 = vmatpush2.msra.mxu0 0.0
    %4820 = vmatprep.subr.mxu0 0.0
    %4821 = vmatpush2.msra.mxu0 0.0
    %4822 = vmatprep.subr.mxu0 0.0
    %4823 = vmatpush2.msra.mxu0 0.0
    %4824 = vmatprep.subr.mxu0 0.0
    %4825 = vmatpush2.msra.mxu0 0.0
    %4826 = vmatprep.subr.mxu0 0.0
    %4827 = vmatpush2.msra.mxu0 0.0
    %4828 = vmatprep.subr.mxu0 0.0
    %4829 = vmatpush2.msra.mxu0 0.0
    %4830 = vmatprep.subr.mxu0 0.0
    %4831 = vmatpush2.msra.mxu0 0.0
    %4832 = vmatprep.subr.mxu0 0.0
    %4833 = vmatpush2.msra.mxu0 0.0
    %4834 = vmatprep.subr.mxu0 0.0
    %4835 = vmatpush2.msra.mxu0 0.0
    %4836 = vmatprep.subr.mxu0 0.0
    %4837 = vmatpush2.msra.mxu0 0.0
    %4838 = vmatprep.subr.mxu0 0.0
    %4839 = vmatpush2.msra.mxu0 0.0
    %4840 = vmatprep.mubr.f32.mxu0 0.0
    %4841 = vmatmul.mubr.f32.gmra.mxu0 %v4774
    %v4842 = vpop.f32.mrf.mxu0
    %v4843 = vadd.f32 0.0, %v4842
    %v4844 = vpop.f32.mrf.mxu0
    %4845 = vdwg.mxu0
    %v4846 = vlaneseq
    %v4847 = vshrl.u32 %v4846, 7
    %v4848 = vsub.s32 0, %v4847
    %v4849 = vrot.slane %v4843, %v4848
    %v4850 = vmul.f32 %v4621, %v4849
    %v4851 = vmul.f32 %v4624, %v4849
    %v4852 = vlaneseq
    %v4853 = vshrl.u32 %v4852, 7
    %v4854 = vsub.s32 1, %v4853
    %v4855 = vrot.slane %v4843, %v4854
    %v4856 = vadd.f32 %v4850, %v4855
    %v4857 = vadd.f32 %v4851, %v4855
    %v4858 = vadd.f32 %v4856, %v3660
    %v4859 = vadd.f32 %v4857, %v3661
    %v4860 = vmax.f32 %v4858, 0.0
    %v4861 = vmax.f32 %v4859, 0.0
    %v4862 = vmul.f32 %v4860, %v50
    %v4863 = vmul.f32 %v4861, %v51
    %v4864 = vpack.c.bf16 %v4863, %v4862
    %v4866 = vunpack.c.l.b16 %v4864
    %v4867 = vunpack.c.h.b16 %v4864
    %v4868 = vpack.c.b16 %v4866, %v4866
    %v4869 = vpack.c.b16 %v4867, %v4867
    %4872 = vst [vmem:[#allocation2 + $0x4] sm:$0xf] %v4868
    %4873 = vst [vmem:[#allocation2 + $0x8] sm:$0xf] %v4869
    %v4874 = vld [vmem:[#allocation2] sm:$0x8]
    %v4875 = vld [vmem:[#allocation2 + $0x4] sm:$0xf]
    %v4876 = vld [vmem:[#allocation2 + $0x8] sm:$0xf]
    %v4877 = vld [vmem:[#allocation2 + $0x4] sm:$0xf]
    %v4878 = vld [vmem:[#allocation2 + $0x8] sm:$0xf]
    %v4879 = vld [vmem:[#allocation2 + $0xc] sm:$0x1]
    %v4883 = vunpack.c.l.b16 %v4874
    %v4884 = vunpack.c.l.b16 %v4875
    %v4885 = vunpack.c.l.b16 %v4876
    %v4886 = vpack.c.b16 %v4884, %v4883
    %v4887 = vpack.c.b16 %v4885, %v4885
    %v4888 = vpack.c.b16 %v4885, %v4884
    %v4890 = vshrl.u32 %v4888, 16
    %v4892 = vrot.slane %v4890, 4
    %v4893 = vshll.u32 %v4888, 16
    %v4895 = vrot.slane %v4893, 5
    %v4896 = vor.u32 %v4892, %v4895
    %v4900 = vunpack.c.l.b16 %v4877
    %v4901 = vunpack.c.l.b16 %v4878
    %v4902 = vunpack.c.l.b16 %v4879
    %v4903 = vpack.c.b16 %v4901, %v4900
    %v4904 = vpack.c.b16 %v4902, %v4902
    %v4905 = vrot.slane %v4903, 5
    %v4906 = vrot.slane %v4904, 5
    %v4907 = vsel %vm99, %v4905, %v4906
    %s4908 = scalar_lea.vmem %s2, 768
    %v4909 = vld [vmem:[%s4908] sm:$0xf]
    %v4910 = vld [vmem:[%s4908 + $0x4] sm:$0xf]
    %v4911 = vld [vmem:[%s4908 + $0x8] sm:$0xf]
    %v4912 = vld [vmem:[%s4908 + $0xc] sm:$0xf]
    %v4913 = vld [vmem:[%s4908 + $0x10] sm:$0xf]
    %v4914 = vld [vmem:[%s4908 + $0x14] sm:$0xf]
    %v4915 = vld [vmem:[%s4908 + $0x18] sm:$0xf]
    %v4916 = vld [vmem:[%s4908 + $0x1c] sm:$0xf]
    %v4917 = vld [vmem:[%s4908 + $0x20] sm:$0xf]
    %v4918 = vld [vmem:[%s4908 + $0x24] sm:$0xf]
    %v4919 = vld [vmem:[%s4908 + $0x28] sm:$0xf]
    %v4920 = vld [vmem:[%s4908 + $0x2c] sm:$0xf]
    %v4921 = vld [vmem:[%s4908 + $0x30] sm:$0xf]
    %v4922 = vld [vmem:[%s4908 + $0x34] sm:$0xf]
    %v4923 = vld [vmem:[%s4908 + $0x38] sm:$0xf]
    %v4924 = vld [vmem:[%s4908 + $0x3c] sm:$0xf]
    %v4925 = vld [vmem:[%s4908 + $0x40] sm:$0xf]
    %v4926 = vld [vmem:[%s4908 + $0x44] sm:$0xf]
    %v4927 = vld [vmem:[%s4908 + $0x48] sm:$0xf]
    %v4928 = vld [vmem:[%s4908 + $0x4c] sm:$0xf]
    %v4929 = vld [vmem:[%s4908 + $0x50] sm:$0xf]
    %v4930 = vld [vmem:[%s4908 + $0x54] sm:$0xf]
    %v4931 = vld [vmem:[%s4908 + $0x58] sm:$0xf]
    %v4932 = vld [vmem:[%s4908 + $0x5c] sm:$0xf]
    %v4933 = vld [vmem:[%s4908 + $0x60] sm:$0xf]
    %v4934 = vld [vmem:[%s4908 + $0x64] sm:$0xf]
    %v4935 = vld [vmem:[%s4908 + $0x68] sm:$0xf]
    %v4936 = vld [vmem:[%s4908 + $0x6c] sm:$0xf]
    %v4937 = vld [vmem:[%s4908 + $0x70] sm:$0xf]
    %v4938 = vld [vmem:[%s4908 + $0x74] sm:$0xf]
    %v4939 = vld [vmem:[%s4908 + $0x78] sm:$0xf]
    %v4940 = vld [vmem:[%s4908 + $0x7c] sm:$0xf]
    %v4941 = vld [vmem:[%s4908 + $0x80] sm:$0xf]
    %v4942 = vld [vmem:[%s4908 + $0x84] sm:$0xf]
    %v4943 = vld [vmem:[%s4908 + $0x88] sm:$0xf]
    %v4944 = vld [vmem:[%s4908 + $0x8c] sm:$0xf]
    %v4945 = vld [vmem:[%s4908 + $0x90] sm:$0xf]
    %v4946 = vld [vmem:[%s4908 + $0x94] sm:$0xf]
    %v4947 = vld [vmem:[%s4908 + $0x98] sm:$0xf]
    %v4948 = vld [vmem:[%s4908 + $0x9c] sm:$0xf]
    %v4949 = vld [vmem:[%s4908 + $0xa0] sm:$0xf]
    %v4950 = vld [vmem:[%s4908 + $0xa4] sm:$0xf]
    %v4951 = vld [vmem:[%s4908 + $0xa8] sm:$0xf]
    %v4952 = vld [vmem:[%s4908 + $0xac] sm:$0xf]
    %v4953 = vld [vmem:[%s4908 + $0xb0] sm:$0xf]
    %v4954 = vld [vmem:[%s4908 + $0xb4] sm:$0xf]
    %v4955 = vld [vmem:[%s4908 + $0xb8] sm:$0xf]
    %v4956 = vld [vmem:[%s4908 + $0xbc] sm:$0xf]
    %v4958 = vshrl.u32 %v4886, 16
    %v4960 = vrot.slane %v4958, 3
    %v4961 = vshll.u32 %v4886, 16
    %v4963 = vrot.slane %v4961, 4
    %v4964 = vor.u32 %v4960, %v4963
    %v4966 = vshrl.u32 %v4887, 16
    %v4968 = vrot.slane %v4966, 3
    %v4969 = vshll.u32 %v4887, 16
    %v4971 = vrot.slane %v4969, 4
    %v4972 = vor.u32 %v4968, %v4971
    %v4973 = vsel %vm151, %v4964, %v4972
    %v4975 = vshrl.u32 %v4896, 16
    %v4977 = vrot.slane %v4975, 3
    %v4978 = vshll.u32 %v4896, 16
    %v4980 = vrot.slane %v4978, 4
    %v4981 = vor.u32 %v4977, %v4980
    %v4982 = vsel %vm151, %v4981, %v4981
    %v4984 = vshrl.u32 %v4905, 16
    %v4986 = vrot.slane %v4984, 3
    %v4987 = vshll.u32 %v4905, 16
    %v4989 = vrot.slane %v4987, 4
    %v4990 = vor.u32 %v4986, %v4989
    %v4992 = vshrl.u32 %v4907, 16
    %v4994 = vrot.slane %v4992, 3
    %v4995 = vshll.u32 %v4907, 16
    %v4997 = vrot.slane %v4995, 4
    %v4998 = vor.u32 %v4994, %v4997
    %v4999 = vsel %vm151, %v4990, %v4998
    %v5051 = vunpack.c.l.b16 %v4909
    %v5052 = vunpack.c.l.b16 %v4910
    %v5053 = vunpack.c.l.b16 %v4911
    %v5054 = vunpack.c.l.b16 %v4912
    %v5055 = vunpack.c.l.b16 %v4913
    %v5056 = vunpack.c.l.b16 %v4914
    %v5057 = vunpack.c.l.b16 %v4915
    %v5058 = vunpack.c.l.b16 %v4916
    %v5059 = vunpack.c.l.b16 %v4917
    %v5060 = vunpack.c.l.b16 %v4918
    %v5061 = vunpack.c.l.b16 %v4919
    %v5062 = vunpack.c.l.b16 %v4920
    %v5063 = vunpack.c.l.b16 %v4921
    %v5064 = vunpack.c.l.b16 %v4922
    %v5065 = vunpack.c.l.b16 %v4923
    %v5066 = vunpack.c.l.b16 %v4924
    %v5067 = vunpack.c.l.b16 %v4925
    %v5068 = vunpack.c.l.b16 %v4926
    %v5069 = vunpack.c.l.b16 %v4927
    %v5070 = vunpack.c.l.b16 %v4928
    %v5071 = vunpack.c.l.b16 %v4929
    %v5072 = vunpack.c.l.b16 %v4930
    %v5073 = vunpack.c.l.b16 %v4931
    %v5074 = vunpack.c.l.b16 %v4932
    %v5075 = vunpack.c.l.b16 %v4933
    %v5076 = vunpack.c.l.b16 %v4934
    %v5077 = vunpack.c.l.b16 %v4935
    %v5078 = vunpack.c.l.b16 %v4936
    %v5079 = vunpack.c.l.b16 %v4937
    %v5080 = vunpack.c.l.b16 %v4938
    %v5081 = vunpack.c.l.b16 %v4939
    %v5082 = vunpack.c.l.b16 %v4940
    %v5083 = vunpack.c.l.b16 %v4941
    %v5084 = vunpack.c.l.b16 %v4942
    %v5085 = vunpack.c.l.b16 %v4943
    %v5086 = vunpack.c.l.b16 %v4944
    %v5087 = vunpack.c.l.b16 %v4945
    %v5088 = vunpack.c.l.b16 %v4946
    %v5089 = vunpack.c.l.b16 %v4947
    %v5090 = vunpack.c.l.b16 %v4948
    %v5091 = vunpack.c.l.b16 %v4949
    %v5092 = vunpack.c.l.b16 %v4950
    %v5093 = vunpack.c.l.b16 %v4951
    %v5094 = vunpack.c.l.b16 %v4952
    %v5095 = vunpack.c.l.b16 %v4953
    %v5096 = vunpack.c.l.b16 %v4954
    %v5097 = vunpack.c.l.b16 %v4955
    %v5098 = vunpack.c.l.b16 %v4956
    %v5099 = vpack.c.b16 %v5052, %v5051
    %v5100 = vpack.c.b16 %v5054, %v5053
    %v5101 = vpack.c.b16 %v5056, %v5055
    %v5102 = vpack.c.b16 %v5058, %v5057
    %v5103 = vpack.c.b16 %v5060, %v5059
    %v5104 = vpack.c.b16 %v5062, %v5061
    %v5105 = vpack.c.b16 %v5064, %v5063
    %v5106 = vpack.c.b16 %v5066, %v5065
    %v5107 = vpack.c.b16 %v5068, %v5067
    %v5108 = vpack.c.b16 %v5070, %v5069
    %v5109 = vpack.c.b16 %v5072, %v5071
    %v5110 = vpack.c.b16 %v5074, %v5073
    %v5111 = vpack.c.b16 %v5076, %v5075
    %v5112 = vpack.c.b16 %v5078, %v5077
    %v5113 = vpack.c.b16 %v5080, %v5079
    %v5114 = vpack.c.b16 %v5082, %v5081
    %v5115 = vpack.c.b16 %v5084, %v5083
    %v5116 = vpack.c.b16 %v5086, %v5085
    %v5117 = vpack.c.b16 %v5088, %v5087
    %v5118 = vpack.c.b16 %v5090, %v5089
    %v5119 = vpack.c.b16 %v5092, %v5091
    %v5120 = vpack.c.b16 %v5094, %v5093
    %v5121 = vpack.c.b16 %v5096, %v5095
    %v5122 = vpack.c.b16 %v5098, %v5097
    %5147 = vmatprep.subr.bf16.mxu0 0
    %5148 = vmatpush1.bf16.msra.mxu0 %v5106
    %5149 = vmatprep.subr.bf16.mxu0 0
    %5150 = vmatpush1.bf16.msra.mxu0 %v5105
    %5151 = vmatprep.subr.bf16.mxu0 0
    %5152 = vmatpush1.bf16.msra.mxu0 %v5104
    %5153 = vmatprep.subr.bf16.mxu0 0
    %5154 = vmatpush1.bf16.msra.mxu0 %v5103
    %5155 = vmatprep.subr.bf16.mxu0 0
    %5156 = vmatpush1.bf16.msra.mxu0 %v5102
    %5157 = vmatprep.subr.bf16.mxu0 0
    %5158 = vmatpush1.bf16.msra.mxu0 %v5101
    %5159 = vmatprep.subr.bf16.mxu0 0
    %5160 = vmatpush1.bf16.msra.mxu0 %v5100
    %5161 = vmatprep.subr.bf16.mxu0 0
    %5162 = vmatpush1.bf16.msra.mxu0 %v5099
    %5163 = vmatprep.subr.bf16.mxu0 0
    %5164 = vmatpush2.bf16.msra.mxu0 %v5114
    %5165 = vmatprep.subr.bf16.mxu0 0
    %5166 = vmatpush2.bf16.msra.mxu0 %v5113
    %5167 = vmatprep.subr.bf16.mxu0 0
    %5168 = vmatpush2.bf16.msra.mxu0 %v5112
    %5169 = vmatprep.subr.bf16.mxu0 0
    %5170 = vmatpush2.bf16.msra.mxu0 %v5111
    %5171 = vmatprep.subr.bf16.mxu0 0
    %5172 = vmatpush2.bf16.msra.mxu0 %v5110
    %5173 = vmatprep.subr.bf16.mxu0 0
    %5174 = vmatpush2.bf16.msra.mxu0 %v5109
    %5175 = vmatprep.subr.bf16.mxu0 0
    %5176 = vmatpush2.bf16.msra.mxu0 %v5108
    %5177 = vmatprep.subr.bf16.mxu0 0
    %5178 = vmatpush2.bf16.msra.mxu0 %v5107
    %5179 = vmatprep.mubr.bf16.mxu0 %v4982
    %5180 = vmatmul.mubr.bf16.gmra.mxu0 %v4973
    %v5181 = vpop.f32.mrf.mxu0
    %v5182 = vadd.f32 0.0, %v5181
    %v5183 = vpop.f32.mrf.mxu0
    %v5184 = vpop.f32.mrf.mxu0
    %v5185 = vadd.f32 0.0, %v5184
    %v5186 = vpop.f32.mrf.mxu0
    %5187 = vdwg.mxu0
    %5188 = vmatprep.subr.bf16.mxu0 0
    %5189 = vmatpush1.bf16.msra.mxu0 %v5122
    %5190 = vmatprep.subr.bf16.mxu0 0
    %5191 = vmatpush1.bf16.msra.mxu0 %v5121
    %5192 = vmatprep.subr.bf16.mxu0 0
    %5193 = vmatpush1.bf16.msra.mxu0 %v5120
    %5194 = vmatprep.subr.bf16.mxu0 0
    %5195 = vmatpush1.bf16.msra.mxu0 %v5119
    %5196 = vmatprep.subr.bf16.mxu0 0
    %5197 = vmatpush1.bf16.msra.mxu0 %v5118
    %5198 = vmatprep.subr.bf16.mxu0 0
    %5199 = vmatpush1.bf16.msra.mxu0 %v5117
    %5200 = vmatprep.subr.bf16.mxu0 0
    %5201 = vmatpush1.bf16.msra.mxu0 %v5116
    %5202 = vmatprep.subr.bf16.mxu0 0
    %5203 = vmatpush1.bf16.msra.mxu0 %v5115
    %5204 = vmatprep.subr.bf16.mxu0 0
    %5205 = vmatpush2.bf16.msra.mxu0 0
    %5206 = vmatprep.subr.bf16.mxu0 0
    %5207 = vmatpush2.bf16.msra.mxu0 0
    %5208 = vmatprep.subr.bf16.mxu0 0
    %5209 = vmatpush2.bf16.msra.mxu0 0
    %5210 = vmatprep.subr.bf16.mxu0 0
    %5211 = vmatpush2.bf16.msra.mxu0 0
    %5212 = vmatprep.subr.bf16.mxu0 0
    %5213 = vmatpush2.bf16.msra.mxu0 0
    %5214 = vmatprep.subr.bf16.mxu0 0
    %5215 = vmatpush2.bf16.msra.mxu0 0
    %5216 = vmatprep.subr.bf16.mxu0 0
    %5217 = vmatpush2.bf16.msra.mxu0 0
    %5218 = vmatprep.subr.bf16.mxu0 0
    %5219 = vmatpush2.bf16.msra.mxu0 0
    %5220 = vmatprep.mubr.bf16.mxu0 0
    %5221 = vmatmul.mubr.bf16.gmra.mxu0 %v4999
    %v5222 = vpop.f32.mrf.mxu0
    %v5223 = vadd.f32 %v5182, %v5222
    %v5224 = vpop.f32.mrf.mxu0
    %v5225 = vpop.f32.mrf.mxu0
    %v5226 = vadd.f32 %v5185, %v5225
    %v5227 = vpop.f32.mrf.mxu0
    %5228 = vdwg.mxu0
    %s5229 = scalar_lea.vmem %s3, 4
    %v5230 = vld [vmem:[%s5229] sm:$0x1]
    %s5231 = scalar_lea.vmem %s4, 4
    %v5232 = vld [vmem:[%s5231] sm:$0x1]
    %v5233 = vmul.f32 %v5223, %v50
    %v5234 = vmul.f32 %v5226, %v51
    %v5235 = vadd.f32 %v5233, %v5234
    %v5236 = vrot.slane %v5235, 4
    %v5237 = vadd.f32 %v5235, %v5236
    %v5238 = vrot.slane %v5237, 2
    %v5239 = vadd.f32 %v5237, %v5238
    %v5240 = vrot.slane %v5239, 1
    %v5241 = vadd.f32 %v5239, %v5240
    %v5242 = vmul.f32 %v5233, %v5223
    %v5243 = vmul.f32 %v5234, %v5226
    %v5244 = vadd.f32 %v5242, %v5243
    %v5245 = vrot.slane %v5244, 4
    %v5246 = vadd.f32 %v5244, %v5245
    %v5247 = vrot.slane %v5246, 2
    %v5248 = vadd.f32 %v5246, %v5247
    %v5249 = vrot.slane %v5248, 1
    %v5250 = vadd.f32 %v5248, %v5249
    %v5251 = vsel %vm444, %v5241, %v5250
    %v5252 = vld [vmem:[#allocation3] sm:$0xff]
    %v5253 = vld [vmem:[#allocation3 + $0x8] sm:$0xff]
    %v5254 = vld [vmem:[#allocation3 + $0x10] sm:$0xff]
    %v5255 = vld [vmem:[#allocation3 + $0x18] sm:$0xff]
    %v5256 = vld [vmem:[#allocation3 + $0x20] sm:$0xff]
    %v5257 = vld [vmem:[#allocation3 + $0x28] sm:$0xff]
    %v5258 = vld [vmem:[#allocation3 + $0x30] sm:$0xff]
    %v5259 = vld [vmem:[#allocation3 + $0x38] sm:$0xff]
    %v5260 = vld [vmem:[#allocation3 + $0x40] sm:$0xff]
    %v5261 = vld [vmem:[#allocation3 + $0x48] sm:$0xff]
    %v5262 = vld [vmem:[#allocation3 + $0x50] sm:$0xff]
    %v5263 = vld [vmem:[#allocation3 + $0x58] sm:$0xff]
    %v5264 = vld [vmem:[#allocation3 + $0x60] sm:$0xff]
    %v5265 = vld [vmem:[#allocation3 + $0x68] sm:$0xff]
    %v5266 = vld [vmem:[#allocation3 + $0x70] sm:$0xff]
    %v5267 = vld [vmem:[#allocation3 + $0x78] sm:$0xff]
    %5268 = vmatprep.subr.mxu0 0.0
    %5269 = vmatpush1.msra.mxu0 %v5267
    %5270 = vmatprep.subr.mxu0 0.0
    %5271 = vmatpush1.msra.mxu0 %v5266
    %5272 = vmatprep.subr.mxu0 0.0
    %5273 = vmatpush1.msra.mxu0 %v5265
    %5274 = vmatprep.subr.mxu0 0.0
    %5275 = vmatpush1.msra.mxu0 %v5264
    %5276 = vmatprep.subr.mxu0 0.0
    %5277 = vmatpush1.msra.mxu0 %v5263
    %5278 = vmatprep.subr.mxu0 0.0
    %5279 = vmatpush1.msra.mxu0 %v5262
    %5280 = vmatprep.subr.mxu0 0.0
    %5281 = vmatpush1.msra.mxu0 %v5261
    %5282 = vmatprep.subr.mxu0 0.0
    %5283 = vmatpush1.msra.mxu0 %v5260
    %5284 = vmatprep.subr.mxu0 0.0
    %5285 = vmatpush1.msra.mxu0 %v5259
    %5286 = vmatprep.subr.mxu0 0.0
    %5287 = vmatpush1.msra.mxu0 %v5258
    %5288 = vmatprep.subr.mxu0 0.0
    %5289 = vmatpush1.msra.mxu0 %v5257
    %5290 = vmatprep.subr.mxu0 0.0
    %5291 = vmatpush1.msra.mxu0 %v5256
    %5292 = vmatprep.subr.mxu0 0.0
    %5293 = vmatpush1.msra.mxu0 %v5255
    %5294 = vmatprep.subr.mxu0 0.0
    %5295 = vmatpush1.msra.mxu0 %v5254
    %5296 = vmatprep.subr.mxu0 0.0
    %5297 = vmatpush1.msra.mxu0 %v5253
    %5298 = vmatprep.subr.mxu0 0.0
    %5299 = vmatpush1.msra.mxu0 %v5252
    %5300 = vmatprep.subr.mxu0 0.0
    %5301 = vmatpush2.msra.mxu0 0.0
    %5302 = vmatprep.subr.mxu0 0.0
    %5303 = vmatpush2.msra.mxu0 0.0
    %5304 = vmatprep.subr.mxu0 0.0
    %5305 = vmatpush2.msra.mxu0 0.0
    %5306 = vmatprep.subr.mxu0 0.0
    %5307 = vmatpush2.msra.mxu0 0.0
    %5308 = vmatprep.subr.mxu0 0.0
    %5309 = vmatpush2.msra.mxu0 0.0
    %5310 = vmatprep.subr.mxu0 0.0
    %5311 = vmatpush2.msra.mxu0 0.0
    %5312 = vmatprep.subr.mxu0 0.0
    %5313 = vmatpush2.msra.mxu0 0.0
    %5314 = vmatprep.subr.mxu0 0.0
    %5315 = vmatpush2.msra.mxu0 0.0
    %5316 = vmatprep.subr.mxu0 0.0
    %5317 = vmatpush2.msra.mxu0 0.0
    %5318 = vmatprep.subr.mxu0 0.0
    %5319 = vmatpush2.msra.mxu0 0.0
    %5320 = vmatprep.subr.mxu0 0.0
    %5321 = vmatpush2.msra.mxu0 0.0
    %5322 = vmatprep.subr.mxu0 0.0
    %5323 = vmatpush2.msra.mxu0 0.0
    %5324 = vmatprep.subr.mxu0 0.0
    %5325 = vmatpush2.msra.mxu0 0.0
    %5326 = vmatprep.subr.mxu0 0.0
    %5327 = vmatpush2.msra.mxu0 0.0
    %5328 = vmatprep.subr.mxu0 0.0
    %5329 = vmatpush2.msra.mxu0 0.0
    %5330 = vmatprep.subr.mxu0 0.0
    %5331 = vmatpush2.msra.mxu0 0.0
    %5332 = vmatprep.mubr.f32.mxu0 0.0
    %5333 = vmatmul.mubr.f32.gmra.mxu0 %v5251
    %v5334 = vpop.f32.mrf.mxu0
    %v5335 = vadd.f32 0.0, %v5334
    %v5336 = vpop.f32.mrf.mxu0
    %5337 = vdwg.mxu0
    %v5338 = vmul.f32 %v5335, 0.03125
    %v5339 = vmul.f32 %v5338, %v5338
    %v5341 = vrot.slane %v5339, 7
    %v5343 = vsub.f32 %v5338, %v5341
    %v5344 = vmax.f32 %v5343, 0.0
    %v5345 = vadd.f32 %v5344, 1e-05
    %v5346 = vrsqrt.pop %v5345
    %v5349 = vunpack.c.l.s4 1966171168
    %v5350 = vunpack.c.0.s8 %v5349
    %v5351 = vlaneseq
    %v5352 = vshrl.u32 %v5351, 7
    %v5353 = vsub.s32 %v5350, %v5352
    %v5354 = vrot.slane %v5346, %v5353
    %v5355 = vcombine.high %v5354, %v5354
    %v5357 = vunpack.c.l.s4 1966171168
    %v5358 = vunpack.c.0.s8 %v5357
    %v5359 = vlaneseq
    %v5360 = vshrl.u32 %v5359, 7
    %v5361 = vsub.s32 %v5358, %v5360
    %v5362 = vrot.slane %v5355, %v5361
    %v5364 = vmul.f32 %v5230, %v5362
    %v5365 = vmul.f32 %v5338, %v5364
    %v5366 = vsub.f32 %v5232, %v5365
    %v5368 = vlaneseq
    %v5369 = vshrl.u32 %v5368, 7
    %v5370 = vsub.s32 0, %v5369
    %v5371 = vrot.slane %v5366, %v5370
    %v5373 = vsel %vm444, %v5364, %v5371
    %v5374 = vld [vmem:[%s9] sm:$0xff]
    %v5376 = vsel %vm569, %v5373, 0
    %5378 = vmatprep.subr.mxu0 0.0
    %5379 = vmatpush1.msra.mxu0 0.0
    %5380 = vmatprep.subr.mxu0 0.0
    %5381 = vmatpush1.msra.mxu0 0.0
    %5382 = vmatprep.subr.mxu0 0.0
    %5383 = vmatpush1.msra.mxu0 0.0
    %5384 = vmatprep.subr.mxu0 0.0
    %5385 = vmatpush1.msra.mxu0 0.0
    %5386 = vmatprep.subr.mxu0 0.0
    %5387 = vmatpush1.msra.mxu0 0.0
    %5388 = vmatprep.subr.mxu0 0.0
    %5389 = vmatpush1.msra.mxu0 0.0
    %5390 = vmatprep.subr.mxu0 0.0
    %5391 = vmatpush1.msra.mxu0 0.0
    %5392 = vmatprep.subr.mxu0 0.0
    %5393 = vmatpush1.msra.mxu0 0.0
    %5394 = vmatprep.subr.mxu0 0.0
    %5395 = vmatpush1.msra.mxu0 0.0
    %5396 = vmatprep.subr.mxu0 0.0
    %5397 = vmatpush1.msra.mxu0 0.0
    %5398 = vmatprep.subr.mxu0 0.0
    %5399 = vmatpush1.msra.mxu0 0.0
    %5400 = vmatprep.subr.mxu0 0.0
    %5401 = vmatpush1.msra.mxu0 0.0
    %5402 = vmatprep.subr.mxu0 0.0
    %5403 = vmatpush1.msra.mxu0 0.0
    %5404 = vmatprep.subr.mxu0 0.0
    %5405 = vmatpush1.msra.mxu0 0.0
    %5406 = vmatprep.subr.mxu0 0.0
    %5407 = vmatpush1.msra.mxu0 0.0
    %5408 = vmatprep.subr.mxu0 0.0
    %5409 = vmatpush1.msra.mxu0 %v5374
    %5410 = vmatprep.subr.mxu0 0.0
    %5411 = vmatpush2.msra.mxu0 0.0
    %5412 = vmatprep.subr.mxu0 0.0
    %5413 = vmatpush2.msra.mxu0 0.0
    %5414 = vmatprep.subr.mxu0 0.0
    %5415 = vmatpush2.msra.mxu0 0.0
    %5416 = vmatprep.subr.mxu0 0.0
    %5417 = vmatpush2.msra.mxu0 0.0
    %5418 = vmatprep.subr.mxu0 0.0
    %5419 = vmatpush2.msra.mxu0 0.0
    %5420 = vmatprep.subr.mxu0 0.0
    %5421 = vmatpush2.msra.mxu0 0.0
    %5422 = vmatprep.subr.mxu0 0.0
    %5423 = vmatpush2.msra.mxu0 0.0
    %5424 = vmatprep.subr.mxu0 0.0
    %5425 = vmatpush2.msra.mxu0 0.0
    %5426 = vmatprep.subr.mxu0 0.0
    %5427 = vmatpush2.msra.mxu0 0.0
    %5428 = vmatprep.subr.mxu0 0.0
    %5429 = vmatpush2.msra.mxu0 0.0
    %5430 = vmatprep.subr.mxu0 0.0
    %5431 = vmatpush2.msra.mxu0 0.0
    %5432 = vmatprep.subr.mxu0 0.0
    %5433 = vmatpush2.msra.mxu0 0.0
    %5434 = vmatprep.subr.mxu0 0.0
    %5435 = vmatpush2.msra.mxu0 0.0
    %5436 = vmatprep.subr.mxu0 0.0
    %5437 = vmatpush2.msra.mxu0 0.0
    %5438 = vmatprep.subr.mxu0 0.0
    %5439 = vmatpush2.msra.mxu0 0.0
    %5440 = vmatprep.subr.mxu0 0.0
    %5441 = vmatpush2.msra.mxu0 0.0
    %5442 = vmatprep.mubr.f32.mxu0 0.0
    %5443 = vmatmul.mubr.f32.gmra.mxu0 %v5376
    %v5444 = vpop.f32.mrf.mxu0
    %v5445 = vadd.f32 0.0, %v5444
    %v5446 = vpop.f32.mrf.mxu0
    %5447 = vdwg.mxu0
    %v5448 = vlaneseq
    %v5449 = vshrl.u32 %v5448, 7
    %v5450 = vsub.s32 0, %v5449
    %v5451 = vrot.slane %v5445, %v5450
    %v5452 = vmul.f32 %v5223, %v5451
    %v5453 = vmul.f32 %v5226, %v5451
    %v5454 = vlaneseq
    %v5455 = vshrl.u32 %v5454, 7
    %v5456 = vsub.s32 1, %v5455
    %v5457 = vrot.slane %v5445, %v5456
    %v5458 = vadd.f32 %v5452, %v5457
    %v5459 = vadd.f32 %v5453, %v5457
    %v5460 = vmax.f32 %v5458, 0.0
    %v5461 = vmax.f32 %v5459, 0.0
    %v5462 = vmul.f32 %v5460, %v50
    %v5463 = vmul.f32 %v5461, %v51
    %v5464 = vpack.c.bf16 %v5463, %v5462
    %v5466 = vunpack.c.l.b16 %v5464
    %v5467 = vunpack.c.h.b16 %v5464
    %v5468 = vpack.c.b16 %v5466, %v5466
    %v5469 = vpack.c.b16 %v5467, %v5467
    %5472 = vst [vmem:[#allocation2 + $0x4] sm:$0xf] %v5468
    %5473 = vst [vmem:[#allocation2 + $0x8] sm:$0xf] %v5469
    %v5474 = vld [vmem:[#allocation2] sm:$0x8]
    %v5475 = vld [vmem:[#allocation2 + $0x4] sm:$0xf]
    %v5476 = vld [vmem:[#allocation2 + $0x8] sm:$0xf]
    %v5477 = vld [vmem:[#allocation2 + $0x4] sm:$0xf]
    %v5478 = vld [vmem:[#allocation2 + $0x8] sm:$0xf]
    %v5479 = vld [vmem:[#allocation2 + $0xc] sm:$0x1]
    %v5483 = vunpack.c.l.b16 %v5474
    %v5484 = vunpack.c.l.b16 %v5475
    %v5485 = vunpack.c.l.b16 %v5476
    %v5486 = vpack.c.b16 %v5484, %v5483
    %v5487 = vpack.c.b16 %v5485, %v5485
    %v5488 = vpack.c.b16 %v5485, %v5484
    %v5490 = vshrl.u32 %v5488, 16
    %v5492 = vrot.slane %v5490, 4
    %v5493 = vshll.u32 %v5488, 16
    %v5495 = vrot.slane %v5493, 5
    %v5496 = vor.u32 %v5492, %v5495
    %v5500 = vunpack.c.l.b16 %v5477
    %v5501 = vunpack.c.l.b16 %v5478
    %v5502 = vunpack.c.l.b16 %v5479
    %v5503 = vpack.c.b16 %v5501, %v5500
    %v5504 = vpack.c.b16 %v5502, %v5502
    %v5505 = vrot.slane %v5503, 5
    %v5506 = vrot.slane %v5504, 5
    %v5507 = vsel %vm99, %v5505, %v5506
    %s5508 = scalar_lea.vmem %s5, 768
    %v5509 = vld [vmem:[%s5508] sm:$0xf]
    %v5510 = vld [vmem:[%s5508 + $0x4] sm:$0xf]
    %v5511 = vld [vmem:[%s5508 + $0x8] sm:$0xf]
    %v5512 = vld [vmem:[%s5508 + $0xc] sm:$0xf]
    %v5513 = vld [vmem:[%s5508 + $0x10] sm:$0xf]
    %v5514 = vld [vmem:[%s5508 + $0x14] sm:$0xf]
    %v5515 = vld [vmem:[%s5508 + $0x18] sm:$0xf]
    %v5516 = vld [vmem:[%s5508 + $0x1c] sm:$0xf]
    %v5517 = vld [vmem:[%s5508 + $0x20] sm:$0xf]
    %v5518 = vld [vmem:[%s5508 + $0x24] sm:$0xf]
    %v5519 = vld [vmem:[%s5508 + $0x28] sm:$0xf]
    %v5520 = vld [vmem:[%s5508 + $0x2c] sm:$0xf]
    %v5521 = vld [vmem:[%s5508 + $0x30] sm:$0xf]
    %v5522 = vld [vmem:[%s5508 + $0x34] sm:$0xf]
    %v5523 = vld [vmem:[%s5508 + $0x38] sm:$0xf]
    %v5524 = vld [vmem:[%s5508 + $0x3c] sm:$0xf]
    %v5525 = vld [vmem:[%s5508 + $0x40] sm:$0xf]
    %v5526 = vld [vmem:[%s5508 + $0x44] sm:$0xf]
    %v5527 = vld [vmem:[%s5508 + $0x48] sm:$0xf]
    %v5528 = vld [vmem:[%s5508 + $0x4c] sm:$0xf]
    %v5529 = vld [vmem:[%s5508 + $0x50] sm:$0xf]
    %v5530 = vld [vmem:[%s5508 + $0x54] sm:$0xf]
    %v5531 = vld [vmem:[%s5508 + $0x58] sm:$0xf]
    %v5532 = vld [vmem:[%s5508 + $0x5c] sm:$0xf]
    %v5533 = vld [vmem:[%s5508 + $0x60] sm:$0xf]
    %v5534 = vld [vmem:[%s5508 + $0x64] sm:$0xf]
    %v5535 = vld [vmem:[%s5508 + $0x68] sm:$0xf]
    %v5536 = vld [vmem:[%s5508 + $0x6c] sm:$0xf]
    %v5537 = vld [vmem:[%s5508 + $0x70] sm:$0xf]
    %v5538 = vld [vmem:[%s5508 + $0x74] sm:$0xf]
    %v5539 = vld [vmem:[%s5508 + $0x78] sm:$0xf]
    %v5540 = vld [vmem:[%s5508 + $0x7c] sm:$0xf]
    %v5541 = vld [vmem:[%s5508 + $0x80] sm:$0xf]
    %v5542 = vld [vmem:[%s5508 + $0x84] sm:$0xf]
    %v5543 = vld [vmem:[%s5508 + $0x88] sm:$0xf]
    %v5544 = vld [vmem:[%s5508 + $0x8c] sm:$0xf]
    %v5545 = vld [vmem:[%s5508 + $0x90] sm:$0xf]
    %v5546 = vld [vmem:[%s5508 + $0x94] sm:$0xf]
    %v5547 = vld [vmem:[%s5508 + $0x98] sm:$0xf]
    %v5548 = vld [vmem:[%s5508 + $0x9c] sm:$0xf]
    %v5549 = vld [vmem:[%s5508 + $0xa0] sm:$0xf]
    %v5550 = vld [vmem:[%s5508 + $0xa4] sm:$0xf]
    %v5551 = vld [vmem:[%s5508 + $0xa8] sm:$0xf]
    %v5552 = vld [vmem:[%s5508 + $0xac] sm:$0xf]
    %v5553 = vld [vmem:[%s5508 + $0xb0] sm:$0xf]
    %v5554 = vld [vmem:[%s5508 + $0xb4] sm:$0xf]
    %v5555 = vld [vmem:[%s5508 + $0xb8] sm:$0xf]
    %v5556 = vld [vmem:[%s5508 + $0xbc] sm:$0xf]
    %v5558 = vshrl.u32 %v5486, 16
    %v5560 = vrot.slane %v5558, 3
    %v5561 = vshll.u32 %v5486, 16
    %v5563 = vrot.slane %v5561, 4
    %v5564 = vor.u32 %v5560, %v5563
    %v5566 = vshrl.u32 %v5487, 16
    %v5568 = vrot.slane %v5566, 3
    %v5569 = vshll.u32 %v5487, 16
    %v5571 = vrot.slane %v5569, 4
    %v5572 = vor.u32 %v5568, %v5571
    %v5573 = vsel %vm151, %v5564, %v5572
    %v5575 = vshrl.u32 %v5496, 16
    %v5577 = vrot.slane %v5575, 3
    %v5578 = vshll.u32 %v5496, 16
    %v5580 = vrot.slane %v5578, 4
    %v5581 = vor.u32 %v5577, %v5580
    %v5582 = vsel %vm151, %v5581, %v5581
    %v5584 = vshrl.u32 %v5505, 16
    %v5586 = vrot.slane %v5584, 3
    %v5587 = vshll.u32 %v5505, 16
    %v5589 = vrot.slane %v5587, 4
    %v5590 = vor.u32 %v5586, %v5589
    %v5592 = vshrl.u32 %v5507, 16
    %v5594 = vrot.slane %v5592, 3
    %v5595 = vshll.u32 %v5507, 16
    %v5597 = vrot.slane %v5595, 4
    %v5598 = vor.u32 %v5594, %v5597
    %v5599 = vsel %vm151, %v5590, %v5598
    %v5651 = vunpack.c.l.b16 %v5509
    %v5652 = vunpack.c.l.b16 %v5510
    %v5653 = vunpack.c.l.b16 %v5511
    %v5654 = vunpack.c.l.b16 %v5512
    %v5655 = vunpack.c.l.b16 %v5513
    %v5656 = vunpack.c.l.b16 %v5514
    %v5657 = vunpack.c.l.b16 %v5515
    %v5658 = vunpack.c.l.b16 %v5516
    %v5659 = vunpack.c.l.b16 %v5517
    %v5660 = vunpack.c.l.b16 %v5518
    %v5661 = vunpack.c.l.b16 %v5519
    %v5662 = vunpack.c.l.b16 %v5520
    %v5663 = vunpack.c.l.b16 %v5521
    %v5664 = vunpack.c.l.b16 %v5522
    %v5665 = vunpack.c.l.b16 %v5523
    %v5666 = vunpack.c.l.b16 %v5524
    %v5667 = vunpack.c.l.b16 %v5525
    %v5668 = vunpack.c.l.b16 %v5526
    %v5669 = vunpack.c.l.b16 %v5527
    %v5670 = vunpack.c.l.b16 %v5528
    %v5671 = vunpack.c.l.b16 %v5529
    %v5672 = vunpack.c.l.b16 %v5530
    %v5673 = vunpack.c.l.b16 %v5531
    %v5674 = vunpack.c.l.b16 %v5532
    %v5675 = vunpack.c.l.b16 %v5533
    %v5676 = vunpack.c.l.b16 %v5534
    %v5677 = vunpack.c.l.b16 %v5535
    %v5678 = vunpack.c.l.b16 %v5536
    %v5679 = vunpack.c.l.b16 %v5537
    %v5680 = vunpack.c.l.b16 %v5538
    %v5681 = vunpack.c.l.b16 %v5539
    %v5682 = vunpack.c.l.b16 %v5540
    %v5683 = vunpack.c.l.b16 %v5541
    %v5684 = vunpack.c.l.b16 %v5542
    %v5685 = vunpack.c.l.b16 %v5543
    %v5686 = vunpack.c.l.b16 %v5544
    %v5687 = vunpack.c.l.b16 %v5545
    %v5688 = vunpack.c.l.b16 %v5546
    %v5689 = vunpack.c.l.b16 %v5547
    %v5690 = vunpack.c.l.b16 %v5548
    %v5691 = vunpack.c.l.b16 %v5549
    %v5692 = vunpack.c.l.b16 %v5550
    %v5693 = vunpack.c.l.b16 %v5551
    %v5694 = vunpack.c.l.b16 %v5552
    %v5695 = vunpack.c.l.b16 %v5553
    %v5696 = vunpack.c.l.b16 %v5554
    %v5697 = vunpack.c.l.b16 %v5555
    %v5698 = vunpack.c.l.b16 %v5556
    %v5699 = vpack.c.b16 %v5652, %v5651
    %v5700 = vpack.c.b16 %v5654, %v5653
    %v5701 = vpack.c.b16 %v5656, %v5655
    %v5702 = vpack.c.b16 %v5658, %v5657
    %v5703 = vpack.c.b16 %v5660, %v5659
    %v5704 = vpack.c.b16 %v5662, %v5661
    %v5705 = vpack.c.b16 %v5664, %v5663
    %v5706 = vpack.c.b16 %v5666, %v5665
    %v5707 = vpack.c.b16 %v5668, %v5667
    %v5708 = vpack.c.b16 %v5670, %v5669
    %v5709 = vpack.c.b16 %v5672, %v5671
    %v5710 = vpack.c.b16 %v5674, %v5673
    %v5711 = vpack.c.b16 %v5676, %v5675
    %v5712 = vpack.c.b16 %v5678, %v5677
    %v5713 = vpack.c.b16 %v5680, %v5679
    %v5714 = vpack.c.b16 %v5682, %v5681
    %v5715 = vpack.c.b16 %v5684, %v5683
    %v5716 = vpack.c.b16 %v5686, %v5685
    %v5717 = vpack.c.b16 %v5688, %v5687
    %v5718 = vpack.c.b16 %v5690, %v5689
    %v5719 = vpack.c.b16 %v5692, %v5691
    %v5720 = vpack.c.b16 %v5694, %v5693
    %v5721 = vpack.c.b16 %v5696, %v5695
    %v5722 = vpack.c.b16 %v5698, %v5697
    %5747 = vmatprep.subr.bf16.mxu0 0
    %5748 = vmatpush1.bf16.msra.mxu0 %v5706
    %5749 = vmatprep.subr.bf16.mxu0 0
    %5750 = vmatpush1.bf16.msra.mxu0 %v5705
    %5751 = vmatprep.subr.bf16.mxu0 0
    %5752 = vmatpush1.bf16.msra.mxu0 %v5704
    %5753 = vmatprep.subr.bf16.mxu0 0
    %5754 = vmatpush1.bf16.msra.mxu0 %v5703
    %5755 = vmatprep.subr.bf16.mxu0 0
    %5756 = vmatpush1.bf16.msra.mxu0 %v5702
    %5757 = vmatprep.subr.bf16.mxu0 0
    %5758 = vmatpush1.bf16.msra.mxu0 %v5701
    %5759 = vmatprep.subr.bf16.mxu0 0
    %5760 = vmatpush1.bf16.msra.mxu0 %v5700
    %5761 = vmatprep.subr.bf16.mxu0 0
    %5762 = vmatpush1.bf16.msra.mxu0 %v5699
    %5763 = vmatprep.subr.bf16.mxu0 0
    %5764 = vmatpush2.bf16.msra.mxu0 %v5714
    %5765 = vmatprep.subr.bf16.mxu0 0
    %5766 = vmatpush2.bf16.msra.mxu0 %v5713
    %5767 = vmatprep.subr.bf16.mxu0 0
    %5768 = vmatpush2.bf16.msra.mxu0 %v5712
    %5769 = vmatprep.subr.bf16.mxu0 0
    %5770 = vmatpush2.bf16.msra.mxu0 %v5711
    %5771 = vmatprep.subr.bf16.mxu0 0
    %5772 = vmatpush2.bf16.msra.mxu0 %v5710
    %5773 = vmatprep.subr.bf16.mxu0 0
    %5774 = vmatpush2.bf16.msra.mxu0 %v5709
    %5775 = vmatprep.subr.bf16.mxu0 0
    %5776 = vmatpush2.bf16.msra.mxu0 %v5708
    %5777 = vmatprep.subr.bf16.mxu0 0
    %5778 = vmatpush2.bf16.msra.mxu0 %v5707
    %5779 = vmatprep.mubr.bf16.mxu0 %v5582
    %5780 = vmatmul.mubr.bf16.gmra.mxu0 %v5573
    %v5781 = vpop.f32.mrf.mxu0
    %v5782 = vadd.f32 0.0, %v5781
    %v5783 = vpop.f32.mrf.mxu0
    %v5784 = vpop.f32.mrf.mxu0
    %v5785 = vadd.f32 0.0, %v5784
    %v5786 = vpop.f32.mrf.mxu0
    %5787 = vdwg.mxu0
    %5788 = vmatprep.subr.bf16.mxu0 0
    %5789 = vmatpush1.bf16.msra.mxu0 %v5722
    %5790 = vmatprep.subr.bf16.mxu0 0
    %5791 = vmatpush1.bf16.msra.mxu0 %v5721
    %5792 = vmatprep.subr.bf16.mxu0 0
    %5793 = vmatpush1.bf16.msra.mxu0 %v5720
    %5794 = vmatprep.subr.bf16.mxu0 0
    %5795 = vmatpush1.bf16.msra.mxu0 %v5719
    %5796 = vmatprep.subr.bf16.mxu0 0
    %5797 = vmatpush1.bf16.msra.mxu0 %v5718
    %5798 = vmatprep.subr.bf16.mxu0 0
    %5799 = vmatpush1.bf16.msra.mxu0 %v5717
    %5800 = vmatprep.subr.bf16.mxu0 0
    %5801 = vmatpush1.bf16.msra.mxu0 %v5716
    %5802 = vmatprep.subr.bf16.mxu0 0
    %5803 = vmatpush1.bf16.msra.mxu0 %v5715
    %5804 = vmatprep.subr.bf16.mxu0 0
    %5805 = vmatpush2.bf16.msra.mxu0 0
    %5806 = vmatprep.subr.bf16.mxu0 0
    %5807 = vmatpush2.bf16.msra.mxu0 0
    %5808 = vmatprep.subr.bf16.mxu0 0
    %5809 = vmatpush2.bf16.msra.mxu0 0
    %5810 = vmatprep.subr.bf16.mxu0 0
    %5811 = vmatpush2.bf16.msra.mxu0 0
    %5812 = vmatprep.subr.bf16.mxu0 0
    %5813 = vmatpush2.bf16.msra.mxu0 0
    %5814 = vmatprep.subr.bf16.mxu0 0
    %5815 = vmatpush2.bf16.msra.mxu0 0
    %5816 = vmatprep.subr.bf16.mxu0 0
    %5817 = vmatpush2.bf16.msra.mxu0 0
    %5818 = vmatprep.subr.bf16.mxu0 0
    %5819 = vmatpush2.bf16.msra.mxu0 0
    %5820 = vmatprep.mubr.bf16.mxu0 0
    %5821 = vmatmul.mubr.bf16.gmra.mxu0 %v5599
    %v5822 = vpop.f32.mrf.mxu0
    %v5823 = vadd.f32 %v5782, %v5822
    %v5824 = vpop.f32.mrf.mxu0
    %v5825 = vpop.f32.mrf.mxu0
    %v5826 = vadd.f32 %v5785, %v5825
    %v5827 = vpop.f32.mrf.mxu0
    %5828 = vdwg.mxu0
    %s5829 = scalar_lea.vmem %s6, 4
    %v5830 = vld [vmem:[%s5829] sm:$0x1]
    %s5831 = scalar_lea.vmem %s7, 4
    %v5832 = vld [vmem:[%s5831] sm:$0x1]
    %v5833 = vmul.f32 %v5823, %v50
    %v5834 = vmul.f32 %v5826, %v51
    %v5835 = vadd.f32 %v5833, %v5834
    %v5836 = vrot.slane %v5835, 4
    %v5837 = vadd.f32 %v5835, %v5836
    %v5838 = vrot.slane %v5837, 2
    %v5839 = vadd.f32 %v5837, %v5838
    %v5840 = vrot.slane %v5839, 1
    %v5841 = vadd.f32 %v5839, %v5840
    %v5842 = vmul.f32 %v5833, %v5823
    %v5843 = vmul.f32 %v5834, %v5826
    %v5844 = vadd.f32 %v5842, %v5843
    %v5845 = vrot.slane %v5844, 4
    %v5846 = vadd.f32 %v5844, %v5845
    %v5847 = vrot.slane %v5846, 2
    %v5848 = vadd.f32 %v5846, %v5847
    %v5849 = vrot.slane %v5848, 1
    %v5850 = vadd.f32 %v5848, %v5849
    %v5851 = vsel %vm444, %v5841, %v5850
    %v5852 = vld [vmem:[#allocation3] sm:$0xff]
    %v5853 = vld [vmem:[#allocation3 + $0x8] sm:$0xff]
    %v5854 = vld [vmem:[#allocation3 + $0x10] sm:$0xff]
    %v5855 = vld [vmem:[#allocation3 + $0x18] sm:$0xff]
    %v5856 = vld [vmem:[#allocation3 + $0x20] sm:$0xff]
    %v5857 = vld [vmem:[#allocation3 + $0x28] sm:$0xff]
    %v5858 = vld [vmem:[#allocation3 + $0x30] sm:$0xff]
    %v5859 = vld [vmem:[#allocation3 + $0x38] sm:$0xff]
    %v5860 = vld [vmem:[#allocation3 + $0x40] sm:$0xff]
    %v5861 = vld [vmem:[#allocation3 + $0x48] sm:$0xff]
    %v5862 = vld [vmem:[#allocation3 + $0x50] sm:$0xff]
    %v5863 = vld [vmem:[#allocation3 + $0x58] sm:$0xff]
    %v5864 = vld [vmem:[#allocation3 + $0x60] sm:$0xff]
    %v5865 = vld [vmem:[#allocation3 + $0x68] sm:$0xff]
    %v5866 = vld [vmem:[#allocation3 + $0x70] sm:$0xff]
    %v5867 = vld [vmem:[#allocation3 + $0x78] sm:$0xff]
    %5868 = vmatprep.subr.mxu0 0.0
    %5869 = vmatpush1.msra.mxu0 %v5867
    %5870 = vmatprep.subr.mxu0 0.0
    %5871 = vmatpush1.msra.mxu0 %v5866
    %5872 = vmatprep.subr.mxu0 0.0
    %5873 = vmatpush1.msra.mxu0 %v5865
    %5874 = vmatprep.subr.mxu0 0.0
    %5875 = vmatpush1.msra.mxu0 %v5864
    %5876 = vmatprep.subr.mxu0 0.0
    %5877 = vmatpush1.msra.mxu0 %v5863
    %5878 = vmatprep.subr.mxu0 0.0
    %5879 = vmatpush1.msra.mxu0 %v5862
    %5880 = vmatprep.subr.mxu0 0.0
    %5881 = vmatpush1.msra.mxu0 %v5861
    %5882 = vmatprep.subr.mxu0 0.0
    %5883 = vmatpush1.msra.mxu0 %v5860
    %5884 = vmatprep.subr.mxu0 0.0
    %5885 = vmatpush1.msra.mxu0 %v5859
    %5886 = vmatprep.subr.mxu0 0.0
    %5887 = vmatpush1.msra.mxu0 %v5858
    %5888 = vmatprep.subr.mxu0 0.0
    %5889 = vmatpush1.msra.mxu0 %v5857
    %5890 = vmatprep.subr.mxu0 0.0
    %5891 = vmatpush1.msra.mxu0 %v5856
    %5892 = vmatprep.subr.mxu0 0.0
    %5893 = vmatpush1.msra.mxu0 %v5855
    %5894 = vmatprep.subr.mxu0 0.0
    %5895 = vmatpush1.msra.mxu0 %v5854
    %5896 = vmatprep.subr.mxu0 0.0
    %5897 = vmatpush1.msra.mxu0 %v5853
    %5898 = vmatprep.subr.mxu0 0.0
    %5899 = vmatpush1.msra.mxu0 %v5852
    %5900 = vmatprep.subr.mxu0 0.0
    %5901 = vmatpush2.msra.mxu0 0.0
    %5902 = vmatprep.subr.mxu0 0.0
    %5903 = vmatpush2.msra.mxu0 0.0
    %5904 = vmatprep.subr.mxu0 0.0
    %5905 = vmatpush2.msra.mxu0 0.0
    %5906 = vmatprep.subr.mxu0 0.0
    %5907 = vmatpush2.msra.mxu0 0.0
    %5908 = vmatprep.subr.mxu0 0.0
    %5909 = vmatpush2.msra.mxu0 0.0
    %5910 = vmatprep.subr.mxu0 0.0
    %5911 = vmatpush2.msra.mxu0 0.0
    %5912 = vmatprep.subr.mxu0 0.0
    %5913 = vmatpush2.msra.mxu0 0.0
    %5914 = vmatprep.subr.mxu0 0.0
    %5915 = vmatpush2.msra.mxu0 0.0
    %5916 = vmatprep.subr.mxu0 0.0
    %5917 = vmatpush2.msra.mxu0 0.0
    %5918 = vmatprep.subr.mxu0 0.0
    %5919 = vmatpush2.msra.mxu0 0.0
    %5920 = vmatprep.subr.mxu0 0.0
    %5921 = vmatpush2.msra.mxu0 0.0
    %5922 = vmatprep.subr.mxu0 0.0
    %5923 = vmatpush2.msra.mxu0 0.0
    %5924 = vmatprep.subr.mxu0 0.0
    %5925 = vmatpush2.msra.mxu0 0.0
    %5926 = vmatprep.subr.mxu0 0.0
    %5927 = vmatpush2.msra.mxu0 0.0
    %5928 = vmatprep.subr.mxu0 0.0
    %5929 = vmatpush2.msra.mxu0 0.0
    %5930 = vmatprep.subr.mxu0 0.0
    %5931 = vmatpush2.msra.mxu0 0.0
    %5932 = vmatprep.mubr.f32.mxu0 0.0
    %5933 = vmatmul.mubr.f32.gmra.mxu0 %v5851
    %v5934 = vpop.f32.mrf.mxu0
    %v5935 = vadd.f32 0.0, %v5934
    %v5936 = vpop.f32.mrf.mxu0
    %5937 = vdwg.mxu0
    %v5938 = vmul.f32 %v5935, 0.03125
    %v5939 = vmul.f32 %v5938, %v5938
    %v5941 = vrot.slane %v5939, 7
    %v5943 = vsub.f32 %v5938, %v5941
    %v5944 = vmax.f32 %v5943, 0.0
    %v5945 = vadd.f32 %v5944, 1e-05
    %v5946 = vrsqrt.pop %v5945
    %v5949 = vunpack.c.l.s4 1966171168
    %v5950 = vunpack.c.0.s8 %v5949
    %v5951 = vlaneseq
    %v5952 = vshrl.u32 %v5951, 7
    %v5953 = vsub.s32 %v5950, %v5952
    %v5954 = vrot.slane %v5946, %v5953
    %v5955 = vcombine.high %v5954, %v5954
    %v5957 = vunpack.c.l.s4 1966171168
    %v5958 = vunpack.c.0.s8 %v5957
    %v5959 = vlaneseq
    %v5960 = vshrl.u32 %v5959, 7
    %v5961 = vsub.s32 %v5958, %v5960
    %v5962 = vrot.slane %v5955, %v5961
    %v5964 = vmul.f32 %v5830, %v5962
    %v5965 = vmul.f32 %v5938, %v5964
    %v5966 = vsub.f32 %v5832, %v5965
    %v5968 = vlaneseq
    %v5969 = vshrl.u32 %v5968, 7
    %v5970 = vsub.s32 0, %v5969
    %v5971 = vrot.slane %v5966, %v5970
    %v5973 = vsel %vm444, %v5964, %v5971
    %v5974 = vld [vmem:[%s9] sm:$0xff]
    %v5976 = vsel %vm569, %v5973, 0
    %5978 = vmatprep.subr.mxu0 0.0
    %5979 = vmatpush1.msra.mxu0 0.0
    %5980 = vmatprep.subr.mxu0 0.0
    %5981 = vmatpush1.msra.mxu0 0.0
    %5982 = vmatprep.subr.mxu0 0.0
    %5983 = vmatpush1.msra.mxu0 0.0
    %5984 = vmatprep.subr.mxu0 0.0
    %5985 = vmatpush1.msra.mxu0 0.0
    %5986 = vmatprep.subr.mxu0 0.0
    %5987 = vmatpush1.msra.mxu0 0.0
    %5988 = vmatprep.subr.mxu0 0.0
    %5989 = vmatpush1.msra.mxu0 0.0
    %5990 = vmatprep.subr.mxu0 0.0
    %5991 = vmatpush1.msra.mxu0 0.0
    %5992 = vmatprep.subr.mxu0 0.0
    %5993 = vmatpush1.msra.mxu0 0.0
    %5994 = vmatprep.subr.mxu0 0.0
    %5995 = vmatpush1.msra.mxu0 0.0
    %5996 = vmatprep.subr.mxu0 0.0
    %5997 = vmatpush1.msra.mxu0 0.0
    %5998 = vmatprep.subr.mxu0 0.0
    %5999 = vmatpush1.msra.mxu0 0.0
    %6000 = vmatprep.subr.mxu0 0.0
    %6001 = vmatpush1.msra.mxu0 0.0
    %6002 = vmatprep.subr.mxu0 0.0
    %6003 = vmatpush1.msra.mxu0 0.0
    %6004 = vmatprep.subr.mxu0 0.0
    %6005 = vmatpush1.msra.mxu0 0.0
    %6006 = vmatprep.subr.mxu0 0.0
    %6007 = vmatpush1.msra.mxu0 0.0
    %6008 = vmatprep.subr.mxu0 0.0
    %6009 = vmatpush1.msra.mxu0 %v5974
    %6010 = vmatprep.subr.mxu0 0.0
    %6011 = vmatpush2.msra.mxu0 0.0
    %6012 = vmatprep.subr.mxu0 0.0
    %6013 = vmatpush2.msra.mxu0 0.0
    %6014 = vmatprep.subr.mxu0 0.0
    %6015 = vmatpush2.msra.mxu0 0.0
    %6016 = vmatprep.subr.mxu0 0.0
    %6017 = vmatpush2.msra.mxu0 0.0
    %6018 = vmatprep.subr.mxu0 0.0
    %6019 = vmatpush2.msra.mxu0 0.0
    %6020 = vmatprep.subr.mxu0 0.0
    %6021 = vmatpush2.msra.mxu0 0.0
    %6022 = vmatprep.subr.mxu0 0.0
    %6023 = vmatpush2.msra.mxu0 0.0
    %6024 = vmatprep.subr.mxu0 0.0
    %6025 = vmatpush2.msra.mxu0 0.0
    %6026 = vmatprep.subr.mxu0 0.0
    %6027 = vmatpush2.msra.mxu0 0.0
    %6028 = vmatprep.subr.mxu0 0.0
    %6029 = vmatpush2.msra.mxu0 0.0
    %6030 = vmatprep.subr.mxu0 0.0
    %6031 = vmatpush2.msra.mxu0 0.0
    %6032 = vmatprep.subr.mxu0 0.0
    %6033 = vmatpush2.msra.mxu0 0.0
    %6034 = vmatprep.subr.mxu0 0.0
    %6035 = vmatpush2.msra.mxu0 0.0
    %6036 = vmatprep.subr.mxu0 0.0
    %6037 = vmatpush2.msra.mxu0 0.0
    %6038 = vmatprep.subr.mxu0 0.0
    %6039 = vmatpush2.msra.mxu0 0.0
    %6040 = vmatprep.subr.mxu0 0.0
    %6041 = vmatpush2.msra.mxu0 0.0
    %6042 = vmatprep.mubr.f32.mxu0 0.0
    %6043 = vmatmul.mubr.f32.gmra.mxu0 %v5976
    %v6044 = vpop.f32.mrf.mxu0
    %v6045 = vadd.f32 0.0, %v6044
    %v6046 = vpop.f32.mrf.mxu0
    %6047 = vdwg.mxu0
    %v6048 = vlaneseq
    %v6049 = vshrl.u32 %v6048, 7
    %v6050 = vsub.s32 0, %v6049
    %v6051 = vrot.slane %v6045, %v6050
    %v6052 = vmul.f32 %v5823, %v6051
    %v6053 = vmul.f32 %v5826, %v6051
    %v6054 = vlaneseq
    %v6055 = vshrl.u32 %v6054, 7
    %v6056 = vsub.s32 1, %v6055
    %v6057 = vrot.slane %v6045, %v6056
    %v6058 = vadd.f32 %v6052, %v6057
    %v6059 = vadd.f32 %v6053, %v6057
    %v6060 = vadd.f32 %v6058, %v4862
    %v6061 = vadd.f32 %v6059, %v4863
    %v6062 = vmax.f32 %v6060, 0.0
    %v6063 = vmax.f32 %v6061, 0.0
    %v6064 = vmul.f32 %v6062, %v50
    %v6065 = vmul.f32 %v6063, %v51
    %v6066 = vpack.c.bf16 %v6065, %v6064
    %v6068 = vunpack.c.l.b16 %v6066
    %v6069 = vunpack.c.h.b16 %v6066
    %v6070 = vpack.c.b16 %v6068, %v6068
    %v6071 = vpack.c.b16 %v6069, %v6069
    %6074 = vst [vmem:[#allocation2 + $0x4] sm:$0xf] %v6070
    %6075 = vst [vmem:[#allocation2 + $0x8] sm:$0xf] %v6071
    %v6076 = vld [vmem:[#allocation2] sm:$0x8]
    %v6077 = vld [vmem:[#allocation2 + $0x4] sm:$0xf]
    %v6078 = vld [vmem:[#allocation2 + $0x8] sm:$0xf]
    %v6079 = vld [vmem:[#allocation2 + $0x4] sm:$0xf]
    %v6080 = vld [vmem:[#allocation2 + $0x8] sm:$0xf]
    %v6081 = vld [vmem:[#allocation2 + $0xc] sm:$0x1]
    %v6085 = vunpack.c.l.b16 %v6076
    %v6086 = vunpack.c.l.b16 %v6077
    %v6087 = vunpack.c.l.b16 %v6078
    %v6088 = vpack.c.b16 %v6086, %v6085
    %v6089 = vpack.c.b16 %v6087, %v6087
    %v6090 = vpack.c.b16 %v6087, %v6086
    %v6092 = vshrl.u32 %v6090, 16
    %v6094 = vrot.slane %v6092, 4
    %v6095 = vshll.u32 %v6090, 16
    %v6097 = vrot.slane %v6095, 5
    %v6098 = vor.u32 %v6094, %v6097
    %v6102 = vunpack.c.l.b16 %v6079
    %v6103 = vunpack.c.l.b16 %v6080
    %v6104 = vunpack.c.l.b16 %v6081
    %v6105 = vpack.c.b16 %v6103, %v6102
    %v6106 = vpack.c.b16 %v6104, %v6104
    %v6107 = vrot.slane %v6105, 5
    %v6108 = vrot.slane %v6106, 5
    %v6109 = vsel %vm99, %v6107, %v6108
    %s6110 = scalar_lea.vmem %s2, 960
    %v6111 = vld [vmem:[%s6110] sm:$0xf]
    %v6112 = vld [vmem:[%s6110 + $0x4] sm:$0xf]
    %v6113 = vld [vmem:[%s6110 + $0x8] sm:$0xf]
    %v6114 = vld [vmem:[%s6110 + $0xc] sm:$0xf]
    %v6115 = vld [vmem:[%s6110 + $0x10] sm:$0xf]
    %v6116 = vld [vmem:[%s6110 + $0x14] sm:$0xf]
    %v6117 = vld [vmem:[%s6110 + $0x18] sm:$0xf]
    %v6118 = vld [vmem:[%s6110 + $0x1c] sm:$0xf]
    %v6119 = vld [vmem:[%s6110 + $0x20] sm:$0xf]
    %v6120 = vld [vmem:[%s6110 + $0x24] sm:$0xf]
    %v6121 = vld [vmem:[%s6110 + $0x28] sm:$0xf]
    %v6122 = vld [vmem:[%s6110 + $0x2c] sm:$0xf]
    %v6123 = vld [vmem:[%s6110 + $0x30] sm:$0xf]
    %v6124 = vld [vmem:[%s6110 + $0x34] sm:$0xf]
    %v6125 = vld [vmem:[%s6110 + $0x38] sm:$0xf]
    %v6126 = vld [vmem:[%s6110 + $0x3c] sm:$0xf]
    %v6127 = vld [vmem:[%s6110 + $0x40] sm:$0xf]
    %v6128 = vld [vmem:[%s6110 + $0x44] sm:$0xf]
    %v6129 = vld [vmem:[%s6110 + $0x48] sm:$0xf]
    %v6130 = vld [vmem:[%s6110 + $0x4c] sm:$0xf]
    %v6131 = vld [vmem:[%s6110 + $0x50] sm:$0xf]
    %v6132 = vld [vmem:[%s6110 + $0x54] sm:$0xf]
    %v6133 = vld [vmem:[%s6110 + $0x58] sm:$0xf]
    %v6134 = vld [vmem:[%s6110 + $0x5c] sm:$0xf]
    %v6135 = vld [vmem:[%s6110 + $0x60] sm:$0xf]
    %v6136 = vld [vmem:[%s6110 + $0x64] sm:$0xf]
    %v6137 = vld [vmem:[%s6110 + $0x68] sm:$0xf]
    %v6138 = vld [vmem:[%s6110 + $0x6c] sm:$0xf]
    %v6139 = vld [vmem:[%s6110 + $0x70] sm:$0xf]
    %v6140 = vld [vmem:[%s6110 + $0x74] sm:$0xf]
    %v6141 = vld [vmem:[%s6110 + $0x78] sm:$0xf]
    %v6142 = vld [vmem:[%s6110 + $0x7c] sm:$0xf]
    %v6143 = vld [vmem:[%s6110 + $0x80] sm:$0xf]
    %v6144 = vld [vmem:[%s6110 + $0x84] sm:$0xf]
    %v6145 = vld [vmem:[%s6110 + $0x88] sm:$0xf]
    %v6146 = vld [vmem:[%s6110 + $0x8c] sm:$0xf]
    %v6147 = vld [vmem:[%s6110 + $0x90] sm:$0xf]
    %v6148 = vld [vmem:[%s6110 + $0x94] sm:$0xf]
    %v6149 = vld [vmem:[%s6110 + $0x98] sm:$0xf]
    %v6150 = vld [vmem:[%s6110 + $0x9c] sm:$0xf]
    %v6151 = vld [vmem:[%s6110 + $0xa0] sm:$0xf]
    %v6152 = vld [vmem:[%s6110 + $0xa4] sm:$0xf]
    %v6153 = vld [vmem:[%s6110 + $0xa8] sm:$0xf]
    %v6154 = vld [vmem:[%s6110 + $0xac] sm:$0xf]
    %v6155 = vld [vmem:[%s6110 + $0xb0] sm:$0xf]
    %v6156 = vld [vmem:[%s6110 + $0xb4] sm:$0xf]
    %v6157 = vld [vmem:[%s6110 + $0xb8] sm:$0xf]
    %v6158 = vld [vmem:[%s6110 + $0xbc] sm:$0xf]
    %v6160 = vshrl.u32 %v6088, 16
    %v6162 = vrot.slane %v6160, 3
    %v6163 = vshll.u32 %v6088, 16
    %v6165 = vrot.slane %v6163, 4
    %v6166 = vor.u32 %v6162, %v6165
    %v6168 = vshrl.u32 %v6089, 16
    %v6170 = vrot.slane %v6168, 3
    %v6171 = vshll.u32 %v6089, 16
    %v6173 = vrot.slane %v6171, 4
    %v6174 = vor.u32 %v6170, %v6173
    %v6175 = vsel %vm151, %v6166, %v6174
    %v6177 = vshrl.u32 %v6098, 16
    %v6179 = vrot.slane %v6177, 3
    %v6180 = vshll.u32 %v6098, 16
    %v6182 = vrot.slane %v6180, 4
    %v6183 = vor.u32 %v6179, %v6182
    %v6184 = vsel %vm151, %v6183, %v6183
    %v6186 = vshrl.u32 %v6107, 16
    %v6188 = vrot.slane %v6186, 3
    %v6189 = vshll.u32 %v6107, 16
    %v6191 = vrot.slane %v6189, 4
    %v6192 = vor.u32 %v6188, %v6191
    %v6194 = vshrl.u32 %v6109, 16
    %v6196 = vrot.slane %v6194, 3
    %v6197 = vshll.u32 %v6109, 16
    %v6199 = vrot.slane %v6197, 4
    %v6200 = vor.u32 %v6196, %v6199
    %v6201 = vsel %vm151, %v6192, %v6200
    %v6253 = vunpack.c.l.b16 %v6111
    %v6254 = vunpack.c.l.b16 %v6112
    %v6255 = vunpack.c.l.b16 %v6113
    %v6256 = vunpack.c.l.b16 %v6114
    %v6257 = vunpack.c.l.b16 %v6115
    %v6258 = vunpack.c.l.b16 %v6116
    %v6259 = vunpack.c.l.b16 %v6117
    %v6260 = vunpack.c.l.b16 %v6118
    %v6261 = vunpack.c.l.b16 %v6119
    %v6262 = vunpack.c.l.b16 %v6120
    %v6263 = vunpack.c.l.b16 %v6121
    %v6264 = vunpack.c.l.b16 %v6122
    %v6265 = vunpack.c.l.b16 %v6123
    %v6266 = vunpack.c.l.b16 %v6124
    %v6267 = vunpack.c.l.b16 %v6125
    %v6268 = vunpack.c.l.b16 %v6126
    %v6269 = vunpack.c.l.b16 %v6127
    %v6270 = vunpack.c.l.b16 %v6128
    %v6271 = vunpack.c.l.b16 %v6129
    %v6272 = vunpack.c.l.b16 %v6130
    %v6273 = vunpack.c.l.b16 %v6131
    %v6274 = vunpack.c.l.b16 %v6132
    %v6275 = vunpack.c.l.b16 %v6133
    %v6276 = vunpack.c.l.b16 %v6134
    %v6277 = vunpack.c.l.b16 %v6135
    %v6278 = vunpack.c.l.b16 %v6136
    %v6279 = vunpack.c.l.b16 %v6137
    %v6280 = vunpack.c.l.b16 %v6138
    %v6281 = vunpack.c.l.b16 %v6139
    %v6282 = vunpack.c.l.b16 %v6140
    %v6283 = vunpack.c.l.b16 %v6141
    %v6284 = vunpack.c.l.b16 %v6142
    %v6285 = vunpack.c.l.b16 %v6143
    %v6286 = vunpack.c.l.b16 %v6144
    %v6287 = vunpack.c.l.b16 %v6145
    %v6288 = vunpack.c.l.b16 %v6146
    %v6289 = vunpack.c.l.b16 %v6147
    %v6290 = vunpack.c.l.b16 %v6148
    %v6291 = vunpack.c.l.b16 %v6149
    %v6292 = vunpack.c.l.b16 %v6150
    %v6293 = vunpack.c.l.b16 %v6151
    %v6294 = vunpack.c.l.b16 %v6152
    %v6295 = vunpack.c.l.b16 %v6153
    %v6296 = vunpack.c.l.b16 %v6154
    %v6297 = vunpack.c.l.b16 %v6155
    %v6298 = vunpack.c.l.b16 %v6156
    %v6299 = vunpack.c.l.b16 %v6157
    %v6300 = vunpack.c.l.b16 %v6158
    %v6301 = vpack.c.b16 %v6254, %v6253
    %v6302 = vpack.c.b16 %v6256, %v6255
    %v6303 = vpack.c.b16 %v6258, %v6257
    %v6304 = vpack.c.b16 %v6260, %v6259
    %v6305 = vpack.c.b16 %v6262, %v6261
    %v6306 = vpack.c.b16 %v6264, %v6263
    %v6307 = vpack.c.b16 %v6266, %v6265
    %v6308 = vpack.c.b16 %v6268, %v6267
    %v6309 = vpack.c.b16 %v6270, %v6269
    %v6310 = vpack.c.b16 %v6272, %v6271
    %v6311 = vpack.c.b16 %v6274, %v6273
    %v6312 = vpack.c.b16 %v6276, %v6275
    %v6313 = vpack.c.b16 %v6278, %v6277
    %v6314 = vpack.c.b16 %v6280, %v6279
    %v6315 = vpack.c.b16 %v6282, %v6281
    %v6316 = vpack.c.b16 %v6284, %v6283
    %v6317 = vpack.c.b16 %v6286, %v6285
    %v6318 = vpack.c.b16 %v6288, %v6287
    %v6319 = vpack.c.b16 %v6290, %v6289
    %v6320 = vpack.c.b16 %v6292, %v6291
    %v6321 = vpack.c.b16 %v6294, %v6293
    %v6322 = vpack.c.b16 %v6296, %v6295
    %v6323 = vpack.c.b16 %v6298, %v6297
    %v6324 = vpack.c.b16 %v6300, %v6299
    %6349 = vmatprep.subr.bf16.mxu0 0
    %6350 = vmatpush1.bf16.msra.mxu0 %v6308
    %6351 = vmatprep.subr.bf16.mxu0 0
    %6352 = vmatpush1.bf16.msra.mxu0 %v6307
    %6353 = vmatprep.subr.bf16.mxu0 0
    %6354 = vmatpush1.bf16.msra.mxu0 %v6306
    %6355 = vmatprep.subr.bf16.mxu0 0
    %6356 = vmatpush1.bf16.msra.mxu0 %v6305
    %6357 = vmatprep.subr.bf16.mxu0 0
    %6358 = vmatpush1.bf16.msra.mxu0 %v6304
    %6359 = vmatprep.subr.bf16.mxu0 0
    %6360 = vmatpush1.bf16.msra.mxu0 %v6303
    %6361 = vmatprep.subr.bf16.mxu0 0
    %6362 = vmatpush1.bf16.msra.mxu0 %v6302
    %6363 = vmatprep.subr.bf16.mxu0 0
    %6364 = vmatpush1.bf16.msra.mxu0 %v6301
    %6365 = vmatprep.subr.bf16.mxu0 0
    %6366 = vmatpush2.bf16.msra.mxu0 %v6316
    %6367 = vmatprep.subr.bf16.mxu0 0
    %6368 = vmatpush2.bf16.msra.mxu0 %v6315
    %6369 = vmatprep.subr.bf16.mxu0 0
    %6370 = vmatpush2.bf16.msra.mxu0 %v6314
    %6371 = vmatprep.subr.bf16.mxu0 0
    %6372 = vmatpush2.bf16.msra.mxu0 %v6313
    %6373 = vmatprep.subr.bf16.mxu0 0
    %6374 = vmatpush2.bf16.msra.mxu0 %v6312
    %6375 = vmatprep.subr.bf16.mxu0 0
    %6376 = vmatpush2.bf16.msra.mxu0 %v6311
    %6377 = vmatprep.subr.bf16.mxu0 0
    %6378 = vmatpush2.bf16.msra.mxu0 %v6310
    %6379 = vmatprep.subr.bf16.mxu0 0
    %6380 = vmatpush2.bf16.msra.mxu0 %v6309
    %6381 = vmatprep.mubr.bf16.mxu0 %v6184
    %6382 = vmatmul.mubr.bf16.gmra.mxu0 %v6175
    %v6383 = vpop.f32.mrf.mxu0
    %v6384 = vadd.f32 0.0, %v6383
    %v6385 = vpop.f32.mrf.mxu0
    %v6386 = vpop.f32.mrf.mxu0
    %v6387 = vadd.f32 0.0, %v6386
    %v6388 = vpop.f32.mrf.mxu0
    %6389 = vdwg.mxu0
    %6390 = vmatprep.subr.bf16.mxu0 0
    %6391 = vmatpush1.bf16.msra.mxu0 %v6324
    %6392 = vmatprep.subr.bf16.mxu0 0
    %6393 = vmatpush1.bf16.msra.mxu0 %v6323
    %6394 = vmatprep.subr.bf16.mxu0 0
    %6395 = vmatpush1.bf16.msra.mxu0 %v6322
    %6396 = vmatprep.subr.bf16.mxu0 0
    %6397 = vmatpush1.bf16.msra.mxu0 %v6321
    %6398 = vmatprep.subr.bf16.mxu0 0
    %6399 = vmatpush1.bf16.msra.mxu0 %v6320
    %6400 = vmatprep.subr.bf16.mxu0 0
    %6401 = vmatpush1.bf16.msra.mxu0 %v6319
    %6402 = vmatprep.subr.bf16.mxu0 0
    %6403 = vmatpush1.bf16.msra.mxu0 %v6318
    %6404 = vmatprep.subr.bf16.mxu0 0
    %6405 = vmatpush1.bf16.msra.mxu0 %v6317
    %6406 = vmatprep.subr.bf16.mxu0 0
    %6407 = vmatpush2.bf16.msra.mxu0 0
    %6408 = vmatprep.subr.bf16.mxu0 0
    %6409 = vmatpush2.bf16.msra.mxu0 0
    %6410 = vmatprep.subr.bf16.mxu0 0
    %6411 = vmatpush2.bf16.msra.mxu0 0
    %6412 = vmatprep.subr.bf16.mxu0 0
    %6413 = vmatpush2.bf16.msra.mxu0 0
    %6414 = vmatprep.subr.bf16.mxu0 0
    %6415 = vmatpush2.bf16.msra.mxu0 0
    %6416 = vmatprep.subr.bf16.mxu0 0
    %6417 = vmatpush2.bf16.msra.mxu0 0
    %6418 = vmatprep.subr.bf16.mxu0 0
    %6419 = vmatpush2.bf16.msra.mxu0 0
    %6420 = vmatprep.subr.bf16.mxu0 0
    %6421 = vmatpush2.bf16.msra.mxu0 0
    %6422 = vmatprep.mubr.bf16.mxu0 0
    %6423 = vmatmul.mubr.bf16.gmra.mxu0 %v6201
    %v6424 = vpop.f32.mrf.mxu0
    %v6425 = vadd.f32 %v6384, %v6424
    %v6426 = vpop.f32.mrf.mxu0
    %v6427 = vpop.f32.mrf.mxu0
    %v6428 = vadd.f32 %v6387, %v6427
    %v6429 = vpop.f32.mrf.mxu0
    %6430 = vdwg.mxu0
    %s6431 = scalar_lea.vmem %s3, 5
    %v6432 = vld [vmem:[%s6431] sm:$0x1]
    %s6433 = scalar_lea.vmem %s4, 5
    %v6434 = vld [vmem:[%s6433] sm:$0x1]
    %v6435 = vmul.f32 %v6425, %v50
    %v6436 = vmul.f32 %v6428, %v51
    %v6437 = vadd.f32 %v6435, %v6436
    %v6438 = vrot.slane %v6437, 4
    %v6439 = vadd.f32 %v6437, %v6438
    %v6440 = vrot.slane %v6439, 2
    %v6441 = vadd.f32 %v6439, %v6440
    %v6442 = vrot.slane %v6441, 1
    %v6443 = vadd.f32 %v6441, %v6442
    %v6444 = vmul.f32 %v6435, %v6425
    %v6445 = vmul.f32 %v6436, %v6428
    %v6446 = vadd.f32 %v6444, %v6445
    %v6447 = vrot.slane %v6446, 4
    %v6448 = vadd.f32 %v6446, %v6447
    %v6449 = vrot.slane %v6448, 2
    %v6450 = vadd.f32 %v6448, %v6449
    %v6451 = vrot.slane %v6450, 1
    %v6452 = vadd.f32 %v6450, %v6451
    %v6453 = vsel %vm444, %v6443, %v6452
    %v6454 = vld [vmem:[#allocation3] sm:$0xff]
    %v6455 = vld [vmem:[#allocation3 + $0x8] sm:$0xff]
    %v6456 = vld [vmem:[#allocation3 + $0x10] sm:$0xff]
    %v6457 = vld [vmem:[#allocation3 + $0x18] sm:$0xff]
    %v6458 = vld [vmem:[#allocation3 + $0x20] sm:$0xff]
    %v6459 = vld [vmem:[#allocation3 + $0x28] sm:$0xff]
    %v6460 = vld [vmem:[#allocation3 + $0x30] sm:$0xff]
    %v6461 = vld [vmem:[#allocation3 + $0x38] sm:$0xff]
    %v6462 = vld [vmem:[#allocation3 + $0x40] sm:$0xff]
    %v6463 = vld [vmem:[#allocation3 + $0x48] sm:$0xff]
    %v6464 = vld [vmem:[#allocation3 + $0x50] sm:$0xff]
    %v6465 = vld [vmem:[#allocation3 + $0x58] sm:$0xff]
    %v6466 = vld [vmem:[#allocation3 + $0x60] sm:$0xff]
    %v6467 = vld [vmem:[#allocation3 + $0x68] sm:$0xff]
    %v6468 = vld [vmem:[#allocation3 + $0x70] sm:$0xff]
    %v6469 = vld [vmem:[#allocation3 + $0x78] sm:$0xff]
    %6470 = vmatprep.subr.mxu0 0.0
    %6471 = vmatpush1.msra.mxu0 %v6469
    %6472 = vmatprep.subr.mxu0 0.0
    %6473 = vmatpush1.msra.mxu0 %v6468
    %6474 = vmatprep.subr.mxu0 0.0
    %6475 = vmatpush1.msra.mxu0 %v6467
    %6476 = vmatprep.subr.mxu0 0.0
    %6477 = vmatpush1.msra.mxu0 %v6466
    %6478 = vmatprep.subr.mxu0 0.0
    %6479 = vmatpush1.msra.mxu0 %v6465
    %6480 = vmatprep.subr.mxu0 0.0
    %6481 = vmatpush1.msra.mxu0 %v6464
    %6482 = vmatprep.subr.mxu0 0.0
    %6483 = vmatpush1.msra.mxu0 %v6463
    %6484 = vmatprep.subr.mxu0 0.0
    %6485 = vmatpush1.msra.mxu0 %v6462
    %6486 = vmatprep.subr.mxu0 0.0
    %6487 = vmatpush1.msra.mxu0 %v6461
    %6488 = vmatprep.subr.mxu0 0.0
    %6489 = vmatpush1.msra.mxu0 %v6460
    %6490 = vmatprep.subr.mxu0 0.0
    %6491 = vmatpush1.msra.mxu0 %v6459
    %6492 = vmatprep.subr.mxu0 0.0
    %6493 = vmatpush1.msra.mxu0 %v6458
    %6494 = vmatprep.subr.mxu0 0.0
    %6495 = vmatpush1.msra.mxu0 %v6457
    %6496 = vmatprep.subr.mxu0 0.0
    %6497 = vmatpush1.msra.mxu0 %v6456
    %6498 = vmatprep.subr.mxu0 0.0
    %6499 = vmatpush1.msra.mxu0 %v6455
    %6500 = vmatprep.subr.mxu0 0.0
    %6501 = vmatpush1.msra.mxu0 %v6454
    %6502 = vmatprep.subr.mxu0 0.0
    %6503 = vmatpush2.msra.mxu0 0.0
    %6504 = vmatprep.subr.mxu0 0.0
    %6505 = vmatpush2.msra.mxu0 0.0
    %6506 = vmatprep.subr.mxu0 0.0
    %6507 = vmatpush2.msra.mxu0 0.0
    %6508 = vmatprep.subr.mxu0 0.0
    %6509 = vmatpush2.msra.mxu0 0.0
    %6510 = vmatprep.subr.mxu0 0.0
    %6511 = vmatpush2.msra.mxu0 0.0
    %6512 = vmatprep.subr.mxu0 0.0
    %6513 = vmatpush2.msra.mxu0 0.0
    %6514 = vmatprep.subr.mxu0 0.0
    %6515 = vmatpush2.msra.mxu0 0.0
    %6516 = vmatprep.subr.mxu0 0.0
    %6517 = vmatpush2.msra.mxu0 0.0
    %6518 = vmatprep.subr.mxu0 0.0
    %6519 = vmatpush2.msra.mxu0 0.0
    %6520 = vmatprep.subr.mxu0 0.0
    %6521 = vmatpush2.msra.mxu0 0.0
    %6522 = vmatprep.subr.mxu0 0.0
    %6523 = vmatpush2.msra.mxu0 0.0
    %6524 = vmatprep.subr.mxu0 0.0
    %6525 = vmatpush2.msra.mxu0 0.0
    %6526 = vmatprep.subr.mxu0 0.0
    %6527 = vmatpush2.msra.mxu0 0.0
    %6528 = vmatprep.subr.mxu0 0.0
    %6529 = vmatpush2.msra.mxu0 0.0
    %6530 = vmatprep.subr.mxu0 0.0
    %6531 = vmatpush2.msra.mxu0 0.0
    %6532 = vmatprep.subr.mxu0 0.0
    %6533 = vmatpush2.msra.mxu0 0.0
    %6534 = vmatprep.mubr.f32.mxu0 0.0
    %6535 = vmatmul.mubr.f32.gmra.mxu0 %v6453
    %v6536 = vpop.f32.mrf.mxu0
    %v6537 = vadd.f32 0.0, %v6536
    %v6538 = vpop.f32.mrf.mxu0
    %6539 = vdwg.mxu0
    %v6540 = vmul.f32 %v6537, 0.03125
    %v6541 = vmul.f32 %v6540, %v6540
    %v6543 = vrot.slane %v6541, 7
    %v6545 = vsub.f32 %v6540, %v6543
    %v6546 = vmax.f32 %v6545, 0.0
    %v6547 = vadd.f32 %v6546, 1e-05
    %v6548 = vrsqrt.pop %v6547
    %v6551 = vunpack.c.l.s4 1966171168
    %v6552 = vunpack.c.0.s8 %v6551
    %v6553 = vlaneseq
    %v6554 = vshrl.u32 %v6553, 7
    %v6555 = vsub.s32 %v6552, %v6554
    %v6556 = vrot.slane %v6548, %v6555
    %v6557 = vcombine.high %v6556, %v6556
    %v6559 = vunpack.c.l.s4 1966171168
    %v6560 = vunpack.c.0.s8 %v6559
    %v6561 = vlaneseq
    %v6562 = vshrl.u32 %v6561, 7
    %v6563 = vsub.s32 %v6560, %v6562
    %v6564 = vrot.slane %v6557, %v6563
    %v6566 = vmul.f32 %v6432, %v6564
    %v6567 = vmul.f32 %v6540, %v6566
    %v6568 = vsub.f32 %v6434, %v6567
    %v6570 = vlaneseq
    %v6571 = vshrl.u32 %v6570, 7
    %v6572 = vsub.s32 0, %v6571
    %v6573 = vrot.slane %v6568, %v6572
    %v6575 = vsel %vm444, %v6566, %v6573
    %v6576 = vld [vmem:[%s9] sm:$0xff]
    %v6578 = vsel %vm569, %v6575, 0
    %6580 = vmatprep.subr.mxu0 0.0
    %6581 = vmatpush1.msra.mxu0 0.0
    %6582 = vmatprep.subr.mxu0 0.0
    %6583 = vmatpush1.msra.mxu0 0.0
    %6584 = vmatprep.subr.mxu0 0.0
    %6585 = vmatpush1.msra.mxu0 0.0
    %6586 = vmatprep.subr.mxu0 0.0
    %6587 = vmatpush1.msra.mxu0 0.0
    %6588 = vmatprep.subr.mxu0 0.0
    %6589 = vmatpush1.msra.mxu0 0.0
    %6590 = vmatprep.subr.mxu0 0.0
    %6591 = vmatpush1.msra.mxu0 0.0
    %6592 = vmatprep.subr.mxu0 0.0
    %6593 = vmatpush1.msra.mxu0 0.0
    %6594 = vmatprep.subr.mxu0 0.0
    %6595 = vmatpush1.msra.mxu0 0.0
    %6596 = vmatprep.subr.mxu0 0.0
    %6597 = vmatpush1.msra.mxu0 0.0
    %6598 = vmatprep.subr.mxu0 0.0
    %6599 = vmatpush1.msra.mxu0 0.0
    %6600 = vmatprep.subr.mxu0 0.0
    %6601 = vmatpush1.msra.mxu0 0.0
    %6602 = vmatprep.subr.mxu0 0.0
    %6603 = vmatpush1.msra.mxu0 0.0
    %6604 = vmatprep.subr.mxu0 0.0
    %6605 = vmatpush1.msra.mxu0 0.0
    %6606 = vmatprep.subr.mxu0 0.0
    %6607 = vmatpush1.msra.mxu0 0.0
    %6608 = vmatprep.subr.mxu0 0.0
    %6609 = vmatpush1.msra.mxu0 0.0
    %6610 = vmatprep.subr.mxu0 0.0
    %6611 = vmatpush1.msra.mxu0 %v6576
    %6612 = vmatprep.subr.mxu0 0.0
    %6613 = vmatpush2.msra.mxu0 0.0
    %6614 = vmatprep.subr.mxu0 0.0
    %6615 = vmatpush2.msra.mxu0 0.0
    %6616 = vmatprep.subr.mxu0 0.0
    %6617 = vmatpush2.msra.mxu0 0.0
    %6618 = vmatprep.subr.mxu0 0.0
    %6619 = vmatpush2.msra.mxu0 0.0
    %6620 = vmatprep.subr.mxu0 0.0
    %6621 = vmatpush2.msra.mxu0 0.0
    %6622 = vmatprep.subr.mxu0 0.0
    %6623 = vmatpush2.msra.mxu0 0.0
    %6624 = vmatprep.subr.mxu0 0.0
    %6625 = vmatpush2.msra.mxu0 0.0
    %6626 = vmatprep.subr.mxu0 0.0
    %6627 = vmatpush2.msra.mxu0 0.0
    %6628 = vmatprep.subr.mxu0 0.0
    %6629 = vmatpush2.msra.mxu0 0.0
    %6630 = vmatprep.subr.mxu0 0.0
    %6631 = vmatpush2.msra.mxu0 0.0
    %6632 = vmatprep.subr.mxu0 0.0
    %6633 = vmatpush2.msra.mxu0 0.0
    %6634 = vmatprep.subr.mxu0 0.0
    %6635 = vmatpush2.msra.mxu0 0.0
    %6636 = vmatprep.subr.mxu0 0.0
    %6637 = vmatpush2.msra.mxu0 0.0
    %6638 = vmatprep.subr.mxu0 0.0
    %6639 = vmatpush2.msra.mxu0 0.0
    %6640 = vmatprep.subr.mxu0 0.0
    %6641 = vmatpush2.msra.mxu0 0.0
    %6642 = vmatprep.subr.mxu0 0.0
    %6643 = vmatpush2.msra.mxu0 0.0
    %6644 = vmatprep.mubr.f32.mxu0 0.0
    %6645 = vmatmul.mubr.f32.gmra.mxu0 %v6578
    %v6646 = vpop.f32.mrf.mxu0
    %v6647 = vadd.f32 0.0, %v6646
    %v6648 = vpop.f32.mrf.mxu0
    %6649 = vdwg.mxu0
    %v6650 = vlaneseq
    %v6651 = vshrl.u32 %v6650, 7
    %v6652 = vsub.s32 0, %v6651
    %v6653 = vrot.slane %v6647, %v6652
    %v6654 = vmul.f32 %v6425, %v6653
    %v6655 = vmul.f32 %v6428, %v6653
    %v6656 = vlaneseq
    %v6657 = vshrl.u32 %v6656, 7
    %v6658 = vsub.s32 1, %v6657
    %v6659 = vrot.slane %v6647, %v6658
    %v6660 = vadd.f32 %v6654, %v6659
    %v6661 = vadd.f32 %v6655, %v6659
    %v6662 = vmax.f32 %v6660, 0.0
    %v6663 = vmax.f32 %v6661, 0.0
    %v6664 = vmul.f32 %v6662, %v50
    %v6665 = vmul.f32 %v6663, %v51
    %v6666 = vpack.c.bf16 %v6665, %v6664
    %v6668 = vunpack.c.l.b16 %v6666
    %v6669 = vunpack.c.h.b16 %v6666
    %v6670 = vpack.c.b16 %v6668, %v6668
    %v6671 = vpack.c.b16 %v6669, %v6669
    %6674 = vst [vmem:[#allocation2 + $0x4] sm:$0xf] %v6670
    %6675 = vst [vmem:[#allocation2 + $0x8] sm:$0xf] %v6671
    %v6676 = vld [vmem:[#allocation2] sm:$0x8]
    %v6677 = vld [vmem:[#allocation2 + $0x4] sm:$0xf]
    %v6678 = vld [vmem:[#allocation2 + $0x8] sm:$0xf]
    %v6679 = vld [vmem:[#allocation2 + $0x4] sm:$0xf]
    %v6680 = vld [vmem:[#allocation2 + $0x8] sm:$0xf]
    %v6681 = vld [vmem:[#allocation2 + $0xc] sm:$0x1]
    %v6685 = vunpack.c.l.b16 %v6676
    %v6686 = vunpack.c.l.b16 %v6677
    %v6687 = vunpack.c.l.b16 %v6678
    %v6688 = vpack.c.b16 %v6686, %v6685
    %v6689 = vpack.c.b16 %v6687, %v6687
    %v6690 = vpack.c.b16 %v6687, %v6686
    %v6692 = vshrl.u32 %v6690, 16
    %v6694 = vrot.slane %v6692, 4
    %v6695 = vshll.u32 %v6690, 16
    %v6697 = vrot.slane %v6695, 5
    %v6698 = vor.u32 %v6694, %v6697
    %v6702 = vunpack.c.l.b16 %v6679
    %v6703 = vunpack.c.l.b16 %v6680
    %v6704 = vunpack.c.l.b16 %v6681
    %v6705 = vpack.c.b16 %v6703, %v6702
    %v6706 = vpack.c.b16 %v6704, %v6704
    %v6707 = vrot.slane %v6705, 5
    %v6708 = vrot.slane %v6706, 5
    %v6709 = vsel %vm99, %v6707, %v6708
    %s6710 = scalar_lea.vmem %s5, 960
    %v6711 = vld [vmem:[%s6710] sm:$0xf]
    %v6712 = vld [vmem:[%s6710 + $0x4] sm:$0xf]
    %v6713 = vld [vmem:[%s6710 + $0x8] sm:$0xf]
    %v6714 = vld [vmem:[%s6710 + $0xc] sm:$0xf]
    %v6715 = vld [vmem:[%s6710 + $0x10] sm:$0xf]
    %v6716 = vld [vmem:[%s6710 + $0x14] sm:$0xf]
    %v6717 = vld [vmem:[%s6710 + $0x18] sm:$0xf]
    %v6718 = vld [vmem:[%s6710 + $0x1c] sm:$0xf]
    %v6719 = vld [vmem:[%s6710 + $0x20] sm:$0xf]
    %v6720 = vld [vmem:[%s6710 + $0x24] sm:$0xf]
    %v6721 = vld [vmem:[%s6710 + $0x28] sm:$0xf]
    %v6722 = vld [vmem:[%s6710 + $0x2c] sm:$0xf]
    %v6723 = vld [vmem:[%s6710 + $0x30] sm:$0xf]
    %v6724 = vld [vmem:[%s6710 + $0x34] sm:$0xf]
    %v6725 = vld [vmem:[%s6710 + $0x38] sm:$0xf]
    %v6726 = vld [vmem:[%s6710 + $0x3c] sm:$0xf]
    %v6727 = vld [vmem:[%s6710 + $0x40] sm:$0xf]
    %v6728 = vld [vmem:[%s6710 + $0x44] sm:$0xf]
    %v6729 = vld [vmem:[%s6710 + $0x48] sm:$0xf]
    %v6730 = vld [vmem:[%s6710 + $0x4c] sm:$0xf]
    %v6731 = vld [vmem:[%s6710 + $0x50] sm:$0xf]
    %v6732 = vld [vmem:[%s6710 + $0x54] sm:$0xf]
    %v6733 = vld [vmem:[%s6710 + $0x58] sm:$0xf]
    %v6734 = vld [vmem:[%s6710 + $0x5c] sm:$0xf]
    %v6735 = vld [vmem:[%s6710 + $0x60] sm:$0xf]
    %v6736 = vld [vmem:[%s6710 + $0x64] sm:$0xf]
    %v6737 = vld [vmem:[%s6710 + $0x68] sm:$0xf]
    %v6738 = vld [vmem:[%s6710 + $0x6c] sm:$0xf]
    %v6739 = vld [vmem:[%s6710 + $0x70] sm:$0xf]
    %v6740 = vld [vmem:[%s6710 + $0x74] sm:$0xf]
    %v6741 = vld [vmem:[%s6710 + $0x78] sm:$0xf]
    %v6742 = vld [vmem:[%s6710 + $0x7c] sm:$0xf]
    %v6743 = vld [vmem:[%s6710 + $0x80] sm:$0xf]
    %v6744 = vld [vmem:[%s6710 + $0x84] sm:$0xf]
    %v6745 = vld [vmem:[%s6710 + $0x88] sm:$0xf]
    %v6746 = vld [vmem:[%s6710 + $0x8c] sm:$0xf]
    %v6747 = vld [vmem:[%s6710 + $0x90] sm:$0xf]
    %v6748 = vld [vmem:[%s6710 + $0x94] sm:$0xf]
    %v6749 = vld [vmem:[%s6710 + $0x98] sm:$0xf]
    %v6750 = vld [vmem:[%s6710 + $0x9c] sm:$0xf]
    %v6751 = vld [vmem:[%s6710 + $0xa0] sm:$0xf]
    %v6752 = vld [vmem:[%s6710 + $0xa4] sm:$0xf]
    %v6753 = vld [vmem:[%s6710 + $0xa8] sm:$0xf]
    %v6754 = vld [vmem:[%s6710 + $0xac] sm:$0xf]
    %v6755 = vld [vmem:[%s6710 + $0xb0] sm:$0xf]
    %v6756 = vld [vmem:[%s6710 + $0xb4] sm:$0xf]
    %v6757 = vld [vmem:[%s6710 + $0xb8] sm:$0xf]
    %v6758 = vld [vmem:[%s6710 + $0xbc] sm:$0xf]
    %v6760 = vshrl.u32 %v6688, 16
    %v6762 = vrot.slane %v6760, 3
    %v6763 = vshll.u32 %v6688, 16
    %v6765 = vrot.slane %v6763, 4
    %v6766 = vor.u32 %v6762, %v6765
    %v6768 = vshrl.u32 %v6689, 16
    %v6770 = vrot.slane %v6768, 3
    %v6771 = vshll.u32 %v6689, 16
    %v6773 = vrot.slane %v6771, 4
    %v6774 = vor.u32 %v6770, %v6773
    %v6775 = vsel %vm151, %v6766, %v6774
    %v6777 = vshrl.u32 %v6698, 16
    %v6779 = vrot.slane %v6777, 3
    %v6780 = vshll.u32 %v6698, 16
    %v6782 = vrot.slane %v6780, 4
    %v6783 = vor.u32 %v6779, %v6782
    %v6784 = vsel %vm151, %v6783, %v6783
    %v6786 = vshrl.u32 %v6707, 16
    %v6788 = vrot.slane %v6786, 3
    %v6789 = vshll.u32 %v6707, 16
    %v6791 = vrot.slane %v6789, 4
    %v6792 = vor.u32 %v6788, %v6791
    %v6794 = vshrl.u32 %v6709, 16
    %v6796 = vrot.slane %v6794, 3
    %v6797 = vshll.u32 %v6709, 16
    %v6799 = vrot.slane %v6797, 4
    %v6800 = vor.u32 %v6796, %v6799
    %v6801 = vsel %vm151, %v6792, %v6800
    %v6853 = vunpack.c.l.b16 %v6711
    %v6854 = vunpack.c.l.b16 %v6712
    %v6855 = vunpack.c.l.b16 %v6713
    %v6856 = vunpack.c.l.b16 %v6714
    %v6857 = vunpack.c.l.b16 %v6715
    %v6858 = vunpack.c.l.b16 %v6716
    %v6859 = vunpack.c.l.b16 %v6717
    %v6860 = vunpack.c.l.b16 %v6718
    %v6861 = vunpack.c.l.b16 %v6719
    %v6862 = vunpack.c.l.b16 %v6720
    %v6863 = vunpack.c.l.b16 %v6721
    %v6864 = vunpack.c.l.b16 %v6722
    %v6865 = vunpack.c.l.b16 %v6723
    %v6866 = vunpack.c.l.b16 %v6724
    %v6867 = vunpack.c.l.b16 %v6725
    %v6868 = vunpack.c.l.b16 %v6726
    %v6869 = vunpack.c.l.b16 %v6727
    %v6870 = vunpack.c.l.b16 %v6728
    %v6871 = vunpack.c.l.b16 %v6729
    %v6872 = vunpack.c.l.b16 %v6730
    %v6873 = vunpack.c.l.b16 %v6731
    %v6874 = vunpack.c.l.b16 %v6732
    %v6875 = vunpack.c.l.b16 %v6733
    %v6876 = vunpack.c.l.b16 %v6734
    %v6877 = vunpack.c.l.b16 %v6735
    %v6878 = vunpack.c.l.b16 %v6736
    %v6879 = vunpack.c.l.b16 %v6737
    %v6880 = vunpack.c.l.b16 %v6738
    %v6881 = vunpack.c.l.b16 %v6739
    %v6882 = vunpack.c.l.b16 %v6740
    %v6883 = vunpack.c.l.b16 %v6741
    %v6884 = vunpack.c.l.b16 %v6742
    %v6885 = vunpack.c.l.b16 %v6743
    %v6886 = vunpack.c.l.b16 %v6744
    %v6887 = vunpack.c.l.b16 %v6745
    %v6888 = vunpack.c.l.b16 %v6746
    %v6889 = vunpack.c.l.b16 %v6747
    %v6890 = vunpack.c.l.b16 %v6748
    %v6891 = vunpack.c.l.b16 %v6749
    %v6892 = vunpack.c.l.b16 %v6750
    %v6893 = vunpack.c.l.b16 %v6751
    %v6894 = vunpack.c.l.b16 %v6752
    %v6895 = vunpack.c.l.b16 %v6753
    %v6896 = vunpack.c.l.b16 %v6754
    %v6897 = vunpack.c.l.b16 %v6755
    %v6898 = vunpack.c.l.b16 %v6756
    %v6899 = vunpack.c.l.b16 %v6757
    %v6900 = vunpack.c.l.b16 %v6758
    %v6901 = vpack.c.b16 %v6854, %v6853
    %v6902 = vpack.c.b16 %v6856, %v6855
    %v6903 = vpack.c.b16 %v6858, %v6857
    %v6904 = vpack.c.b16 %v6860, %v6859
    %v6905 = vpack.c.b16 %v6862, %v6861
    %v6906 = vpack.c.b16 %v6864, %v6863
    %v6907 = vpack.c.b16 %v6866, %v6865
    %v6908 = vpack.c.b16 %v6868, %v6867
    %v6909 = vpack.c.b16 %v6870, %v6869
    %v6910 = vpack.c.b16 %v6872, %v6871
    %v6911 = vpack.c.b16 %v6874, %v6873
    %v6912 = vpack.c.b16 %v6876, %v6875
    %v6913 = vpack.c.b16 %v6878, %v6877
    %v6914 = vpack.c.b16 %v6880, %v6879
    %v6915 = vpack.c.b16 %v6882, %v6881
    %v6916 = vpack.c.b16 %v6884, %v6883
    %v6917 = vpack.c.b16 %v6886, %v6885
    %v6918 = vpack.c.b16 %v6888, %v6887
    %v6919 = vpack.c.b16 %v6890, %v6889
    %v6920 = vpack.c.b16 %v6892, %v6891
    %v6921 = vpack.c.b16 %v6894, %v6893
    %v6922 = vpack.c.b16 %v6896, %v6895
    %v6923 = vpack.c.b16 %v6898, %v6897
    %v6924 = vpack.c.b16 %v6900, %v6899
    %6949 = vmatprep.subr.bf16.mxu0 0
    %6950 = vmatpush1.bf16.msra.mxu0 %v6908
    %6951 = vmatprep.subr.bf16.mxu0 0
    %6952 = vmatpush1.bf16.msra.mxu0 %v6907
    %6953 = vmatprep.subr.bf16.mxu0 0
    %6954 = vmatpush1.bf16.msra.mxu0 %v6906
    %6955 = vmatprep.subr.bf16.mxu0 0
    %6956 = vmatpush1.bf16.msra.mxu0 %v6905
    %6957 = vmatprep.subr.bf16.mxu0 0
    %6958 = vmatpush1.bf16.msra.mxu0 %v6904
    %6959 = vmatprep.subr.bf16.mxu0 0
    %6960 = vmatpush1.bf16.msra.mxu0 %v6903
    %6961 = vmatprep.subr.bf16.mxu0 0
    %6962 = vmatpush1.bf16.msra.mxu0 %v6902
    %6963 = vmatprep.subr.bf16.mxu0 0
    %6964 = vmatpush1.bf16.msra.mxu0 %v6901
    %6965 = vmatprep.subr.bf16.mxu0 0
    %6966 = vmatpush2.bf16.msra.mxu0 %v6916
    %6967 = vmatprep.subr.bf16.mxu0 0
    %6968 = vmatpush2.bf16.msra.mxu0 %v6915
    %6969 = vmatprep.subr.bf16.mxu0 0
    %6970 = vmatpush2.bf16.msra.mxu0 %v6914
    %6971 = vmatprep.subr.bf16.mxu0 0
    %6972 = vmatpush2.bf16.msra.mxu0 %v6913
    %6973 = vmatprep.subr.bf16.mxu0 0
    %6974 = vmatpush2.bf16.msra.mxu0 %v6912
    %6975 = vmatprep.subr.bf16.mxu0 0
    %6976 = vmatpush2.bf16.msra.mxu0 %v6911
    %6977 = vmatprep.subr.bf16.mxu0 0
    %6978 = vmatpush2.bf16.msra.mxu0 %v6910
    %6979 = vmatprep.subr.bf16.mxu0 0
    %6980 = vmatpush2.bf16.msra.mxu0 %v6909
    %6981 = vmatprep.mubr.bf16.mxu0 %v6784
    %6982 = vmatmul.mubr.bf16.gmra.mxu0 %v6775
    %v6983 = vpop.f32.mrf.mxu0
    %v6984 = vadd.f32 0.0, %v6983
    %v6985 = vpop.f32.mrf.mxu0
    %v6986 = vpop.f32.mrf.mxu0
    %v6987 = vadd.f32 0.0, %v6986
    %v6988 = vpop.f32.mrf.mxu0
    %6989 = vdwg.mxu0
    %6990 = vmatprep.subr.bf16.mxu0 0
    %6991 = vmatpush1.bf16.msra.mxu0 %v6924
    %6992 = vmatprep.subr.bf16.mxu0 0
    %6993 = vmatpush1.bf16.msra.mxu0 %v6923
    %6994 = vmatprep.subr.bf16.mxu0 0
    %6995 = vmatpush1.bf16.msra.mxu0 %v6922
    %6996 = vmatprep.subr.bf16.mxu0 0
    %6997 = vmatpush1.bf16.msra.mxu0 %v6921
    %6998 = vmatprep.subr.bf16.mxu0 0
    %6999 = vmatpush1.bf16.msra.mxu0 %v6920
    %7000 = vmatprep.subr.bf16.mxu0 0
    %7001 = vmatpush1.bf16.msra.mxu0 %v6919
    %7002 = vmatprep.subr.bf16.mxu0 0
    %7003 = vmatpush1.bf16.msra.mxu0 %v6918
    %7004 = vmatprep.subr.bf16.mxu0 0
    %7005 = vmatpush1.bf16.msra.mxu0 %v6917
    %7006 = vmatprep.subr.bf16.mxu0 0
    %7007 = vmatpush2.bf16.msra.mxu0 0
    %7008 = vmatprep.subr.bf16.mxu0 0
    %7009 = vmatpush2.bf16.msra.mxu0 0
    %7010 = vmatprep.subr.bf16.mxu0 0
    %7011 = vmatpush2.bf16.msra.mxu0 0
    %7012 = vmatprep.subr.bf16.mxu0 0
    %7013 = vmatpush2.bf16.msra.mxu0 0
    %7014 = vmatprep.subr.bf16.mxu0 0
    %7015 = vmatpush2.bf16.msra.mxu0 0
    %7016 = vmatprep.subr.bf16.mxu0 0
    %7017 = vmatpush2.bf16.msra.mxu0 0
    %7018 = vmatprep.subr.bf16.mxu0 0
    %7019 = vmatpush2.bf16.msra.mxu0 0
    %7020 = vmatprep.subr.bf16.mxu0 0
    %7021 = vmatpush2.bf16.msra.mxu0 0
    %7022 = vmatprep.mubr.bf16.mxu0 0
    %7023 = vmatmul.mubr.bf16.gmra.mxu0 %v6801
    %v7024 = vpop.f32.mrf.mxu0
    %v7025 = vadd.f32 %v6984, %v7024
    %v7026 = vpop.f32.mrf.mxu0
    %v7027 = vpop.f32.mrf.mxu0
    %v7028 = vadd.f32 %v6987, %v7027
    %v7029 = vpop.f32.mrf.mxu0
    %7030 = vdwg.mxu0
    %s7031 = scalar_lea.vmem %s6, 5
    %v7032 = vld [vmem:[%s7031] sm:$0x1]
    %s7033 = scalar_lea.vmem %s7, 5
    %v7034 = vld [vmem:[%s7033] sm:$0x1]
    %v7035 = vmul.f32 %v7025, %v50
    %v7036 = vmul.f32 %v7028, %v51
    %v7037 = vadd.f32 %v7035, %v7036
    %v7038 = vrot.slane %v7037, 4
    %v7039 = vadd.f32 %v7037, %v7038
    %v7040 = vrot.slane %v7039, 2
    %v7041 = vadd.f32 %v7039, %v7040
    %v7042 = vrot.slane %v7041, 1
    %v7043 = vadd.f32 %v7041, %v7042
    %v7044 = vmul.f32 %v7035, %v7025
    %v7045 = vmul.f32 %v7036, %v7028
    %v7046 = vadd.f32 %v7044, %v7045
    %v7047 = vrot.slane %v7046, 4
    %v7048 = vadd.f32 %v7046, %v7047
    %v7049 = vrot.slane %v7048, 2
    %v7050 = vadd.f32 %v7048, %v7049
    %v7051 = vrot.slane %v7050, 1
    %v7052 = vadd.f32 %v7050, %v7051
    %v7053 = vsel %vm444, %v7043, %v7052
    %v7054 = vld [vmem:[#allocation3] sm:$0xff]
    %v7055 = vld [vmem:[#allocation3 + $0x8] sm:$0xff]
    %v7056 = vld [vmem:[#allocation3 + $0x10] sm:$0xff]
    %v7057 = vld [vmem:[#allocation3 + $0x18] sm:$0xff]
    %v7058 = vld [vmem:[#allocation3 + $0x20] sm:$0xff]
    %v7059 = vld [vmem:[#allocation3 + $0x28] sm:$0xff]
    %v7060 = vld [vmem:[#allocation3 + $0x30] sm:$0xff]
    %v7061 = vld [vmem:[#allocation3 + $0x38] sm:$0xff]
    %v7062 = vld [vmem:[#allocation3 + $0x40] sm:$0xff]
    %v7063 = vld [vmem:[#allocation3 + $0x48] sm:$0xff]
    %v7064 = vld [vmem:[#allocation3 + $0x50] sm:$0xff]
    %v7065 = vld [vmem:[#allocation3 + $0x58] sm:$0xff]
    %v7066 = vld [vmem:[#allocation3 + $0x60] sm:$0xff]
    %v7067 = vld [vmem:[#allocation3 + $0x68] sm:$0xff]
    %v7068 = vld [vmem:[#allocation3 + $0x70] sm:$0xff]
    %v7069 = vld [vmem:[#allocation3 + $0x78] sm:$0xff]
    %7070 = vmatprep.subr.mxu0 0.0
    %7071 = vmatpush1.msra.mxu0 %v7069
    %7072 = vmatprep.subr.mxu0 0.0
    %7073 = vmatpush1.msra.mxu0 %v7068
    %7074 = vmatprep.subr.mxu0 0.0
    %7075 = vmatpush1.msra.mxu0 %v7067
    %7076 = vmatprep.subr.mxu0 0.0
    %7077 = vmatpush1.msra.mxu0 %v7066
    %7078 = vmatprep.subr.mxu0 0.0
    %7079 = vmatpush1.msra.mxu0 %v7065
    %7080 = vmatprep.subr.mxu0 0.0
    %7081 = vmatpush1.msra.mxu0 %v7064
    %7082 = vmatprep.subr.mxu0 0.0
    %7083 = vmatpush1.msra.mxu0 %v7063
    %7084 = vmatprep.subr.mxu0 0.0
    %7085 = vmatpush1.msra.mxu0 %v7062
    %7086 = vmatprep.subr.mxu0 0.0
    %7087 = vmatpush1.msra.mxu0 %v7061
    %7088 = vmatprep.subr.mxu0 0.0
    %7089 = vmatpush1.msra.mxu0 %v7060
    %7090 = vmatprep.subr.mxu0 0.0
    %7091 = vmatpush1.msra.mxu0 %v7059
    %7092 = vmatprep.subr.mxu0 0.0
    %7093 = vmatpush1.msra.mxu0 %v7058
    %7094 = vmatprep.subr.mxu0 0.0
    %7095 = vmatpush1.msra.mxu0 %v7057
    %7096 = vmatprep.subr.mxu0 0.0
    %7097 = vmatpush1.msra.mxu0 %v7056
    %7098 = vmatprep.subr.mxu0 0.0
    %7099 = vmatpush1.msra.mxu0 %v7055
    %7100 = vmatprep.subr.mxu0 0.0
    %7101 = vmatpush1.msra.mxu0 %v7054
    %7102 = vmatprep.subr.mxu0 0.0
    %7103 = vmatpush2.msra.mxu0 0.0
    %7104 = vmatprep.subr.mxu0 0.0
    %7105 = vmatpush2.msra.mxu0 0.0
    %7106 = vmatprep.subr.mxu0 0.0
    %7107 = vmatpush2.msra.mxu0 0.0
    %7108 = vmatprep.subr.mxu0 0.0
    %7109 = vmatpush2.msra.mxu0 0.0
    %7110 = vmatprep.subr.mxu0 0.0
    %7111 = vmatpush2.msra.mxu0 0.0
    %7112 = vmatprep.subr.mxu0 0.0
    %7113 = vmatpush2.msra.mxu0 0.0
    %7114 = vmatprep.subr.mxu0 0.0
    %7115 = vmatpush2.msra.mxu0 0.0
    %7116 = vmatprep.subr.mxu0 0.0
    %7117 = vmatpush2.msra.mxu0 0.0
    %7118 = vmatprep.subr.mxu0 0.0
    %7119 = vmatpush2.msra.mxu0 0.0
    %7120 = vmatprep.subr.mxu0 0.0
    %7121 = vmatpush2.msra.mxu0 0.0
    %7122 = vmatprep.subr.mxu0 0.0
    %7123 = vmatpush2.msra.mxu0 0.0
    %7124 = vmatprep.subr.mxu0 0.0
    %7125 = vmatpush2.msra.mxu0 0.0
    %7126 = vmatprep.subr.mxu0 0.0
    %7127 = vmatpush2.msra.mxu0 0.0
    %7128 = vmatprep.subr.mxu0 0.0
    %7129 = vmatpush2.msra.mxu0 0.0
    %7130 = vmatprep.subr.mxu0 0.0
    %7131 = vmatpush2.msra.mxu0 0.0
    %7132 = vmatprep.subr.mxu0 0.0
    %7133 = vmatpush2.msra.mxu0 0.0
    %7134 = vmatprep.mubr.f32.mxu0 0.0
    %7135 = vmatmul.mubr.f32.gmra.mxu0 %v7053
    %v7136 = vpop.f32.mrf.mxu0
    %v7137 = vadd.f32 0.0, %v7136
    %v7138 = vpop.f32.mrf.mxu0
    %7139 = vdwg.mxu0
    %v7140 = vmul.f32 %v7137, 0.03125
    %v7141 = vmul.f32 %v7140, %v7140
    %v7143 = vrot.slane %v7141, 7
    %v7145 = vsub.f32 %v7140, %v7143
    %v7146 = vmax.f32 %v7145, 0.0
    %v7147 = vadd.f32 %v7146, 1e-05
    %v7148 = vrsqrt.pop %v7147
    %v7151 = vunpack.c.l.s4 1966171168
    %v7152 = vunpack.c.0.s8 %v7151
    %v7153 = vlaneseq
    %v7154 = vshrl.u32 %v7153, 7
    %v7155 = vsub.s32 %v7152, %v7154
    %v7156 = vrot.slane %v7148, %v7155
    %v7157 = vcombine.high %v7156, %v7156
    %v7159 = vunpack.c.l.s4 1966171168
    %v7160 = vunpack.c.0.s8 %v7159
    %v7161 = vlaneseq
    %v7162 = vshrl.u32 %v7161, 7
    %v7163 = vsub.s32 %v7160, %v7162
    %v7164 = vrot.slane %v7157, %v7163
    %v7166 = vmul.f32 %v7032, %v7164
    %v7167 = vmul.f32 %v7140, %v7166
    %v7168 = vsub.f32 %v7034, %v7167
    %v7170 = vlaneseq
    %v7171 = vshrl.u32 %v7170, 7
    %v7172 = vsub.s32 0, %v7171
    %v7173 = vrot.slane %v7168, %v7172
    %v7175 = vsel %vm444, %v7166, %v7173
    %v7176 = vld [vmem:[%s9] sm:$0xff]
    %v7178 = vsel %vm569, %v7175, 0
    %7180 = vmatprep.subr.mxu0 0.0
    %7181 = vmatpush1.msra.mxu0 0.0
    %7182 = vmatprep.subr.mxu0 0.0
    %7183 = vmatpush1.msra.mxu0 0.0
    %7184 = vmatprep.subr.mxu0 0.0
    %7185 = vmatpush1.msra.mxu0 0.0
    %7186 = vmatprep.subr.mxu0 0.0
    %7187 = vmatpush1.msra.mxu0 0.0
    %7188 = vmatprep.subr.mxu0 0.0
    %7189 = vmatpush1.msra.mxu0 0.0
    %7190 = vmatprep.subr.mxu0 0.0
    %7191 = vmatpush1.msra.mxu0 0.0
    %7192 = vmatprep.subr.mxu0 0.0
    %7193 = vmatpush1.msra.mxu0 0.0
    %7194 = vmatprep.subr.mxu0 0.0
    %7195 = vmatpush1.msra.mxu0 0.0
    %7196 = vmatprep.subr.mxu0 0.0
    %7197 = vmatpush1.msra.mxu0 0.0
    %7198 = vmatprep.subr.mxu0 0.0
    %7199 = vmatpush1.msra.mxu0 0.0
    %7200 = vmatprep.subr.mxu0 0.0
    %7201 = vmatpush1.msra.mxu0 0.0
    %7202 = vmatprep.subr.mxu0 0.0
    %7203 = vmatpush1.msra.mxu0 0.0
    %7204 = vmatprep.subr.mxu0 0.0
    %7205 = vmatpush1.msra.mxu0 0.0
    %7206 = vmatprep.subr.mxu0 0.0
    %7207 = vmatpush1.msra.mxu0 0.0
    %7208 = vmatprep.subr.mxu0 0.0
    %7209 = vmatpush1.msra.mxu0 0.0
    %7210 = vmatprep.subr.mxu0 0.0
    %7211 = vmatpush1.msra.mxu0 %v7176
    %7212 = vmatprep.subr.mxu0 0.0
    %7213 = vmatpush2.msra.mxu0 0.0
    %7214 = vmatprep.subr.mxu0 0.0
    %7215 = vmatpush2.msra.mxu0 0.0
    %7216 = vmatprep.subr.mxu0 0.0
    %7217 = vmatpush2.msra.mxu0 0.0
    %7218 = vmatprep.subr.mxu0 0.0
    %7219 = vmatpush2.msra.mxu0 0.0
    %7220 = vmatprep.subr.mxu0 0.0
    %7221 = vmatpush2.msra.mxu0 0.0
    %7222 = vmatprep.subr.mxu0 0.0
    %7223 = vmatpush2.msra.mxu0 0.0
    %7224 = vmatprep.subr.mxu0 0.0
    %7225 = vmatpush2.msra.mxu0 0.0
    %7226 = vmatprep.subr.mxu0 0.0
    %7227 = vmatpush2.msra.mxu0 0.0
    %7228 = vmatprep.subr.mxu0 0.0
    %7229 = vmatpush2.msra.mxu0 0.0
    %7230 = vmatprep.subr.mxu0 0.0
    %7231 = vmatpush2.msra.mxu0 0.0
    %7232 = vmatprep.subr.mxu0 0.0
    %7233 = vmatpush2.msra.mxu0 0.0
    %7234 = vmatprep.subr.mxu0 0.0
    %7235 = vmatpush2.msra.mxu0 0.0
    %7236 = vmatprep.subr.mxu0 0.0
    %7237 = vmatpush2.msra.mxu0 0.0
    %7238 = vmatprep.subr.mxu0 0.0
    %7239 = vmatpush2.msra.mxu0 0.0
    %7240 = vmatprep.subr.mxu0 0.0
    %7241 = vmatpush2.msra.mxu0 0.0
    %7242 = vmatprep.subr.mxu0 0.0
    %7243 = vmatpush2.msra.mxu0 0.0
    %7244 = vmatprep.mubr.f32.mxu0 0.0
    %7245 = vmatmul.mubr.f32.gmra.mxu0 %v7178
    %v7246 = vpop.f32.mrf.mxu0
    %v7247 = vadd.f32 0.0, %v7246
    %v7248 = vpop.f32.mrf.mxu0
    %7249 = vdwg.mxu0
    %v7250 = vlaneseq
    %v7251 = vshrl.u32 %v7250, 7
    %v7252 = vsub.s32 0, %v7251
    %v7253 = vrot.slane %v7247, %v7252
    %v7254 = vmul.f32 %v7025, %v7253
    %v7255 = vmul.f32 %v7028, %v7253
    %v7256 = vlaneseq
    %v7257 = vshrl.u32 %v7256, 7
    %v7258 = vsub.s32 1, %v7257
    %v7259 = vrot.slane %v7247, %v7258
    %v7260 = vadd.f32 %v7254, %v7259
    %v7261 = vadd.f32 %v7255, %v7259
    %v7262 = vadd.f32 %v7260, %v6064
    %v7263 = vadd.f32 %v7261, %v6065
    %v7264 = vmax.f32 %v7262, 0.0
    %v7265 = vmax.f32 %v7263, 0.0
    %v7266 = vmul.f32 %v7264, %v50
    %v7267 = vmul.f32 %v7265, %v51
    %v7268 = vpack.c.bf16 %v7267, %v7266
    %v7270 = vunpack.c.l.b16 %v7268
    %v7271 = vunpack.c.h.b16 %v7268
    %v7272 = vpack.c.b16 %v7270, %v7270
    %v7273 = vpack.c.b16 %v7271, %v7271
    %7276 = vst [vmem:[#allocation2 + $0x4] sm:$0xf] %v7272
    %7277 = vst [vmem:[#allocation2 + $0x8] sm:$0xf] %v7273
    %v7278 = vld [vmem:[#allocation2] sm:$0x8]
    %v7279 = vld [vmem:[#allocation2 + $0x4] sm:$0xf]
    %v7280 = vld [vmem:[#allocation2 + $0x8] sm:$0xf]
    %v7281 = vld [vmem:[#allocation2 + $0x4] sm:$0xf]
    %v7282 = vld [vmem:[#allocation2 + $0x8] sm:$0xf]
    %v7283 = vld [vmem:[#allocation2 + $0xc] sm:$0x1]
    %v7287 = vunpack.c.l.b16 %v7278
    %v7288 = vunpack.c.l.b16 %v7279
    %v7289 = vunpack.c.l.b16 %v7280
    %v7290 = vpack.c.b16 %v7288, %v7287
    %v7291 = vpack.c.b16 %v7289, %v7289
    %v7292 = vpack.c.b16 %v7289, %v7288
    %v7294 = vshrl.u32 %v7292, 16
    %v7296 = vrot.slane %v7294, 4
    %v7297 = vshll.u32 %v7292, 16
    %v7299 = vrot.slane %v7297, 5
    %v7300 = vor.u32 %v7296, %v7299
    %v7304 = vunpack.c.l.b16 %v7281
    %v7305 = vunpack.c.l.b16 %v7282
    %v7306 = vunpack.c.l.b16 %v7283
    %v7307 = vpack.c.b16 %v7305, %v7304
    %v7308 = vpack.c.b16 %v7306, %v7306
    %v7309 = vrot.slane %v7307, 5
    %v7310 = vrot.slane %v7308, 5
    %v7311 = vsel %vm99, %v7309, %v7310
    %s7312 = scalar_lea.vmem %s2, 1152
    %v7313 = vld [vmem:[%s7312] sm:$0xf]
    %v7314 = vld [vmem:[%s7312 + $0x4] sm:$0xf]
    %v7315 = vld [vmem:[%s7312 + $0x8] sm:$0xf]
    %v7316 = vld [vmem:[%s7312 + $0xc] sm:$0xf]
    %v7317 = vld [vmem:[%s7312 + $0x10] sm:$0xf]
    %v7318 = vld [vmem:[%s7312 + $0x14] sm:$0xf]
    %v7319 = vld [vmem:[%s7312 + $0x18] sm:$0xf]
    %v7320 = vld [vmem:[%s7312 + $0x1c] sm:$0xf]
    %v7321 = vld [vmem:[%s7312 + $0x20] sm:$0xf]
    %v7322 = vld [vmem:[%s7312 + $0x24] sm:$0xf]
    %v7323 = vld [vmem:[%s7312 + $0x28] sm:$0xf]
    %v7324 = vld [vmem:[%s7312 + $0x2c] sm:$0xf]
    %v7325 = vld [vmem:[%s7312 + $0x30] sm:$0xf]
    %v7326 = vld [vmem:[%s7312 + $0x34] sm:$0xf]
    %v7327 = vld [vmem:[%s7312 + $0x38] sm:$0xf]
    %v7328 = vld [vmem:[%s7312 + $0x3c] sm:$0xf]
    %v7329 = vld [vmem:[%s7312 + $0x40] sm:$0xf]
    %v7330 = vld [vmem:[%s7312 + $0x44] sm:$0xf]
    %v7331 = vld [vmem:[%s7312 + $0x48] sm:$0xf]
    %v7332 = vld [vmem:[%s7312 + $0x4c] sm:$0xf]
    %v7333 = vld [vmem:[%s7312 + $0x50] sm:$0xf]
    %v7334 = vld [vmem:[%s7312 + $0x54] sm:$0xf]
    %v7335 = vld [vmem:[%s7312 + $0x58] sm:$0xf]
    %v7336 = vld [vmem:[%s7312 + $0x5c] sm:$0xf]
    %v7337 = vld [vmem:[%s7312 + $0x60] sm:$0xf]
    %v7338 = vld [vmem:[%s7312 + $0x64] sm:$0xf]
    %v7339 = vld [vmem:[%s7312 + $0x68] sm:$0xf]
    %v7340 = vld [vmem:[%s7312 + $0x6c] sm:$0xf]
    %v7341 = vld [vmem:[%s7312 + $0x70] sm:$0xf]
    %v7342 = vld [vmem:[%s7312 + $0x74] sm:$0xf]
    %v7343 = vld [vmem:[%s7312 + $0x78] sm:$0xf]
    %v7344 = vld [vmem:[%s7312 + $0x7c] sm:$0xf]
    %v7345 = vld [vmem:[%s7312 + $0x80] sm:$0xf]
    %v7346 = vld [vmem:[%s7312 + $0x84] sm:$0xf]
    %v7347 = vld [vmem:[%s7312 + $0x88] sm:$0xf]
    %v7348 = vld [vmem:[%s7312 + $0x8c] sm:$0xf]
    %v7349 = vld [vmem:[%s7312 + $0x90] sm:$0xf]
    %v7350 = vld [vmem:[%s7312 + $0x94] sm:$0xf]
    %v7351 = vld [vmem:[%s7312 + $0x98] sm:$0xf]
    %v7352 = vld [vmem:[%s7312 + $0x9c] sm:$0xf]
    %v7353 = vld [vmem:[%s7312 + $0xa0] sm:$0xf]
    %v7354 = vld [vmem:[%s7312 + $0xa4] sm:$0xf]
    %v7355 = vld [vmem:[%s7312 + $0xa8] sm:$0xf]
    %v7356 = vld [vmem:[%s7312 + $0xac] sm:$0xf]
    %v7357 = vld [vmem:[%s7312 + $0xb0] sm:$0xf]
    %v7358 = vld [vmem:[%s7312 + $0xb4] sm:$0xf]
    %v7359 = vld [vmem:[%s7312 + $0xb8] sm:$0xf]
    %v7360 = vld [vmem:[%s7312 + $0xbc] sm:$0xf]
    %v7362 = vshrl.u32 %v7290, 16
    %v7364 = vrot.slane %v7362, 3
    %v7365 = vshll.u32 %v7290, 16
    %v7367 = vrot.slane %v7365, 4
    %v7368 = vor.u32 %v7364, %v7367
    %v7370 = vshrl.u32 %v7291, 16
    %v7372 = vrot.slane %v7370, 3
    %v7373 = vshll.u32 %v7291, 16
    %v7375 = vrot.slane %v7373, 4
    %v7376 = vor.u32 %v7372, %v7375
    %v7377 = vsel %vm151, %v7368, %v7376
    %v7379 = vshrl.u32 %v7300, 16
    %v7381 = vrot.slane %v7379, 3
    %v7382 = vshll.u32 %v7300, 16
    %v7384 = vrot.slane %v7382, 4
    %v7385 = vor.u32 %v7381, %v7384
    %v7386 = vsel %vm151, %v7385, %v7385
    %v7388 = vshrl.u32 %v7309, 16
    %v7390 = vrot.slane %v7388, 3
    %v7391 = vshll.u32 %v7309, 16
    %v7393 = vrot.slane %v7391, 4
    %v7394 = vor.u32 %v7390, %v7393
    %v7396 = vshrl.u32 %v7311, 16
    %v7398 = vrot.slane %v7396, 3
    %v7399 = vshll.u32 %v7311, 16
    %v7401 = vrot.slane %v7399, 4
    %v7402 = vor.u32 %v7398, %v7401
    %v7403 = vsel %vm151, %v7394, %v7402
    %v7455 = vunpack.c.l.b16 %v7313
    %v7456 = vunpack.c.l.b16 %v7314
    %v7457 = vunpack.c.l.b16 %v7315
    %v7458 = vunpack.c.l.b16 %v7316
    %v7459 = vunpack.c.l.b16 %v7317
    %v7460 = vunpack.c.l.b16 %v7318
    %v7461 = vunpack.c.l.b16 %v7319
    %v7462 = vunpack.c.l.b16 %v7320
    %v7463 = vunpack.c.l.b16 %v7321
    %v7464 = vunpack.c.l.b16 %v7322
    %v7465 = vunpack.c.l.b16 %v7323
    %v7466 = vunpack.c.l.b16 %v7324
    %v7467 = vunpack.c.l.b16 %v7325
    %v7468 = vunpack.c.l.b16 %v7326
    %v7469 = vunpack.c.l.b16 %v7327
    %v7470 = vunpack.c.l.b16 %v7328
    %v7471 = vunpack.c.l.b16 %v7329
    %v7472 = vunpack.c.l.b16 %v7330
    %v7473 = vunpack.c.l.b16 %v7331
    %v7474 = vunpack.c.l.b16 %v7332
    %v7475 = vunpack.c.l.b16 %v7333
    %v7476 = vunpack.c.l.b16 %v7334
    %v7477 = vunpack.c.l.b16 %v7335
    %v7478 = vunpack.c.l.b16 %v7336
    %v7479 = vunpack.c.l.b16 %v7337
    %v7480 = vunpack.c.l.b16 %v7338
    %v7481 = vunpack.c.l.b16 %v7339
    %v7482 = vunpack.c.l.b16 %v7340
    %v7483 = vunpack.c.l.b16 %v7341
    %v7484 = vunpack.c.l.b16 %v7342
    %v7485 = vunpack.c.l.b16 %v7343
    %v7486 = vunpack.c.l.b16 %v7344
    %v7487 = vunpack.c.l.b16 %v7345
    %v7488 = vunpack.c.l.b16 %v7346
    %v7489 = vunpack.c.l.b16 %v7347
    %v7490 = vunpack.c.l.b16 %v7348
    %v7491 = vunpack.c.l.b16 %v7349
    %v7492 = vunpack.c.l.b16 %v7350
    %v7493 = vunpack.c.l.b16 %v7351
    %v7494 = vunpack.c.l.b16 %v7352
    %v7495 = vunpack.c.l.b16 %v7353
    %v7496 = vunpack.c.l.b16 %v7354
    %v7497 = vunpack.c.l.b16 %v7355
    %v7498 = vunpack.c.l.b16 %v7356
    %v7499 = vunpack.c.l.b16 %v7357
    %v7500 = vunpack.c.l.b16 %v7358
    %v7501 = vunpack.c.l.b16 %v7359
    %v7502 = vunpack.c.l.b16 %v7360
    %v7503 = vpack.c.b16 %v7456, %v7455
    %v7504 = vpack.c.b16 %v7458, %v7457
    %v7505 = vpack.c.b16 %v7460, %v7459
    %v7506 = vpack.c.b16 %v7462, %v7461
    %v7507 = vpack.c.b16 %v7464, %v7463
    %v7508 = vpack.c.b16 %v7466, %v7465
    %v7509 = vpack.c.b16 %v7468, %v7467
    %v7510 = vpack.c.b16 %v7470, %v7469
    %v7511 = vpack.c.b16 %v7472, %v7471
    %v7512 = vpack.c.b16 %v7474, %v7473
    %v7513 = vpack.c.b16 %v7476, %v7475
    %v7514 = vpack.c.b16 %v7478, %v7477
    %v7515 = vpack.c.b16 %v7480, %v7479
    %v7516 = vpack.c.b16 %v7482, %v7481
    %v7517 = vpack.c.b16 %v7484, %v7483
    %v7518 = vpack.c.b16 %v7486, %v7485
    %v7519 = vpack.c.b16 %v7488, %v7487
    %v7520 = vpack.c.b16 %v7490, %v7489
    %v7521 = vpack.c.b16 %v7492, %v7491
    %v7522 = vpack.c.b16 %v7494, %v7493
    %v7523 = vpack.c.b16 %v7496, %v7495
    %v7524 = vpack.c.b16 %v7498, %v7497
    %v7525 = vpack.c.b16 %v7500, %v7499
    %v7526 = vpack.c.b16 %v7502, %v7501
    %7551 = vmatprep.subr.bf16.mxu0 0
    %7552 = vmatpush1.bf16.msra.mxu0 %v7510
    %7553 = vmatprep.subr.bf16.mxu0 0
    %7554 = vmatpush1.bf16.msra.mxu0 %v7509
    %7555 = vmatprep.subr.bf16.mxu0 0
    %7556 = vmatpush1.bf16.msra.mxu0 %v7508
    %7557 = vmatprep.subr.bf16.mxu0 0
    %7558 = vmatpush1.bf16.msra.mxu0 %v7507
    %7559 = vmatprep.subr.bf16.mxu0 0
    %7560 = vmatpush1.bf16.msra.mxu0 %v7506
    %7561 = vmatprep.subr.bf16.mxu0 0
    %7562 = vmatpush1.bf16.msra.mxu0 %v7505
    %7563 = vmatprep.subr.bf16.mxu0 0
    %7564 = vmatpush1.bf16.msra.mxu0 %v7504
    %7565 = vmatprep.subr.bf16.mxu0 0
    %7566 = vmatpush1.bf16.msra.mxu0 %v7503
    %7567 = vmatprep.subr.bf16.mxu0 0
    %7568 = vmatpush2.bf16.msra.mxu0 %v7518
    %7569 = vmatprep.subr.bf16.mxu0 0
    %7570 = vmatpush2.bf16.msra.mxu0 %v7517
    %7571 = vmatprep.subr.bf16.mxu0 0
    %7572 = vmatpush2.bf16.msra.mxu0 %v7516
    %7573 = vmatprep.subr.bf16.mxu0 0
    %7574 = vmatpush2.bf16.msra.mxu0 %v7515
    %7575 = vmatprep.subr.bf16.mxu0 0
    %7576 = vmatpush2.bf16.msra.mxu0 %v7514
    %7577 = vmatprep.subr.bf16.mxu0 0
    %7578 = vmatpush2.bf16.msra.mxu0 %v7513
    %7579 = vmatprep.subr.bf16.mxu0 0
    %7580 = vmatpush2.bf16.msra.mxu0 %v7512
    %7581 = vmatprep.subr.bf16.mxu0 0
    %7582 = vmatpush2.bf16.msra.mxu0 %v7511
    %7583 = vmatprep.mubr.bf16.mxu0 %v7386
    %7584 = vmatmul.mubr.bf16.gmra.mxu0 %v7377
    %v7585 = vpop.f32.mrf.mxu0
    %v7586 = vadd.f32 0.0, %v7585
    %v7587 = vpop.f32.mrf.mxu0
    %v7588 = vpop.f32.mrf.mxu0
    %v7589 = vadd.f32 0.0, %v7588
    %v7590 = vpop.f32.mrf.mxu0
    %7591 = vdwg.mxu0
    %7592 = vmatprep.subr.bf16.mxu0 0
    %7593 = vmatpush1.bf16.msra.mxu0 %v7526
    %7594 = vmatprep.subr.bf16.mxu0 0
    %7595 = vmatpush1.bf16.msra.mxu0 %v7525
    %7596 = vmatprep.subr.bf16.mxu0 0
    %7597 = vmatpush1.bf16.msra.mxu0 %v7524
    %7598 = vmatprep.subr.bf16.mxu0 0
    %7599 = vmatpush1.bf16.msra.mxu0 %v7523
    %7600 = vmatprep.subr.bf16.mxu0 0
    %7601 = vmatpush1.bf16.msra.mxu0 %v7522
    %7602 = vmatprep.subr.bf16.mxu0 0
    %7603 = vmatpush1.bf16.msra.mxu0 %v7521
    %7604 = vmatprep.subr.bf16.mxu0 0
    %7605 = vmatpush1.bf16.msra.mxu0 %v7520
    %7606 = vmatprep.subr.bf16.mxu0 0
    %7607 = vmatpush1.bf16.msra.mxu0 %v7519
    %7608 = vmatprep.subr.bf16.mxu0 0
    %7609 = vmatpush2.bf16.msra.mxu0 0
    %7610 = vmatprep.subr.bf16.mxu0 0
    %7611 = vmatpush2.bf16.msra.mxu0 0
    %7612 = vmatprep.subr.bf16.mxu0 0
    %7613 = vmatpush2.bf16.msra.mxu0 0
    %7614 = vmatprep.subr.bf16.mxu0 0
    %7615 = vmatpush2.bf16.msra.mxu0 0
    %7616 = vmatprep.subr.bf16.mxu0 0
    %7617 = vmatpush2.bf16.msra.mxu0 0
    %7618 = vmatprep.subr.bf16.mxu0 0
    %7619 = vmatpush2.bf16.msra.mxu0 0
    %7620 = vmatprep.subr.bf16.mxu0 0
    %7621 = vmatpush2.bf16.msra.mxu0 0
    %7622 = vmatprep.subr.bf16.mxu0 0
    %7623 = vmatpush2.bf16.msra.mxu0 0
    %7624 = vmatprep.mubr.bf16.mxu0 0
    %7625 = vmatmul.mubr.bf16.gmra.mxu0 %v7403
    %v7626 = vpop.f32.mrf.mxu0
    %v7627 = vadd.f32 %v7586, %v7626
    %v7628 = vpop.f32.mrf.mxu0
    %v7629 = vpop.f32.mrf.mxu0
    %v7630 = vadd.f32 %v7589, %v7629
    %v7631 = vpop.f32.mrf.mxu0
    %7632 = vdwg.mxu0
    %s7633 = scalar_lea.vmem %s3, 6
    %v7634 = vld [vmem:[%s7633] sm:$0x1]
    %s7635 = scalar_lea.vmem %s4, 6
    %v7636 = vld [vmem:[%s7635] sm:$0x1]
    %v7637 = vmul.f32 %v7627, %v50
    %v7638 = vmul.f32 %v7630, %v51
    %v7639 = vadd.f32 %v7637, %v7638
    %v7640 = vrot.slane %v7639, 4
    %v7641 = vadd.f32 %v7639, %v7640
    %v7642 = vrot.slane %v7641, 2
    %v7643 = vadd.f32 %v7641, %v7642
    %v7644 = vrot.slane %v7643, 1
    %v7645 = vadd.f32 %v7643, %v7644
    %v7646 = vmul.f32 %v7637, %v7627
    %v7647 = vmul.f32 %v7638, %v7630
    %v7648 = vadd.f32 %v7646, %v7647
    %v7649 = vrot.slane %v7648, 4
    %v7650 = vadd.f32 %v7648, %v7649
    %v7651 = vrot.slane %v7650, 2
    %v7652 = vadd.f32 %v7650, %v7651
    %v7653 = vrot.slane %v7652, 1
    %v7654 = vadd.f32 %v7652, %v7653
    %v7655 = vsel %vm444, %v7645, %v7654
    %v7656 = vld [vmem:[#allocation3] sm:$0xff]
    %v7657 = vld [vmem:[#allocation3 + $0x8] sm:$0xff]
    %v7658 = vld [vmem:[#allocation3 + $0x10] sm:$0xff]
    %v7659 = vld [vmem:[#allocation3 + $0x18] sm:$0xff]
    %v7660 = vld [vmem:[#allocation3 + $0x20] sm:$0xff]
    %v7661 = vld [vmem:[#allocation3 + $0x28] sm:$0xff]
    %v7662 = vld [vmem:[#allocation3 + $0x30] sm:$0xff]
    %v7663 = vld [vmem:[#allocation3 + $0x38] sm:$0xff]
    %v7664 = vld [vmem:[#allocation3 + $0x40] sm:$0xff]
    %v7665 = vld [vmem:[#allocation3 + $0x48] sm:$0xff]
    %v7666 = vld [vmem:[#allocation3 + $0x50] sm:$0xff]
    %v7667 = vld [vmem:[#allocation3 + $0x58] sm:$0xff]
    %v7668 = vld [vmem:[#allocation3 + $0x60] sm:$0xff]
    %v7669 = vld [vmem:[#allocation3 + $0x68] sm:$0xff]
    %v7670 = vld [vmem:[#allocation3 + $0x70] sm:$0xff]
    %v7671 = vld [vmem:[#allocation3 + $0x78] sm:$0xff]
    %7672 = vmatprep.subr.mxu0 0.0
    %7673 = vmatpush1.msra.mxu0 %v7671
    %7674 = vmatprep.subr.mxu0 0.0
    %7675 = vmatpush1.msra.mxu0 %v7670
    %7676 = vmatprep.subr.mxu0 0.0
    %7677 = vmatpush1.msra.mxu0 %v7669
    %7678 = vmatprep.subr.mxu0 0.0
    %7679 = vmatpush1.msra.mxu0 %v7668
    %7680 = vmatprep.subr.mxu0 0.0
    %7681 = vmatpush1.msra.mxu0 %v7667
    %7682 = vmatprep.subr.mxu0 0.0
    %7683 = vmatpush1.msra.mxu0 %v7666
    %7684 = vmatprep.subr.mxu0 0.0
    %7685 = vmatpush1.msra.mxu0 %v7665
    %7686 = vmatprep.subr.mxu0 0.0
    %7687 = vmatpush1.msra.mxu0 %v7664
    %7688 = vmatprep.subr.mxu0 0.0
    %7689 = vmatpush1.msra.mxu0 %v7663
    %7690 = vmatprep.subr.mxu0 0.0
    %7691 = vmatpush1.msra.mxu0 %v7662
    %7692 = vmatprep.subr.mxu0 0.0
    %7693 = vmatpush1.msra.mxu0 %v7661
    %7694 = vmatprep.subr.mxu0 0.0
    %7695 = vmatpush1.msra.mxu0 %v7660
    %7696 = vmatprep.subr.mxu0 0.0
    %7697 = vmatpush1.msra.mxu0 %v7659
    %7698 = vmatprep.subr.mxu0 0.0
    %7699 = vmatpush1.msra.mxu0 %v7658
    %7700 = vmatprep.subr.mxu0 0.0
    %7701 = vmatpush1.msra.mxu0 %v7657
    %7702 = vmatprep.subr.mxu0 0.0
    %7703 = vmatpush1.msra.mxu0 %v7656
    %7704 = vmatprep.subr.mxu0 0.0
    %7705 = vmatpush2.msra.mxu0 0.0
    %7706 = vmatprep.subr.mxu0 0.0
    %7707 = vmatpush2.msra.mxu0 0.0
    %7708 = vmatprep.subr.mxu0 0.0
    %7709 = vmatpush2.msra.mxu0 0.0
    %7710 = vmatprep.subr.mxu0 0.0
    %7711 = vmatpush2.msra.mxu0 0.0
    %7712 = vmatprep.subr.mxu0 0.0
    %7713 = vmatpush2.msra.mxu0 0.0
    %7714 = vmatprep.subr.mxu0 0.0
    %7715 = vmatpush2.msra.mxu0 0.0
    %7716 = vmatprep.subr.mxu0 0.0
    %7717 = vmatpush2.msra.mxu0 0.0
    %7718 = vmatprep.subr.mxu0 0.0
    %7719 = vmatpush2.msra.mxu0 0.0
    %7720 = vmatprep.subr.mxu0 0.0
    %7721 = vmatpush2.msra.mxu0 0.0
    %7722 = vmatprep.subr.mxu0 0.0
    %7723 = vmatpush2.msra.mxu0 0.0
    %7724 = vmatprep.subr.mxu0 0.0
    %7725 = vmatpush2.msra.mxu0 0.0
    %7726 = vmatprep.subr.mxu0 0.0
    %7727 = vmatpush2.msra.mxu0 0.0
    %7728 = vmatprep.subr.mxu0 0.0
    %7729 = vmatpush2.msra.mxu0 0.0
    %7730 = vmatprep.subr.mxu0 0.0
    %7731 = vmatpush2.msra.mxu0 0.0
    %7732 = vmatprep.subr.mxu0 0.0
    %7733 = vmatpush2.msra.mxu0 0.0
    %7734 = vmatprep.subr.mxu0 0.0
    %7735 = vmatpush2.msra.mxu0 0.0
    %7736 = vmatprep.mubr.f32.mxu0 0.0
    %7737 = vmatmul.mubr.f32.gmra.mxu0 %v7655
    %v7738 = vpop.f32.mrf.mxu0
    %v7739 = vadd.f32 0.0, %v7738
    %v7740 = vpop.f32.mrf.mxu0
    %7741 = vdwg.mxu0
    %v7742 = vmul.f32 %v7739, 0.03125
    %v7743 = vmul.f32 %v7742, %v7742
    %v7745 = vrot.slane %v7743, 7
    %v7747 = vsub.f32 %v7742, %v7745
    %v7748 = vmax.f32 %v7747, 0.0
    %v7749 = vadd.f32 %v7748, 1e-05
    %v7750 = vrsqrt.pop %v7749
    %v7753 = vunpack.c.l.s4 1966171168
    %v7754 = vunpack.c.0.s8 %v7753
    %v7755 = vlaneseq
    %v7756 = vshrl.u32 %v7755, 7
    %v7757 = vsub.s32 %v7754, %v7756
    %v7758 = vrot.slane %v7750, %v7757
    %v7759 = vcombine.high %v7758, %v7758
    %v7761 = vunpack.c.l.s4 1966171168
    %v7762 = vunpack.c.0.s8 %v7761
    %v7763 = vlaneseq
    %v7764 = vshrl.u32 %v7763, 7
    %v7765 = vsub.s32 %v7762, %v7764
    %v7766 = vrot.slane %v7759, %v7765
    %v7768 = vmul.f32 %v7634, %v7766
    %v7769 = vmul.f32 %v7742, %v7768
    %v7770 = vsub.f32 %v7636, %v7769
    %v7772 = vlaneseq
    %v7773 = vshrl.u32 %v7772, 7
    %v7774 = vsub.s32 0, %v7773
    %v7775 = vrot.slane %v7770, %v7774
    %v7777 = vsel %vm444, %v7768, %v7775
    %v7778 = vld [vmem:[%s9] sm:$0xff]
    %v7780 = vsel %vm569, %v7777, 0
    %7782 = vmatprep.subr.mxu0 0.0
    %7783 = vmatpush1.msra.mxu0 0.0
    %7784 = vmatprep.subr.mxu0 0.0
    %7785 = vmatpush1.msra.mxu0 0.0
    %7786 = vmatprep.subr.mxu0 0.0
    %7787 = vmatpush1.msra.mxu0 0.0
    %7788 = vmatprep.subr.mxu0 0.0
    %7789 = vmatpush1.msra.mxu0 0.0
    %7790 = vmatprep.subr.mxu0 0.0
    %7791 = vmatpush1.msra.mxu0 0.0
    %7792 = vmatprep.subr.mxu0 0.0
    %7793 = vmatpush1.msra.mxu0 0.0
    %7794 = vmatprep.subr.mxu0 0.0
    %7795 = vmatpush1.msra.mxu0 0.0
    %7796 = vmatprep.subr.mxu0 0.0
    %7797 = vmatpush1.msra.mxu0 0.0
    %7798 = vmatprep.subr.mxu0 0.0
    %7799 = vmatpush1.msra.mxu0 0.0
    %7800 = vmatprep.subr.mxu0 0.0
    %7801 = vmatpush1.msra.mxu0 0.0
    %7802 = vmatprep.subr.mxu0 0.0
    %7803 = vmatpush1.msra.mxu0 0.0
    %7804 = vmatprep.subr.mxu0 0.0
    %7805 = vmatpush1.msra.mxu0 0.0
    %7806 = vmatprep.subr.mxu0 0.0
    %7807 = vmatpush1.msra.mxu0 0.0
    %7808 = vmatprep.subr.mxu0 0.0
    %7809 = vmatpush1.msra.mxu0 0.0
    %7810 = vmatprep.subr.mxu0 0.0
    %7811 = vmatpush1.msra.mxu0 0.0
    %7812 = vmatprep.subr.mxu0 0.0
    %7813 = vmatpush1.msra.mxu0 %v7778
    %7814 = vmatprep.subr.mxu0 0.0
    %7815 = vmatpush2.msra.mxu0 0.0
    %7816 = vmatprep.subr.mxu0 0.0
    %7817 = vmatpush2.msra.mxu0 0.0
    %7818 = vmatprep.subr.mxu0 0.0
    %7819 = vmatpush2.msra.mxu0 0.0
    %7820 = vmatprep.subr.mxu0 0.0
    %7821 = vmatpush2.msra.mxu0 0.0
    %7822 = vmatprep.subr.mxu0 0.0
    %7823 = vmatpush2.msra.mxu0 0.0
    %7824 = vmatprep.subr.mxu0 0.0
    %7825 = vmatpush2.msra.mxu0 0.0
    %7826 = vmatprep.subr.mxu0 0.0
    %7827 = vmatpush2.msra.mxu0 0.0
    %7828 = vmatprep.subr.mxu0 0.0
    %7829 = vmatpush2.msra.mxu0 0.0
    %7830 = vmatprep.subr.mxu0 0.0
    %7831 = vmatpush2.msra.mxu0 0.0
    %7832 = vmatprep.subr.mxu0 0.0
    %7833 = vmatpush2.msra.mxu0 0.0
    %7834 = vmatprep.subr.mxu0 0.0
    %7835 = vmatpush2.msra.mxu0 0.0
    %7836 = vmatprep.subr.mxu0 0.0
    %7837 = vmatpush2.msra.mxu0 0.0
    %7838 = vmatprep.subr.mxu0 0.0
    %7839 = vmatpush2.msra.mxu0 0.0
    %7840 = vmatprep.subr.mxu0 0.0
    %7841 = vmatpush2.msra.mxu0 0.0
    %7842 = vmatprep.subr.mxu0 0.0
    %7843 = vmatpush2.msra.mxu0 0.0
    %7844 = vmatprep.subr.mxu0 0.0
    %7845 = vmatpush2.msra.mxu0 0.0
    %7846 = vmatprep.mubr.f32.mxu0 0.0
    %7847 = vmatmul.mubr.f32.gmra.mxu0 %v7780
    %v7848 = vpop.f32.mrf.mxu0
    %v7849 = vadd.f32 0.0, %v7848
    %v7850 = vpop.f32.mrf.mxu0
    %7851 = vdwg.mxu0
    %v7852 = vlaneseq
    %v7853 = vshrl.u32 %v7852, 7
    %v7854 = vsub.s32 0, %v7853
    %v7855 = vrot.slane %v7849, %v7854
    %v7856 = vmul.f32 %v7627, %v7855
    %v7857 = vmul.f32 %v7630, %v7855
    %v7858 = vlaneseq
    %v7859 = vshrl.u32 %v7858, 7
    %v7860 = vsub.s32 1, %v7859
    %v7861 = vrot.slane %v7849, %v7860
    %v7862 = vadd.f32 %v7856, %v7861
    %v7863 = vadd.f32 %v7857, %v7861
    %v7864 = vmax.f32 %v7862, 0.0
    %v7865 = vmax.f32 %v7863, 0.0
    %v7866 = vmul.f32 %v7864, %v50
    %v7867 = vmul.f32 %v7865, %v51
    %v7868 = vpack.c.bf16 %v7867, %v7866
    %v7870 = vunpack.c.l.b16 %v7868
    %v7871 = vunpack.c.h.b16 %v7868
    %v7872 = vpack.c.b16 %v7870, %v7870
    %v7873 = vpack.c.b16 %v7871, %v7871
    %7876 = vst [vmem:[#allocation2 + $0x4] sm:$0xf] %v7872
    %7877 = vst [vmem:[#allocation2 + $0x8] sm:$0xf] %v7873
    %v7878 = vld [vmem:[#allocation2] sm:$0x8]
    %v7879 = vld [vmem:[#allocation2 + $0x4] sm:$0xf]
    %v7880 = vld [vmem:[#allocation2 + $0x8] sm:$0xf]
    %v7881 = vld [vmem:[#allocation2 + $0x4] sm:$0xf]
    %v7882 = vld [vmem:[#allocation2 + $0x8] sm:$0xf]
    %v7883 = vld [vmem:[#allocation2 + $0xc] sm:$0x1]
    %v7887 = vunpack.c.l.b16 %v7878
    %v7888 = vunpack.c.l.b16 %v7879
    %v7889 = vunpack.c.l.b16 %v7880
    %v7890 = vpack.c.b16 %v7888, %v7887
    %v7891 = vpack.c.b16 %v7889, %v7889
    %v7892 = vpack.c.b16 %v7889, %v7888
    %v7894 = vshrl.u32 %v7892, 16
    %v7896 = vrot.slane %v7894, 4
    %v7897 = vshll.u32 %v7892, 16
    %v7899 = vrot.slane %v7897, 5
    %v7900 = vor.u32 %v7896, %v7899
    %v7904 = vunpack.c.l.b16 %v7881
    %v7905 = vunpack.c.l.b16 %v7882
    %v7906 = vunpack.c.l.b16 %v7883
    %v7907 = vpack.c.b16 %v7905, %v7904
    %v7908 = vpack.c.b16 %v7906, %v7906
    %v7909 = vrot.slane %v7907, 5
    %v7910 = vrot.slane %v7908, 5
    %v7911 = vsel %vm99, %v7909, %v7910
    %s7912 = scalar_lea.vmem %s5, 1152
    %v7913 = vld [vmem:[%s7912] sm:$0xf]
    %v7914 = vld [vmem:[%s7912 + $0x4] sm:$0xf]
    %v7915 = vld [vmem:[%s7912 + $0x8] sm:$0xf]
    %v7916 = vld [vmem:[%s7912 + $0xc] sm:$0xf]
    %v7917 = vld [vmem:[%s7912 + $0x10] sm:$0xf]
    %v7918 = vld [vmem:[%s7912 + $0x14] sm:$0xf]
    %v7919 = vld [vmem:[%s7912 + $0x18] sm:$0xf]
    %v7920 = vld [vmem:[%s7912 + $0x1c] sm:$0xf]
    %v7921 = vld [vmem:[%s7912 + $0x20] sm:$0xf]
    %v7922 = vld [vmem:[%s7912 + $0x24] sm:$0xf]
    %v7923 = vld [vmem:[%s7912 + $0x28] sm:$0xf]
    %v7924 = vld [vmem:[%s7912 + $0x2c] sm:$0xf]
    %v7925 = vld [vmem:[%s7912 + $0x30] sm:$0xf]
    %v7926 = vld [vmem:[%s7912 + $0x34] sm:$0xf]
    %v7927 = vld [vmem:[%s7912 + $0x38] sm:$0xf]
    %v7928 = vld [vmem:[%s7912 + $0x3c] sm:$0xf]
    %v7929 = vld [vmem:[%s7912 + $0x40] sm:$0xf]
    %v7930 = vld [vmem:[%s7912 + $0x44] sm:$0xf]
    %v7931 = vld [vmem:[%s7912 + $0x48] sm:$0xf]
    %v7932 = vld [vmem:[%s7912 + $0x4c] sm:$0xf]
    %v7933 = vld [vmem:[%s7912 + $0x50] sm:$0xf]
    %v7934 = vld [vmem:[%s7912 + $0x54] sm:$0xf]
    %v7935 = vld [vmem:[%s7912 + $0x58] sm:$0xf]
    %v7936 = vld [vmem:[%s7912 + $0x5c] sm:$0xf]
    %v7937 = vld [vmem:[%s7912 + $0x60] sm:$0xf]
    %v7938 = vld [vmem:[%s7912 + $0x64] sm:$0xf]
    %v7939 = vld [vmem:[%s7912 + $0x68] sm:$0xf]
    %v7940 = vld [vmem:[%s7912 + $0x6c] sm:$0xf]
    %v7941 = vld [vmem:[%s7912 + $0x70] sm:$0xf]
    %v7942 = vld [vmem:[%s7912 + $0x74] sm:$0xf]
    %v7943 = vld [vmem:[%s7912 + $0x78] sm:$0xf]
    %v7944 = vld [vmem:[%s7912 + $0x7c] sm:$0xf]
    %v7945 = vld [vmem:[%s7912 + $0x80] sm:$0xf]
    %v7946 = vld [vmem:[%s7912 + $0x84] sm:$0xf]
    %v7947 = vld [vmem:[%s7912 + $0x88] sm:$0xf]
    %v7948 = vld [vmem:[%s7912 + $0x8c] sm:$0xf]
    %v7949 = vld [vmem:[%s7912 + $0x90] sm:$0xf]
    %v7950 = vld [vmem:[%s7912 + $0x94] sm:$0xf]
    %v7951 = vld [vmem:[%s7912 + $0x98] sm:$0xf]
    %v7952 = vld [vmem:[%s7912 + $0x9c] sm:$0xf]
    %v7953 = vld [vmem:[%s7912 + $0xa0] sm:$0xf]
    %v7954 = vld [vmem:[%s7912 + $0xa4] sm:$0xf]
    %v7955 = vld [vmem:[%s7912 + $0xa8] sm:$0xf]
    %v7956 = vld [vmem:[%s7912 + $0xac] sm:$0xf]
    %v7957 = vld [vmem:[%s7912 + $0xb0] sm:$0xf]
    %v7958 = vld [vmem:[%s7912 + $0xb4] sm:$0xf]
    %v7959 = vld [vmem:[%s7912 + $0xb8] sm:$0xf]
    %v7960 = vld [vmem:[%s7912 + $0xbc] sm:$0xf]
    %v7962 = vshrl.u32 %v7890, 16
    %v7964 = vrot.slane %v7962, 3
    %v7965 = vshll.u32 %v7890, 16
    %v7967 = vrot.slane %v7965, 4
    %v7968 = vor.u32 %v7964, %v7967
    %v7970 = vshrl.u32 %v7891, 16
    %v7972 = vrot.slane %v7970, 3
    %v7973 = vshll.u32 %v7891, 16
    %v7975 = vrot.slane %v7973, 4
    %v7976 = vor.u32 %v7972, %v7975
    %v7977 = vsel %vm151, %v7968, %v7976
    %v7979 = vshrl.u32 %v7900, 16
    %v7981 = vrot.slane %v7979, 3
    %v7982 = vshll.u32 %v7900, 16
    %v7984 = vrot.slane %v7982, 4
    %v7985 = vor.u32 %v7981, %v7984
    %v7986 = vsel %vm151, %v7985, %v7985
    %v7988 = vshrl.u32 %v7909, 16
    %v7990 = vrot.slane %v7988, 3
    %v7991 = vshll.u32 %v7909, 16
    %v7993 = vrot.slane %v7991, 4
    %v7994 = vor.u32 %v7990, %v7993
    %v7996 = vshrl.u32 %v7911, 16
    %v7998 = vrot.slane %v7996, 3
    %v7999 = vshll.u32 %v7911, 16
    %v8001 = vrot.slane %v7999, 4
    %v8002 = vor.u32 %v7998, %v8001
    %v8003 = vsel %vm151, %v7994, %v8002
    %v8055 = vunpack.c.l.b16 %v7913
    %v8056 = vunpack.c.l.b16 %v7914
    %v8057 = vunpack.c.l.b16 %v7915
    %v8058 = vunpack.c.l.b16 %v7916
    %v8059 = vunpack.c.l.b16 %v7917
    %v8060 = vunpack.c.l.b16 %v7918
    %v8061 = vunpack.c.l.b16 %v7919
    %v8062 = vunpack.c.l.b16 %v7920
    %v8063 = vunpack.c.l.b16 %v7921
    %v8064 = vunpack.c.l.b16 %v7922
    %v8065 = vunpack.c.l.b16 %v7923
    %v8066 = vunpack.c.l.b16 %v7924
    %v8067 = vunpack.c.l.b16 %v7925
    %v8068 = vunpack.c.l.b16 %v7926
    %v8069 = vunpack.c.l.b16 %v7927
    %v8070 = vunpack.c.l.b16 %v7928
    %v8071 = vunpack.c.l.b16 %v7929
    %v8072 = vunpack.c.l.b16 %v7930
    %v8073 = vunpack.c.l.b16 %v7931
    %v8074 = vunpack.c.l.b16 %v7932
    %v8075 = vunpack.c.l.b16 %v7933
    %v8076 = vunpack.c.l.b16 %v7934
    %v8077 = vunpack.c.l.b16 %v7935
    %v8078 = vunpack.c.l.b16 %v7936
    %v8079 = vunpack.c.l.b16 %v7937
    %v8080 = vunpack.c.l.b16 %v7938
    %v8081 = vunpack.c.l.b16 %v7939
    %v8082 = vunpack.c.l.b16 %v7940
    %v8083 = vunpack.c.l.b16 %v7941
    %v8084 = vunpack.c.l.b16 %v7942
    %v8085 = vunpack.c.l.b16 %v7943
    %v8086 = vunpack.c.l.b16 %v7944
    %v8087 = vunpack.c.l.b16 %v7945
    %v8088 = vunpack.c.l.b16 %v7946
    %v8089 = vunpack.c.l.b16 %v7947
    %v8090 = vunpack.c.l.b16 %v7948
    %v8091 = vunpack.c.l.b16 %v7949
    %v8092 = vunpack.c.l.b16 %v7950
    %v8093 = vunpack.c.l.b16 %v7951
    %v8094 = vunpack.c.l.b16 %v7952
    %v8095 = vunpack.c.l.b16 %v7953
    %v8096 = vunpack.c.l.b16 %v7954
    %v8097 = vunpack.c.l.b16 %v7955
    %v8098 = vunpack.c.l.b16 %v7956
    %v8099 = vunpack.c.l.b16 %v7957
    %v8100 = vunpack.c.l.b16 %v7958
    %v8101 = vunpack.c.l.b16 %v7959
    %v8102 = vunpack.c.l.b16 %v7960
    %v8103 = vpack.c.b16 %v8056, %v8055
    %v8104 = vpack.c.b16 %v8058, %v8057
    %v8105 = vpack.c.b16 %v8060, %v8059
    %v8106 = vpack.c.b16 %v8062, %v8061
    %v8107 = vpack.c.b16 %v8064, %v8063
    %v8108 = vpack.c.b16 %v8066, %v8065
    %v8109 = vpack.c.b16 %v8068, %v8067
    %v8110 = vpack.c.b16 %v8070, %v8069
    %v8111 = vpack.c.b16 %v8072, %v8071
    %v8112 = vpack.c.b16 %v8074, %v8073
    %v8113 = vpack.c.b16 %v8076, %v8075
    %v8114 = vpack.c.b16 %v8078, %v8077
    %v8115 = vpack.c.b16 %v8080, %v8079
    %v8116 = vpack.c.b16 %v8082, %v8081
    %v8117 = vpack.c.b16 %v8084, %v8083
    %v8118 = vpack.c.b16 %v8086, %v8085
    %v8119 = vpack.c.b16 %v8088, %v8087
    %v8120 = vpack.c.b16 %v8090, %v8089
    %v8121 = vpack.c.b16 %v8092, %v8091
    %v8122 = vpack.c.b16 %v8094, %v8093
    %v8123 = vpack.c.b16 %v8096, %v8095
    %v8124 = vpack.c.b16 %v8098, %v8097
    %v8125 = vpack.c.b16 %v8100, %v8099
    %v8126 = vpack.c.b16 %v8102, %v8101
    %8151 = vmatprep.subr.bf16.mxu0 0
    %8152 = vmatpush1.bf16.msra.mxu0 %v8110
    %8153 = vmatprep.subr.bf16.mxu0 0
    %8154 = vmatpush1.bf16.msra.mxu0 %v8109
    %8155 = vmatprep.subr.bf16.mxu0 0
    %8156 = vmatpush1.bf16.msra.mxu0 %v8108
    %8157 = vmatprep.subr.bf16.mxu0 0
    %8158 = vmatpush1.bf16.msra.mxu0 %v8107
    %8159 = vmatprep.subr.bf16.mxu0 0
    %8160 = vmatpush1.bf16.msra.mxu0 %v8106
    %8161 = vmatprep.subr.bf16.mxu0 0
    %8162 = vmatpush1.bf16.msra.mxu0 %v8105
    %8163 = vmatprep.subr.bf16.mxu0 0
    %8164 = vmatpush1.bf16.msra.mxu0 %v8104
    %8165 = vmatprep.subr.bf16.mxu0 0
    %8166 = vmatpush1.bf16.msra.mxu0 %v8103
    %8167 = vmatprep.subr.bf16.mxu0 0
    %8168 = vmatpush2.bf16.msra.mxu0 %v8118
    %8169 = vmatprep.subr.bf16.mxu0 0
    %8170 = vmatpush2.bf16.msra.mxu0 %v8117
    %8171 = vmatprep.subr.bf16.mxu0 0
    %8172 = vmatpush2.bf16.msra.mxu0 %v8116
    %8173 = vmatprep.subr.bf16.mxu0 0
    %8174 = vmatpush2.bf16.msra.mxu0 %v8115
    %8175 = vmatprep.subr.bf16.mxu0 0
    %8176 = vmatpush2.bf16.msra.mxu0 %v8114
    %8177 = vmatprep.subr.bf16.mxu0 0
    %8178 = vmatpush2.bf16.msra.mxu0 %v8113
    %8179 = vmatprep.subr.bf16.mxu0 0
    %8180 = vmatpush2.bf16.msra.mxu0 %v8112
    %8181 = vmatprep.subr.bf16.mxu0 0
    %8182 = vmatpush2.bf16.msra.mxu0 %v8111
    %8183 = vmatprep.mubr.bf16.mxu0 %v7986
    %8184 = vmatmul.mubr.bf16.gmra.mxu0 %v7977
    %v8185 = vpop.f32.mrf.mxu0
    %v8186 = vadd.f32 0.0, %v8185
    %v8187 = vpop.f32.mrf.mxu0
    %v8188 = vpop.f32.mrf.mxu0
    %v8189 = vadd.f32 0.0, %v8188
    %v8190 = vpop.f32.mrf.mxu0
    %8191 = vdwg.mxu0
    %8192 = vmatprep.subr.bf16.mxu0 0
    %8193 = vmatpush1.bf16.msra.mxu0 %v8126
    %8194 = vmatprep.subr.bf16.mxu0 0
    %8195 = vmatpush1.bf16.msra.mxu0 %v8125
    %8196 = vmatprep.subr.bf16.mxu0 0
    %8197 = vmatpush1.bf16.msra.mxu0 %v8124
    %8198 = vmatprep.subr.bf16.mxu0 0
    %8199 = vmatpush1.bf16.msra.mxu0 %v8123
    %8200 = vmatprep.subr.bf16.mxu0 0
    %8201 = vmatpush1.bf16.msra.mxu0 %v8122
    %8202 = vmatprep.subr.bf16.mxu0 0
    %8203 = vmatpush1.bf16.msra.mxu0 %v8121
    %8204 = vmatprep.subr.bf16.mxu0 0
    %8205 = vmatpush1.bf16.msra.mxu0 %v8120
    %8206 = vmatprep.subr.bf16.mxu0 0
    %8207 = vmatpush1.bf16.msra.mxu0 %v8119
    %8208 = vmatprep.subr.bf16.mxu0 0
    %8209 = vmatpush2.bf16.msra.mxu0 0
    %8210 = vmatprep.subr.bf16.mxu0 0
    %8211 = vmatpush2.bf16.msra.mxu0 0
    %8212 = vmatprep.subr.bf16.mxu0 0
    %8213 = vmatpush2.bf16.msra.mxu0 0
    %8214 = vmatprep.subr.bf16.mxu0 0
    %8215 = vmatpush2.bf16.msra.mxu0 0
    %8216 = vmatprep.subr.bf16.mxu0 0
    %8217 = vmatpush2.bf16.msra.mxu0 0
    %8218 = vmatprep.subr.bf16.mxu0 0
    %8219 = vmatpush2.bf16.msra.mxu0 0
    %8220 = vmatprep.subr.bf16.mxu0 0
    %8221 = vmatpush2.bf16.msra.mxu0 0
    %8222 = vmatprep.subr.bf16.mxu0 0
    %8223 = vmatpush2.bf16.msra.mxu0 0
    %8224 = vmatprep.mubr.bf16.mxu0 0
    %8225 = vmatmul.mubr.bf16.gmra.mxu0 %v8003
    %v8226 = vpop.f32.mrf.mxu0
    %v8227 = vadd.f32 %v8186, %v8226
    %v8228 = vpop.f32.mrf.mxu0
    %v8229 = vpop.f32.mrf.mxu0
    %v8230 = vadd.f32 %v8189, %v8229
    %v8231 = vpop.f32.mrf.mxu0
    %8232 = vdwg.mxu0
    %s8233 = scalar_lea.vmem %s6, 6
    %v8234 = vld [vmem:[%s8233] sm:$0x1]
    %s8235 = scalar_lea.vmem %s7, 6
    %v8236 = vld [vmem:[%s8235] sm:$0x1]
    %v8237 = vmul.f32 %v8227, %v50
    %v8238 = vmul.f32 %v8230, %v51
    %v8239 = vadd.f32 %v8237, %v8238
    %v8240 = vrot.slane %v8239, 4
    %v8241 = vadd.f32 %v8239, %v8240
    %v8242 = vrot.slane %v8241, 2
    %v8243 = vadd.f32 %v8241, %v8242
    %v8244 = vrot.slane %v8243, 1
    %v8245 = vadd.f32 %v8243, %v8244
    %v8246 = vmul.f32 %v8237, %v8227
    %v8247 = vmul.f32 %v8238, %v8230
    %v8248 = vadd.f32 %v8246, %v8247
    %v8249 = vrot.slane %v8248, 4
    %v8250 = vadd.f32 %v8248, %v8249
    %v8251 = vrot.slane %v8250, 2
    %v8252 = vadd.f32 %v8250, %v8251
    %v8253 = vrot.slane %v8252, 1
    %v8254 = vadd.f32 %v8252, %v8253
    %v8255 = vsel %vm444, %v8245, %v8254
    %v8256 = vld [vmem:[#allocation3] sm:$0xff]
    %v8257 = vld [vmem:[#allocation3 + $0x8] sm:$0xff]
    %v8258 = vld [vmem:[#allocation3 + $0x10] sm:$0xff]
    %v8259 = vld [vmem:[#allocation3 + $0x18] sm:$0xff]
    %v8260 = vld [vmem:[#allocation3 + $0x20] sm:$0xff]
    %v8261 = vld [vmem:[#allocation3 + $0x28] sm:$0xff]
    %v8262 = vld [vmem:[#allocation3 + $0x30] sm:$0xff]
    %v8263 = vld [vmem:[#allocation3 + $0x38] sm:$0xff]
    %v8264 = vld [vmem:[#allocation3 + $0x40] sm:$0xff]
    %v8265 = vld [vmem:[#allocation3 + $0x48] sm:$0xff]
    %v8266 = vld [vmem:[#allocation3 + $0x50] sm:$0xff]
    %v8267 = vld [vmem:[#allocation3 + $0x58] sm:$0xff]
    %v8268 = vld [vmem:[#allocation3 + $0x60] sm:$0xff]
    %v8269 = vld [vmem:[#allocation3 + $0x68] sm:$0xff]
    %v8270 = vld [vmem:[#allocation3 + $0x70] sm:$0xff]
    %v8271 = vld [vmem:[#allocation3 + $0x78] sm:$0xff]
    %8272 = vmatprep.subr.mxu0 0.0
    %8273 = vmatpush1.msra.mxu0 %v8271
    %8274 = vmatprep.subr.mxu0 0.0
    %8275 = vmatpush1.msra.mxu0 %v8270
    %8276 = vmatprep.subr.mxu0 0.0
    %8277 = vmatpush1.msra.mxu0 %v8269
    %8278 = vmatprep.subr.mxu0 0.0
    %8279 = vmatpush1.msra.mxu0 %v8268
    %8280 = vmatprep.subr.mxu0 0.0
    %8281 = vmatpush1.msra.mxu0 %v8267
    %8282 = vmatprep.subr.mxu0 0.0
    %8283 = vmatpush1.msra.mxu0 %v8266
    %8284 = vmatprep.subr.mxu0 0.0
    %8285 = vmatpush1.msra.mxu0 %v8265
    %8286 = vmatprep.subr.mxu0 0.0
    %8287 = vmatpush1.msra.mxu0 %v8264
    %8288 = vmatprep.subr.mxu0 0.0
    %8289 = vmatpush1.msra.mxu0 %v8263
    %8290 = vmatprep.subr.mxu0 0.0
    %8291 = vmatpush1.msra.mxu0 %v8262
    %8292 = vmatprep.subr.mxu0 0.0
    %8293 = vmatpush1.msra.mxu0 %v8261
    %8294 = vmatprep.subr.mxu0 0.0
    %8295 = vmatpush1.msra.mxu0 %v8260
    %8296 = vmatprep.subr.mxu0 0.0
    %8297 = vmatpush1.msra.mxu0 %v8259
    %8298 = vmatprep.subr.mxu0 0.0
    %8299 = vmatpush1.msra.mxu0 %v8258
    %8300 = vmatprep.subr.mxu0 0.0
    %8301 = vmatpush1.msra.mxu0 %v8257
    %8302 = vmatprep.subr.mxu0 0.0
    %8303 = vmatpush1.msra.mxu0 %v8256
    %8304 = vmatprep.subr.mxu0 0.0
    %8305 = vmatpush2.msra.mxu0 0.0
    %8306 = vmatprep.subr.mxu0 0.0
    %8307 = vmatpush2.msra.mxu0 0.0
    %8308 = vmatprep.subr.mxu0 0.0
    %8309 = vmatpush2.msra.mxu0 0.0
    %8310 = vmatprep.subr.mxu0 0.0
    %8311 = vmatpush2.msra.mxu0 0.0
    %8312 = vmatprep.subr.mxu0 0.0
    %8313 = vmatpush2.msra.mxu0 0.0
    %8314 = vmatprep.subr.mxu0 0.0
    %8315 = vmatpush2.msra.mxu0 0.0
    %8316 = vmatprep.subr.mxu0 0.0
    %8317 = vmatpush2.msra.mxu0 0.0
    %8318 = vmatprep.subr.mxu0 0.0
    %8319 = vmatpush2.msra.mxu0 0.0
    %8320 = vmatprep.subr.mxu0 0.0
    %8321 = vmatpush2.msra.mxu0 0.0
    %8322 = vmatprep.subr.mxu0 0.0
    %8323 = vmatpush2.msra.mxu0 0.0
    %8324 = vmatprep.subr.mxu0 0.0
    %8325 = vmatpush2.msra.mxu0 0.0
    %8326 = vmatprep.subr.mxu0 0.0
    %8327 = vmatpush2.msra.mxu0 0.0
    %8328 = vmatprep.subr.mxu0 0.0
    %8329 = vmatpush2.msra.mxu0 0.0
    %8330 = vmatprep.subr.mxu0 0.0
    %8331 = vmatpush2.msra.mxu0 0.0
    %8332 = vmatprep.subr.mxu0 0.0
    %8333 = vmatpush2.msra.mxu0 0.0
    %8334 = vmatprep.subr.mxu0 0.0
    %8335 = vmatpush2.msra.mxu0 0.0
    %8336 = vmatprep.mubr.f32.mxu0 0.0
    %8337 = vmatmul.mubr.f32.gmra.mxu0 %v8255
    %v8338 = vpop.f32.mrf.mxu0
    %v8339 = vadd.f32 0.0, %v8338
    %v8340 = vpop.f32.mrf.mxu0
    %8341 = vdwg.mxu0
    %v8342 = vmul.f32 %v8339, 0.03125
    %v8343 = vmul.f32 %v8342, %v8342
    %v8345 = vrot.slane %v8343, 7
    %v8347 = vsub.f32 %v8342, %v8345
    %v8348 = vmax.f32 %v8347, 0.0
    %v8349 = vadd.f32 %v8348, 1e-05
    %v8350 = vrsqrt.pop %v8349
    %v8353 = vunpack.c.l.s4 1966171168
    %v8354 = vunpack.c.0.s8 %v8353
    %v8355 = vlaneseq
    %v8356 = vshrl.u32 %v8355, 7
    %v8357 = vsub.s32 %v8354, %v8356
    %v8358 = vrot.slane %v8350, %v8357
    %v8359 = vcombine.high %v8358, %v8358
    %v8361 = vunpack.c.l.s4 1966171168
    %v8362 = vunpack.c.0.s8 %v8361
    %v8363 = vlaneseq
    %v8364 = vshrl.u32 %v8363, 7
    %v8365 = vsub.s32 %v8362, %v8364
    %v8366 = vrot.slane %v8359, %v8365
    %v8368 = vmul.f32 %v8234, %v8366
    %v8369 = vmul.f32 %v8342, %v8368
    %v8370 = vsub.f32 %v8236, %v8369
    %v8372 = vlaneseq
    %v8373 = vshrl.u32 %v8372, 7
    %v8374 = vsub.s32 0, %v8373
    %v8375 = vrot.slane %v8370, %v8374
    %v8377 = vsel %vm444, %v8368, %v8375
    %v8378 = vld [vmem:[%s9] sm:$0xff]
    %v8380 = vsel %vm569, %v8377, 0
    %8382 = vmatprep.subr.mxu0 0.0
    %8383 = vmatpush1.msra.mxu0 0.0
    %8384 = vmatprep.subr.mxu0 0.0
    %8385 = vmatpush1.msra.mxu0 0.0
    %8386 = vmatprep.subr.mxu0 0.0
    %8387 = vmatpush1.msra.mxu0 0.0
    %8388 = vmatprep.subr.mxu0 0.0
    %8389 = vmatpush1.msra.mxu0 0.0
    %8390 = vmatprep.subr.mxu0 0.0
    %8391 = vmatpush1.msra.mxu0 0.0
    %8392 = vmatprep.subr.mxu0 0.0
    %8393 = vmatpush1.msra.mxu0 0.0
    %8394 = vmatprep.subr.mxu0 0.0
    %8395 = vmatpush1.msra.mxu0 0.0
    %8396 = vmatprep.subr.mxu0 0.0
    %8397 = vmatpush1.msra.mxu0 0.0
    %8398 = vmatprep.subr.mxu0 0.0
    %8399 = vmatpush1.msra.mxu0 0.0
    %8400 = vmatprep.subr.mxu0 0.0
    %8401 = vmatpush1.msra.mxu0 0.0
    %8402 = vmatprep.subr.mxu0 0.0
    %8403 = vmatpush1.msra.mxu0 0.0
    %8404 = vmatprep.subr.mxu0 0.0
    %8405 = vmatpush1.msra.mxu0 0.0
    %8406 = vmatprep.subr.mxu0 0.0
    %8407 = vmatpush1.msra.mxu0 0.0
    %8408 = vmatprep.subr.mxu0 0.0
    %8409 = vmatpush1.msra.mxu0 0.0
    %8410 = vmatprep.subr.mxu0 0.0
    %8411 = vmatpush1.msra.mxu0 0.0
    %8412 = vmatprep.subr.mxu0 0.0
    %8413 = vmatpush1.msra.mxu0 %v8378
    %8414 = vmatprep.subr.mxu0 0.0
    %8415 = vmatpush2.msra.mxu0 0.0
    %8416 = vmatprep.subr.mxu0 0.0
    %8417 = vmatpush2.msra.mxu0 0.0
    %8418 = vmatprep.subr.mxu0 0.0
    %8419 = vmatpush2.msra.mxu0 0.0
    %8420 = vmatprep.subr.mxu0 0.0
    %8421 = vmatpush2.msra.mxu0 0.0
    %8422 = vmatprep.subr.mxu0 0.0
    %8423 = vmatpush2.msra.mxu0 0.0
    %8424 = vmatprep.subr.mxu0 0.0
    %8425 = vmatpush2.msra.mxu0 0.0
    %8426 = vmatprep.subr.mxu0 0.0
    %8427 = vmatpush2.msra.mxu0 0.0
    %8428 = vmatprep.subr.mxu0 0.0
    %8429 = vmatpush2.msra.mxu0 0.0
    %8430 = vmatprep.subr.mxu0 0.0
    %8431 = vmatpush2.msra.mxu0 0.0
    %8432 = vmatprep.subr.mxu0 0.0
    %8433 = vmatpush2.msra.mxu0 0.0
    %8434 = vmatprep.subr.mxu0 0.0
    %8435 = vmatpush2.msra.mxu0 0.0
    %8436 = vmatprep.subr.mxu0 0.0
    %8437 = vmatpush2.msra.mxu0 0.0
    %8438 = vmatprep.subr.mxu0 0.0
    %8439 = vmatpush2.msra.mxu0 0.0
    %8440 = vmatprep.subr.mxu0 0.0
    %8441 = vmatpush2.msra.mxu0 0.0
    %8442 = vmatprep.subr.mxu0 0.0
    %8443 = vmatpush2.msra.mxu0 0.0
    %8444 = vmatprep.subr.mxu0 0.0
    %8445 = vmatpush2.msra.mxu0 0.0
    %8446 = vmatprep.mubr.f32.mxu0 0.0
    %8447 = vmatmul.mubr.f32.gmra.mxu0 %v8380
    %v8448 = vpop.f32.mrf.mxu0
    %v8449 = vadd.f32 0.0, %v8448
    %v8450 = vpop.f32.mrf.mxu0
    %8451 = vdwg.mxu0
    %v8452 = vlaneseq
    %v8453 = vshrl.u32 %v8452, 7
    %v8454 = vsub.s32 0, %v8453
    %v8455 = vrot.slane %v8449, %v8454
    %v8456 = vmul.f32 %v8227, %v8455
    %v8457 = vmul.f32 %v8230, %v8455
    %v8458 = vlaneseq
    %v8459 = vshrl.u32 %v8458, 7
    %v8460 = vsub.s32 1, %v8459
    %v8461 = vrot.slane %v8449, %v8460
    %v8462 = vadd.f32 %v8456, %v8461
    %v8463 = vadd.f32 %v8457, %v8461
    %v8464 = vadd.f32 %v8462, %v7266
    %v8465 = vadd.f32 %v8463, %v7267
    %v8466 = vmax.f32 %v8464, 0.0
    %v8467 = vmax.f32 %v8465, 0.0
    %v8468 = vmul.f32 %v8466, %v50
    %v8469 = vmul.f32 %v8467, %v51
    %vm8470 = vcmp.gt.f32.partialorder %v50, 0.0
    %vm8471 = vcmp.gt.f32.partialorder %v51, 0.0
    %v8472 = vsel %vm8470, %v8468, 3e+38
    %v8473 = vsel %vm8471, %v8469, 3e+38
    %8474 = vmin.xlane.f32.xlu0 %v8472
    %v8475 = vpop.xlane.xlu0 %8474
    %8476 = vmin.xlane.f32.xlu0 %v8473
    %v8477 = vpop.xlane.xlu0 %8476
    %v8478 = vmin.f32 %v8475, %v8477
    %v8479 = vrot.slane %v8478, 4
    %v8480 = vmin.f32 %v8478, %v8479
    %v8481 = vrot.slane %v8480, 2
    %v8482 = vmin.f32 %v8480, %v8481
    %v8483 = vrot.slane %v8482, 1
    %v8484 = vmin.f32 %v8482, %v8483
    %v8485 = vsel %vm8470, %v8468, -3e+38
    %v8486 = vsel %vm8471, %v8469, -3e+38
    %8487 = vmax.xlane.f32.xlu0 %v8485
    %v8488 = vpop.xlane.xlu0 %8487
    %8489 = vmax.xlane.f32.xlu0 %v8486
    %v8490 = vpop.xlane.xlu0 %8489
    %v8491 = vmax.f32 %v8488, %v8490
    %v8492 = vrot.slane %v8491, 4
    %v8493 = vmax.f32 %v8491, %v8492
    %v8494 = vrot.slane %v8493, 2
    %v8495 = vmax.f32 %v8493, %v8494
    %v8496 = vrot.slane %v8495, 1
    %v8497 = vmax.f32 %v8495, %v8496
    %v8498 = vsub.f32 %v8497, %v8484
    %v8499 = vadd.f32 %v8498, 1e-05
    %v8500 = vrcp.pop %v8499
    %v8501 = vsub.f32 %v8468, %v8484
    %v8502 = vsub.f32 %v8469, %v8484
    %v8503 = vmul.f32 %v8501, %v8500
    %v8504 = vmul.f32 %v8502, %v8500
    %8505 = vst [vmem:[%s10] sm:$0xff] %v8503
    %8506 = vst [vmem:[%s10 + $0x8] sm:$0xff] %v8504
    // Predicated region
    $region46: #{_lambda_.5} parent=1 // pred_check
      _
    $region47: #{_lambda_.5} parent=1 // pred_check_branch
      %8508 = sbr.rel (0) target = $region49
    $region48: #{_lambda_.5} parent=1 // pred_region
      _
    $region49: #{_lambda_.5} parent=1 // pred_fallthru
      _
    // Predicated region
    $region50: #{_lambda_.5} parent=1 // pred_check
      _
    $region51: #{_lambda_.5} parent=1 // pred_check_branch
      %8510 = sbr.rel (0) target = $region53
    $region52: #{_lambda_.5} parent=1 // pred_region
      _
    $region53: #{_lambda_.5} parent=1 // pred_fallthru
      _
    %8511 = vsyncpa [#allocation4], 1

</llo_original>
